<compile_context>
chip_gen: v7x
topology: tpu7x:2x2x1
jax: 0.10.0
libtpu: 0.0.40
codegen_flags: <defaults>
</compile_context>

<pallas_src>
import itertools

import jax
import jax.numpy as jnp
from jax.experimental import pallas as pl
from jax.experimental.pallas import tpu as pltpu

# ---------------- configuration (mirrors the module's __init__) ----------------
MUL = 32            # multiplicity (identical for all irreps, required by the module)
DIM_IN = 4          # irreps_in.dim  // MUL   (0e + 1o -> 1 + 3)
DIM_OUT = 4         # irreps_out.dim // MUL   (0e + 1o -> 1 + 3)
DEGREE = 3          # contraction_degree
NUM_ELEMENTS = 5    # num_elements
P1, P2, P3 = 2, 3, 4                     # weighted paths per degree (descriptor dependent)
NUM_PATHS = P1 + P2 + P3                 # == weight_shape[0]
WEIGHT_SHAPE = (NUM_ELEMENTS, NUM_PATHS, MUL)   # torch.nn.Parameter shape

# canonical (symmetry-folded) monomial layout of the xf scratch (rows):
#   [OFF1, OFF1+4)   degree-1:  x_i
#   [OFF2, OFF2+10)  degree-2:  x_i*x_j,       i<=j   (pairs in lexicographic order)
#   [OFF3, OFF3+20)  degree-3:  x_i*x_j*x_l,   i<=j<=l (triples in lexicographic order)
#   [N_MONO, K_FUSED) explicit zero padding (coefficient columns are zero there too)
_PAIRS = [(i, j) for i in range(DIM_IN) for j in range(i, DIM_IN)]                       # 10
_TRIPLES = [(i, j, l) for i in range(DIM_IN) for j in range(i, DIM_IN)
            for l in range(j, DIM_IN)]                                                   # 20
N_PAIRS = len(_PAIRS)          # 10
N_TRIPLES = len(_TRIPLES)      # 20
OFF1 = 0
OFF2 = OFF1 + DIM_IN           # 4
OFF3 = OFF2 + N_PAIRS          # 14
N_MONO = OFF3 + N_TRIPLES      # 34
K_FUSED = 40                   # padded to a multiple of 8 sublanes
N_ROWS = NUM_PATHS * DIM_OUT   # 36


# ------------------------------- Pallas kernel ---------------------------------
def _symcon_kernel(x_ref, w_ref, c_ref, out_ref, xf_ref):
    # x_ref  : (DIM_IN, TBM)     f32, column n = z_local*MUL + u (ir_mul, transposed)
    # w_ref  : (NUM_PATHS, TBM)  f32, pre-gathered per-row path weights (weight[indices])
    # c_ref  : (N_ROWS, K_FUSED) math_dtype, fused + symmetry-folded contraction coeffs
    # out_ref: (DIM_OUT, TBM)    output, column n = z_local*MUL + u
    # xf_ref : (K_FUSED, TBM)    math_dtype VMEM scratch holding the canonical monomials
    x1 = x_ref[...]                                            # (4, TBM) f32

    # degree-1 monomials
    xf_ref[OFF1:OFF1 + DIM_IN, :] = x1.astype(xf_ref.dtype)

    # degree-2 canonical monomials x_i*x_j (i<=j); arithmetic in f32, cast at the store
    x2segs = []                                                # x2segs[i]: (4-i, TBM) f32
    r = OFF2
    for i in range(DIM_IN):
        seg = x1[i:i + 1, :] * x1[i:DIM_IN, :]
        x2segs.append(seg)
        xf_ref[r:r + (DIM_IN - i), :] = seg.astype(xf_ref.dtype)
        r += DIM_IN - i

    # degree-3 canonical monomials x_i*x_j*x_l (i<=j<=l), built from the deg-2 segments
    r = OFF3
    for i in range(DIM_IN):
        for j in range(i, DIM_IN):
            seg3 = x1[i:i + 1, :] * x2segs[j]                  # triples (i, j, l), l=j..3
            xf_ref[r:r + (DIM_IN - j), :] = seg3.astype(xf_ref.dtype)
            r += DIM_IN - j

    # explicit zeros in the padding rows so garbage never reaches the MXU
    xf_ref[N_MONO:K_FUSED, :] = jnp.zeros(
        (K_FUSED - N_MONO, xf_ref.shape[1]), xf_ref.dtype)

    # fused contraction on the MXU: (36, 40) @ (40, TBM), f32 accumulation
    y = jnp.dot(c_ref[...], xf_ref[...],
                preferred_element_type=jnp.float32)            # (36, TBM) f32

    # per-path weighting: out[k,n] = sum_p w[p,n] * y[p*DIM_OUT + k, n]
    # (3 independent accumulators to expose VALU ILP; 4-row y slices are cheap relative
    #  to the MXU column stream, so no 8-row path padding is needed)
    w = w_ref[...]                                             # (9, TBM) f32
    group = 3
    partials = []
    for p0 in range(0, NUM_PATHS, group):
        acc = w[p0:p0 + 1, :] * y[DIM_OUT * p0:DIM_OUT * (p0 + 1), :]
        for p in range(p0 + 1, min(p0 + group, NUM_PATHS)):
            acc = acc + w[p:p + 1, :] * y[DIM_OUT * p:DIM_OUT * (p + 1), :]
        partials.append(acc)
    total = partials[0]
    for t in partials[1:]:
        total = total + t
    out_ref[...] = total.astype(out_ref.dtype)


# --------------------------------- wrapper --------------------------------------
def _fold_deg2(c2):
    """(P2*DIM_OUT, 16) -> (P2*DIM_OUT, 10): sum C2[i,j]+C2[j,i] onto canonical i<=j."""
    c2m = c2.astype(jnp.float32).reshape(-1, DIM_IN, DIM_IN)
    cols = []
    for (i, j) in _PAIRS:
        col = c2m[:, i, j] if i == j else c2m[:, i, j] + c2m[:, j, i]
        cols.append(col)
    return jnp.stack(cols, axis=1)


def _fold_deg3(c3):
    """(P3*DIM_OUT, 64) -> (P3*DIM_OUT, 20): sum over distinct permutations onto i<=j<=l."""
    c3m = c3.astype(jnp.float32).reshape(-1, DIM_IN, DIM_IN, DIM_IN)
    cols = []
    for t in _TRIPLES:
        perms = sorted(set(itertools.permutations(t)))
        col = c3m[:, perms[0][0], perms[0][1], perms[0][2]]
        for (a, b, c) in perms[1:]:
            col = col + c3m[:, a, b, c]
        cols.append(col)
    return jnp.stack(cols, axis=1)


def _build_fused_coeff(c1, c2, c3):
    """Pack C1 / folded C2 / folded C3 into one (36, 40) coefficient matrix (f32)."""
    cf = jnp.zeros((N_ROWS, K_FUSED), jnp.float32)
    cf = cf.at[0:P1 * DIM_OUT, OFF1:OFF1 + DIM_IN].set(
        c1.astype(jnp.float32).reshape(P1 * DIM_OUT, DIM_IN))
    cf = cf.at[P1 * DIM_OUT:(P1 + P2) * DIM_OUT, OFF2:OFF2 + N_PAIRS].set(_fold_deg2(c2))
    cf = cf.at[(P1 + P2) * DIM_OUT:N_ROWS, OFF3:OFF3 + N_TRIPLES].set(_fold_deg3(c3))
    return cf


def _pick_tile(batch):
    """Largest batch tile that still gives >= 2 grid steps (keeps both v7x TCs busy)."""
    for tb in (1024, 512, 256, 128):
        if batch >= 2 * tb:
            return tb
    return 128


def symmetric_contraction(x, indices, weight, c1, c2, c3, *,
                          tile_b=None, math_dtype=jnp.bfloat16):
    """x: (B, DIM_IN*MUL) ir_mul layout; indices: (B,) int32 -> (B, DIM_OUT*MUL).

    math_dtype mirrors the module's math_dtype: bf16 (default) gives single-pass MXU
    matmuls with f32 accumulation; pass jnp.float32 for full-precision math.
    """
    B = x.shape[0]
    TB = _pick_tile(B) if tile_b is None else int(tile_b)
    assert (TB * MUL) % 128 == 0, "TB*MUL must be a multiple of 128 (lane-dense blocks)"
    TBM = TB * MUL
    B_pad = ((B + TB - 1) // TB) * TB

    xp = jnp.pad(x.astype(jnp.float32), ((0, B_pad - B), (0, 0)))
    ip = jnp.pad(indices.astype(jnp.int32), (0, B_pad - B))

    # lane-dense transposed layout: column n = z*MUL + u (layout plumbing only)
    # TODO(synk): for very large B, fold this transpose (and the output one) into the
    # kernel with pltpu.einshape on a (TB, DIM_IN*MUL) block to save two HBM passes.
    x_t = xp.reshape(B_pad, DIM_IN, MUL).transpose(1, 0, 2).reshape(DIM_IN, B_pad * MUL)

    # pre-gathered per-row path weights in the same lane-dense layout
    w_rows = weight.astype(jnp.float32)[ip]                     # (B_pad, NUM_PATHS, MUL)
    w_t = w_rows.transpose(1, 0, 2).reshape(NUM_PATHS, B_pad * MUL)

    c_fused = _build_fused_coeff(c1, c2, c3).astype(math_dtype)

    grid = (B_pad // TB,)

    out_t = pl.pallas_call(
        _symcon_kernel,
        out_shape=jax.ShapeDtypeStruct((DIM_OUT, B_pad * MUL), x.dtype),
        grid_spec=pltpu.PrefetchScalarGridSpec(
            num_scalar_prefetch=0,
            grid=grid,
            in_specs=[
                pl.BlockSpec((DIM_IN, TBM), lambda b: (0, b)),          # x tile
                pl.BlockSpec((NUM_PATHS, TBM), lambda b: (0, b)),       # gathered weights
                pl.BlockSpec((N_ROWS, K_FUSED), lambda b: (0, 0)),      # fused coefficients
            ],
            out_specs=pl.BlockSpec((DIM_OUT, TBM), lambda b: (0, b)),
            scratch_shapes=[pltpu.VMEM((K_FUSED, TBM), math_dtype)],
        ),
        compiler_params=pltpu.CompilerParams(
            dimension_semantics=("parallel",),        # shards batch tiles across TCs (v7x)
            vmem_limit_bytes=32 * 1024 * 1024,        # fits v7x's smaller VMEM with headroom
        ),
    )(x_t, w_t, c_fused)

    out = out_t.reshape(DIM_OUT, B_pad, MUL).transpose(1, 0, 2).reshape(B_pad, DIM_OUT * MUL)
    return out[:B]


# ---------------------------- pure-JAX reference ---------------------------------
def symmetric_contraction_ref(x, indices, weight, c1, c2, c3):
    B = x.shape[0]
    xr = x.reshape(B, DIM_IN, MUL).astype(jnp.float32)
    wg = weight[indices].astype(jnp.float32)                       # (B, NUM_PATHS, MUL)
    C1 = c1.reshape(P1, DIM_OUT, DIM_IN)
    C2 = c2.reshape(P2, DIM_OUT, DIM_IN, DIM_IN)
    C3 = c3.reshape(P3, DIM_OUT, DIM_IN, DIM_IN, DIM_IN)
    y1 = jnp.einsum('pki,ziu->zpku', C1, xr)
    y2 = jnp.einsum('pkij,ziu,zju->zpku', C2, xr, xr)
    y3 = jnp.einsum('pkijl,ziu,zju,zlu->zpku', C3, xr, xr, xr)
    out = (jnp.einsum('zpu,zpku->zku', wg[:, 0:P1], y1)
           + jnp.einsum('zpu,zpku->zku', wg[:, P1:P1 + P2], y2)
           + jnp.einsum('zpu,zpku->zku', wg[:, P1 + P2:], y3))
    return out.reshape(B, DIM_OUT * MUL).astype(x.dtype)


# ------------------------------------ main ---------------------------------------
if __name__ == "__main__":
    key = jax.random.PRNGKey(0)
    k_w, k_x, k_i, k_c1, k_c2, k_c3 = jax.random.split(key, 6)

    B = 500  # not a multiple of the batch tile -> exercises the padding path

    # deterministic parameter init (torch.randn analogue on the weight Parameter)
    weight = jax.random.normal(k_w, WEIGHT_SHAPE, dtype=jnp.float32)

    # deterministic synthetic contraction coefficients (stand-in for the cue descriptor)
    c1 = 0.5 * jax.random.normal(k_c1, (P1 * DIM_OUT, DIM_IN), dtype=jnp.float32)
    c2 = 0.25 * jax.random.normal(k_c2, (P2 * DIM_OUT, DIM_IN * DIM_IN), dtype=jnp.float32)
    c3 = 0.125 * jax.random.normal(k_c3, (P3 * DIM_OUT, DIM_IN ** 3), dtype=jnp.float32)

    # inputs: node features (ir_mul layout) and per-node element indices
    x = jax.random.normal(k_x, (B, DIM_IN * MUL), dtype=jnp.float32)
    indices = jax.random.randint(k_i, (B,), 0, NUM_ELEMENTS, dtype=jnp.int32)

    ref = symmetric_contraction_ref(x, indices, weight, c1, c2, c3)

    # full-precision path: tight correctness check
    out_f32 = symmetric_contraction(x, indices, weight, c1, c2, c3,
                                    math_dtype=jnp.float32)
    out_f32 = jax.block_until_ready(out_f32)
    if not jnp.allclose(out_f32, ref, rtol=1e-3, atol=1e-3):
        err = jnp.max(jnp.abs(out_f32 - ref))
        raise AssertionError(f"f32 Pallas kernel does not match reference (max abs err {err})")

    # fast path (bf16 MXU operands, f32 accumulation): normalized-error sanity check
    out_bf16 = symmetric_contraction(x, indices, weight, c1, c2, c3)
    out_bf16 = jax.block_until_ready(out_bf16)
    rel = jnp.max(jnp.abs(out_bf16 - ref)) / (jnp.max(jnp.abs(ref)) + 1e-6)
    if rel > 3e-2:
        raise AssertionError(f"bf16 Pallas kernel deviates too much from reference (rel err {rel})")

    print("KERNEL_OK")
</pallas_src>

<mosaic_0001>
module attributes {stable_mosaic.version = 11 : i64} {
  func.func @_symcon_kernel(%arg0: i32, %arg1: memref<4x4096xf32, #tpu.memory_space<vmem>>, %arg2: memref<9x4096xf32, #tpu.memory_space<vmem>>, %arg3: memref<36x40xf32, #tpu.memory_space<vmem>>, %arg4: memref<4x4096xf32, #tpu.memory_space<vmem>>, %arg5: memref<40x4096xf32, #tpu.memory_space<vmem>>) attributes {dimension_semantics = [#tpu.dimension_semantics<parallel>], iteration_bounds = array<i64: 4>, scalar_prefetch = 0 : i64, scratch_operands = 1 : i64, tpu.core_type = #tpu.core_type<tc>, window_params = [{transform_indices = @transform_0, window_bounds = array<i64: 4, 4096>}, {transform_indices = @transform_1, window_bounds = array<i64: 9, 4096>}, {pipeline_mode = #tpu.pipeline_mode<synchronous>, transform_indices = @transform_2, window_bounds = array<i64: 36, 40>}, {transform_indices = @transform_3, window_bounds = array<i64: 4, 4096>}]} {
    %c0 = arith.constant 0 : index
    %c0_0 = arith.constant 0 : index
    %0 = vector.load %arg1[%c0, %c0_0] : memref<4x4096xf32, #tpu.memory_space<vmem>>, vector<4x4096xf32>
    %c0_1 = arith.constant 0 : index
    %c0_2 = arith.constant 0 : index
    %1 = vector.load %arg5[%c0_1, %c0_2] : memref<40x4096xf32, #tpu.memory_space<vmem>>, vector<4x4096xf32>
    tpu.vector_store %arg5[%c0_1, %c0_2], %0 {strides = array<i32>} : memref<40x4096xf32, #tpu.memory_space<vmem>>, vector<4x4096xf32>,
    %2 = vector.extract_strided_slice %0 {offsets = [0, 0], sizes = [1, 4096], strides = [1, 1]} : vector<4x4096xf32> to vector<1x4096xf32>
    %3 = vector.broadcast %2 : vector<1x4096xf32> to vector<4x4096xf32>
    %4 = arith.mulf %3, %0 : vector<4x4096xf32>
    %c4 = arith.constant 4 : index
    %c0_3 = arith.constant 0 : index
    %5 = vector.load %arg5[%c4, %c0_3] : memref<40x4096xf32, #tpu.memory_space<vmem>>, vector<4x4096xf32>
    tpu.vector_store %arg5[%c4, %c0_3], %4 {strides = array<i32>} : memref<40x4096xf32, #tpu.memory_space<vmem>>, vector<4x4096xf32>,
    %6 = vector.extract_strided_slice %0 {offsets = [1, 0], sizes = [1, 4096], strides = [1, 1]} : vector<4x4096xf32> to vector<1x4096xf32>
    %7 = vector.extract_strided_slice %0 {offsets = [1, 0], sizes = [3, 4096], strides = [1, 1]} : vector<4x4096xf32> to vector<3x4096xf32>
    %8 = vector.broadcast %6 : vector<1x4096xf32> to vector<3x4096xf32>
    %9 = arith.mulf %8, %7 : vector<3x4096xf32>
    %c8 = arith.constant 8 : index
    %c0_4 = arith.constant 0 : index
    %10 = vector.load %arg5[%c8, %c0_4] : memref<40x4096xf32, #tpu.memory_space<vmem>>, vector<3x4096xf32>
    tpu.vector_store %arg5[%c8, %c0_4], %9 {strides = array<i32>} : memref<40x4096xf32, #tpu.memory_space<vmem>>, vector<3x4096xf32>,
    %11 = vector.extract_strided_slice %0 {offsets = [2, 0], sizes = [1, 4096], strides = [1, 1]} : vector<4x4096xf32> to vector<1x4096xf32>
    %12 = vector.extract_strided_slice %0 {offsets = [2, 0], sizes = [2, 4096], strides = [1, 1]} : vector<4x4096xf32> to vector<2x4096xf32>
    %13 = vector.broadcast %11 : vector<1x4096xf32> to vector<2x4096xf32>
    %14 = arith.mulf %13, %12 : vector<2x4096xf32>
    %c11 = arith.constant 11 : index
    %c0_5 = arith.constant 0 : index
    %15 = vector.load %arg5[%c11, %c0_5] : memref<40x4096xf32, #tpu.memory_space<vmem>>, vector<2x4096xf32>
    tpu.vector_store %arg5[%c11, %c0_5], %14 {strides = array<i32>} : memref<40x4096xf32, #tpu.memory_space<vmem>>, vector<2x4096xf32>,
    %16 = vector.extract_strided_slice %0 {offsets = [3, 0], sizes = [1, 4096], strides = [1, 1]} : vector<4x4096xf32> to vector<1x4096xf32>
    %17 = vector.extract_strided_slice %0 {offsets = [3, 0], sizes = [1, 4096], strides = [1, 1]} : vector<4x4096xf32> to vector<1x4096xf32>
    %18 = arith.mulf %16, %17 : vector<1x4096xf32>
    %c13 = arith.constant 13 : index
    %c0_6 = arith.constant 0 : index
    %19 = vector.load %arg5[%c13, %c0_6] : memref<40x4096xf32, #tpu.memory_space<vmem>>, vector<1x4096xf32>
    tpu.vector_store %arg5[%c13, %c0_6], %18 {strides = array<i32>} : memref<40x4096xf32, #tpu.memory_space<vmem>>, vector<1x4096xf32>,
    %20 = vector.extract_strided_slice %0 {offsets = [0, 0], sizes = [1, 4096], strides = [1, 1]} : vector<4x4096xf32> to vector<1x4096xf32>
    %21 = vector.broadcast %20 : vector<1x4096xf32> to vector<4x4096xf32>
    %22 = arith.mulf %21, %4 : vector<4x4096xf32>
    %c14 = arith.constant 14 : index
    %c0_7 = arith.constant 0 : index
    %23 = vector.load %arg5[%c14, %c0_7] : memref<40x4096xf32, #tpu.memory_space<vmem>>, vector<4x4096xf32>
    tpu.vector_store %arg5[%c14, %c0_7], %22 {strides = array<i32>} : memref<40x4096xf32, #tpu.memory_space<vmem>>, vector<4x4096xf32>,
    %24 = vector.extract_strided_slice %0 {offsets = [0, 0], sizes = [1, 4096], strides = [1, 1]} : vector<4x4096xf32> to vector<1x4096xf32>
    %25 = vector.broadcast %24 : vector<1x4096xf32> to vector<3x4096xf32>
    %26 = arith.mulf %25, %9 : vector<3x4096xf32>
    %c18 = arith.constant 18 : index
    %c0_8 = arith.constant 0 : index
    %27 = vector.load %arg5[%c18, %c0_8] : memref<40x4096xf32, #tpu.memory_space<vmem>>, vector<3x4096xf32>
    tpu.vector_store %arg5[%c18, %c0_8], %26 {strides = array<i32>} : memref<40x4096xf32, #tpu.memory_space<vmem>>, vector<3x4096xf32>,
    %28 = vector.extract_strided_slice %0 {offsets = [0, 0], sizes = [1, 4096], strides = [1, 1]} : vector<4x4096xf32> to vector<1x4096xf32>
    %29 = vector.broadcast %28 : vector<1x4096xf32> to vector<2x4096xf32>
    %30 = arith.mulf %29, %14 : vector<2x4096xf32>
    %c21 = arith.constant 21 : index
    %c0_9 = arith.constant 0 : index
    %31 = vector.load %arg5[%c21, %c0_9] : memref<40x4096xf32, #tpu.memory_space<vmem>>, vector<2x4096xf32>
    tpu.vector_store %arg5[%c21, %c0_9], %30 {strides = array<i32>} : memref<40x4096xf32, #tpu.memory_space<vmem>>, vector<2x4096xf32>,
    %32 = vector.extract_strided_slice %0 {offsets = [0, 0], sizes = [1, 4096], strides = [1, 1]} : vector<4x4096xf32> to vector<1x4096xf32>
    %33 = arith.mulf %32, %18 : vector<1x4096xf32>
    %c23 = arith.constant 23 : index
    %c0_10 = arith.constant 0 : index
    %34 = vector.load %arg5[%c23, %c0_10] : memref<40x4096xf32, #tpu.memory_space<vmem>>, vector<1x4096xf32>
    tpu.vector_store %arg5[%c23, %c0_10], %33 {strides = array<i32>} : memref<40x4096xf32, #tpu.memory_space<vmem>>, vector<1x4096xf32>,
    %35 = vector.extract_strided_slice %0 {offsets = [1, 0], sizes = [1, 4096], strides = [1, 1]} : vector<4x4096xf32> to vector<1x4096xf32>
    %36 = vector.broadcast %35 : vector<1x4096xf32> to vector<3x4096xf32>
    %37 = arith.mulf %36, %9 : vector<3x4096xf32>
    %c24 = arith.constant 24 : index
    %c0_11 = arith.constant 0 : index
    %38 = vector.load %arg5[%c24, %c0_11] : memref<40x4096xf32, #tpu.memory_space<vmem>>, vector<3x4096xf32>
    tpu.vector_store %arg5[%c24, %c0_11], %37 {strides = array<i32>} : memref<40x4096xf32, #tpu.memory_space<vmem>>, vector<3x4096xf32>,
    %39 = vector.extract_strided_slice %0 {offsets = [1, 0], sizes = [1, 4096], strides = [1, 1]} : vector<4x4096xf32> to vector<1x4096xf32>
    %40 = vector.broadcast %39 : vector<1x4096xf32> to vector<2x4096xf32>
    %41 = arith.mulf %40, %14 : vector<2x4096xf32>
    %c27 = arith.constant 27 : index
    %c0_12 = arith.constant 0 : index
    %42 = vector.load %arg5[%c27, %c0_12] : memref<40x4096xf32, #tpu.memory_space<vmem>>, vector<2x4096xf32>
    tpu.vector_store %arg5[%c27, %c0_12], %41 {strides = array<i32>} : memref<40x4096xf32, #tpu.memory_space<vmem>>, vector<2x4096xf32>,
    %43 = vector.extract_strided_slice %0 {offsets = [1, 0], sizes = [1, 4096], strides = [1, 1]} : vector<4x4096xf32> to vector<1x4096xf32>
    %44 = arith.mulf %43, %18 : vector<1x4096xf32>
    %c29 = arith.constant 29 : index
    %c0_13 = arith.constant 0 : index
    %45 = vector.load %arg5[%c29, %c0_13] : memref<40x4096xf32, #tpu.memory_space<vmem>>, vector<1x4096xf32>
    tpu.vector_store %arg5[%c29, %c0_13], %44 {strides = array<i32>} : memref<40x4096xf32, #tpu.memory_space<vmem>>, vector<1x4096xf32>,
    %46 = vector.extract_strided_slice %0 {offsets = [2, 0], sizes = [1, 4096], strides = [1, 1]} : vector<4x4096xf32> to vector<1x4096xf32>
    %47 = vector.broadcast %46 : vector<1x4096xf32> to vector<2x4096xf32>
    %48 = arith.mulf %47, %14 : vector<2x4096xf32>
    %c30 = arith.constant 30 : index
    %c0_14 = arith.constant 0 : index
    %49 = vector.load %arg5[%c30, %c0_14] : memref<40x4096xf32, #tpu.memory_space<vmem>>, vector<2x4096xf32>
    tpu.vector_store %arg5[%c30, %c0_14], %48 {strides = array<i32>} : memref<40x4096xf32, #tpu.memory_space<vmem>>, vector<2x4096xf32>,
    %50 = vector.extract_strided_slice %0 {offsets = [2, 0], sizes = [1, 4096], strides = [1, 1]} : vector<4x4096xf32> to vector<1x4096xf32>
    %51 = arith.mulf %50, %18 : vector<1x4096xf32>
    %c32 = arith.constant 32 : index
    %c0_15 = arith.constant 0 : index
    %52 = vector.load %arg5[%c32, %c0_15] : memref<40x4096xf32, #tpu.memory_space<vmem>>, vector<1x4096xf32>
    tpu.vector_store %arg5[%c32, %c0_15], %51 {strides = array<i32>} : memref<40x4096xf32, #tpu.memory_space<vmem>>, vector<1x4096xf32>,
    %53 = vector.extract_strided_slice %0 {offsets = [3, 0], sizes = [1, 4096], strides = [1, 1]} : vector<4x4096xf32> to vector<1x4096xf32>
    %54 = arith.mulf %53, %18 : vector<1x4096xf32>
    %c33 = arith.constant 33 : index
    %c0_16 = arith.constant 0 : index
    %55 = vector.load %arg5[%c33, %c0_16] : memref<40x4096xf32, #tpu.memory_space<vmem>>, vector<1x4096xf32>
    tpu.vector_store %arg5[%c33, %c0_16], %54 {strides = array<i32>} : memref<40x4096xf32, #tpu.memory_space<vmem>>, vector<1x4096xf32>,
    %cst = arith.constant 0.000000e+00 : f32
    %56 = vector.broadcast %cst : f32 to vector<6x4096xf32>
    %c34 = arith.constant 34 : index
    %c0_17 = arith.constant 0 : index
    %57 = vector.load %arg5[%c34, %c0_17] : memref<40x4096xf32, #tpu.memory_space<vmem>>, vector<6x4096xf32>
    tpu.vector_store %arg5[%c34, %c0_17], %56 {strides = array<i32>} : memref<40x4096xf32, #tpu.memory_space<vmem>>, vector<6x4096xf32>,
    %c0_18 = arith.constant 0 : index
    %c0_19 = arith.constant 0 : index
    %58 = vector.load %arg3[%c0_18, %c0_19] : memref<36x40xf32, #tpu.memory_space<vmem>>, vector<36x40xf32>
    %c0_20 = arith.constant 0 : index
    %c0_21 = arith.constant 0 : index
    %59 = vector.load %arg5[%c0_20, %c0_21] : memref<40x4096xf32, #tpu.memory_space<vmem>>, vector<40x4096xf32>
    %cst_22 = arith.constant dense<0.000000e+00> : vector<36x4096xf32>
    %60 = tpu.matmul %58, %59, %cst_22 {dimension_numbers = #tpu.dot_dimension_numbers<[1], [0], [0], [1], [0, 0, 1, 1], [], []>} : vector<36x40xf32>, vector<40x4096xf32>, vector<36x4096xf32> -> vector<36x4096xf32>
    %c0_23 = arith.constant 0 : index
    %c0_24 = arith.constant 0 : index
    %61 = vector.load %arg2[%c0_23, %c0_24] : memref<9x4096xf32, #tpu.memory_space<vmem>>, vector<9x4096xf32>
    %62 = vector.extract_strided_slice %61 {offsets = [0, 0], sizes = [1, 4096], strides = [1, 1]} : vector<9x4096xf32> to vector<1x4096xf32>
    %63 = vector.extract_strided_slice %60 {offsets = [0, 0], sizes = [4, 4096], strides = [1, 1]} : vector<36x4096xf32> to vector<4x4096xf32>
    %64 = vector.broadcast %62 : vector<1x4096xf32> to vector<4x4096xf32>
    %65 = arith.mulf %64, %63 : vector<4x4096xf32>
    %66 = vector.extract_strided_slice %61 {offsets = [1, 0], sizes = [1, 4096], strides = [1, 1]} : vector<9x4096xf32> to vector<1x4096xf32>
    %67 = vector.extract_strided_slice %60 {offsets = [4, 0], sizes = [4, 4096], strides = [1, 1]} : vector<36x4096xf32> to vector<4x4096xf32>
    %68 = vector.broadcast %66 : vector<1x4096xf32> to vector<4x4096xf32>
    %69 = arith.mulf %68, %67 : vector<4x4096xf32>
    %70 = arith.addf %65, %69 : vector<4x4096xf32>
    %71 = vector.extract_strided_slice %61 {offsets = [2, 0], sizes = [1, 4096], strides = [1, 1]} : vector<9x4096xf32> to vector<1x4096xf32>
    %72 = vector.extract_strided_slice %60 {offsets = [8, 0], sizes = [4, 4096], strides = [1, 1]} : vector<36x4096xf32> to vector<4x4096xf32>
    %73 = vector.broadcast %71 : vector<1x4096xf32> to vector<4x4096xf32>
    %74 = arith.mulf %73, %72 : vector<4x4096xf32>
    %75 = arith.addf %70, %74 : vector<4x4096xf32>
    %76 = vector.extract_strided_slice %61 {offsets = [3, 0], sizes = [1, 4096], strides = [1, 1]} : vector<9x4096xf32> to vector<1x4096xf32>
    %77 = vector.extract_strided_slice %60 {offsets = [12, 0], sizes = [4, 4096], strides = [1, 1]} : vector<36x4096xf32> to vector<4x4096xf32>
    %78 = vector.broadcast %76 : vector<1x4096xf32> to vector<4x4096xf32>
    %79 = arith.mulf %78, %77 : vector<4x4096xf32>
    %80 = vector.extract_strided_slice %61 {offsets = [4, 0], sizes = [1, 4096], strides = [1, 1]} : vector<9x4096xf32> to vector<1x4096xf32>
    %81 = vector.extract_strided_slice %60 {offsets = [16, 0], sizes = [4, 4096], strides = [1, 1]} : vector<36x4096xf32> to vector<4x4096xf32>
    %82 = vector.broadcast %80 : vector<1x4096xf32> to vector<4x4096xf32>
    %83 = arith.mulf %82, %81 : vector<4x4096xf32>
    %84 = arith.addf %79, %83 : vector<4x4096xf32>
    %85 = vector.extract_strided_slice %61 {offsets = [5, 0], sizes = [1, 4096], strides = [1, 1]} : vector<9x4096xf32> to vector<1x4096xf32>
    %86 = vector.extract_strided_slice %60 {offsets = [20, 0], sizes = [4, 4096], strides = [1, 1]} : vector<36x4096xf32> to vector<4x4096xf32>
    %87 = vector.broadcast %85 : vector<1x4096xf32> to vector<4x4096xf32>
    %88 = arith.mulf %87, %86 : vector<4x4096xf32>
    %89 = arith.addf %84, %88 : vector<4x4096xf32>
    %90 = vector.extract_strided_slice %61 {offsets = [6, 0], sizes = [1, 4096], strides = [1, 1]} : vector<9x4096xf32> to vector<1x4096xf32>
    %91 = vector.extract_strided_slice %60 {offsets = [24, 0], sizes = [4, 4096], strides = [1, 1]} : vector<36x4096xf32> to vector<4x4096xf32>
    %92 = vector.broadcast %90 : vector<1x4096xf32> to vector<4x4096xf32>
    %93 = arith.mulf %92, %91 : vector<4x4096xf32>
    %94 = vector.extract_strided_slice %61 {offsets = [7, 0], sizes = [1, 4096], strides = [1, 1]} : vector<9x4096xf32> to vector<1x4096xf32>
    %95 = vector.extract_strided_slice %60 {offsets = [28, 0], sizes = [4, 4096], strides = [1, 1]} : vector<36x4096xf32> to vector<4x4096xf32>
    %96 = vector.broadcast %94 : vector<1x4096xf32> to vector<4x4096xf32>
    %97 = arith.mulf %96, %95 : vector<4x4096xf32>
    %98 = arith.addf %93, %97 : vector<4x4096xf32>
    %99 = vector.extract_strided_slice %61 {offsets = [8, 0], sizes = [1, 4096], strides = [1, 1]} : vector<9x4096xf32> to vector<1x4096xf32>
    %100 = vector.extract_strided_slice %60 {offsets = [32, 0], sizes = [4, 4096], strides = [1, 1]} : vector<36x4096xf32> to vector<4x4096xf32>
    %101 = vector.broadcast %99 : vector<1x4096xf32> to vector<4x4096xf32>
    %102 = arith.mulf %101, %100 : vector<4x4096xf32>
    %103 = arith.addf %98, %102 : vector<4x4096xf32>
    %104 = arith.addf %75, %89 : vector<4x4096xf32>
    %105 = arith.addf %104, %103 : vector<4x4096xf32>
    %c0_25 = arith.constant 0 : index
    %c0_26 = arith.constant 0 : index
    %106 = vector.load %arg4[%c0_25, %c0_26] : memref<4x4096xf32, #tpu.memory_space<vmem>>, vector<4x4096xf32>
    tpu.vector_store %arg4[%c0_25, %c0_26], %105 {strides = array<i32>} : memref<4x4096xf32, #tpu.memory_space<vmem>>, vector<4x4096xf32>,
    return
  }
  func.func @transform_0(%arg0: i32) -> (i32, i32) {
    %c0_i32 = arith.constant 0 : i32
    %c0_i32_0 = arith.constant 0 : i32
    return %c0_i32, %arg0 : i32, i32
  }
  func.func @transform_1(%arg0: i32) -> (i32, i32) {
    %c0_i32 = arith.constant 0 : i32
    %c0_i32_0 = arith.constant 0 : i32
    return %c0_i32, %arg0 : i32, i32
  }
  func.func @transform_2(%arg0: i32) -> (i32, i32) {
    %c0_i32 = arith.constant 0 : i32
    %c0_i32_0 = arith.constant 0 : i32
    %c0_i32_1 = arith.constant 0 : i32
    return %c0_i32, %c0_i32_0 : i32, i32
  }
  func.func @transform_3(%arg0: i32) -> (i32, i32) {
    %c0_i32 = arith.constant 0 : i32
    %c0_i32_0 = arith.constant 0 : i32
    return %c0_i32, %arg0 : i32, i32
  }
}

</mosaic_0001>

<llo_original>
// kernel: tpu_custom_call.1
$region0: #{tpu_custom_call.1}
  #allocation0 [shape = 'u32[]', space=smem, size = 0x4, offset = 0x4, fixed_abs, tag = 'smem constant byte address 0x4 - core index']
  #allocation1 [shape = 'u32[144,128]{1,0:T(1,128)}', space=vmem, size = 0x12000, scoped, tag = 'internal scratch']
  #allocation2 [shape = 'f32[40,4096]{1,0:T(8,128)}', space=vmem, size = 0xa0000, scoped, tag = 'scratch operand']
  %s0 = inlined_call_operand.hbm [shape: f32[4,16384], index: 0, kind: input, shape index: {}]
  %s1 = inlined_call_operand.hbm [shape: f32[9,16384], index: 1, kind: input, shape index: {}]
  %s2 = inlined_call_operand.hbm [shape: f32[36,40], index: 2, kind: input, shape index: {}]
  %s3 = inlined_call_operand.hbm [shape: f32[4,16384], index: 3, kind: output, shape index: {}]
  %s4 = sld [smem:[#allocation0]]
  $region57: #{tpu_custom_call.1} parent=0
    _
  %s6 = ssub.s32 1, %s4
  %s7 = scalar_select 0, %s6, %s4
  $region1: #{tpu_custom_call.1} parent=0
    #allocation3 [shape = 'u8[131072]{0}', space=vmem, size = 0x20000, scoped, tag = 'input window, operand 0']
    #allocation4 [shape = 's32[2]{0}', space=sflag, size = 0x8, scoped, tag = 'scoped memory for tpu_custom_call.1']
    #allocation5 [shape = 's32[2]{0}', space=sflag, size = 0x8, scoped, tag = 'scoped memory for tpu_custom_call.1']
    #allocation6 [shape = 'u8[524288]{0}', space=vmem, size = 0x80000, scoped, tag = 'input window, operand 1']
    #allocation7 [shape = 's32[2]{0}', space=sflag, size = 0x8, scoped, tag = 'scoped memory for tpu_custom_call.1']
    #allocation8 [shape = 'u8[20480]{0}', space=vmem, size = 0x5000, scoped, tag = 'input window, operand 2, single buffered']
    #allocation9 [shape = 'u8[131072]{0}', space=vmem, size = 0x20000, scoped, tag = 'output window, operand 0']
    %8 = vsyncpa [#allocation4], 0
    %s9 = scalar_lea.sflag [#allocation4], 1
    %10 = vsyncpa %s9, 0
    %11 = vsyncpa [#allocation7], 0
    %s12 = scalar_lea.sflag [#allocation7], 1
    %13 = vsyncpa %s12, 0
    %14 = vsyncpa [#allocation5], 0
    %s15 = scalar_lea.sflag [#allocation5], 1
    %16 = vsyncpa %s15, 0
    loop: start=0, step=1, limit=6
    $region2: #{tpu_custom_call.1} parent=1 // loop_pre_header
      _
    $region3: #{tpu_custom_call.1} parent=1 // loop_header
      %s18 = sphi 0, %s22
      %p19 = scmp.ge.s32.totalorder %s18, 6
      %s28 = sphi 0, %s30
      %s31 = sphi 0, %s28
      %s32 = sphi 0, %s31
      %s48 = sphi 0, %s32
      %s54 = sphi 0, %s56
      %s57 = sphi 0, %s54
      %s58 = sphi 0, %s57
      %s74 = sphi 0, %s58
      %s78 = sphi 0, %s78
      %s80 = sphi 0, %s78
      %s81 = sphi 0, %s80
      %s95 = sphi 0, %s81
      %s101 = sphi 0, %s103
      %s104 = sphi 0, %s101
      %s105 = sphi 0, %s104
      %s121 = sphi 0, %s105
    $region4: #{tpu_custom_call.1} parent=1 // loop_header_branch
      %21 = sbr.rel (%p19) target = $region8
    $region5: #{tpu_custom_call.1} parent=1 // loop_body
      %s23 = ssub.s32 %s18, 1
      %s24 = ssub.s32 %s18, 2
      %s25 = sadd.s32 %s18, 1
      %s26 = ssub.s32 %s18, %s25
      %p27 = scmp.eq.s32.totalorder %s26, 0
      %s29 = sadd.s32 %s28, 1
      %s30 = scalar_select %p27, %s28, %s29
      %p33 = pneg %p27
      %p34 = scmp.eq.s32.totalorder %s18, 3
      %p35 = por %p33, %p34
      %p36 = scmp.ne.s32.totalorder %s28, %s31
      %p37 = scmp.eq.s32.totalorder %s18, 0
      %p38 = por %p36, %p37
      %p39 = scmp.ne.s32.totalorder %s28, %s31
      %p40 = scmp.eq.s32.totalorder %s23, 3
      %p41 = por %p39, %p40
      %p42 = scmp.ne.s32.totalorder %s31, %s32
      %p43 = scmp.eq.s32.totalorder %s23, 0
      %p44 = por %p42, %p43
      %p45 = scmp.ne.s32.totalorder %s31, %s32
      %p46 = scmp.eq.s32.totalorder %s24, 3
      %p47 = por %p45, %p46
      %p49 = scmp.ne.s32.totalorder %s32, %s48
      %p50 = scmp.eq.s32.totalorder %s24, 0
      %p51 = por %p49, %p50
      %s52 = ssub.s32 %s18, %s25
      %p53 = scmp.eq.s32.totalorder %s52, 0
      %s55 = sadd.s32 %s54, 1
      %s56 = scalar_select %p53, %s54, %s55
      %p59 = pneg %p53
      %p60 = scmp.eq.s32.totalorder %s18, 3
      %p61 = por %p59, %p60
      %p62 = scmp.ne.s32.totalorder %s54, %s57
      %p63 = scmp.eq.s32.totalorder %s18, 0
      %p64 = por %p62, %p63
      %p65 = scmp.ne.s32.totalorder %s54, %s57
      %p66 = scmp.eq.s32.totalorder %s23, 3
      %p67 = por %p65, %p66
      %p68 = scmp.ne.s32.totalorder %s57, %s58
      %p69 = scmp.eq.s32.totalorder %s23, 0
      %p70 = por %p68, %p69
      %p71 = scmp.ne.s32.totalorder %s57, %s58
      %p72 = scmp.eq.s32.totalorder %s24, 3
      %p73 = por %p71, %p72
      %p75 = scmp.ne.s32.totalorder %s58, %s74
      %p76 = scmp.eq.s32.totalorder %s24, 0
      %p77 = por %p75, %p76
      %s79 = sadd.s32 %s78, 1
      %p82 = scmp.eq.s32.totalorder %s18, 3
      %p83 = scmp.ne.s32.totalorder %s78, %s80
      %p84 = scmp.eq.s32.totalorder %s18, 0
      %p85 = por %p83, %p84
      %p86 = scmp.ne.s32.totalorder %s78, %s80
      %p87 = scmp.eq.s32.totalorder %s23, 3
      %p88 = por %p86, %p87
      %p89 = scmp.ne.s32.totalorder %s80, %s81
      %p90 = scmp.eq.s32.totalorder %s23, 0
      %p91 = por %p89, %p90
      %p92 = scmp.ne.s32.totalorder %s80, %s81
      %p93 = scmp.eq.s32.totalorder %s24, 3
      %p94 = por %p92, %p93
      %p96 = scmp.ne.s32.totalorder %s81, %s95
      %p97 = scmp.eq.s32.totalorder %s24, 0
      %p98 = por %p96, %p97
      %s99 = ssub.s32 %s18, %s25
      %p100 = scmp.eq.s32.totalorder %s99, 0
      %s102 = sadd.s32 %s101, 1
      %s103 = scalar_select %p100, %s101, %s102
      %p106 = pneg %p100
      %p107 = scmp.eq.s32.totalorder %s18, 3
      %p108 = por %p106, %p107
      %p109 = scmp.ne.s32.totalorder %s101, %s104
      %p110 = scmp.eq.s32.totalorder %s18, 0
      %p111 = por %p109, %p110
      %p112 = scmp.ne.s32.totalorder %s101, %s104
      %p113 = scmp.eq.s32.totalorder %s23, 3
      %p114 = por %p112, %p113
      %p115 = scmp.ne.s32.totalorder %s104, %s105
      %p116 = scmp.eq.s32.totalorder %s23, 0
      %p117 = por %p115, %p116
      %p118 = scmp.ne.s32.totalorder %s104, %s105
      %p119 = scmp.eq.s32.totalorder %s24, 3
      %p120 = por %p118, %p119
      %p122 = scmp.ne.s32.totalorder %s105, %s121
      %p123 = scmp.eq.s32.totalorder %s24, 0
      %p124 = por %p122, %p123
      %p125 = scmp.le.s32.totalorder 1, %s18
      %p126 = scmp.lt.s32.totalorder %s18, 5
      %p127 = pnand %p125, %p126
      %p128 = pneg %p127
      // Predicated region
      $region9: #{tpu_custom_call.1} parent=5 // pred_check
        _
      $region10: #{tpu_custom_call.1} parent=5 // pred_check_branch
        %130 = sbr.rel (%p127) target = $region12
      $region11: #{tpu_custom_call.1} parent=5 // pred_region
        %s131 = ssub.s32 %s18, 1
        // Predicated region
        $region13: #{tpu_custom_call.1} parent=11 // pred_check
          %p132 = pneg %p91
        $region14: #{tpu_custom_call.1} parent=11 // pred_check_branch
          %134 = sbr.rel (%p132) target = $region16
        $region15: #{tpu_custom_call.1} parent=11 // pred_region
          %s136 = ssub.s32 640, 640
          %137 = vsyncadd [#allocation7], %s136
          %s138 = sshll.u32 [#allocation8], 4
          %s139 = int_to_ptr.vmem [resolvable:$true] %s138
          %144 = dma.hbm_to_vmem [thread:$0]  %s2, 640, %s139, [#allocation7], 128, 128, 8
        $region16: #{tpu_custom_call.1} parent=11 // pred_fallthru
          _
      $region12: #{tpu_custom_call.1} parent=5 // pred_fallthru
        _
      %p145 = scmp.lt.s32.totalorder %s18, 4
      // Predicated region
      $region17: #{tpu_custom_call.1} parent=5 // pred_check
        %p146 = pneg %p145
      $region18: #{tpu_custom_call.1} parent=5 // pred_check_branch
        %148 = sbr.rel (%p146) target = $region20
      $region19: #{tpu_custom_call.1} parent=5 // pred_region
        // Predicated region
        $region21: #{tpu_custom_call.1} parent=19 // pred_check
          %p149 = pneg %p38
        $region22: #{tpu_custom_call.1} parent=19 // pred_check_branch
          %151 = sbr.rel (%p149) target = $region24
        $region23: #{tpu_custom_call.1} parent=19 // pred_region
          %s152 = sand.u32 %s28, 1
          %s153 = scalar_lea.sflag [#allocation4], %s152
          %s154 = sand.u32 %s28, 1
          %s155 = smul.addr %s154, 128
          %s156 = scalar_lea.vmem [#allocation3], %s155
          %s157 = smul.u32 32, %s18
          %s159 = ssub.s32 2048, 2048
          %160 = vsyncadd %s153, %s159
          %s161 = smul.addr %s157, 64
          %s162 = scalar_lea.hbm %s0, %s161
          %s164 = sshll.u32 %s156, 4
          %s165 = int_to_ptr.vmem [resolvable:$true] %s164
          %167 = dma.hbm_to_vmem [thread:$0]  %s162, 2048, %s165, %s153
        $region24: #{tpu_custom_call.1} parent=19 // pred_fallthru
          _
        // Predicated region
        $region25: #{tpu_custom_call.1} parent=19 // pred_check
          %p168 = pneg %p64
        $region26: #{tpu_custom_call.1} parent=19 // pred_check_branch
          %170 = sbr.rel (%p168) target = $region28
        $region27: #{tpu_custom_call.1} parent=19 // pred_region
          %s171 = sand.u32 %s18, 1
          %s172 = scalar_lea.sflag [#allocation7], %s171
          %s173 = sand.u32 %s54, 1
          %s174 = smul.addr %s173, 512
          %s175 = scalar_lea.vmem [#allocation6], %s174
          %s176 = smul.u32 32, %s18
          %s178 = ssub.s32 8192, 8192
          %179 = vsyncadd %s172, %s178
          %s180 = smul.addr %s176, 128
          %s181 = scalar_lea.hbm %s1, %s180
          %s182 = sshll.u32 %s175, 4
          %s183 = int_to_ptr.vmem [resolvable:$true] %s182
          %188 = dma.hbm_to_vmem [thread:$0]  %s181, 8192, %s183, %s172, 16384, 4096, 256
        $region28: #{tpu_custom_call.1} parent=19 // pred_fallthru
          _
      $region20: #{tpu_custom_call.1} parent=5 // pred_fallthru
        _
      %p189 = scmp.le.s32.totalorder 1, %s18
      %p190 = scmp.lt.s32.totalorder %s18, 5
      %p191 = pnand %p189, %p190
      %p192 = pneg %p191
      // Predicated region
      $region29: #{tpu_custom_call.1} parent=5 // pred_check
        _
      $region30: #{tpu_custom_call.1} parent=5 // pred_check_branch
        %194 = sbr.rel (%p191) target = $region32
      $region31: #{tpu_custom_call.1} parent=5 // pred_region
        %s195 = ssub.s32 %s18, 1
        %s196 = sand.u32 %s31, 1
        %s197 = scalar_lea.sflag [#allocation4], %s196
        %s198 = sand.u32 %s31, 1
        %s199 = smul.addr %s198, 128
        %s200 = scalar_lea.vmem [#allocation3], %s199
        // Predicated region
        $region33: #{tpu_custom_call.1} parent=31 // pred_check
          %p201 = pneg %p44
        $region34: #{tpu_custom_call.1} parent=31 // pred_check_branch
          %203 = sbr.rel (%p201) target = $region36
        $region35: #{tpu_custom_call.1} parent=31 // pred_region
          %204 = dma.done %s197, 2048
        $region36: #{tpu_custom_call.1} parent=31 // pred_fallthru
          _
        %s205 = sand.u32 %s23, 1
        %s206 = scalar_lea.sflag [#allocation7], %s205
        %s207 = sand.u32 %s57, 1
        %s208 = smul.addr %s207, 512
        %s209 = scalar_lea.vmem [#allocation6], %s208
        // Predicated region
        $region37: #{tpu_custom_call.1} parent=31 // pred_check
          %p210 = pneg %p70
        $region38: #{tpu_custom_call.1} parent=31 // pred_check_branch
          %212 = sbr.rel (%p210) target = $region40
        $region39: #{tpu_custom_call.1} parent=31 // pred_region
          %213 = dma.done %s206, 8192
        $region40: #{tpu_custom_call.1} parent=31 // pred_fallthru
          _
        // Predicated region
        $region41: #{tpu_custom_call.1} parent=31 // pred_check
          %p214 = pneg %p91
        $region42: #{tpu_custom_call.1} parent=31 // pred_check_branch
          %216 = sbr.rel (%p214) target = $region44
        $region43: #{tpu_custom_call.1} parent=31 // pred_region
          %217 = dma.done [#allocation7], 640
        $region44: #{tpu_custom_call.1} parent=31 // pred_fallthru
          _
        %s218 = sand.u32 %s31, 1
        %s219 = scalar_lea.sflag [#allocation4], %s218
        %s220 = sand.u32 %s31, 1
        %s221 = smul.addr %s220, 128
        %s222 = scalar_lea.vmem [#allocation3], %s221
        %p223 = pneg %p44
        %p224 = pneg %p41
        %s225 = sand.u32 %s23, 1
        %s226 = scalar_lea.sflag [#allocation7], %s225
        %s227 = sand.u32 %s57, 1
        %s228 = smul.addr %s227, 512
        %s229 = scalar_lea.vmem [#allocation6], %s228
        %p230 = pneg %p70
        %p231 = pneg %p67
        %p232 = pneg %p91
        %p233 = pneg %p88
        %p234 = pneg %p117
        %p235 = pneg %p114
        %s236 = sand.u32 %s104, 1
        %s237 = scalar_lea.sflag [#allocation5], %s236
        %s238 = sand.u32 %s104, 1
        %s239 = smul.addr %s238, 128
        %s240 = scalar_lea.vmem [#allocation9], %s239
        %s241 = smul.u32 32, %s23
        %s242 = smul.u32 32, %s23
        %s243 = smul.u32 32, %s23
        %v244 = vld [vmem:[%s200] sm:$0xff]
        %v245 = vld [vmem:[%s200 + $0x8] sm:$0xff]
        %v246 = vld [vmem:[%s200 + $0x10] sm:$0xff]
        %v247 = vld [vmem:[%s200 + $0x18] sm:$0xff]
        %v248 = vld [vmem:[%s200 + $0x20] sm:$0xff]
        %v249 = vld [vmem:[%s200 + $0x28] sm:$0xff]
        %v250 = vld [vmem:[%s200 + $0x30] sm:$0xff]
        %v251 = vld [vmem:[%s200 + $0x38] sm:$0xff]
        %v252 = vld [vmem:[%s200 + $0x40] sm:$0xff]
        %v253 = vld [vmem:[%s200 + $0x48] sm:$0xff]
        %v254 = vld [vmem:[%s200 + $0x50] sm:$0xff]
        %v255 = vld [vmem:[%s200 + $0x58] sm:$0xff]
        %v256 = vld [vmem:[%s200 + $0x60] sm:$0xff]
        %v257 = vld [vmem:[%s200 + $0x68] sm:$0xff]
        %v258 = vld [vmem:[%s200 + $0x70] sm:$0xff]
        %v259 = vld [vmem:[%s200 + $0x78] sm:$0xff]
        %v276 = vcombine.high %v244, %v244
        %v277 = vcombine.high %v245, %v245
        %v278 = vcombine.high %v246, %v246
        %v279 = vcombine.high %v247, %v247
        %v280 = vcombine.high %v248, %v248
        %v281 = vcombine.high %v249, %v249
        %v282 = vcombine.high %v250, %v250
        %v283 = vcombine.high %v251, %v251
        %v284 = vcombine.high %v252, %v252
        %v285 = vcombine.high %v253, %v253
        %v286 = vcombine.high %v254, %v254
        %v287 = vcombine.high %v255, %v255
        %v288 = vcombine.high %v256, %v256
        %v289 = vcombine.high %v257, %v257
        %v290 = vcombine.high %v258, %v258
        %v291 = vcombine.high %v259, %v259
        %308 = vst [vmem:[#allocation2] sm:$0xf] %v244
        %309 = vst [vmem:[#allocation2 + $0x8] sm:$0xf] %v276
        %310 = vst [vmem:[#allocation2 + $0x10] sm:$0xf] %v245
        %311 = vst [vmem:[#allocation2 + $0x18] sm:$0xf] %v277
        %312 = vst [vmem:[#allocation2 + $0x20] sm:$0xf] %v246
        %313 = vst [vmem:[#allocation2 + $0x28] sm:$0xf] %v278
        %314 = vst [vmem:[#allocation2 + $0x30] sm:$0xf] %v247
        %315 = vst [vmem:[#allocation2 + $0x38] sm:$0xf] %v279
        %316 = vst [vmem:[#allocation2 + $0x40] sm:$0xf] %v248
        %317 = vst [vmem:[#allocation2 + $0x48] sm:$0xf] %v280
        %318 = vst [vmem:[#allocation2 + $0x50] sm:$0xf] %v249
        %319 = vst [vmem:[#allocation2 + $0x58] sm:$0xf] %v281
        %320 = vst [vmem:[#allocation2 + $0x60] sm:$0xf] %v250
        %321 = vst [vmem:[#allocation2 + $0x68] sm:$0xf] %v282
        %322 = vst [vmem:[#allocation2 + $0x70] sm:$0xf] %v251
        %323 = vst [vmem:[#allocation2 + $0x78] sm:$0xf] %v283
        %324 = vst [vmem:[#allocation2 + $0x80] sm:$0xf] %v252
        %325 = vst [vmem:[#allocation2 + $0x88] sm:$0xf] %v284
        %326 = vst [vmem:[#allocation2 + $0x90] sm:$0xf] %v253
        %327 = vst [vmem:[#allocation2 + $0x98] sm:$0xf] %v285
        %328 = vst [vmem:[#allocation2 + $0xa0] sm:$0xf] %v254
        %329 = vst [vmem:[#allocation2 + $0xa8] sm:$0xf] %v286
        %330 = vst [vmem:[#allocation2 + $0xb0] sm:$0xf] %v255
        %331 = vst [vmem:[#allocation2 + $0xb8] sm:$0xf] %v287
        %332 = vst [vmem:[#allocation2 + $0xc0] sm:$0xf] %v256
        %333 = vst [vmem:[#allocation2 + $0xc8] sm:$0xf] %v288
        %334 = vst [vmem:[#allocation2 + $0xd0] sm:$0xf] %v257
        %335 = vst [vmem:[#allocation2 + $0xd8] sm:$0xf] %v289
        %336 = vst [vmem:[#allocation2 + $0xe0] sm:$0xf] %v258
        %337 = vst [vmem:[#allocation2 + $0xe8] sm:$0xf] %v290
        %338 = vst [vmem:[#allocation2 + $0xf0] sm:$0xf] %v259
        %339 = vst [vmem:[#allocation2 + $0xf8] sm:$0xf] %v291
        %v340 = vlaneseq
        %v341 = vshrl.u32 %v340, 7
        %v342 = vsub.s32 0, %v341
        %v343 = vrot.slane %v244, %v342
        %v344 = vlaneseq
        %v345 = vshrl.u32 %v344, 7
        %v346 = vsub.s32 4, %v345
        %v347 = vrot.slane %v244, %v346
        %v348 = vlaneseq
        %v349 = vshrl.u32 %v348, 7
        %v350 = vsub.s32 0, %v349
        %v351 = vrot.slane %v245, %v350
        %v352 = vlaneseq
        %v353 = vshrl.u32 %v352, 7
        %v354 = vsub.s32 4, %v353
        %v355 = vrot.slane %v245, %v354
        %v356 = vlaneseq
        %v357 = vshrl.u32 %v356, 7
        %v358 = vsub.s32 0, %v357
        %v359 = vrot.slane %v246, %v358
        %v360 = vlaneseq
        %v361 = vshrl.u32 %v360, 7
        %v362 = vsub.s32 4, %v361
        %v363 = vrot.slane %v246, %v362
        %v364 = vlaneseq
        %v365 = vshrl.u32 %v364, 7
        %v366 = vsub.s32 0, %v365
        %v367 = vrot.slane %v247, %v366
        %v368 = vlaneseq
        %v369 = vshrl.u32 %v368, 7
        %v370 = vsub.s32 4, %v369
        %v371 = vrot.slane %v247, %v370
        %v372 = vlaneseq
        %v373 = vshrl.u32 %v372, 7
        %v374 = vsub.s32 0, %v373
        %v375 = vrot.slane %v248, %v374
        %v376 = vlaneseq
        %v377 = vshrl.u32 %v376, 7
        %v378 = vsub.s32 4, %v377
        %v379 = vrot.slane %v248, %v378
        %v380 = vlaneseq
        %v381 = vshrl.u32 %v380, 7
        %v382 = vsub.s32 0, %v381
        %v383 = vrot.slane %v249, %v382
        %v384 = vlaneseq
        %v385 = vshrl.u32 %v384, 7
        %v386 = vsub.s32 4, %v385
        %v387 = vrot.slane %v249, %v386
        %v388 = vlaneseq
        %v389 = vshrl.u32 %v388, 7
        %v390 = vsub.s32 0, %v389
        %v391 = vrot.slane %v250, %v390
        %v392 = vlaneseq
        %v393 = vshrl.u32 %v392, 7
        %v394 = vsub.s32 4, %v393
        %v395 = vrot.slane %v250, %v394
        %v396 = vlaneseq
        %v397 = vshrl.u32 %v396, 7
        %v398 = vsub.s32 0, %v397
        %v399 = vrot.slane %v251, %v398
        %v400 = vlaneseq
        %v401 = vshrl.u32 %v400, 7
        %v402 = vsub.s32 4, %v401
        %v403 = vrot.slane %v251, %v402
        %v404 = vlaneseq
        %v405 = vshrl.u32 %v404, 7
        %v406 = vsub.s32 0, %v405
        %v407 = vrot.slane %v252, %v406
        %v408 = vlaneseq
        %v409 = vshrl.u32 %v408, 7
        %v410 = vsub.s32 4, %v409
        %v411 = vrot.slane %v252, %v410
        %v412 = vlaneseq
        %v413 = vshrl.u32 %v412, 7
        %v414 = vsub.s32 0, %v413
        %v415 = vrot.slane %v253, %v414
        %v416 = vlaneseq
        %v417 = vshrl.u32 %v416, 7
        %v418 = vsub.s32 4, %v417
        %v419 = vrot.slane %v253, %v418
        %v420 = vlaneseq
        %v421 = vshrl.u32 %v420, 7
        %v422 = vsub.s32 0, %v421
        %v423 = vrot.slane %v254, %v422
        %v424 = vlaneseq
        %v425 = vshrl.u32 %v424, 7
        %v426 = vsub.s32 4, %v425
        %v427 = vrot.slane %v254, %v426
        %v428 = vlaneseq
        %v429 = vshrl.u32 %v428, 7
        %v430 = vsub.s32 0, %v429
        %v431 = vrot.slane %v255, %v430
        %v432 = vlaneseq
        %v433 = vshrl.u32 %v432, 7
        %v434 = vsub.s32 4, %v433
        %v435 = vrot.slane %v255, %v434
        %v436 = vlaneseq
        %v437 = vshrl.u32 %v436, 7
        %v438 = vsub.s32 0, %v437
        %v439 = vrot.slane %v256, %v438
        %v440 = vlaneseq
        %v441 = vshrl.u32 %v440, 7
        %v442 = vsub.s32 4, %v441
        %v443 = vrot.slane %v256, %v442
        %v444 = vlaneseq
        %v445 = vshrl.u32 %v444, 7
        %v446 = vsub.s32 0, %v445
        %v447 = vrot.slane %v257, %v446
        %v448 = vlaneseq
        %v449 = vshrl.u32 %v448, 7
        %v450 = vsub.s32 4, %v449
        %v451 = vrot.slane %v257, %v450
        %v452 = vlaneseq
        %v453 = vshrl.u32 %v452, 7
        %v454 = vsub.s32 0, %v453
        %v455 = vrot.slane %v258, %v454
        %v456 = vlaneseq
        %v457 = vshrl.u32 %v456, 7
        %v458 = vsub.s32 4, %v457
        %v459 = vrot.slane %v258, %v458
        %v460 = vlaneseq
        %v461 = vshrl.u32 %v460, 7
        %v462 = vsub.s32 0, %v461
        %v463 = vrot.slane %v259, %v462
        %v464 = vlaneseq
        %v465 = vshrl.u32 %v464, 7
        %v466 = vsub.s32 4, %v465
        %v467 = vrot.slane %v259, %v466
        %v500 = vlaneseq
        %v501 = vshrl.u32 %v500, 7
        %v502 = vsub.s32 0, %v501
        %v503 = vrot.slane %v343, %v502
        %v504 = vlaneseq
        %v505 = vshrl.u32 %v504, 7
        %v506 = vsub.s32 0, %v505
        %v507 = vrot.slane %v347, %v506
        %v508 = vlaneseq
        %v509 = vshrl.u32 %v508, 7
        %v510 = vsub.s32 0, %v509
        %v511 = vrot.slane %v351, %v510
        %v512 = vlaneseq
        %v513 = vshrl.u32 %v512, 7
        %v514 = vsub.s32 0, %v513
        %v515 = vrot.slane %v355, %v514
        %v516 = vlaneseq
        %v517 = vshrl.u32 %v516, 7
        %v518 = vsub.s32 0, %v517
        %v519 = vrot.slane %v359, %v518
        %v520 = vlaneseq
        %v521 = vshrl.u32 %v520, 7
        %v522 = vsub.s32 0, %v521
        %v523 = vrot.slane %v363, %v522
        %v524 = vlaneseq
        %v525 = vshrl.u32 %v524, 7
        %v526 = vsub.s32 0, %v525
        %v527 = vrot.slane %v367, %v526
        %v528 = vlaneseq
        %v529 = vshrl.u32 %v528, 7
        %v530 = vsub.s32 0, %v529
        %v531 = vrot.slane %v371, %v530
        %v532 = vlaneseq
        %v533 = vshrl.u32 %v532, 7
        %v534 = vsub.s32 0, %v533
        %v535 = vrot.slane %v375, %v534
        %v536 = vlaneseq
        %v537 = vshrl.u32 %v536, 7
        %v538 = vsub.s32 0, %v537
        %v539 = vrot.slane %v379, %v538
        %v540 = vlaneseq
        %v541 = vshrl.u32 %v540, 7
        %v542 = vsub.s32 0, %v541
        %v543 = vrot.slane %v383, %v542
        %v544 = vlaneseq
        %v545 = vshrl.u32 %v544, 7
        %v546 = vsub.s32 0, %v545
        %v547 = vrot.slane %v387, %v546
        %v548 = vlaneseq
        %v549 = vshrl.u32 %v548, 7
        %v550 = vsub.s32 0, %v549
        %v551 = vrot.slane %v391, %v550
        %v552 = vlaneseq
        %v553 = vshrl.u32 %v552, 7
        %v554 = vsub.s32 0, %v553
        %v555 = vrot.slane %v395, %v554
        %v556 = vlaneseq
        %v557 = vshrl.u32 %v556, 7
        %v558 = vsub.s32 0, %v557
        %v559 = vrot.slane %v399, %v558
        %v560 = vlaneseq
        %v561 = vshrl.u32 %v560, 7
        %v562 = vsub.s32 0, %v561
        %v563 = vrot.slane %v403, %v562
        %v564 = vlaneseq
        %v565 = vshrl.u32 %v564, 7
        %v566 = vsub.s32 0, %v565
        %v567 = vrot.slane %v407, %v566
        %v568 = vlaneseq
        %v569 = vshrl.u32 %v568, 7
        %v570 = vsub.s32 0, %v569
        %v571 = vrot.slane %v411, %v570
        %v572 = vlaneseq
        %v573 = vshrl.u32 %v572, 7
        %v574 = vsub.s32 0, %v573
        %v575 = vrot.slane %v415, %v574
        %v576 = vlaneseq
        %v577 = vshrl.u32 %v576, 7
        %v578 = vsub.s32 0, %v577
        %v579 = vrot.slane %v419, %v578
        %v580 = vlaneseq
        %v581 = vshrl.u32 %v580, 7
        %v582 = vsub.s32 0, %v581
        %v583 = vrot.slane %v423, %v582
        %v584 = vlaneseq
        %v585 = vshrl.u32 %v584, 7
        %v586 = vsub.s32 0, %v585
        %v587 = vrot.slane %v427, %v586
        %v588 = vlaneseq
        %v589 = vshrl.u32 %v588, 7
        %v590 = vsub.s32 0, %v589
        %v591 = vrot.slane %v431, %v590
        %v592 = vlaneseq
        %v593 = vshrl.u32 %v592, 7
        %v594 = vsub.s32 0, %v593
        %v595 = vrot.slane %v435, %v594
        %v596 = vlaneseq
        %v597 = vshrl.u32 %v596, 7
        %v598 = vsub.s32 0, %v597
        %v599 = vrot.slane %v439, %v598
        %v600 = vlaneseq
        %v601 = vshrl.u32 %v600, 7
        %v602 = vsub.s32 0, %v601
        %v603 = vrot.slane %v443, %v602
        %v604 = vlaneseq
        %v605 = vshrl.u32 %v604, 7
        %v606 = vsub.s32 0, %v605
        %v607 = vrot.slane %v447, %v606
        %v608 = vlaneseq
        %v609 = vshrl.u32 %v608, 7
        %v610 = vsub.s32 0, %v609
        %v611 = vrot.slane %v451, %v610
        %v612 = vlaneseq
        %v613 = vshrl.u32 %v612, 7
        %v614 = vsub.s32 0, %v613
        %v615 = vrot.slane %v455, %v614
        %v616 = vlaneseq
        %v617 = vshrl.u32 %v616, 7
        %v618 = vsub.s32 0, %v617
        %v619 = vrot.slane %v459, %v618
        %v620 = vlaneseq
        %v621 = vshrl.u32 %v620, 7
        %v622 = vsub.s32 0, %v621
        %v623 = vrot.slane %v463, %v622
        %v624 = vlaneseq
        %v625 = vshrl.u32 %v624, 7
        %v626 = vsub.s32 0, %v625
        %v627 = vrot.slane %v467, %v626
        %v628 = vmul.f32 %v503, %v244
        %v629 = vmul.f32 %v507, %v276
        %v630 = vmul.f32 %v511, %v245
        %v631 = vmul.f32 %v515, %v277
        %v632 = vmul.f32 %v519, %v246
        %v633 = vmul.f32 %v523, %v278
        %v634 = vmul.f32 %v527, %v247
        %v635 = vmul.f32 %v531, %v279
        %v636 = vmul.f32 %v535, %v248
        %v637 = vmul.f32 %v539, %v280
        %v638 = vmul.f32 %v543, %v249
        %v639 = vmul.f32 %v547, %v281
        %v640 = vmul.f32 %v551, %v250
        %v641 = vmul.f32 %v555, %v282
        %v642 = vmul.f32 %v559, %v251
        %v643 = vmul.f32 %v563, %v283
        %v644 = vmul.f32 %v567, %v252
        %v645 = vmul.f32 %v571, %v284
        %v646 = vmul.f32 %v575, %v253
        %v647 = vmul.f32 %v579, %v285
        %v648 = vmul.f32 %v583, %v254
        %v649 = vmul.f32 %v587, %v286
        %v650 = vmul.f32 %v591, %v255
        %v651 = vmul.f32 %v595, %v287
        %v652 = vmul.f32 %v599, %v256
        %v653 = vmul.f32 %v603, %v288
        %v654 = vmul.f32 %v607, %v257
        %v655 = vmul.f32 %v611, %v289
        %v656 = vmul.f32 %v615, %v258
        %v657 = vmul.f32 %v619, %v290
        %v658 = vmul.f32 %v623, %v259
        %v659 = vmul.f32 %v627, %v291
        %v692 = vrot.slane %v628, 4
        %v693 = vrot.slane %v629, 4
        %v694 = vrot.slane %v630, 4
        %v695 = vrot.slane %v631, 4
        %v696 = vrot.slane %v632, 4
        %v697 = vrot.slane %v633, 4
        %v698 = vrot.slane %v634, 4
        %v699 = vrot.slane %v635, 4
        %v700 = vrot.slane %v636, 4
        %v701 = vrot.slane %v637, 4
        %v702 = vrot.slane %v638, 4
        %v703 = vrot.slane %v639, 4
        %v704 = vrot.slane %v640, 4
        %v705 = vrot.slane %v641, 4
        %v706 = vrot.slane %v642, 4
        %v707 = vrot.slane %v643, 4
        %v708 = vrot.slane %v644, 4
        %v709 = vrot.slane %v645, 4
        %v710 = vrot.slane %v646, 4
        %v711 = vrot.slane %v647, 4
        %v712 = vrot.slane %v648, 4
        %v713 = vrot.slane %v649, 4
        %v714 = vrot.slane %v650, 4
        %v715 = vrot.slane %v651, 4
        %v716 = vrot.slane %v652, 4
        %v717 = vrot.slane %v653, 4
        %v718 = vrot.slane %v654, 4
        %v719 = vrot.slane %v655, 4
        %v720 = vrot.slane %v656, 4
        %v721 = vrot.slane %v657, 4
        %v722 = vrot.slane %v658, 4
        %v723 = vrot.slane %v659, 4
        %756 = vst [vmem:[#allocation2] sm:$0xf0] %v692
        %757 = vst [vmem:[#allocation2 + $0x8] sm:$0xf0] %v693
        %758 = vst [vmem:[#allocation2 + $0x10] sm:$0xf0] %v694
        %759 = vst [vmem:[#allocation2 + $0x18] sm:$0xf0] %v695
        %760 = vst [vmem:[#allocation2 + $0x20] sm:$0xf0] %v696
        %761 = vst [vmem:[#allocation2 + $0x28] sm:$0xf0] %v697
        %762 = vst [vmem:[#allocation2 + $0x30] sm:$0xf0] %v698
        %763 = vst [vmem:[#allocation2 + $0x38] sm:$0xf0] %v699
        %764 = vst [vmem:[#allocation2 + $0x40] sm:$0xf0] %v700
        %765 = vst [vmem:[#allocation2 + $0x48] sm:$0xf0] %v701
        %766 = vst [vmem:[#allocation2 + $0x50] sm:$0xf0] %v702
        %767 = vst [vmem:[#allocation2 + $0x58] sm:$0xf0] %v703
        %768 = vst [vmem:[#allocation2 + $0x60] sm:$0xf0] %v704
        %769 = vst [vmem:[#allocation2 + $0x68] sm:$0xf0] %v705
        %770 = vst [vmem:[#allocation2 + $0x70] sm:$0xf0] %v706
        %771 = vst [vmem:[#allocation2 + $0x78] sm:$0xf0] %v707
        %772 = vst [vmem:[#allocation2 + $0x80] sm:$0xf0] %v708
        %773 = vst [vmem:[#allocation2 + $0x88] sm:$0xf0] %v709
        %774 = vst [vmem:[#allocation2 + $0x90] sm:$0xf0] %v710
        %775 = vst [vmem:[#allocation2 + $0x98] sm:$0xf0] %v711
        %776 = vst [vmem:[#allocation2 + $0xa0] sm:$0xf0] %v712
        %777 = vst [vmem:[#allocation2 + $0xa8] sm:$0xf0] %v713
        %778 = vst [vmem:[#allocation2 + $0xb0] sm:$0xf0] %v714
        %779 = vst [vmem:[#allocation2 + $0xb8] sm:$0xf0] %v715
        %780 = vst [vmem:[#allocation2 + $0xc0] sm:$0xf0] %v716
        %781 = vst [vmem:[#allocation2 + $0xc8] sm:$0xf0] %v717
        %782 = vst [vmem:[#allocation2 + $0xd0] sm:$0xf0] %v718
        %783 = vst [vmem:[#allocation2 + $0xd8] sm:$0xf0] %v719
        %784 = vst [vmem:[#allocation2 + $0xe0] sm:$0xf0] %v720
        %785 = vst [vmem:[#allocation2 + $0xe8] sm:$0xf0] %v721
        %786 = vst [vmem:[#allocation2 + $0xf0] sm:$0xf0] %v722
        %787 = vst [vmem:[#allocation2 + $0xf8] sm:$0xf0] %v723
        %v788 = vlaneseq
        %v789 = vshrl.u32 %v788, 7
        %v790 = vsub.s32 1, %v789
        %v791 = vrot.slane %v244, %v790
        %v792 = vlaneseq
        %v793 = vshrl.u32 %v792, 7
        %v794 = vsub.s32 5, %v793
        %v795 = vrot.slane %v244, %v794
        %v796 = vlaneseq
        %v797 = vshrl.u32 %v796, 7
        %v798 = vsub.s32 1, %v797
        %v799 = vrot.slane %v245, %v798
        %v800 = vlaneseq
        %v801 = vshrl.u32 %v800, 7
        %v802 = vsub.s32 5, %v801
        %v803 = vrot.slane %v245, %v802
        %v804 = vlaneseq
        %v805 = vshrl.u32 %v804, 7
        %v806 = vsub.s32 1, %v805
        %v807 = vrot.slane %v246, %v806
        %v808 = vlaneseq
        %v809 = vshrl.u32 %v808, 7
        %v810 = vsub.s32 5, %v809
        %v811 = vrot.slane %v246, %v810
        %v812 = vlaneseq
        %v813 = vshrl.u32 %v812, 7
        %v814 = vsub.s32 1, %v813
        %v815 = vrot.slane %v247, %v814
        %v816 = vlaneseq
        %v817 = vshrl.u32 %v816, 7
        %v818 = vsub.s32 5, %v817
        %v819 = vrot.slane %v247, %v818
        %v820 = vlaneseq
        %v821 = vshrl.u32 %v820, 7
        %v822 = vsub.s32 1, %v821
        %v823 = vrot.slane %v248, %v822
        %v824 = vlaneseq
        %v825 = vshrl.u32 %v824, 7
        %v826 = vsub.s32 5, %v825
        %v827 = vrot.slane %v248, %v826
        %v828 = vlaneseq
        %v829 = vshrl.u32 %v828, 7
        %v830 = vsub.s32 1, %v829
        %v831 = vrot.slane %v249, %v830
        %v832 = vlaneseq
        %v833 = vshrl.u32 %v832, 7
        %v834 = vsub.s32 5, %v833
        %v835 = vrot.slane %v249, %v834
        %v836 = vlaneseq
        %v837 = vshrl.u32 %v836, 7
        %v838 = vsub.s32 1, %v837
        %v839 = vrot.slane %v250, %v838
        %v840 = vlaneseq
        %v841 = vshrl.u32 %v840, 7
        %v842 = vsub.s32 5, %v841
        %v843 = vrot.slane %v250, %v842
        %v844 = vlaneseq
        %v845 = vshrl.u32 %v844, 7
        %v846 = vsub.s32 1, %v845
        %v847 = vrot.slane %v251, %v846
        %v848 = vlaneseq
        %v849 = vshrl.u32 %v848, 7
        %v850 = vsub.s32 5, %v849
        %v851 = vrot.slane %v251, %v850
        %v852 = vlaneseq
        %v853 = vshrl.u32 %v852, 7
        %v854 = vsub.s32 1, %v853
        %v855 = vrot.slane %v252, %v854
        %v856 = vlaneseq
        %v857 = vshrl.u32 %v856, 7
        %v858 = vsub.s32 5, %v857
        %v859 = vrot.slane %v252, %v858
        %v860 = vlaneseq
        %v861 = vshrl.u32 %v860, 7
        %v862 = vsub.s32 1, %v861
        %v863 = vrot.slane %v253, %v862
        %v864 = vlaneseq
        %v865 = vshrl.u32 %v864, 7
        %v866 = vsub.s32 5, %v865
        %v867 = vrot.slane %v253, %v866
        %v868 = vlaneseq
        %v869 = vshrl.u32 %v868, 7
        %v870 = vsub.s32 1, %v869
        %v871 = vrot.slane %v254, %v870
        %v872 = vlaneseq
        %v873 = vshrl.u32 %v872, 7
        %v874 = vsub.s32 5, %v873
        %v875 = vrot.slane %v254, %v874
        %v876 = vlaneseq
        %v877 = vshrl.u32 %v876, 7
        %v878 = vsub.s32 1, %v877
        %v879 = vrot.slane %v255, %v878
        %v880 = vlaneseq
        %v881 = vshrl.u32 %v880, 7
        %v882 = vsub.s32 5, %v881
        %v883 = vrot.slane %v255, %v882
        %v884 = vlaneseq
        %v885 = vshrl.u32 %v884, 7
        %v886 = vsub.s32 1, %v885
        %v887 = vrot.slane %v256, %v886
        %v888 = vlaneseq
        %v889 = vshrl.u32 %v888, 7
        %v890 = vsub.s32 5, %v889
        %v891 = vrot.slane %v256, %v890
        %v892 = vlaneseq
        %v893 = vshrl.u32 %v892, 7
        %v894 = vsub.s32 1, %v893
        %v895 = vrot.slane %v257, %v894
        %v896 = vlaneseq
        %v897 = vshrl.u32 %v896, 7
        %v898 = vsub.s32 5, %v897
        %v899 = vrot.slane %v257, %v898
        %v900 = vlaneseq
        %v901 = vshrl.u32 %v900, 7
        %v902 = vsub.s32 1, %v901
        %v903 = vrot.slane %v258, %v902
        %v904 = vlaneseq
        %v905 = vshrl.u32 %v904, 7
        %v906 = vsub.s32 5, %v905
        %v907 = vrot.slane %v258, %v906
        %v908 = vlaneseq
        %v909 = vshrl.u32 %v908, 7
        %v910 = vsub.s32 1, %v909
        %v911 = vrot.slane %v259, %v910
        %v912 = vlaneseq
        %v913 = vshrl.u32 %v912, 7
        %v914 = vsub.s32 5, %v913
        %v915 = vrot.slane %v259, %v914
        %v948 = vlaneseq
        %v949 = vshrl.u32 %v948, 7
        %v950 = vsub.s32 1, %v949
        %v951 = vrot.slane %v791, %v950
        %v952 = vlaneseq
        %v953 = vshrl.u32 %v952, 7
        %v954 = vsub.s32 1, %v953
        %v955 = vrot.slane %v795, %v954
        %v956 = vlaneseq
        %v957 = vshrl.u32 %v956, 7
        %v958 = vsub.s32 1, %v957
        %v959 = vrot.slane %v799, %v958
        %v960 = vlaneseq
        %v961 = vshrl.u32 %v960, 7
        %v962 = vsub.s32 1, %v961
        %v963 = vrot.slane %v803, %v962
        %v964 = vlaneseq
        %v965 = vshrl.u32 %v964, 7
        %v966 = vsub.s32 1, %v965
        %v967 = vrot.slane %v807, %v966
        %v968 = vlaneseq
        %v969 = vshrl.u32 %v968, 7
        %v970 = vsub.s32 1, %v969
        %v971 = vrot.slane %v811, %v970
        %v972 = vlaneseq
        %v973 = vshrl.u32 %v972, 7
        %v974 = vsub.s32 1, %v973
        %v975 = vrot.slane %v815, %v974
        %v976 = vlaneseq
        %v977 = vshrl.u32 %v976, 7
        %v978 = vsub.s32 1, %v977
        %v979 = vrot.slane %v819, %v978
        %v980 = vlaneseq
        %v981 = vshrl.u32 %v980, 7
        %v982 = vsub.s32 1, %v981
        %v983 = vrot.slane %v823, %v982
        %v984 = vlaneseq
        %v985 = vshrl.u32 %v984, 7
        %v986 = vsub.s32 1, %v985
        %v987 = vrot.slane %v827, %v986
        %v988 = vlaneseq
        %v989 = vshrl.u32 %v988, 7
        %v990 = vsub.s32 1, %v989
        %v991 = vrot.slane %v831, %v990
        %v992 = vlaneseq
        %v993 = vshrl.u32 %v992, 7
        %v994 = vsub.s32 1, %v993
        %v995 = vrot.slane %v835, %v994
        %v996 = vlaneseq
        %v997 = vshrl.u32 %v996, 7
        %v998 = vsub.s32 1, %v997
        %v999 = vrot.slane %v839, %v998
        %v1000 = vlaneseq
        %v1001 = vshrl.u32 %v1000, 7
        %v1002 = vsub.s32 1, %v1001
        %v1003 = vrot.slane %v843, %v1002
        %v1004 = vlaneseq
        %v1005 = vshrl.u32 %v1004, 7
        %v1006 = vsub.s32 1, %v1005
        %v1007 = vrot.slane %v847, %v1006
        %v1008 = vlaneseq
        %v1009 = vshrl.u32 %v1008, 7
        %v1010 = vsub.s32 1, %v1009
        %v1011 = vrot.slane %v851, %v1010
        %v1012 = vlaneseq
        %v1013 = vshrl.u32 %v1012, 7
        %v1014 = vsub.s32 1, %v1013
        %v1015 = vrot.slane %v855, %v1014
        %v1016 = vlaneseq
        %v1017 = vshrl.u32 %v1016, 7
        %v1018 = vsub.s32 1, %v1017
        %v1019 = vrot.slane %v859, %v1018
        %v1020 = vlaneseq
        %v1021 = vshrl.u32 %v1020, 7
        %v1022 = vsub.s32 1, %v1021
        %v1023 = vrot.slane %v863, %v1022
        %v1024 = vlaneseq
        %v1025 = vshrl.u32 %v1024, 7
        %v1026 = vsub.s32 1, %v1025
        %v1027 = vrot.slane %v867, %v1026
        %v1028 = vlaneseq
        %v1029 = vshrl.u32 %v1028, 7
        %v1030 = vsub.s32 1, %v1029
        %v1031 = vrot.slane %v871, %v1030
        %v1032 = vlaneseq
        %v1033 = vshrl.u32 %v1032, 7
        %v1034 = vsub.s32 1, %v1033
        %v1035 = vrot.slane %v875, %v1034
        %v1036 = vlaneseq
        %v1037 = vshrl.u32 %v1036, 7
        %v1038 = vsub.s32 1, %v1037
        %v1039 = vrot.slane %v879, %v1038
        %v1040 = vlaneseq
        %v1041 = vshrl.u32 %v1040, 7
        %v1042 = vsub.s32 1, %v1041
        %v1043 = vrot.slane %v883, %v1042
        %v1044 = vlaneseq
        %v1045 = vshrl.u32 %v1044, 7
        %v1046 = vsub.s32 1, %v1045
        %v1047 = vrot.slane %v887, %v1046
        %v1048 = vlaneseq
        %v1049 = vshrl.u32 %v1048, 7
        %v1050 = vsub.s32 1, %v1049
        %v1051 = vrot.slane %v891, %v1050
        %v1052 = vlaneseq
        %v1053 = vshrl.u32 %v1052, 7
        %v1054 = vsub.s32 1, %v1053
        %v1055 = vrot.slane %v895, %v1054
        %v1056 = vlaneseq
        %v1057 = vshrl.u32 %v1056, 7
        %v1058 = vsub.s32 1, %v1057
        %v1059 = vrot.slane %v899, %v1058
        %v1060 = vlaneseq
        %v1061 = vshrl.u32 %v1060, 7
        %v1062 = vsub.s32 1, %v1061
        %v1063 = vrot.slane %v903, %v1062
        %v1064 = vlaneseq
        %v1065 = vshrl.u32 %v1064, 7
        %v1066 = vsub.s32 1, %v1065
        %v1067 = vrot.slane %v907, %v1066
        %v1068 = vlaneseq
        %v1069 = vshrl.u32 %v1068, 7
        %v1070 = vsub.s32 1, %v1069
        %v1071 = vrot.slane %v911, %v1070
        %v1072 = vlaneseq
        %v1073 = vshrl.u32 %v1072, 7
        %v1074 = vsub.s32 1, %v1073
        %v1075 = vrot.slane %v915, %v1074
        %v1076 = vrot.slane %v244, 1
        %v1077 = vrot.slane %v276, 1
        %v1078 = vrot.slane %v245, 1
        %v1079 = vrot.slane %v277, 1
        %v1080 = vrot.slane %v246, 1
        %v1081 = vrot.slane %v278, 1
        %v1082 = vrot.slane %v247, 1
        %v1083 = vrot.slane %v279, 1
        %v1084 = vrot.slane %v248, 1
        %v1085 = vrot.slane %v280, 1
        %v1086 = vrot.slane %v249, 1
        %v1087 = vrot.slane %v281, 1
        %v1088 = vrot.slane %v250, 1
        %v1089 = vrot.slane %v282, 1
        %v1090 = vrot.slane %v251, 1
        %v1091 = vrot.slane %v283, 1
        %v1092 = vrot.slane %v252, 1
        %v1093 = vrot.slane %v284, 1
        %v1094 = vrot.slane %v253, 1
        %v1095 = vrot.slane %v285, 1
        %v1096 = vrot.slane %v254, 1
        %v1097 = vrot.slane %v286, 1
        %v1098 = vrot.slane %v255, 1
        %v1099 = vrot.slane %v287, 1
        %v1100 = vrot.slane %v256, 1
        %v1101 = vrot.slane %v288, 1
        %v1102 = vrot.slane %v257, 1
        %v1103 = vrot.slane %v289, 1
        %v1104 = vrot.slane %v258, 1
        %v1105 = vrot.slane %v290, 1
        %v1106 = vrot.slane %v259, 1
        %v1107 = vrot.slane %v291, 1
        %v1140 = vmul.f32 %v951, %v1076
        %v1141 = vmul.f32 %v955, %v1077
        %v1142 = vmul.f32 %v959, %v1078
        %v1143 = vmul.f32 %v963, %v1079
        %v1144 = vmul.f32 %v967, %v1080
        %v1145 = vmul.f32 %v971, %v1081
        %v1146 = vmul.f32 %v975, %v1082
        %v1147 = vmul.f32 %v979, %v1083
        %v1148 = vmul.f32 %v983, %v1084
        %v1149 = vmul.f32 %v987, %v1085
        %v1150 = vmul.f32 %v991, %v1086
        %v1151 = vmul.f32 %v995, %v1087
        %v1152 = vmul.f32 %v999, %v1088
        %v1153 = vmul.f32 %v1003, %v1089
        %v1154 = vmul.f32 %v1007, %v1090
        %v1155 = vmul.f32 %v1011, %v1091
        %v1156 = vmul.f32 %v1015, %v1092
        %v1157 = vmul.f32 %v1019, %v1093
        %v1158 = vmul.f32 %v1023, %v1094
        %v1159 = vmul.f32 %v1027, %v1095
        %v1160 = vmul.f32 %v1031, %v1096
        %v1161 = vmul.f32 %v1035, %v1097
        %v1162 = vmul.f32 %v1039, %v1098
        %v1163 = vmul.f32 %v1043, %v1099
        %v1164 = vmul.f32 %v1047, %v1100
        %v1165 = vmul.f32 %v1051, %v1101
        %v1166 = vmul.f32 %v1055, %v1102
        %v1167 = vmul.f32 %v1059, %v1103
        %v1168 = vmul.f32 %v1063, %v1104
        %v1169 = vmul.f32 %v1067, %v1105
        %v1170 = vmul.f32 %v1071, %v1106
        %v1171 = vmul.f32 %v1075, %v1107
        %1172 = vst [vmem:[#allocation2 + $0x100] sm:$0x7] %v1140
        %1173 = vst [vmem:[#allocation2 + $0x108] sm:$0x7] %v1141
        %1174 = vst [vmem:[#allocation2 + $0x110] sm:$0x7] %v1142
        %1175 = vst [vmem:[#allocation2 + $0x118] sm:$0x7] %v1143
        %1176 = vst [vmem:[#allocation2 + $0x120] sm:$0x7] %v1144
        %1177 = vst [vmem:[#allocation2 + $0x128] sm:$0x7] %v1145
        %1178 = vst [vmem:[#allocation2 + $0x130] sm:$0x7] %v1146
        %1179 = vst [vmem:[#allocation2 + $0x138] sm:$0x7] %v1147
        %1180 = vst [vmem:[#allocation2 + $0x140] sm:$0x7] %v1148
        %1181 = vst [vmem:[#allocation2 + $0x148] sm:$0x7] %v1149
        %1182 = vst [vmem:[#allocation2 + $0x150] sm:$0x7] %v1150
        %1183 = vst [vmem:[#allocation2 + $0x158] sm:$0x7] %v1151
        %1184 = vst [vmem:[#allocation2 + $0x160] sm:$0x7] %v1152
        %1185 = vst [vmem:[#allocation2 + $0x168] sm:$0x7] %v1153
        %1186 = vst [vmem:[#allocation2 + $0x170] sm:$0x7] %v1154
        %1187 = vst [vmem:[#allocation2 + $0x178] sm:$0x7] %v1155
        %1188 = vst [vmem:[#allocation2 + $0x180] sm:$0x7] %v1156
        %1189 = vst [vmem:[#allocation2 + $0x188] sm:$0x7] %v1157
        %1190 = vst [vmem:[#allocation2 + $0x190] sm:$0x7] %v1158
        %1191 = vst [vmem:[#allocation2 + $0x198] sm:$0x7] %v1159
        %1192 = vst [vmem:[#allocation2 + $0x1a0] sm:$0x7] %v1160
        %1193 = vst [vmem:[#allocation2 + $0x1a8] sm:$0x7] %v1161
        %1194 = vst [vmem:[#allocation2 + $0x1b0] sm:$0x7] %v1162
        %1195 = vst [vmem:[#allocation2 + $0x1b8] sm:$0x7] %v1163
        %1196 = vst [vmem:[#allocation2 + $0x1c0] sm:$0x7] %v1164
        %1197 = vst [vmem:[#allocation2 + $0x1c8] sm:$0x7] %v1165
        %1198 = vst [vmem:[#allocation2 + $0x1d0] sm:$0x7] %v1166
        %1199 = vst [vmem:[#allocation2 + $0x1d8] sm:$0x7] %v1167
        %1200 = vst [vmem:[#allocation2 + $0x1e0] sm:$0x7] %v1168
        %1201 = vst [vmem:[#allocation2 + $0x1e8] sm:$0x7] %v1169
        %1202 = vst [vmem:[#allocation2 + $0x1f0] sm:$0x7] %v1170
        %1203 = vst [vmem:[#allocation2 + $0x1f8] sm:$0x7] %v1171
        %v1204 = vlaneseq
        %v1205 = vshrl.u32 %v1204, 7
        %v1206 = vsub.s32 2, %v1205
        %v1207 = vrot.slane %v244, %v1206
        %v1208 = vlaneseq
        %v1209 = vshrl.u32 %v1208, 7
        %v1210 = vsub.s32 6, %v1209
        %v1211 = vrot.slane %v244, %v1210
        %v1212 = vlaneseq
        %v1213 = vshrl.u32 %v1212, 7
        %v1214 = vsub.s32 2, %v1213
        %v1215 = vrot.slane %v245, %v1214
        %v1216 = vlaneseq
        %v1217 = vshrl.u32 %v1216, 7
        %v1218 = vsub.s32 6, %v1217
        %v1219 = vrot.slane %v245, %v1218
        %v1220 = vlaneseq
        %v1221 = vshrl.u32 %v1220, 7
        %v1222 = vsub.s32 2, %v1221
        %v1223 = vrot.slane %v246, %v1222
        %v1224 = vlaneseq
        %v1225 = vshrl.u32 %v1224, 7
        %v1226 = vsub.s32 6, %v1225
        %v1227 = vrot.slane %v246, %v1226
        %v1228 = vlaneseq
        %v1229 = vshrl.u32 %v1228, 7
        %v1230 = vsub.s32 2, %v1229
        %v1231 = vrot.slane %v247, %v1230
        %v1232 = vlaneseq
        %v1233 = vshrl.u32 %v1232, 7
        %v1234 = vsub.s32 6, %v1233
        %v1235 = vrot.slane %v247, %v1234
        %v1236 = vlaneseq
        %v1237 = vshrl.u32 %v1236, 7
        %v1238 = vsub.s32 2, %v1237
        %v1239 = vrot.slane %v248, %v1238
        %v1240 = vlaneseq
        %v1241 = vshrl.u32 %v1240, 7
        %v1242 = vsub.s32 6, %v1241
        %v1243 = vrot.slane %v248, %v1242
        %v1244 = vlaneseq
        %v1245 = vshrl.u32 %v1244, 7
        %v1246 = vsub.s32 2, %v1245
        %v1247 = vrot.slane %v249, %v1246
        %v1248 = vlaneseq
        %v1249 = vshrl.u32 %v1248, 7
        %v1250 = vsub.s32 6, %v1249
        %v1251 = vrot.slane %v249, %v1250
        %v1252 = vlaneseq
        %v1253 = vshrl.u32 %v1252, 7
        %v1254 = vsub.s32 2, %v1253
        %v1255 = vrot.slane %v250, %v1254
        %v1256 = vlaneseq
        %v1257 = vshrl.u32 %v1256, 7
        %v1258 = vsub.s32 6, %v1257
        %v1259 = vrot.slane %v250, %v1258
        %v1260 = vlaneseq
        %v1261 = vshrl.u32 %v1260, 7
        %v1262 = vsub.s32 2, %v1261
        %v1263 = vrot.slane %v251, %v1262
        %v1264 = vlaneseq
        %v1265 = vshrl.u32 %v1264, 7
        %v1266 = vsub.s32 6, %v1265
        %v1267 = vrot.slane %v251, %v1266
        %v1268 = vlaneseq
        %v1269 = vshrl.u32 %v1268, 7
        %v1270 = vsub.s32 2, %v1269
        %v1271 = vrot.slane %v252, %v1270
        %v1272 = vlaneseq
        %v1273 = vshrl.u32 %v1272, 7
        %v1274 = vsub.s32 6, %v1273
        %v1275 = vrot.slane %v252, %v1274
        %v1276 = vlaneseq
        %v1277 = vshrl.u32 %v1276, 7
        %v1278 = vsub.s32 2, %v1277
        %v1279 = vrot.slane %v253, %v1278
        %v1280 = vlaneseq
        %v1281 = vshrl.u32 %v1280, 7
        %v1282 = vsub.s32 6, %v1281
        %v1283 = vrot.slane %v253, %v1282
        %v1284 = vlaneseq
        %v1285 = vshrl.u32 %v1284, 7
        %v1286 = vsub.s32 2, %v1285
        %v1287 = vrot.slane %v254, %v1286
        %v1288 = vlaneseq
        %v1289 = vshrl.u32 %v1288, 7
        %v1290 = vsub.s32 6, %v1289
        %v1291 = vrot.slane %v254, %v1290
        %v1292 = vlaneseq
        %v1293 = vshrl.u32 %v1292, 7
        %v1294 = vsub.s32 2, %v1293
        %v1295 = vrot.slane %v255, %v1294
        %v1296 = vlaneseq
        %v1297 = vshrl.u32 %v1296, 7
        %v1298 = vsub.s32 6, %v1297
        %v1299 = vrot.slane %v255, %v1298
        %v1300 = vlaneseq
        %v1301 = vshrl.u32 %v1300, 7
        %v1302 = vsub.s32 2, %v1301
        %v1303 = vrot.slane %v256, %v1302
        %v1304 = vlaneseq
        %v1305 = vshrl.u32 %v1304, 7
        %v1306 = vsub.s32 6, %v1305
        %v1307 = vrot.slane %v256, %v1306
        %v1308 = vlaneseq
        %v1309 = vshrl.u32 %v1308, 7
        %v1310 = vsub.s32 2, %v1309
        %v1311 = vrot.slane %v257, %v1310
        %v1312 = vlaneseq
        %v1313 = vshrl.u32 %v1312, 7
        %v1314 = vsub.s32 6, %v1313
        %v1315 = vrot.slane %v257, %v1314
        %v1316 = vlaneseq
        %v1317 = vshrl.u32 %v1316, 7
        %v1318 = vsub.s32 2, %v1317
        %v1319 = vrot.slane %v258, %v1318
        %v1320 = vlaneseq
        %v1321 = vshrl.u32 %v1320, 7
        %v1322 = vsub.s32 6, %v1321
        %v1323 = vrot.slane %v258, %v1322
        %v1324 = vlaneseq
        %v1325 = vshrl.u32 %v1324, 7
        %v1326 = vsub.s32 2, %v1325
        %v1327 = vrot.slane %v259, %v1326
        %v1328 = vlaneseq
        %v1329 = vshrl.u32 %v1328, 7
        %v1330 = vsub.s32 6, %v1329
        %v1331 = vrot.slane %v259, %v1330
        %v1364 = vlaneseq
        %v1365 = vshrl.u32 %v1364, 7
        %v1366 = vsub.s32 2, %v1365
        %v1367 = vrot.slane %v1207, %v1366
        %v1368 = vlaneseq
        %v1369 = vshrl.u32 %v1368, 7
        %v1370 = vsub.s32 2, %v1369
        %v1371 = vrot.slane %v1211, %v1370
        %v1372 = vlaneseq
        %v1373 = vshrl.u32 %v1372, 7
        %v1374 = vsub.s32 2, %v1373
        %v1375 = vrot.slane %v1215, %v1374
        %v1376 = vlaneseq
        %v1377 = vshrl.u32 %v1376, 7
        %v1378 = vsub.s32 2, %v1377
        %v1379 = vrot.slane %v1219, %v1378
        %v1380 = vlaneseq
        %v1381 = vshrl.u32 %v1380, 7
        %v1382 = vsub.s32 2, %v1381
        %v1383 = vrot.slane %v1223, %v1382
        %v1384 = vlaneseq
        %v1385 = vshrl.u32 %v1384, 7
        %v1386 = vsub.s32 2, %v1385
        %v1387 = vrot.slane %v1227, %v1386
        %v1388 = vlaneseq
        %v1389 = vshrl.u32 %v1388, 7
        %v1390 = vsub.s32 2, %v1389
        %v1391 = vrot.slane %v1231, %v1390
        %v1392 = vlaneseq
        %v1393 = vshrl.u32 %v1392, 7
        %v1394 = vsub.s32 2, %v1393
        %v1395 = vrot.slane %v1235, %v1394
        %v1396 = vlaneseq
        %v1397 = vshrl.u32 %v1396, 7
        %v1398 = vsub.s32 2, %v1397
        %v1399 = vrot.slane %v1239, %v1398
        %v1400 = vlaneseq
        %v1401 = vshrl.u32 %v1400, 7
        %v1402 = vsub.s32 2, %v1401
        %v1403 = vrot.slane %v1243, %v1402
        %v1404 = vlaneseq
        %v1405 = vshrl.u32 %v1404, 7
        %v1406 = vsub.s32 2, %v1405
        %v1407 = vrot.slane %v1247, %v1406
        %v1408 = vlaneseq
        %v1409 = vshrl.u32 %v1408, 7
        %v1410 = vsub.s32 2, %v1409
        %v1411 = vrot.slane %v1251, %v1410
        %v1412 = vlaneseq
        %v1413 = vshrl.u32 %v1412, 7
        %v1414 = vsub.s32 2, %v1413
        %v1415 = vrot.slane %v1255, %v1414
        %v1416 = vlaneseq
        %v1417 = vshrl.u32 %v1416, 7
        %v1418 = vsub.s32 2, %v1417
        %v1419 = vrot.slane %v1259, %v1418
        %v1420 = vlaneseq
        %v1421 = vshrl.u32 %v1420, 7
        %v1422 = vsub.s32 2, %v1421
        %v1423 = vrot.slane %v1263, %v1422
        %v1424 = vlaneseq
        %v1425 = vshrl.u32 %v1424, 7
        %v1426 = vsub.s32 2, %v1425
        %v1427 = vrot.slane %v1267, %v1426
        %v1428 = vlaneseq
        %v1429 = vshrl.u32 %v1428, 7
        %v1430 = vsub.s32 2, %v1429
        %v1431 = vrot.slane %v1271, %v1430
        %v1432 = vlaneseq
        %v1433 = vshrl.u32 %v1432, 7
        %v1434 = vsub.s32 2, %v1433
        %v1435 = vrot.slane %v1275, %v1434
        %v1436 = vlaneseq
        %v1437 = vshrl.u32 %v1436, 7
        %v1438 = vsub.s32 2, %v1437
        %v1439 = vrot.slane %v1279, %v1438
        %v1440 = vlaneseq
        %v1441 = vshrl.u32 %v1440, 7
        %v1442 = vsub.s32 2, %v1441
        %v1443 = vrot.slane %v1283, %v1442
        %v1444 = vlaneseq
        %v1445 = vshrl.u32 %v1444, 7
        %v1446 = vsub.s32 2, %v1445
        %v1447 = vrot.slane %v1287, %v1446
        %v1448 = vlaneseq
        %v1449 = vshrl.u32 %v1448, 7
        %v1450 = vsub.s32 2, %v1449
        %v1451 = vrot.slane %v1291, %v1450
        %v1452 = vlaneseq
        %v1453 = vshrl.u32 %v1452, 7
        %v1454 = vsub.s32 2, %v1453
        %v1455 = vrot.slane %v1295, %v1454
        %v1456 = vlaneseq
        %v1457 = vshrl.u32 %v1456, 7
        %v1458 = vsub.s32 2, %v1457
        %v1459 = vrot.slane %v1299, %v1458
        %v1460 = vlaneseq
        %v1461 = vshrl.u32 %v1460, 7
        %v1462 = vsub.s32 2, %v1461
        %v1463 = vrot.slane %v1303, %v1462
        %v1464 = vlaneseq
        %v1465 = vshrl.u32 %v1464, 7
        %v1466 = vsub.s32 2, %v1465
        %v1467 = vrot.slane %v1307, %v1466
        %v1468 = vlaneseq
        %v1469 = vshrl.u32 %v1468, 7
        %v1470 = vsub.s32 2, %v1469
        %v1471 = vrot.slane %v1311, %v1470
        %v1472 = vlaneseq
        %v1473 = vshrl.u32 %v1472, 7
        %v1474 = vsub.s32 2, %v1473
        %v1475 = vrot.slane %v1315, %v1474
        %v1476 = vlaneseq
        %v1477 = vshrl.u32 %v1476, 7
        %v1478 = vsub.s32 2, %v1477
        %v1479 = vrot.slane %v1319, %v1478
        %v1480 = vlaneseq
        %v1481 = vshrl.u32 %v1480, 7
        %v1482 = vsub.s32 2, %v1481
        %v1483 = vrot.slane %v1323, %v1482
        %v1484 = vlaneseq
        %v1485 = vshrl.u32 %v1484, 7
        %v1486 = vsub.s32 2, %v1485
        %v1487 = vrot.slane %v1327, %v1486
        %v1488 = vlaneseq
        %v1489 = vshrl.u32 %v1488, 7
        %v1490 = vsub.s32 2, %v1489
        %v1491 = vrot.slane %v1331, %v1490
        %v1492 = vrot.slane %v244, 2
        %v1493 = vrot.slane %v276, 2
        %v1494 = vrot.slane %v245, 2
        %v1495 = vrot.slane %v277, 2
        %v1496 = vrot.slane %v246, 2
        %v1497 = vrot.slane %v278, 2
        %v1498 = vrot.slane %v247, 2
        %v1499 = vrot.slane %v279, 2
        %v1500 = vrot.slane %v248, 2
        %v1501 = vrot.slane %v280, 2
        %v1502 = vrot.slane %v249, 2
        %v1503 = vrot.slane %v281, 2
        %v1504 = vrot.slane %v250, 2
        %v1505 = vrot.slane %v282, 2
        %v1506 = vrot.slane %v251, 2
        %v1507 = vrot.slane %v283, 2
        %v1508 = vrot.slane %v252, 2
        %v1509 = vrot.slane %v284, 2
        %v1510 = vrot.slane %v253, 2
        %v1511 = vrot.slane %v285, 2
        %v1512 = vrot.slane %v254, 2
        %v1513 = vrot.slane %v286, 2
        %v1514 = vrot.slane %v255, 2
        %v1515 = vrot.slane %v287, 2
        %v1516 = vrot.slane %v256, 2
        %v1517 = vrot.slane %v288, 2
        %v1518 = vrot.slane %v257, 2
        %v1519 = vrot.slane %v289, 2
        %v1520 = vrot.slane %v258, 2
        %v1521 = vrot.slane %v290, 2
        %v1522 = vrot.slane %v259, 2
        %v1523 = vrot.slane %v291, 2
        %v1556 = vmul.f32 %v1367, %v1492
        %v1557 = vmul.f32 %v1371, %v1493
        %v1558 = vmul.f32 %v1375, %v1494
        %v1559 = vmul.f32 %v1379, %v1495
        %v1560 = vmul.f32 %v1383, %v1496
        %v1561 = vmul.f32 %v1387, %v1497
        %v1562 = vmul.f32 %v1391, %v1498
        %v1563 = vmul.f32 %v1395, %v1499
        %v1564 = vmul.f32 %v1399, %v1500
        %v1565 = vmul.f32 %v1403, %v1501
        %v1566 = vmul.f32 %v1407, %v1502
        %v1567 = vmul.f32 %v1411, %v1503
        %v1568 = vmul.f32 %v1415, %v1504
        %v1569 = vmul.f32 %v1419, %v1505
        %v1570 = vmul.f32 %v1423, %v1506
        %v1571 = vmul.f32 %v1427, %v1507
        %v1572 = vmul.f32 %v1431, %v1508
        %v1573 = vmul.f32 %v1435, %v1509
        %v1574 = vmul.f32 %v1439, %v1510
        %v1575 = vmul.f32 %v1443, %v1511
        %v1576 = vmul.f32 %v1447, %v1512
        %v1577 = vmul.f32 %v1451, %v1513
        %v1578 = vmul.f32 %v1455, %v1514
        %v1579 = vmul.f32 %v1459, %v1515
        %v1580 = vmul.f32 %v1463, %v1516
        %v1581 = vmul.f32 %v1467, %v1517
        %v1582 = vmul.f32 %v1471, %v1518
        %v1583 = vmul.f32 %v1475, %v1519
        %v1584 = vmul.f32 %v1479, %v1520
        %v1585 = vmul.f32 %v1483, %v1521
        %v1586 = vmul.f32 %v1487, %v1522
        %v1587 = vmul.f32 %v1491, %v1523
        %v1620 = vrot.slane %v1556, 5
        %v1621 = vrot.slane %v1557, 5
        %v1622 = vrot.slane %v1558, 5
        %v1623 = vrot.slane %v1559, 5
        %v1624 = vrot.slane %v1560, 5
        %v1625 = vrot.slane %v1561, 5
        %v1626 = vrot.slane %v1562, 5
        %v1627 = vrot.slane %v1563, 5
        %v1628 = vrot.slane %v1564, 5
        %v1629 = vrot.slane %v1565, 5
        %v1630 = vrot.slane %v1566, 5
        %v1631 = vrot.slane %v1567, 5
        %v1632 = vrot.slane %v1568, 5
        %v1633 = vrot.slane %v1569, 5
        %v1634 = vrot.slane %v1570, 5
        %v1635 = vrot.slane %v1571, 5
        %v1636 = vrot.slane %v1572, 5
        %v1637 = vrot.slane %v1573, 5
        %v1638 = vrot.slane %v1574, 5
        %v1639 = vrot.slane %v1575, 5
        %v1640 = vrot.slane %v1576, 5
        %v1641 = vrot.slane %v1577, 5
        %v1642 = vrot.slane %v1578, 5
        %v1643 = vrot.slane %v1579, 5
        %v1644 = vrot.slane %v1580, 5
        %v1645 = vrot.slane %v1581, 5
        %v1646 = vrot.slane %v1582, 5
        %v1647 = vrot.slane %v1583, 5
        %v1648 = vrot.slane %v1584, 5
        %v1649 = vrot.slane %v1585, 5
        %v1650 = vrot.slane %v1586, 5
        %v1651 = vrot.slane %v1587, 5
        %1684 = vst [vmem:[#allocation2 + $0x100] sm:$0x18] %v1620
        %1685 = vst [vmem:[#allocation2 + $0x108] sm:$0x18] %v1621
        %1686 = vst [vmem:[#allocation2 + $0x110] sm:$0x18] %v1622
        %1687 = vst [vmem:[#allocation2 + $0x118] sm:$0x18] %v1623
        %1688 = vst [vmem:[#allocation2 + $0x120] sm:$0x18] %v1624
        %1689 = vst [vmem:[#allocation2 + $0x128] sm:$0x18] %v1625
        %1690 = vst [vmem:[#allocation2 + $0x130] sm:$0x18] %v1626
        %1691 = vst [vmem:[#allocation2 + $0x138] sm:$0x18] %v1627
        %1692 = vst [vmem:[#allocation2 + $0x140] sm:$0x18] %v1628
        %1693 = vst [vmem:[#allocation2 + $0x148] sm:$0x18] %v1629
        %1694 = vst [vmem:[#allocation2 + $0x150] sm:$0x18] %v1630
        %1695 = vst [vmem:[#allocation2 + $0x158] sm:$0x18] %v1631
        %1696 = vst [vmem:[#allocation2 + $0x160] sm:$0x18] %v1632
        %1697 = vst [vmem:[#allocation2 + $0x168] sm:$0x18] %v1633
        %1698 = vst [vmem:[#allocation2 + $0x170] sm:$0x18] %v1634
        %1699 = vst [vmem:[#allocation2 + $0x178] sm:$0x18] %v1635
        %1700 = vst [vmem:[#allocation2 + $0x180] sm:$0x18] %v1636
        %1701 = vst [vmem:[#allocation2 + $0x188] sm:$0x18] %v1637
        %1702 = vst [vmem:[#allocation2 + $0x190] sm:$0x18] %v1638
        %1703 = vst [vmem:[#allocation2 + $0x198] sm:$0x18] %v1639
        %1704 = vst [vmem:[#allocation2 + $0x1a0] sm:$0x18] %v1640
        %1705 = vst [vmem:[#allocation2 + $0x1a8] sm:$0x18] %v1641
        %1706 = vst [vmem:[#allocation2 + $0x1b0] sm:$0x18] %v1642
        %1707 = vst [vmem:[#allocation2 + $0x1b8] sm:$0x18] %v1643
        %1708 = vst [vmem:[#allocation2 + $0x1c0] sm:$0x18] %v1644
        %1709 = vst [vmem:[#allocation2 + $0x1c8] sm:$0x18] %v1645
        %1710 = vst [vmem:[#allocation2 + $0x1d0] sm:$0x18] %v1646
        %1711 = vst [vmem:[#allocation2 + $0x1d8] sm:$0x18] %v1647
        %1712 = vst [vmem:[#allocation2 + $0x1e0] sm:$0x18] %v1648
        %1713 = vst [vmem:[#allocation2 + $0x1e8] sm:$0x18] %v1649
        %1714 = vst [vmem:[#allocation2 + $0x1f0] sm:$0x18] %v1650
        %1715 = vst [vmem:[#allocation2 + $0x1f8] sm:$0x18] %v1651
        %v1716 = vmul.f32 %v244, %v244
        %v1717 = vmul.f32 %v245, %v245
        %v1718 = vmul.f32 %v246, %v246
        %v1719 = vmul.f32 %v247, %v247
        %v1720 = vmul.f32 %v248, %v248
        %v1721 = vmul.f32 %v249, %v249
        %v1722 = vmul.f32 %v250, %v250
        %v1723 = vmul.f32 %v251, %v251
        %v1724 = vmul.f32 %v252, %v252
        %v1725 = vmul.f32 %v253, %v253
        %v1726 = vmul.f32 %v254, %v254
        %v1727 = vmul.f32 %v255, %v255
        %v1728 = vmul.f32 %v256, %v256
        %v1729 = vmul.f32 %v257, %v257
        %v1730 = vmul.f32 %v258, %v258
        %v1731 = vmul.f32 %v259, %v259
        %v1749 = vunpack.c.l.s4 1966171168
        %v1750 = vunpack.c.0.s8 %v1749
        %v1751 = vlaneseq
        %v1752 = vshrl.u32 %v1751, 7
        %v1753 = vsub.s32 %v1750, %v1752
        %v1754 = vrot.slane %v1716, %v1753
        %v1756 = vunpack.c.l.s4 1966171168
        %v1757 = vunpack.c.0.s8 %v1756
        %v1758 = vlaneseq
        %v1759 = vshrl.u32 %v1758, 7
        %v1760 = vsub.s32 %v1757, %v1759
        %v1761 = vrot.slane %v1717, %v1760
        %v1763 = vunpack.c.l.s4 1966171168
        %v1764 = vunpack.c.0.s8 %v1763
        %v1765 = vlaneseq
        %v1766 = vshrl.u32 %v1765, 7
        %v1767 = vsub.s32 %v1764, %v1766
        %v1768 = vrot.slane %v1718, %v1767
        %v1770 = vunpack.c.l.s4 1966171168
        %v1771 = vunpack.c.0.s8 %v1770
        %v1772 = vlaneseq
        %v1773 = vshrl.u32 %v1772, 7
        %v1774 = vsub.s32 %v1771, %v1773
        %v1775 = vrot.slane %v1719, %v1774
        %v1776 = vcombine.high %v1754, %v1761
        %v1777 = vcombine.high %v1768, %v1775
        %v1779 = vunpack.c.l.s4 1966171168
        %v1780 = vunpack.c.0.s8 %v1779
        %v1781 = vlaneseq
        %v1782 = vshrl.u32 %v1781, 7
        %v1783 = vsub.s32 %v1780, %v1782
        %v1784 = vrot.slane %v1776, %v1783
        %v1786 = vunpack.c.l.s4 1966171168
        %v1787 = vunpack.c.0.s8 %v1786
        %v1788 = vlaneseq
        %v1789 = vshrl.u32 %v1788, 7
        %v1790 = vsub.s32 %v1787, %v1789
        %v1791 = vrot.slane %v1777, %v1790
        %v1792 = vcombine.high %v1784, %v1791
        %v1794 = vunpack.c.l.s4 1966171168
        %v1795 = vunpack.c.0.s8 %v1794
        %v1796 = vlaneseq
        %v1797 = vshrl.u32 %v1796, 7
        %v1798 = vsub.s32 %v1795, %v1797
        %v1799 = vrot.slane %v1720, %v1798
        %v1801 = vunpack.c.l.s4 1966171168
        %v1802 = vunpack.c.0.s8 %v1801
        %v1803 = vlaneseq
        %v1804 = vshrl.u32 %v1803, 7
        %v1805 = vsub.s32 %v1802, %v1804
        %v1806 = vrot.slane %v1721, %v1805
        %v1808 = vunpack.c.l.s4 1966171168
        %v1809 = vunpack.c.0.s8 %v1808
        %v1810 = vlaneseq
        %v1811 = vshrl.u32 %v1810, 7
        %v1812 = vsub.s32 %v1809, %v1811
        %v1813 = vrot.slane %v1722, %v1812
        %v1815 = vunpack.c.l.s4 1966171168
        %v1816 = vunpack.c.0.s8 %v1815
        %v1817 = vlaneseq
        %v1818 = vshrl.u32 %v1817, 7
        %v1819 = vsub.s32 %v1816, %v1818
        %v1820 = vrot.slane %v1723, %v1819
        %v1821 = vcombine.high %v1799, %v1806
        %v1822 = vcombine.high %v1813, %v1820
        %v1824 = vunpack.c.l.s4 1966171168
        %v1825 = vunpack.c.0.s8 %v1824
        %v1826 = vlaneseq
        %v1827 = vshrl.u32 %v1826, 7
        %v1828 = vsub.s32 %v1825, %v1827
        %v1829 = vrot.slane %v1821, %v1828
        %v1831 = vunpack.c.l.s4 1966171168
        %v1832 = vunpack.c.0.s8 %v1831
        %v1833 = vlaneseq
        %v1834 = vshrl.u32 %v1833, 7
        %v1835 = vsub.s32 %v1832, %v1834
        %v1836 = vrot.slane %v1822, %v1835
        %v1837 = vcombine.high %v1829, %v1836
        %v1839 = vunpack.c.l.s4 1966171168
        %v1840 = vunpack.c.0.s8 %v1839
        %v1841 = vlaneseq
        %v1842 = vshrl.u32 %v1841, 7
        %v1843 = vsub.s32 %v1840, %v1842
        %v1844 = vrot.slane %v1724, %v1843
        %v1846 = vunpack.c.l.s4 1966171168
        %v1847 = vunpack.c.0.s8 %v1846
        %v1848 = vlaneseq
        %v1849 = vshrl.u32 %v1848, 7
        %v1850 = vsub.s32 %v1847, %v1849
        %v1851 = vrot.slane %v1725, %v1850
        %v1853 = vunpack.c.l.s4 1966171168
        %v1854 = vunpack.c.0.s8 %v1853
        %v1855 = vlaneseq
        %v1856 = vshrl.u32 %v1855, 7
        %v1857 = vsub.s32 %v1854, %v1856
        %v1858 = vrot.slane %v1726, %v1857
        %v1860 = vunpack.c.l.s4 1966171168
        %v1861 = vunpack.c.0.s8 %v1860
        %v1862 = vlaneseq
        %v1863 = vshrl.u32 %v1862, 7
        %v1864 = vsub.s32 %v1861, %v1863
        %v1865 = vrot.slane %v1727, %v1864
        %v1866 = vcombine.high %v1844, %v1851
        %v1867 = vcombine.high %v1858, %v1865
        %v1869 = vunpack.c.l.s4 1966171168
        %v1870 = vunpack.c.0.s8 %v1869
        %v1871 = vlaneseq
        %v1872 = vshrl.u32 %v1871, 7
        %v1873 = vsub.s32 %v1870, %v1872
        %v1874 = vrot.slane %v1866, %v1873
        %v1876 = vunpack.c.l.s4 1966171168
        %v1877 = vunpack.c.0.s8 %v1876
        %v1878 = vlaneseq
        %v1879 = vshrl.u32 %v1878, 7
        %v1880 = vsub.s32 %v1877, %v1879
        %v1881 = vrot.slane %v1867, %v1880
        %v1882 = vcombine.high %v1874, %v1881
        %v1884 = vunpack.c.l.s4 1966171168
        %v1885 = vunpack.c.0.s8 %v1884
        %v1886 = vlaneseq
        %v1887 = vshrl.u32 %v1886, 7
        %v1888 = vsub.s32 %v1885, %v1887
        %v1889 = vrot.slane %v1728, %v1888
        %v1891 = vunpack.c.l.s4 1966171168
        %v1892 = vunpack.c.0.s8 %v1891
        %v1893 = vlaneseq
        %v1894 = vshrl.u32 %v1893, 7
        %v1895 = vsub.s32 %v1892, %v1894
        %v1896 = vrot.slane %v1729, %v1895
        %v1898 = vunpack.c.l.s4 1966171168
        %v1899 = vunpack.c.0.s8 %v1898
        %v1900 = vlaneseq
        %v1901 = vshrl.u32 %v1900, 7
        %v1902 = vsub.s32 %v1899, %v1901
        %v1903 = vrot.slane %v1730, %v1902
        %v1905 = vunpack.c.l.s4 1966171168
        %v1906 = vunpack.c.0.s8 %v1905
        %v1907 = vlaneseq
        %v1908 = vshrl.u32 %v1907, 7
        %v1909 = vsub.s32 %v1906, %v1908
        %v1910 = vrot.slane %v1731, %v1909
        %v1911 = vcombine.high %v1889, %v1896
        %v1912 = vcombine.high %v1903, %v1910
        %v1914 = vunpack.c.l.s4 1966171168
        %v1915 = vunpack.c.0.s8 %v1914
        %v1916 = vlaneseq
        %v1917 = vshrl.u32 %v1916, 7
        %v1918 = vsub.s32 %v1915, %v1917
        %v1919 = vrot.slane %v1911, %v1918
        %v1921 = vunpack.c.l.s4 1966171168
        %v1922 = vunpack.c.0.s8 %v1921
        %v1923 = vlaneseq
        %v1924 = vshrl.u32 %v1923, 7
        %v1925 = vsub.s32 %v1922, %v1924
        %v1926 = vrot.slane %v1912, %v1925
        %v1927 = vcombine.high %v1919, %v1926
        %s1932 = scalar_lea.vmem [#allocation2], 261
        %1933 = vst [vmem:[%s1932] ss:$8 sm:$0xf] %v1792
        %1934 = vst [vmem:[%s1932] ss:$8 sm:$0xf0] %v1792
        %s1935 = scalar_lea.vmem [#allocation2], 325
        %1936 = vst [vmem:[%s1935] ss:$8 sm:$0xf] %v1837
        %1937 = vst [vmem:[%s1935] ss:$8 sm:$0xf0] %v1837
        %s1938 = scalar_lea.vmem [#allocation2], 389
        %1939 = vst [vmem:[%s1938] ss:$8 sm:$0xf] %v1882
        %1940 = vst [vmem:[%s1938] ss:$8 sm:$0xf0] %v1882
        %s1941 = scalar_lea.vmem [#allocation2], 453
        %1942 = vst [vmem:[%s1941] ss:$8 sm:$0xf] %v1927
        %1943 = vst [vmem:[%s1941] ss:$8 sm:$0xf0] %v1927
        %v1944 = vmul.f32 %v503, %v628
        %v1945 = vmul.f32 %v507, %v629
        %v1946 = vmul.f32 %v511, %v630
        %v1947 = vmul.f32 %v515, %v631
        %v1948 = vmul.f32 %v519, %v632
        %v1949 = vmul.f32 %v523, %v633
        %v1950 = vmul.f32 %v527, %v634
        %v1951 = vmul.f32 %v531, %v635
        %v1952 = vmul.f32 %v535, %v636
        %v1953 = vmul.f32 %v539, %v637
        %v1954 = vmul.f32 %v543, %v638
        %v1955 = vmul.f32 %v547, %v639
        %v1956 = vmul.f32 %v551, %v640
        %v1957 = vmul.f32 %v555, %v641
        %v1958 = vmul.f32 %v559, %v642
        %v1959 = vmul.f32 %v563, %v643
        %v1960 = vmul.f32 %v567, %v644
        %v1961 = vmul.f32 %v571, %v645
        %v1962 = vmul.f32 %v575, %v646
        %v1963 = vmul.f32 %v579, %v647
        %v1964 = vmul.f32 %v583, %v648
        %v1965 = vmul.f32 %v587, %v649
        %v1966 = vmul.f32 %v591, %v650
        %v1967 = vmul.f32 %v595, %v651
        %v1968 = vmul.f32 %v599, %v652
        %v1969 = vmul.f32 %v603, %v653
        %v1970 = vmul.f32 %v607, %v654
        %v1971 = vmul.f32 %v611, %v655
        %v1972 = vmul.f32 %v615, %v656
        %v1973 = vmul.f32 %v619, %v657
        %v1974 = vmul.f32 %v623, %v658
        %v1975 = vmul.f32 %v627, %v659
        %v2008 = vrot.slane %v1944, 2
        %v2009 = vrot.slane %v1945, 2
        %v2010 = vrot.slane %v1946, 2
        %v2011 = vrot.slane %v1947, 2
        %v2012 = vrot.slane %v1948, 2
        %v2013 = vrot.slane %v1949, 2
        %v2014 = vrot.slane %v1950, 2
        %v2015 = vrot.slane %v1951, 2
        %v2016 = vrot.slane %v1952, 2
        %v2017 = vrot.slane %v1953, 2
        %v2018 = vrot.slane %v1954, 2
        %v2019 = vrot.slane %v1955, 2
        %v2020 = vrot.slane %v1956, 2
        %v2021 = vrot.slane %v1957, 2
        %v2022 = vrot.slane %v1958, 2
        %v2023 = vrot.slane %v1959, 2
        %v2024 = vrot.slane %v1960, 2
        %v2025 = vrot.slane %v1961, 2
        %v2026 = vrot.slane %v1962, 2
        %v2027 = vrot.slane %v1963, 2
        %v2028 = vrot.slane %v1964, 2
        %v2029 = vrot.slane %v1965, 2
        %v2030 = vrot.slane %v1966, 2
        %v2031 = vrot.slane %v1967, 2
        %v2032 = vrot.slane %v1968, 2
        %v2033 = vrot.slane %v1969, 2
        %v2034 = vrot.slane %v1970, 2
        %v2035 = vrot.slane %v1971, 2
        %v2036 = vrot.slane %v1972, 2
        %v2037 = vrot.slane %v1973, 2
        %v2038 = vrot.slane %v1974, 2
        %v2039 = vrot.slane %v1975, 2
        %2072 = vst [vmem:[#allocation2 + $0x100] sm:$0xc0] %v2008
        %2073 = vst [vmem:[#allocation2 + $0x108] sm:$0xc0] %v2009
        %2074 = vst [vmem:[#allocation2 + $0x110] sm:$0xc0] %v2010
        %2075 = vst [vmem:[#allocation2 + $0x118] sm:$0xc0] %v2011
        %2076 = vst [vmem:[#allocation2 + $0x120] sm:$0xc0] %v2012
        %2077 = vst [vmem:[#allocation2 + $0x128] sm:$0xc0] %v2013
        %2078 = vst [vmem:[#allocation2 + $0x130] sm:$0xc0] %v2014
        %2079 = vst [vmem:[#allocation2 + $0x138] sm:$0xc0] %v2015
        %2080 = vst [vmem:[#allocation2 + $0x140] sm:$0xc0] %v2016
        %2081 = vst [vmem:[#allocation2 + $0x148] sm:$0xc0] %v2017
        %2082 = vst [vmem:[#allocation2 + $0x150] sm:$0xc0] %v2018
        %2083 = vst [vmem:[#allocation2 + $0x158] sm:$0xc0] %v2019
        %2084 = vst [vmem:[#allocation2 + $0x160] sm:$0xc0] %v2020
        %2085 = vst [vmem:[#allocation2 + $0x168] sm:$0xc0] %v2021
        %2086 = vst [vmem:[#allocation2 + $0x170] sm:$0xc0] %v2022
        %2087 = vst [vmem:[#allocation2 + $0x178] sm:$0xc0] %v2023
        %2088 = vst [vmem:[#allocation2 + $0x180] sm:$0xc0] %v2024
        %2089 = vst [vmem:[#allocation2 + $0x188] sm:$0xc0] %v2025
        %2090 = vst [vmem:[#allocation2 + $0x190] sm:$0xc0] %v2026
        %2091 = vst [vmem:[#allocation2 + $0x198] sm:$0xc0] %v2027
        %2092 = vst [vmem:[#allocation2 + $0x1a0] sm:$0xc0] %v2028
        %2093 = vst [vmem:[#allocation2 + $0x1a8] sm:$0xc0] %v2029
        %2094 = vst [vmem:[#allocation2 + $0x1b0] sm:$0xc0] %v2030
        %2095 = vst [vmem:[#allocation2 + $0x1b8] sm:$0xc0] %v2031
        %2096 = vst [vmem:[#allocation2 + $0x1c0] sm:$0xc0] %v2032
        %2097 = vst [vmem:[#allocation2 + $0x1c8] sm:$0xc0] %v2033
        %2098 = vst [vmem:[#allocation2 + $0x1d0] sm:$0xc0] %v2034
        %2099 = vst [vmem:[#allocation2 + $0x1d8] sm:$0xc0] %v2035
        %2100 = vst [vmem:[#allocation2 + $0x1e0] sm:$0xc0] %v2036
        %2101 = vst [vmem:[#allocation2 + $0x1e8] sm:$0xc0] %v2037
        %2102 = vst [vmem:[#allocation2 + $0x1f0] sm:$0xc0] %v2038
        %2103 = vst [vmem:[#allocation2 + $0x1f8] sm:$0xc0] %v2039
        %2104 = vst [vmem:[#allocation2 + $0x200] sm:$0x3] %v2008
        %2105 = vst [vmem:[#allocation2 + $0x208] sm:$0x3] %v2009
        %2106 = vst [vmem:[#allocation2 + $0x210] sm:$0x3] %v2010
        %2107 = vst [vmem:[#allocation2 + $0x218] sm:$0x3] %v2011
        %2108 = vst [vmem:[#allocation2 + $0x220] sm:$0x3] %v2012
        %2109 = vst [vmem:[#allocation2 + $0x228] sm:$0x3] %v2013
        %2110 = vst [vmem:[#allocation2 + $0x230] sm:$0x3] %v2014
        %2111 = vst [vmem:[#allocation2 + $0x238] sm:$0x3] %v2015
        %2112 = vst [vmem:[#allocation2 + $0x240] sm:$0x3] %v2016
        %2113 = vst [vmem:[#allocation2 + $0x248] sm:$0x3] %v2017
        %2114 = vst [vmem:[#allocation2 + $0x250] sm:$0x3] %v2018
        %2115 = vst [vmem:[#allocation2 + $0x258] sm:$0x3] %v2019
        %2116 = vst [vmem:[#allocation2 + $0x260] sm:$0x3] %v2020
        %2117 = vst [vmem:[#allocation2 + $0x268] sm:$0x3] %v2021
        %2118 = vst [vmem:[#allocation2 + $0x270] sm:$0x3] %v2022
        %2119 = vst [vmem:[#allocation2 + $0x278] sm:$0x3] %v2023
        %2120 = vst [vmem:[#allocation2 + $0x280] sm:$0x3] %v2024
        %2121 = vst [vmem:[#allocation2 + $0x288] sm:$0x3] %v2025
        %2122 = vst [vmem:[#allocation2 + $0x290] sm:$0x3] %v2026
        %2123 = vst [vmem:[#allocation2 + $0x298] sm:$0x3] %v2027
        %2124 = vst [vmem:[#allocation2 + $0x2a0] sm:$0x3] %v2028
        %2125 = vst [vmem:[#allocation2 + $0x2a8] sm:$0x3] %v2029
        %2126 = vst [vmem:[#allocation2 + $0x2b0] sm:$0x3] %v2030
        %2127 = vst [vmem:[#allocation2 + $0x2b8] sm:$0x3] %v2031
        %2128 = vst [vmem:[#allocation2 + $0x2c0] sm:$0x3] %v2032
        %2129 = vst [vmem:[#allocation2 + $0x2c8] sm:$0x3] %v2033
        %2130 = vst [vmem:[#allocation2 + $0x2d0] sm:$0x3] %v2034
        %2131 = vst [vmem:[#allocation2 + $0x2d8] sm:$0x3] %v2035
        %2132 = vst [vmem:[#allocation2 + $0x2e0] sm:$0x3] %v2036
        %2133 = vst [vmem:[#allocation2 + $0x2e8] sm:$0x3] %v2037
        %2134 = vst [vmem:[#allocation2 + $0x2f0] sm:$0x3] %v2038
        %2135 = vst [vmem:[#allocation2 + $0x2f8] sm:$0x3] %v2039
        %v2136 = vmul.f32 %v503, %v1140
        %v2137 = vmul.f32 %v507, %v1141
        %v2138 = vmul.f32 %v511, %v1142
        %v2139 = vmul.f32 %v515, %v1143
        %v2140 = vmul.f32 %v519, %v1144
        %v2141 = vmul.f32 %v523, %v1145
        %v2142 = vmul.f32 %v527, %v1146
        %v2143 = vmul.f32 %v531, %v1147
        %v2144 = vmul.f32 %v535, %v1148
        %v2145 = vmul.f32 %v539, %v1149
        %v2146 = vmul.f32 %v543, %v1150
        %v2147 = vmul.f32 %v547, %v1151
        %v2148 = vmul.f32 %v551, %v1152
        %v2149 = vmul.f32 %v555, %v1153
        %v2150 = vmul.f32 %v559, %v1154
        %v2151 = vmul.f32 %v563, %v1155
        %v2152 = vmul.f32 %v567, %v1156
        %v2153 = vmul.f32 %v571, %v1157
        %v2154 = vmul.f32 %v575, %v1158
        %v2155 = vmul.f32 %v579, %v1159
        %v2156 = vmul.f32 %v583, %v1160
        %v2157 = vmul.f32 %v587, %v1161
        %v2158 = vmul.f32 %v591, %v1162
        %v2159 = vmul.f32 %v595, %v1163
        %v2160 = vmul.f32 %v599, %v1164
        %v2161 = vmul.f32 %v603, %v1165
        %v2162 = vmul.f32 %v607, %v1166
        %v2163 = vmul.f32 %v611, %v1167
        %v2164 = vmul.f32 %v615, %v1168
        %v2165 = vmul.f32 %v619, %v1169
        %v2166 = vmul.f32 %v623, %v1170
        %v2167 = vmul.f32 %v627, %v1171
        %v2200 = vrot.slane %v2136, 6
        %v2201 = vrot.slane %v2137, 6
        %v2202 = vrot.slane %v2138, 6
        %v2203 = vrot.slane %v2139, 6
        %v2204 = vrot.slane %v2140, 6
        %v2205 = vrot.slane %v2141, 6
        %v2206 = vrot.slane %v2142, 6
        %v2207 = vrot.slane %v2143, 6
        %v2208 = vrot.slane %v2144, 6
        %v2209 = vrot.slane %v2145, 6
        %v2210 = vrot.slane %v2146, 6
        %v2211 = vrot.slane %v2147, 6
        %v2212 = vrot.slane %v2148, 6
        %v2213 = vrot.slane %v2149, 6
        %v2214 = vrot.slane %v2150, 6
        %v2215 = vrot.slane %v2151, 6
        %v2216 = vrot.slane %v2152, 6
        %v2217 = vrot.slane %v2153, 6
        %v2218 = vrot.slane %v2154, 6
        %v2219 = vrot.slane %v2155, 6
        %v2220 = vrot.slane %v2156, 6
        %v2221 = vrot.slane %v2157, 6
        %v2222 = vrot.slane %v2158, 6
        %v2223 = vrot.slane %v2159, 6
        %v2224 = vrot.slane %v2160, 6
        %v2225 = vrot.slane %v2161, 6
        %v2226 = vrot.slane %v2162, 6
        %v2227 = vrot.slane %v2163, 6
        %v2228 = vrot.slane %v2164, 6
        %v2229 = vrot.slane %v2165, 6
        %v2230 = vrot.slane %v2166, 6
        %v2231 = vrot.slane %v2167, 6
        %2264 = vst [vmem:[#allocation2 + $0x200] sm:$0x1c] %v2200
        %2265 = vst [vmem:[#allocation2 + $0x208] sm:$0x1c] %v2201
        %2266 = vst [vmem:[#allocation2 + $0x210] sm:$0x1c] %v2202
        %2267 = vst [vmem:[#allocation2 + $0x218] sm:$0x1c] %v2203
        %2268 = vst [vmem:[#allocation2 + $0x220] sm:$0x1c] %v2204
        %2269 = vst [vmem:[#allocation2 + $0x228] sm:$0x1c] %v2205
        %2270 = vst [vmem:[#allocation2 + $0x230] sm:$0x1c] %v2206
        %2271 = vst [vmem:[#allocation2 + $0x238] sm:$0x1c] %v2207
        %2272 = vst [vmem:[#allocation2 + $0x240] sm:$0x1c] %v2208
        %2273 = vst [vmem:[#allocation2 + $0x248] sm:$0x1c] %v2209
        %2274 = vst [vmem:[#allocation2 + $0x250] sm:$0x1c] %v2210
        %2275 = vst [vmem:[#allocation2 + $0x258] sm:$0x1c] %v2211
        %2276 = vst [vmem:[#allocation2 + $0x260] sm:$0x1c] %v2212
        %2277 = vst [vmem:[#allocation2 + $0x268] sm:$0x1c] %v2213
        %2278 = vst [vmem:[#allocation2 + $0x270] sm:$0x1c] %v2214
        %2279 = vst [vmem:[#allocation2 + $0x278] sm:$0x1c] %v2215
        %2280 = vst [vmem:[#allocation2 + $0x280] sm:$0x1c] %v2216
        %2281 = vst [vmem:[#allocation2 + $0x288] sm:$0x1c] %v2217
        %2282 = vst [vmem:[#allocation2 + $0x290] sm:$0x1c] %v2218
        %2283 = vst [vmem:[#allocation2 + $0x298] sm:$0x1c] %v2219
        %2284 = vst [vmem:[#allocation2 + $0x2a0] sm:$0x1c] %v2220
        %2285 = vst [vmem:[#allocation2 + $0x2a8] sm:$0x1c] %v2221
        %2286 = vst [vmem:[#allocation2 + $0x2b0] sm:$0x1c] %v2222
        %2287 = vst [vmem:[#allocation2 + $0x2b8] sm:$0x1c] %v2223
        %2288 = vst [vmem:[#allocation2 + $0x2c0] sm:$0x1c] %v2224
        %2289 = vst [vmem:[#allocation2 + $0x2c8] sm:$0x1c] %v2225
        %2290 = vst [vmem:[#allocation2 + $0x2d0] sm:$0x1c] %v2226
        %2291 = vst [vmem:[#allocation2 + $0x2d8] sm:$0x1c] %v2227
        %2292 = vst [vmem:[#allocation2 + $0x2e0] sm:$0x1c] %v2228
        %2293 = vst [vmem:[#allocation2 + $0x2e8] sm:$0x1c] %v2229
        %2294 = vst [vmem:[#allocation2 + $0x2f0] sm:$0x1c] %v2230
        %2295 = vst [vmem:[#allocation2 + $0x2f8] sm:$0x1c] %v2231
        %v2296 = vmul.f32 %v503, %v1556
        %v2297 = vmul.f32 %v507, %v1557
        %v2298 = vmul.f32 %v511, %v1558
        %v2299 = vmul.f32 %v515, %v1559
        %v2300 = vmul.f32 %v519, %v1560
        %v2301 = vmul.f32 %v523, %v1561
        %v2302 = vmul.f32 %v527, %v1562
        %v2303 = vmul.f32 %v531, %v1563
        %v2304 = vmul.f32 %v535, %v1564
        %v2305 = vmul.f32 %v539, %v1565
        %v2306 = vmul.f32 %v543, %v1566
        %v2307 = vmul.f32 %v547, %v1567
        %v2308 = vmul.f32 %v551, %v1568
        %v2309 = vmul.f32 %v555, %v1569
        %v2310 = vmul.f32 %v559, %v1570
        %v2311 = vmul.f32 %v563, %v1571
        %v2312 = vmul.f32 %v567, %v1572
        %v2313 = vmul.f32 %v571, %v1573
        %v2314 = vmul.f32 %v575, %v1574
        %v2315 = vmul.f32 %v579, %v1575
        %v2316 = vmul.f32 %v583, %v1576
        %v2317 = vmul.f32 %v587, %v1577
        %v2318 = vmul.f32 %v591, %v1578
        %v2319 = vmul.f32 %v595, %v1579
        %v2320 = vmul.f32 %v599, %v1580
        %v2321 = vmul.f32 %v603, %v1581
        %v2322 = vmul.f32 %v607, %v1582
        %v2323 = vmul.f32 %v611, %v1583
        %v2324 = vmul.f32 %v615, %v1584
        %v2325 = vmul.f32 %v619, %v1585
        %v2326 = vmul.f32 %v623, %v1586
        %v2327 = vmul.f32 %v627, %v1587
        %v2360 = vrot.slane %v2296, 3
        %v2361 = vrot.slane %v2297, 3
        %v2362 = vrot.slane %v2298, 3
        %v2363 = vrot.slane %v2299, 3
        %v2364 = vrot.slane %v2300, 3
        %v2365 = vrot.slane %v2301, 3
        %v2366 = vrot.slane %v2302, 3
        %v2367 = vrot.slane %v2303, 3
        %v2368 = vrot.slane %v2304, 3
        %v2369 = vrot.slane %v2305, 3
        %v2370 = vrot.slane %v2306, 3
        %v2371 = vrot.slane %v2307, 3
        %v2372 = vrot.slane %v2308, 3
        %v2373 = vrot.slane %v2309, 3
        %v2374 = vrot.slane %v2310, 3
        %v2375 = vrot.slane %v2311, 3
        %v2376 = vrot.slane %v2312, 3
        %v2377 = vrot.slane %v2313, 3
        %v2378 = vrot.slane %v2314, 3
        %v2379 = vrot.slane %v2315, 3
        %v2380 = vrot.slane %v2316, 3
        %v2381 = vrot.slane %v2317, 3
        %v2382 = vrot.slane %v2318, 3
        %v2383 = vrot.slane %v2319, 3
        %v2384 = vrot.slane %v2320, 3
        %v2385 = vrot.slane %v2321, 3
        %v2386 = vrot.slane %v2322, 3
        %v2387 = vrot.slane %v2323, 3
        %v2388 = vrot.slane %v2324, 3
        %v2389 = vrot.slane %v2325, 3
        %v2390 = vrot.slane %v2326, 3
        %v2391 = vrot.slane %v2327, 3
        %2424 = vst [vmem:[#allocation2 + $0x200] sm:$0x60] %v2360
        %2425 = vst [vmem:[#allocation2 + $0x208] sm:$0x60] %v2361
        %2426 = vst [vmem:[#allocation2 + $0x210] sm:$0x60] %v2362
        %2427 = vst [vmem:[#allocation2 + $0x218] sm:$0x60] %v2363
        %2428 = vst [vmem:[#allocation2 + $0x220] sm:$0x60] %v2364
        %2429 = vst [vmem:[#allocation2 + $0x228] sm:$0x60] %v2365
        %2430 = vst [vmem:[#allocation2 + $0x230] sm:$0x60] %v2366
        %2431 = vst [vmem:[#allocation2 + $0x238] sm:$0x60] %v2367
        %2432 = vst [vmem:[#allocation2 + $0x240] sm:$0x60] %v2368
        %2433 = vst [vmem:[#allocation2 + $0x248] sm:$0x60] %v2369
        %2434 = vst [vmem:[#allocation2 + $0x250] sm:$0x60] %v2370
        %2435 = vst [vmem:[#allocation2 + $0x258] sm:$0x60] %v2371
        %2436 = vst [vmem:[#allocation2 + $0x260] sm:$0x60] %v2372
        %2437 = vst [vmem:[#allocation2 + $0x268] sm:$0x60] %v2373
        %2438 = vst [vmem:[#allocation2 + $0x270] sm:$0x60] %v2374
        %2439 = vst [vmem:[#allocation2 + $0x278] sm:$0x60] %v2375
        %2440 = vst [vmem:[#allocation2 + $0x280] sm:$0x60] %v2376
        %2441 = vst [vmem:[#allocation2 + $0x288] sm:$0x60] %v2377
        %2442 = vst [vmem:[#allocation2 + $0x290] sm:$0x60] %v2378
        %2443 = vst [vmem:[#allocation2 + $0x298] sm:$0x60] %v2379
        %2444 = vst [vmem:[#allocation2 + $0x2a0] sm:$0x60] %v2380
        %2445 = vst [vmem:[#allocation2 + $0x2a8] sm:$0x60] %v2381
        %2446 = vst [vmem:[#allocation2 + $0x2b0] sm:$0x60] %v2382
        %2447 = vst [vmem:[#allocation2 + $0x2b8] sm:$0x60] %v2383
        %2448 = vst [vmem:[#allocation2 + $0x2c0] sm:$0x60] %v2384
        %2449 = vst [vmem:[#allocation2 + $0x2c8] sm:$0x60] %v2385
        %2450 = vst [vmem:[#allocation2 + $0x2d0] sm:$0x60] %v2386
        %2451 = vst [vmem:[#allocation2 + $0x2d8] sm:$0x60] %v2387
        %2452 = vst [vmem:[#allocation2 + $0x2e0] sm:$0x60] %v2388
        %2453 = vst [vmem:[#allocation2 + $0x2e8] sm:$0x60] %v2389
        %2454 = vst [vmem:[#allocation2 + $0x2f0] sm:$0x60] %v2390
        %2455 = vst [vmem:[#allocation2 + $0x2f8] sm:$0x60] %v2391
        %v2456 = vrot.slane %v1716, 7
        %v2457 = vrot.slane %v2456, 4
        %v2458 = vrot.slane %v1717, 7
        %v2459 = vrot.slane %v2458, 4
        %v2460 = vrot.slane %v1718, 7
        %v2461 = vrot.slane %v2460, 4
        %v2462 = vrot.slane %v1719, 7
        %v2463 = vrot.slane %v2462, 4
        %v2464 = vrot.slane %v1720, 7
        %v2465 = vrot.slane %v2464, 4
        %v2466 = vrot.slane %v1721, 7
        %v2467 = vrot.slane %v2466, 4
        %v2468 = vrot.slane %v1722, 7
        %v2469 = vrot.slane %v2468, 4
        %v2470 = vrot.slane %v1723, 7
        %v2471 = vrot.slane %v2470, 4
        %v2472 = vrot.slane %v1724, 7
        %v2473 = vrot.slane %v2472, 4
        %v2474 = vrot.slane %v1725, 7
        %v2475 = vrot.slane %v2474, 4
        %v2476 = vrot.slane %v1726, 7
        %v2477 = vrot.slane %v2476, 4
        %v2478 = vrot.slane %v1727, 7
        %v2479 = vrot.slane %v2478, 4
        %v2480 = vrot.slane %v1728, 7
        %v2481 = vrot.slane %v2480, 4
        %v2482 = vrot.slane %v1729, 7
        %v2483 = vrot.slane %v2482, 4
        %v2484 = vrot.slane %v1730, 7
        %v2485 = vrot.slane %v2484, 4
        %v2486 = vrot.slane %v1731, 7
        %v2487 = vrot.slane %v2486, 4
        %v2504 = vmul.f32 %v244, %v2457
        %v2505 = vmul.f32 %v245, %v2459
        %v2506 = vmul.f32 %v246, %v2461
        %v2507 = vmul.f32 %v247, %v2463
        %v2508 = vmul.f32 %v248, %v2465
        %v2509 = vmul.f32 %v249, %v2467
        %v2510 = vmul.f32 %v250, %v2469
        %v2511 = vmul.f32 %v251, %v2471
        %v2512 = vmul.f32 %v252, %v2473
        %v2513 = vmul.f32 %v253, %v2475
        %v2514 = vmul.f32 %v254, %v2477
        %v2515 = vmul.f32 %v255, %v2479
        %v2516 = vmul.f32 %v256, %v2481
        %v2517 = vmul.f32 %v257, %v2483
        %v2518 = vmul.f32 %v258, %v2485
        %v2519 = vmul.f32 %v259, %v2487
        %v2537 = vunpack.c.l.s4 1966171168
        %v2538 = vunpack.c.0.s8 %v2537
        %v2539 = vlaneseq
        %v2540 = vshrl.u32 %v2539, 7
        %v2541 = vsub.s32 %v2538, %v2540
        %v2542 = vrot.slane %v2504, %v2541
        %v2544 = vunpack.c.l.s4 1966171168
        %v2545 = vunpack.c.0.s8 %v2544
        %v2546 = vlaneseq
        %v2547 = vshrl.u32 %v2546, 7
        %v2548 = vsub.s32 %v2545, %v2547
        %v2549 = vrot.slane %v2505, %v2548
        %v2551 = vunpack.c.l.s4 1966171168
        %v2552 = vunpack.c.0.s8 %v2551
        %v2553 = vlaneseq
        %v2554 = vshrl.u32 %v2553, 7
        %v2555 = vsub.s32 %v2552, %v2554
        %v2556 = vrot.slane %v2506, %v2555
        %v2558 = vunpack.c.l.s4 1966171168
        %v2559 = vunpack.c.0.s8 %v2558
        %v2560 = vlaneseq
        %v2561 = vshrl.u32 %v2560, 7
        %v2562 = vsub.s32 %v2559, %v2561
        %v2563 = vrot.slane %v2507, %v2562
        %v2564 = vcombine.low %v2542, %v2549
        %v2565 = vcombine.low %v2556, %v2563
        %v2567 = vunpack.c.l.s4 1966171168
        %v2568 = vunpack.c.0.s8 %v2567
        %v2569 = vlaneseq
        %v2570 = vshrl.u32 %v2569, 7
        %v2571 = vsub.s32 %v2568, %v2570
        %v2572 = vrot.slane %v2564, %v2571
        %v2574 = vunpack.c.l.s4 1966171168
        %v2575 = vunpack.c.0.s8 %v2574
        %v2576 = vlaneseq
        %v2577 = vshrl.u32 %v2576, 7
        %v2578 = vsub.s32 %v2575, %v2577
        %v2579 = vrot.slane %v2565, %v2578
        %v2580 = vcombine.low %v2572, %v2579
        %v2582 = vunpack.c.l.s4 1966171168
        %v2583 = vunpack.c.0.s8 %v2582
        %v2584 = vlaneseq
        %v2585 = vshrl.u32 %v2584, 7
        %v2586 = vsub.s32 %v2583, %v2585
        %v2587 = vrot.slane %v2508, %v2586
        %v2589 = vunpack.c.l.s4 1966171168
        %v2590 = vunpack.c.0.s8 %v2589
        %v2591 = vlaneseq
        %v2592 = vshrl.u32 %v2591, 7
        %v2593 = vsub.s32 %v2590, %v2592
        %v2594 = vrot.slane %v2509, %v2593
        %v2596 = vunpack.c.l.s4 1966171168
        %v2597 = vunpack.c.0.s8 %v2596
        %v2598 = vlaneseq
        %v2599 = vshrl.u32 %v2598, 7
        %v2600 = vsub.s32 %v2597, %v2599
        %v2601 = vrot.slane %v2510, %v2600
        %v2603 = vunpack.c.l.s4 1966171168
        %v2604 = vunpack.c.0.s8 %v2603
        %v2605 = vlaneseq
        %v2606 = vshrl.u32 %v2605, 7
        %v2607 = vsub.s32 %v2604, %v2606
        %v2608 = vrot.slane %v2511, %v2607
        %v2609 = vcombine.low %v2587, %v2594
        %v2610 = vcombine.low %v2601, %v2608
        %v2612 = vunpack.c.l.s4 1966171168
        %v2613 = vunpack.c.0.s8 %v2612
        %v2614 = vlaneseq
        %v2615 = vshrl.u32 %v2614, 7
        %v2616 = vsub.s32 %v2613, %v2615
        %v2617 = vrot.slane %v2609, %v2616
        %v2619 = vunpack.c.l.s4 1966171168
        %v2620 = vunpack.c.0.s8 %v2619
        %v2621 = vlaneseq
        %v2622 = vshrl.u32 %v2621, 7
        %v2623 = vsub.s32 %v2620, %v2622
        %v2624 = vrot.slane %v2610, %v2623
        %v2625 = vcombine.low %v2617, %v2624
        %v2627 = vunpack.c.l.s4 1966171168
        %v2628 = vunpack.c.0.s8 %v2627
        %v2629 = vlaneseq
        %v2630 = vshrl.u32 %v2629, 7
        %v2631 = vsub.s32 %v2628, %v2630
        %v2632 = vrot.slane %v2512, %v2631
        %v2634 = vunpack.c.l.s4 1966171168
        %v2635 = vunpack.c.0.s8 %v2634
        %v2636 = vlaneseq
        %v2637 = vshrl.u32 %v2636, 7
        %v2638 = vsub.s32 %v2635, %v2637
        %v2639 = vrot.slane %v2513, %v2638
        %v2641 = vunpack.c.l.s4 1966171168
        %v2642 = vunpack.c.0.s8 %v2641
        %v2643 = vlaneseq
        %v2644 = vshrl.u32 %v2643, 7
        %v2645 = vsub.s32 %v2642, %v2644
        %v2646 = vrot.slane %v2514, %v2645
        %v2648 = vunpack.c.l.s4 1966171168
        %v2649 = vunpack.c.0.s8 %v2648
        %v2650 = vlaneseq
        %v2651 = vshrl.u32 %v2650, 7
        %v2652 = vsub.s32 %v2649, %v2651
        %v2653 = vrot.slane %v2515, %v2652
        %v2654 = vcombine.low %v2632, %v2639
        %v2655 = vcombine.low %v2646, %v2653
        %v2657 = vunpack.c.l.s4 1966171168
        %v2658 = vunpack.c.0.s8 %v2657
        %v2659 = vlaneseq
        %v2660 = vshrl.u32 %v2659, 7
        %v2661 = vsub.s32 %v2658, %v2660
        %v2662 = vrot.slane %v2654, %v2661
        %v2664 = vunpack.c.l.s4 1966171168
        %v2665 = vunpack.c.0.s8 %v2664
        %v2666 = vlaneseq
        %v2667 = vshrl.u32 %v2666, 7
        %v2668 = vsub.s32 %v2665, %v2667
        %v2669 = vrot.slane %v2655, %v2668
        %v2670 = vcombine.low %v2662, %v2669
        %v2672 = vunpack.c.l.s4 1966171168
        %v2673 = vunpack.c.0.s8 %v2672
        %v2674 = vlaneseq
        %v2675 = vshrl.u32 %v2674, 7
        %v2676 = vsub.s32 %v2673, %v2675
        %v2677 = vrot.slane %v2516, %v2676
        %v2679 = vunpack.c.l.s4 1966171168
        %v2680 = vunpack.c.0.s8 %v2679
        %v2681 = vlaneseq
        %v2682 = vshrl.u32 %v2681, 7
        %v2683 = vsub.s32 %v2680, %v2682
        %v2684 = vrot.slane %v2517, %v2683
        %v2686 = vunpack.c.l.s4 1966171168
        %v2687 = vunpack.c.0.s8 %v2686
        %v2688 = vlaneseq
        %v2689 = vshrl.u32 %v2688, 7
        %v2690 = vsub.s32 %v2687, %v2689
        %v2691 = vrot.slane %v2518, %v2690
        %v2693 = vunpack.c.l.s4 1966171168
        %v2694 = vunpack.c.0.s8 %v2693
        %v2695 = vlaneseq
        %v2696 = vshrl.u32 %v2695, 7
        %v2697 = vsub.s32 %v2694, %v2696
        %v2698 = vrot.slane %v2519, %v2697
        %v2699 = vcombine.low %v2677, %v2684
        %v2700 = vcombine.low %v2691, %v2698
        %v2702 = vunpack.c.l.s4 1966171168
        %v2703 = vunpack.c.0.s8 %v2702
        %v2704 = vlaneseq
        %v2705 = vshrl.u32 %v2704, 7
        %v2706 = vsub.s32 %v2703, %v2705
        %v2707 = vrot.slane %v2699, %v2706
        %v2709 = vunpack.c.l.s4 1966171168
        %v2710 = vunpack.c.0.s8 %v2709
        %v2711 = vlaneseq
        %v2712 = vshrl.u32 %v2711, 7
        %v2713 = vsub.s32 %v2710, %v2712
        %v2714 = vrot.slane %v2700, %v2713
        %v2715 = vcombine.low %v2707, %v2714
        %s2720 = scalar_lea.vmem [#allocation2], 519
        %2721 = vst [vmem:[%s2720] ss:$8 sm:$0xf] %v2580
        %2722 = vst [vmem:[%s2720] ss:$8 sm:$0xf0] %v2580
        %s2723 = scalar_lea.vmem [#allocation2], 583
        %2724 = vst [vmem:[%s2723] ss:$8 sm:$0xf] %v2625
        %2725 = vst [vmem:[%s2723] ss:$8 sm:$0xf0] %v2625
        %s2726 = scalar_lea.vmem [#allocation2], 647
        %2727 = vst [vmem:[%s2726] ss:$8 sm:$0xf] %v2670
        %2728 = vst [vmem:[%s2726] ss:$8 sm:$0xf0] %v2670
        %s2729 = scalar_lea.vmem [#allocation2], 711
        %2730 = vst [vmem:[%s2729] ss:$8 sm:$0xf] %v2715
        %2731 = vst [vmem:[%s2729] ss:$8 sm:$0xf0] %v2715
        %v2732 = vmul.f32 %v951, %v1140
        %v2733 = vmul.f32 %v955, %v1141
        %v2734 = vmul.f32 %v959, %v1142
        %v2735 = vmul.f32 %v963, %v1143
        %v2736 = vmul.f32 %v967, %v1144
        %v2737 = vmul.f32 %v971, %v1145
        %v2738 = vmul.f32 %v975, %v1146
        %v2739 = vmul.f32 %v979, %v1147
        %v2740 = vmul.f32 %v983, %v1148
        %v2741 = vmul.f32 %v987, %v1149
        %v2742 = vmul.f32 %v991, %v1150
        %v2743 = vmul.f32 %v995, %v1151
        %v2744 = vmul.f32 %v999, %v1152
        %v2745 = vmul.f32 %v1003, %v1153
        %v2746 = vmul.f32 %v1007, %v1154
        %v2747 = vmul.f32 %v1011, %v1155
        %v2748 = vmul.f32 %v1015, %v1156
        %v2749 = vmul.f32 %v1019, %v1157
        %v2750 = vmul.f32 %v1023, %v1158
        %v2751 = vmul.f32 %v1027, %v1159
        %v2752 = vmul.f32 %v1031, %v1160
        %v2753 = vmul.f32 %v1035, %v1161
        %v2754 = vmul.f32 %v1039, %v1162
        %v2755 = vmul.f32 %v1043, %v1163
        %v2756 = vmul.f32 %v1047, %v1164
        %v2757 = vmul.f32 %v1051, %v1165
        %v2758 = vmul.f32 %v1055, %v1166
        %v2759 = vmul.f32 %v1059, %v1167
        %v2760 = vmul.f32 %v1063, %v1168
        %v2761 = vmul.f32 %v1067, %v1169
        %v2762 = vmul.f32 %v1071, %v1170
        %v2763 = vmul.f32 %v1075, %v1171
        %2764 = vst [vmem:[#allocation2 + $0x300] sm:$0x7] %v2732
        %2765 = vst [vmem:[#allocation2 + $0x308] sm:$0x7] %v2733
        %2766 = vst [vmem:[#allocation2 + $0x310] sm:$0x7] %v2734
        %2767 = vst [vmem:[#allocation2 + $0x318] sm:$0x7] %v2735
        %2768 = vst [vmem:[#allocation2 + $0x320] sm:$0x7] %v2736
        %2769 = vst [vmem:[#allocation2 + $0x328] sm:$0x7] %v2737
        %2770 = vst [vmem:[#allocation2 + $0x330] sm:$0x7] %v2738
        %2771 = vst [vmem:[#allocation2 + $0x338] sm:$0x7] %v2739
        %2772 = vst [vmem:[#allocation2 + $0x340] sm:$0x7] %v2740
        %2773 = vst [vmem:[#allocation2 + $0x348] sm:$0x7] %v2741
        %2774 = vst [vmem:[#allocation2 + $0x350] sm:$0x7] %v2742
        %2775 = vst [vmem:[#allocation2 + $0x358] sm:$0x7] %v2743
        %2776 = vst [vmem:[#allocation2 + $0x360] sm:$0x7] %v2744
        %2777 = vst [vmem:[#allocation2 + $0x368] sm:$0x7] %v2745
        %2778 = vst [vmem:[#allocation2 + $0x370] sm:$0x7] %v2746
        %2779 = vst [vmem:[#allocation2 + $0x378] sm:$0x7] %v2747
        %2780 = vst [vmem:[#allocation2 + $0x380] sm:$0x7] %v2748
        %2781 = vst [vmem:[#allocation2 + $0x388] sm:$0x7] %v2749
        %2782 = vst [vmem:[#allocation2 + $0x390] sm:$0x7] %v2750
        %2783 = vst [vmem:[#allocation2 + $0x398] sm:$0x7] %v2751
        %2784 = vst [vmem:[#allocation2 + $0x3a0] sm:$0x7] %v2752
        %2785 = vst [vmem:[#allocation2 + $0x3a8] sm:$0x7] %v2753
        %2786 = vst [vmem:[#allocation2 + $0x3b0] sm:$0x7] %v2754
        %2787 = vst [vmem:[#allocation2 + $0x3b8] sm:$0x7] %v2755
        %2788 = vst [vmem:[#allocation2 + $0x3c0] sm:$0x7] %v2756
        %2789 = vst [vmem:[#allocation2 + $0x3c8] sm:$0x7] %v2757
        %2790 = vst [vmem:[#allocation2 + $0x3d0] sm:$0x7] %v2758
        %2791 = vst [vmem:[#allocation2 + $0x3d8] sm:$0x7] %v2759
        %2792 = vst [vmem:[#allocation2 + $0x3e0] sm:$0x7] %v2760
        %2793 = vst [vmem:[#allocation2 + $0x3e8] sm:$0x7] %v2761
        %2794 = vst [vmem:[#allocation2 + $0x3f0] sm:$0x7] %v2762
        %2795 = vst [vmem:[#allocation2 + $0x3f8] sm:$0x7] %v2763
        %v2796 = vmul.f32 %v951, %v1556
        %v2797 = vmul.f32 %v955, %v1557
        %v2798 = vmul.f32 %v959, %v1558
        %v2799 = vmul.f32 %v963, %v1559
        %v2800 = vmul.f32 %v967, %v1560
        %v2801 = vmul.f32 %v971, %v1561
        %v2802 = vmul.f32 %v975, %v1562
        %v2803 = vmul.f32 %v979, %v1563
        %v2804 = vmul.f32 %v983, %v1564
        %v2805 = vmul.f32 %v987, %v1565
        %v2806 = vmul.f32 %v991, %v1566
        %v2807 = vmul.f32 %v995, %v1567
        %v2808 = vmul.f32 %v999, %v1568
        %v2809 = vmul.f32 %v1003, %v1569
        %v2810 = vmul.f32 %v1007, %v1570
        %v2811 = vmul.f32 %v1011, %v1571
        %v2812 = vmul.f32 %v1015, %v1572
        %v2813 = vmul.f32 %v1019, %v1573
        %v2814 = vmul.f32 %v1023, %v1574
        %v2815 = vmul.f32 %v1027, %v1575
        %v2816 = vmul.f32 %v1031, %v1576
        %v2817 = vmul.f32 %v1035, %v1577
        %v2818 = vmul.f32 %v1039, %v1578
        %v2819 = vmul.f32 %v1043, %v1579
        %v2820 = vmul.f32 %v1047, %v1580
        %v2821 = vmul.f32 %v1051, %v1581
        %v2822 = vmul.f32 %v1055, %v1582
        %v2823 = vmul.f32 %v1059, %v1583
        %v2824 = vmul.f32 %v1063, %v1584
        %v2825 = vmul.f32 %v1067, %v1585
        %v2826 = vmul.f32 %v1071, %v1586
        %v2827 = vmul.f32 %v1075, %v1587
        %v2860 = vrot.slane %v2796, 5
        %v2861 = vrot.slane %v2797, 5
        %v2862 = vrot.slane %v2798, 5
        %v2863 = vrot.slane %v2799, 5
        %v2864 = vrot.slane %v2800, 5
        %v2865 = vrot.slane %v2801, 5
        %v2866 = vrot.slane %v2802, 5
        %v2867 = vrot.slane %v2803, 5
        %v2868 = vrot.slane %v2804, 5
        %v2869 = vrot.slane %v2805, 5
        %v2870 = vrot.slane %v2806, 5
        %v2871 = vrot.slane %v2807, 5
        %v2872 = vrot.slane %v2808, 5
        %v2873 = vrot.slane %v2809, 5
        %v2874 = vrot.slane %v2810, 5
        %v2875 = vrot.slane %v2811, 5
        %v2876 = vrot.slane %v2812, 5
        %v2877 = vrot.slane %v2813, 5
        %v2878 = vrot.slane %v2814, 5
        %v2879 = vrot.slane %v2815, 5
        %v2880 = vrot.slane %v2816, 5
        %v2881 = vrot.slane %v2817, 5
        %v2882 = vrot.slane %v2818, 5
        %v2883 = vrot.slane %v2819, 5
        %v2884 = vrot.slane %v2820, 5
        %v2885 = vrot.slane %v2821, 5
        %v2886 = vrot.slane %v2822, 5
        %v2887 = vrot.slane %v2823, 5
        %v2888 = vrot.slane %v2824, 5
        %v2889 = vrot.slane %v2825, 5
        %v2890 = vrot.slane %v2826, 5
        %v2891 = vrot.slane %v2827, 5
        %2924 = vst [vmem:[#allocation2 + $0x300] sm:$0x18] %v2860
        %2925 = vst [vmem:[#allocation2 + $0x308] sm:$0x18] %v2861
        %2926 = vst [vmem:[#allocation2 + $0x310] sm:$0x18] %v2862
        %2927 = vst [vmem:[#allocation2 + $0x318] sm:$0x18] %v2863
        %2928 = vst [vmem:[#allocation2 + $0x320] sm:$0x18] %v2864
        %2929 = vst [vmem:[#allocation2 + $0x328] sm:$0x18] %v2865
        %2930 = vst [vmem:[#allocation2 + $0x330] sm:$0x18] %v2866
        %2931 = vst [vmem:[#allocation2 + $0x338] sm:$0x18] %v2867
        %2932 = vst [vmem:[#allocation2 + $0x340] sm:$0x18] %v2868
        %2933 = vst [vmem:[#allocation2 + $0x348] sm:$0x18] %v2869
        %2934 = vst [vmem:[#allocation2 + $0x350] sm:$0x18] %v2870
        %2935 = vst [vmem:[#allocation2 + $0x358] sm:$0x18] %v2871
        %2936 = vst [vmem:[#allocation2 + $0x360] sm:$0x18] %v2872
        %2937 = vst [vmem:[#allocation2 + $0x368] sm:$0x18] %v2873
        %2938 = vst [vmem:[#allocation2 + $0x370] sm:$0x18] %v2874
        %2939 = vst [vmem:[#allocation2 + $0x378] sm:$0x18] %v2875
        %2940 = vst [vmem:[#allocation2 + $0x380] sm:$0x18] %v2876
        %2941 = vst [vmem:[#allocation2 + $0x388] sm:$0x18] %v2877
        %2942 = vst [vmem:[#allocation2 + $0x390] sm:$0x18] %v2878
        %2943 = vst [vmem:[#allocation2 + $0x398] sm:$0x18] %v2879
        %2944 = vst [vmem:[#allocation2 + $0x3a0] sm:$0x18] %v2880
        %2945 = vst [vmem:[#allocation2 + $0x3a8] sm:$0x18] %v2881
        %2946 = vst [vmem:[#allocation2 + $0x3b0] sm:$0x18] %v2882
        %2947 = vst [vmem:[#allocation2 + $0x3b8] sm:$0x18] %v2883
        %2948 = vst [vmem:[#allocation2 + $0x3c0] sm:$0x18] %v2884
        %2949 = vst [vmem:[#allocation2 + $0x3c8] sm:$0x18] %v2885
        %2950 = vst [vmem:[#allocation2 + $0x3d0] sm:$0x18] %v2886
        %2951 = vst [vmem:[#allocation2 + $0x3d8] sm:$0x18] %v2887
        %2952 = vst [vmem:[#allocation2 + $0x3e0] sm:$0x18] %v2888
        %2953 = vst [vmem:[#allocation2 + $0x3e8] sm:$0x18] %v2889
        %2954 = vst [vmem:[#allocation2 + $0x3f0] sm:$0x18] %v2890
        %2955 = vst [vmem:[#allocation2 + $0x3f8] sm:$0x18] %v2891
        %v2956 = vrot.slane %v1716, 6
        %v2957 = vrot.slane %v2956, 4
        %v2958 = vrot.slane %v1717, 6
        %v2959 = vrot.slane %v2958, 4
        %v2960 = vrot.slane %v1718, 6
        %v2961 = vrot.slane %v2960, 4
        %v2962 = vrot.slane %v1719, 6
        %v2963 = vrot.slane %v2962, 4
        %v2964 = vrot.slane %v1720, 6
        %v2965 = vrot.slane %v2964, 4
        %v2966 = vrot.slane %v1721, 6
        %v2967 = vrot.slane %v2966, 4
        %v2968 = vrot.slane %v1722, 6
        %v2969 = vrot.slane %v2968, 4
        %v2970 = vrot.slane %v1723, 6
        %v2971 = vrot.slane %v2970, 4
        %v2972 = vrot.slane %v1724, 6
        %v2973 = vrot.slane %v2972, 4
        %v2974 = vrot.slane %v1725, 6
        %v2975 = vrot.slane %v2974, 4
        %v2976 = vrot.slane %v1726, 6
        %v2977 = vrot.slane %v2976, 4
        %v2978 = vrot.slane %v1727, 6
        %v2979 = vrot.slane %v2978, 4
        %v2980 = vrot.slane %v1728, 6
        %v2981 = vrot.slane %v2980, 4
        %v2982 = vrot.slane %v1729, 6
        %v2983 = vrot.slane %v2982, 4
        %v2984 = vrot.slane %v1730, 6
        %v2985 = vrot.slane %v2984, 4
        %v2986 = vrot.slane %v1731, 6
        %v2987 = vrot.slane %v2986, 4
        %v3004 = vmul.f32 %v244, %v2957
        %v3005 = vmul.f32 %v245, %v2959
        %v3006 = vmul.f32 %v246, %v2961
        %v3007 = vmul.f32 %v247, %v2963
        %v3008 = vmul.f32 %v248, %v2965
        %v3009 = vmul.f32 %v249, %v2967
        %v3010 = vmul.f32 %v250, %v2969
        %v3011 = vmul.f32 %v251, %v2971
        %v3012 = vmul.f32 %v252, %v2973
        %v3013 = vmul.f32 %v253, %v2975
        %v3014 = vmul.f32 %v254, %v2977
        %v3015 = vmul.f32 %v255, %v2979
        %v3016 = vmul.f32 %v256, %v2981
        %v3017 = vmul.f32 %v257, %v2983
        %v3018 = vmul.f32 %v258, %v2985
        %v3019 = vmul.f32 %v259, %v2987
        %v3037 = vunpack.c.l.s4 1966171168
        %v3038 = vunpack.c.0.s8 %v3037
        %v3039 = vlaneseq
        %v3040 = vshrl.u32 %v3039, 7
        %v3041 = vsub.s32 %v3038, %v3040
        %v3042 = vrot.slane %v3004, %v3041
        %v3044 = vunpack.c.l.s4 1966171168
        %v3045 = vunpack.c.0.s8 %v3044
        %v3046 = vlaneseq
        %v3047 = vshrl.u32 %v3046, 7
        %v3048 = vsub.s32 %v3045, %v3047
        %v3049 = vrot.slane %v3005, %v3048
        %v3051 = vunpack.c.l.s4 1966171168
        %v3052 = vunpack.c.0.s8 %v3051
        %v3053 = vlaneseq
        %v3054 = vshrl.u32 %v3053, 7
        %v3055 = vsub.s32 %v3052, %v3054
        %v3056 = vrot.slane %v3006, %v3055
        %v3058 = vunpack.c.l.s4 1966171168
        %v3059 = vunpack.c.0.s8 %v3058
        %v3060 = vlaneseq
        %v3061 = vshrl.u32 %v3060, 7
        %v3062 = vsub.s32 %v3059, %v3061
        %v3063 = vrot.slane %v3007, %v3062
        %v3064 = vcombine.high %v3042, %v3049
        %v3065 = vcombine.high %v3056, %v3063
        %v3067 = vunpack.c.l.s4 1966171168
        %v3068 = vunpack.c.0.s8 %v3067
        %v3069 = vlaneseq
        %v3070 = vshrl.u32 %v3069, 7
        %v3071 = vsub.s32 %v3068, %v3070
        %v3072 = vrot.slane %v3064, %v3071
        %v3074 = vunpack.c.l.s4 1966171168
        %v3075 = vunpack.c.0.s8 %v3074
        %v3076 = vlaneseq
        %v3077 = vshrl.u32 %v3076, 7
        %v3078 = vsub.s32 %v3075, %v3077
        %v3079 = vrot.slane %v3065, %v3078
        %v3080 = vcombine.low %v3072, %v3079
        %v3082 = vunpack.c.l.s4 1966171168
        %v3083 = vunpack.c.0.s8 %v3082
        %v3084 = vlaneseq
        %v3085 = vshrl.u32 %v3084, 7
        %v3086 = vsub.s32 %v3083, %v3085
        %v3087 = vrot.slane %v3008, %v3086
        %v3089 = vunpack.c.l.s4 1966171168
        %v3090 = vunpack.c.0.s8 %v3089
        %v3091 = vlaneseq
        %v3092 = vshrl.u32 %v3091, 7
        %v3093 = vsub.s32 %v3090, %v3092
        %v3094 = vrot.slane %v3009, %v3093
        %v3096 = vunpack.c.l.s4 1966171168
        %v3097 = vunpack.c.0.s8 %v3096
        %v3098 = vlaneseq
        %v3099 = vshrl.u32 %v3098, 7
        %v3100 = vsub.s32 %v3097, %v3099
        %v3101 = vrot.slane %v3010, %v3100
        %v3103 = vunpack.c.l.s4 1966171168
        %v3104 = vunpack.c.0.s8 %v3103
        %v3105 = vlaneseq
        %v3106 = vshrl.u32 %v3105, 7
        %v3107 = vsub.s32 %v3104, %v3106
        %v3108 = vrot.slane %v3011, %v3107
        %v3109 = vcombine.high %v3087, %v3094
        %v3110 = vcombine.high %v3101, %v3108
        %v3112 = vunpack.c.l.s4 1966171168
        %v3113 = vunpack.c.0.s8 %v3112
        %v3114 = vlaneseq
        %v3115 = vshrl.u32 %v3114, 7
        %v3116 = vsub.s32 %v3113, %v3115
        %v3117 = vrot.slane %v3109, %v3116
        %v3119 = vunpack.c.l.s4 1966171168
        %v3120 = vunpack.c.0.s8 %v3119
        %v3121 = vlaneseq
        %v3122 = vshrl.u32 %v3121, 7
        %v3123 = vsub.s32 %v3120, %v3122
        %v3124 = vrot.slane %v3110, %v3123
        %v3125 = vcombine.low %v3117, %v3124
        %v3127 = vunpack.c.l.s4 1966171168
        %v3128 = vunpack.c.0.s8 %v3127
        %v3129 = vlaneseq
        %v3130 = vshrl.u32 %v3129, 7
        %v3131 = vsub.s32 %v3128, %v3130
        %v3132 = vrot.slane %v3012, %v3131
        %v3134 = vunpack.c.l.s4 1966171168
        %v3135 = vunpack.c.0.s8 %v3134
        %v3136 = vlaneseq
        %v3137 = vshrl.u32 %v3136, 7
        %v3138 = vsub.s32 %v3135, %v3137
        %v3139 = vrot.slane %v3013, %v3138
        %v3141 = vunpack.c.l.s4 1966171168
        %v3142 = vunpack.c.0.s8 %v3141
        %v3143 = vlaneseq
        %v3144 = vshrl.u32 %v3143, 7
        %v3145 = vsub.s32 %v3142, %v3144
        %v3146 = vrot.slane %v3014, %v3145
        %v3148 = vunpack.c.l.s4 1966171168
        %v3149 = vunpack.c.0.s8 %v3148
        %v3150 = vlaneseq
        %v3151 = vshrl.u32 %v3150, 7
        %v3152 = vsub.s32 %v3149, %v3151
        %v3153 = vrot.slane %v3015, %v3152
        %v3154 = vcombine.high %v3132, %v3139
        %v3155 = vcombine.high %v3146, %v3153
        %v3157 = vunpack.c.l.s4 1966171168
        %v3158 = vunpack.c.0.s8 %v3157
        %v3159 = vlaneseq
        %v3160 = vshrl.u32 %v3159, 7
        %v3161 = vsub.s32 %v3158, %v3160
        %v3162 = vrot.slane %v3154, %v3161
        %v3164 = vunpack.c.l.s4 1966171168
        %v3165 = vunpack.c.0.s8 %v3164
        %v3166 = vlaneseq
        %v3167 = vshrl.u32 %v3166, 7
        %v3168 = vsub.s32 %v3165, %v3167
        %v3169 = vrot.slane %v3155, %v3168
        %v3170 = vcombine.low %v3162, %v3169
        %v3172 = vunpack.c.l.s4 1966171168
        %v3173 = vunpack.c.0.s8 %v3172
        %v3174 = vlaneseq
        %v3175 = vshrl.u32 %v3174, 7
        %v3176 = vsub.s32 %v3173, %v3175
        %v3177 = vrot.slane %v3016, %v3176
        %v3179 = vunpack.c.l.s4 1966171168
        %v3180 = vunpack.c.0.s8 %v3179
        %v3181 = vlaneseq
        %v3182 = vshrl.u32 %v3181, 7
        %v3183 = vsub.s32 %v3180, %v3182
        %v3184 = vrot.slane %v3017, %v3183
        %v3186 = vunpack.c.l.s4 1966171168
        %v3187 = vunpack.c.0.s8 %v3186
        %v3188 = vlaneseq
        %v3189 = vshrl.u32 %v3188, 7
        %v3190 = vsub.s32 %v3187, %v3189
        %v3191 = vrot.slane %v3018, %v3190
        %v3193 = vunpack.c.l.s4 1966171168
        %v3194 = vunpack.c.0.s8 %v3193
        %v3195 = vlaneseq
        %v3196 = vshrl.u32 %v3195, 7
        %v3197 = vsub.s32 %v3194, %v3196
        %v3198 = vrot.slane %v3019, %v3197
        %v3199 = vcombine.high %v3177, %v3184
        %v3200 = vcombine.high %v3191, %v3198
        %v3202 = vunpack.c.l.s4 1966171168
        %v3203 = vunpack.c.0.s8 %v3202
        %v3204 = vlaneseq
        %v3205 = vshrl.u32 %v3204, 7
        %v3206 = vsub.s32 %v3203, %v3205
        %v3207 = vrot.slane %v3199, %v3206
        %v3209 = vunpack.c.l.s4 1966171168
        %v3210 = vunpack.c.0.s8 %v3209
        %v3211 = vlaneseq
        %v3212 = vshrl.u32 %v3211, 7
        %v3213 = vsub.s32 %v3210, %v3212
        %v3214 = vrot.slane %v3200, %v3213
        %v3215 = vcombine.low %v3207, %v3214
        %s3220 = scalar_lea.vmem [#allocation2], 773
        %3221 = vst [vmem:[%s3220] ss:$8 sm:$0xf] %v3080
        %3222 = vst [vmem:[%s3220] ss:$8 sm:$0xf0] %v3080
        %s3223 = scalar_lea.vmem [#allocation2], 837
        %3224 = vst [vmem:[%s3223] ss:$8 sm:$0xf] %v3125
        %3225 = vst [vmem:[%s3223] ss:$8 sm:$0xf0] %v3125
        %s3226 = scalar_lea.vmem [#allocation2], 901
        %3227 = vst [vmem:[%s3226] ss:$8 sm:$0xf] %v3170
        %3228 = vst [vmem:[%s3226] ss:$8 sm:$0xf0] %v3170
        %s3229 = scalar_lea.vmem [#allocation2], 965
        %3230 = vst [vmem:[%s3229] ss:$8 sm:$0xf] %v3215
        %3231 = vst [vmem:[%s3229] ss:$8 sm:$0xf0] %v3215
        %v3232 = vmul.f32 %v1367, %v1556
        %v3233 = vmul.f32 %v1371, %v1557
        %v3234 = vmul.f32 %v1375, %v1558
        %v3235 = vmul.f32 %v1379, %v1559
        %v3236 = vmul.f32 %v1383, %v1560
        %v3237 = vmul.f32 %v1387, %v1561
        %v3238 = vmul.f32 %v1391, %v1562
        %v3239 = vmul.f32 %v1395, %v1563
        %v3240 = vmul.f32 %v1399, %v1564
        %v3241 = vmul.f32 %v1403, %v1565
        %v3242 = vmul.f32 %v1407, %v1566
        %v3243 = vmul.f32 %v1411, %v1567
        %v3244 = vmul.f32 %v1415, %v1568
        %v3245 = vmul.f32 %v1419, %v1569
        %v3246 = vmul.f32 %v1423, %v1570
        %v3247 = vmul.f32 %v1427, %v1571
        %v3248 = vmul.f32 %v1431, %v1572
        %v3249 = vmul.f32 %v1435, %v1573
        %v3250 = vmul.f32 %v1439, %v1574
        %v3251 = vmul.f32 %v1443, %v1575
        %v3252 = vmul.f32 %v1447, %v1576
        %v3253 = vmul.f32 %v1451, %v1577
        %v3254 = vmul.f32 %v1455, %v1578
        %v3255 = vmul.f32 %v1459, %v1579
        %v3256 = vmul.f32 %v1463, %v1580
        %v3257 = vmul.f32 %v1467, %v1581
        %v3258 = vmul.f32 %v1471, %v1582
        %v3259 = vmul.f32 %v1475, %v1583
        %v3260 = vmul.f32 %v1479, %v1584
        %v3261 = vmul.f32 %v1483, %v1585
        %v3262 = vmul.f32 %v1487, %v1586
        %v3263 = vmul.f32 %v1491, %v1587
        %v3296 = vrot.slane %v3232, 2
        %v3297 = vrot.slane %v3233, 2
        %v3298 = vrot.slane %v3234, 2
        %v3299 = vrot.slane %v3235, 2
        %v3300 = vrot.slane %v3236, 2
        %v3301 = vrot.slane %v3237, 2
        %v3302 = vrot.slane %v3238, 2
        %v3303 = vrot.slane %v3239, 2
        %v3304 = vrot.slane %v3240, 2
        %v3305 = vrot.slane %v3241, 2
        %v3306 = vrot.slane %v3242, 2
        %v3307 = vrot.slane %v3243, 2
        %v3308 = vrot.slane %v3244, 2
        %v3309 = vrot.slane %v3245, 2
        %v3310 = vrot.slane %v3246, 2
        %v3311 = vrot.slane %v3247, 2
        %v3312 = vrot.slane %v3248, 2
        %v3313 = vrot.slane %v3249, 2
        %v3314 = vrot.slane %v3250, 2
        %v3315 = vrot.slane %v3251, 2
        %v3316 = vrot.slane %v3252, 2
        %v3317 = vrot.slane %v3253, 2
        %v3318 = vrot.slane %v3254, 2
        %v3319 = vrot.slane %v3255, 2
        %v3320 = vrot.slane %v3256, 2
        %v3321 = vrot.slane %v3257, 2
        %v3322 = vrot.slane %v3258, 2
        %v3323 = vrot.slane %v3259, 2
        %v3324 = vrot.slane %v3260, 2
        %v3325 = vrot.slane %v3261, 2
        %v3326 = vrot.slane %v3262, 2
        %v3327 = vrot.slane %v3263, 2
        %3360 = vst [vmem:[#allocation2 + $0x300] sm:$0xc0] %v3296
        %3361 = vst [vmem:[#allocation2 + $0x308] sm:$0xc0] %v3297
        %3362 = vst [vmem:[#allocation2 + $0x310] sm:$0xc0] %v3298
        %3363 = vst [vmem:[#allocation2 + $0x318] sm:$0xc0] %v3299
        %3364 = vst [vmem:[#allocation2 + $0x320] sm:$0xc0] %v3300
        %3365 = vst [vmem:[#allocation2 + $0x328] sm:$0xc0] %v3301
        %3366 = vst [vmem:[#allocation2 + $0x330] sm:$0xc0] %v3302
        %3367 = vst [vmem:[#allocation2 + $0x338] sm:$0xc0] %v3303
        %3368 = vst [vmem:[#allocation2 + $0x340] sm:$0xc0] %v3304
        %3369 = vst [vmem:[#allocation2 + $0x348] sm:$0xc0] %v3305
        %3370 = vst [vmem:[#allocation2 + $0x350] sm:$0xc0] %v3306
        %3371 = vst [vmem:[#allocation2 + $0x358] sm:$0xc0] %v3307
        %3372 = vst [vmem:[#allocation2 + $0x360] sm:$0xc0] %v3308
        %3373 = vst [vmem:[#allocation2 + $0x368] sm:$0xc0] %v3309
        %3374 = vst [vmem:[#allocation2 + $0x370] sm:$0xc0] %v3310
        %3375 = vst [vmem:[#allocation2 + $0x378] sm:$0xc0] %v3311
        %3376 = vst [vmem:[#allocation2 + $0x380] sm:$0xc0] %v3312
        %3377 = vst [vmem:[#allocation2 + $0x388] sm:$0xc0] %v3313
        %3378 = vst [vmem:[#allocation2 + $0x390] sm:$0xc0] %v3314
        %3379 = vst [vmem:[#allocation2 + $0x398] sm:$0xc0] %v3315
        %3380 = vst [vmem:[#allocation2 + $0x3a0] sm:$0xc0] %v3316
        %3381 = vst [vmem:[#allocation2 + $0x3a8] sm:$0xc0] %v3317
        %3382 = vst [vmem:[#allocation2 + $0x3b0] sm:$0xc0] %v3318
        %3383 = vst [vmem:[#allocation2 + $0x3b8] sm:$0xc0] %v3319
        %3384 = vst [vmem:[#allocation2 + $0x3c0] sm:$0xc0] %v3320
        %3385 = vst [vmem:[#allocation2 + $0x3c8] sm:$0xc0] %v3321
        %3386 = vst [vmem:[#allocation2 + $0x3d0] sm:$0xc0] %v3322
        %3387 = vst [vmem:[#allocation2 + $0x3d8] sm:$0xc0] %v3323
        %3388 = vst [vmem:[#allocation2 + $0x3e0] sm:$0xc0] %v3324
        %3389 = vst [vmem:[#allocation2 + $0x3e8] sm:$0xc0] %v3325
        %3390 = vst [vmem:[#allocation2 + $0x3f0] sm:$0xc0] %v3326
        %3391 = vst [vmem:[#allocation2 + $0x3f8] sm:$0xc0] %v3327
        %v3392 = vrot.slane %v1716, 5
        %v3393 = vrot.slane %v3392, 4
        %v3394 = vrot.slane %v1717, 5
        %v3395 = vrot.slane %v3394, 4
        %v3396 = vrot.slane %v1718, 5
        %v3397 = vrot.slane %v3396, 4
        %v3398 = vrot.slane %v1719, 5
        %v3399 = vrot.slane %v3398, 4
        %v3400 = vrot.slane %v1720, 5
        %v3401 = vrot.slane %v3400, 4
        %v3402 = vrot.slane %v1721, 5
        %v3403 = vrot.slane %v3402, 4
        %v3404 = vrot.slane %v1722, 5
        %v3405 = vrot.slane %v3404, 4
        %v3406 = vrot.slane %v1723, 5
        %v3407 = vrot.slane %v3406, 4
        %v3408 = vrot.slane %v1724, 5
        %v3409 = vrot.slane %v3408, 4
        %v3410 = vrot.slane %v1725, 5
        %v3411 = vrot.slane %v3410, 4
        %v3412 = vrot.slane %v1726, 5
        %v3413 = vrot.slane %v3412, 4
        %v3414 = vrot.slane %v1727, 5
        %v3415 = vrot.slane %v3414, 4
        %v3416 = vrot.slane %v1728, 5
        %v3417 = vrot.slane %v3416, 4
        %v3418 = vrot.slane %v1729, 5
        %v3419 = vrot.slane %v3418, 4
        %v3420 = vrot.slane %v1730, 5
        %v3421 = vrot.slane %v3420, 4
        %v3422 = vrot.slane %v1731, 5
        %v3423 = vrot.slane %v3422, 4
        %v3440 = vmul.f32 %v244, %v3393
        %v3441 = vmul.f32 %v245, %v3395
        %v3442 = vmul.f32 %v246, %v3397
        %v3443 = vmul.f32 %v247, %v3399
        %v3444 = vmul.f32 %v248, %v3401
        %v3445 = vmul.f32 %v249, %v3403
        %v3446 = vmul.f32 %v250, %v3405
        %v3447 = vmul.f32 %v251, %v3407
        %v3448 = vmul.f32 %v252, %v3409
        %v3449 = vmul.f32 %v253, %v3411
        %v3450 = vmul.f32 %v254, %v3413
        %v3451 = vmul.f32 %v255, %v3415
        %v3452 = vmul.f32 %v256, %v3417
        %v3453 = vmul.f32 %v257, %v3419
        %v3454 = vmul.f32 %v258, %v3421
        %v3455 = vmul.f32 %v259, %v3423
        %v3473 = vunpack.c.l.s4 1966171168
        %v3474 = vunpack.c.0.s8 %v3473
        %v3475 = vlaneseq
        %v3476 = vshrl.u32 %v3475, 7
        %v3477 = vsub.s32 %v3474, %v3476
        %v3478 = vrot.slane %v3440, %v3477
        %v3480 = vunpack.c.l.s4 1966171168
        %v3481 = vunpack.c.0.s8 %v3480
        %v3482 = vlaneseq
        %v3483 = vshrl.u32 %v3482, 7
        %v3484 = vsub.s32 %v3481, %v3483
        %v3485 = vrot.slane %v3441, %v3484
        %v3487 = vunpack.c.l.s4 1966171168
        %v3488 = vunpack.c.0.s8 %v3487
        %v3489 = vlaneseq
        %v3490 = vshrl.u32 %v3489, 7
        %v3491 = vsub.s32 %v3488, %v3490
        %v3492 = vrot.slane %v3442, %v3491
        %v3494 = vunpack.c.l.s4 1966171168
        %v3495 = vunpack.c.0.s8 %v3494
        %v3496 = vlaneseq
        %v3497 = vshrl.u32 %v3496, 7
        %v3498 = vsub.s32 %v3495, %v3497
        %v3499 = vrot.slane %v3443, %v3498
        %v3500 = vcombine.low %v3478, %v3485
        %v3501 = vcombine.low %v3492, %v3499
        %v3503 = vunpack.c.l.s4 1966171168
        %v3504 = vunpack.c.0.s8 %v3503
        %v3505 = vlaneseq
        %v3506 = vshrl.u32 %v3505, 7
        %v3507 = vsub.s32 %v3504, %v3506
        %v3508 = vrot.slane %v3500, %v3507
        %v3510 = vunpack.c.l.s4 1966171168
        %v3511 = vunpack.c.0.s8 %v3510
        %v3512 = vlaneseq
        %v3513 = vshrl.u32 %v3512, 7
        %v3514 = vsub.s32 %v3511, %v3513
        %v3515 = vrot.slane %v3501, %v3514
        %v3516 = vcombine.high %v3508, %v3515
        %v3518 = vunpack.c.l.s4 1966171168
        %v3519 = vunpack.c.0.s8 %v3518
        %v3520 = vlaneseq
        %v3521 = vshrl.u32 %v3520, 7
        %v3522 = vsub.s32 %v3519, %v3521
        %v3523 = vrot.slane %v3444, %v3522
        %v3525 = vunpack.c.l.s4 1966171168
        %v3526 = vunpack.c.0.s8 %v3525
        %v3527 = vlaneseq
        %v3528 = vshrl.u32 %v3527, 7
        %v3529 = vsub.s32 %v3526, %v3528
        %v3530 = vrot.slane %v3445, %v3529
        %v3532 = vunpack.c.l.s4 1966171168
        %v3533 = vunpack.c.0.s8 %v3532
        %v3534 = vlaneseq
        %v3535 = vshrl.u32 %v3534, 7
        %v3536 = vsub.s32 %v3533, %v3535
        %v3537 = vrot.slane %v3446, %v3536
        %v3539 = vunpack.c.l.s4 1966171168
        %v3540 = vunpack.c.0.s8 %v3539
        %v3541 = vlaneseq
        %v3542 = vshrl.u32 %v3541, 7
        %v3543 = vsub.s32 %v3540, %v3542
        %v3544 = vrot.slane %v3447, %v3543
        %v3545 = vcombine.low %v3523, %v3530
        %v3546 = vcombine.low %v3537, %v3544
        %v3548 = vunpack.c.l.s4 1966171168
        %v3549 = vunpack.c.0.s8 %v3548
        %v3550 = vlaneseq
        %v3551 = vshrl.u32 %v3550, 7
        %v3552 = vsub.s32 %v3549, %v3551
        %v3553 = vrot.slane %v3545, %v3552
        %v3555 = vunpack.c.l.s4 1966171168
        %v3556 = vunpack.c.0.s8 %v3555
        %v3557 = vlaneseq
        %v3558 = vshrl.u32 %v3557, 7
        %v3559 = vsub.s32 %v3556, %v3558
        %v3560 = vrot.slane %v3546, %v3559
        %v3561 = vcombine.high %v3553, %v3560
        %v3563 = vunpack.c.l.s4 1966171168
        %v3564 = vunpack.c.0.s8 %v3563
        %v3565 = vlaneseq
        %v3566 = vshrl.u32 %v3565, 7
        %v3567 = vsub.s32 %v3564, %v3566
        %v3568 = vrot.slane %v3448, %v3567
        %v3570 = vunpack.c.l.s4 1966171168
        %v3571 = vunpack.c.0.s8 %v3570
        %v3572 = vlaneseq
        %v3573 = vshrl.u32 %v3572, 7
        %v3574 = vsub.s32 %v3571, %v3573
        %v3575 = vrot.slane %v3449, %v3574
        %v3577 = vunpack.c.l.s4 1966171168
        %v3578 = vunpack.c.0.s8 %v3577
        %v3579 = vlaneseq
        %v3580 = vshrl.u32 %v3579, 7
        %v3581 = vsub.s32 %v3578, %v3580
        %v3582 = vrot.slane %v3450, %v3581
        %v3584 = vunpack.c.l.s4 1966171168
        %v3585 = vunpack.c.0.s8 %v3584
        %v3586 = vlaneseq
        %v3587 = vshrl.u32 %v3586, 7
        %v3588 = vsub.s32 %v3585, %v3587
        %v3589 = vrot.slane %v3451, %v3588
        %v3590 = vcombine.low %v3568, %v3575
        %v3591 = vcombine.low %v3582, %v3589
        %v3593 = vunpack.c.l.s4 1966171168
        %v3594 = vunpack.c.0.s8 %v3593
        %v3595 = vlaneseq
        %v3596 = vshrl.u32 %v3595, 7
        %v3597 = vsub.s32 %v3594, %v3596
        %v3598 = vrot.slane %v3590, %v3597
        %v3600 = vunpack.c.l.s4 1966171168
        %v3601 = vunpack.c.0.s8 %v3600
        %v3602 = vlaneseq
        %v3603 = vshrl.u32 %v3602, 7
        %v3604 = vsub.s32 %v3601, %v3603
        %v3605 = vrot.slane %v3591, %v3604
        %v3606 = vcombine.high %v3598, %v3605
        %v3608 = vunpack.c.l.s4 1966171168
        %v3609 = vunpack.c.0.s8 %v3608
        %v3610 = vlaneseq
        %v3611 = vshrl.u32 %v3610, 7
        %v3612 = vsub.s32 %v3609, %v3611
        %v3613 = vrot.slane %v3452, %v3612
        %v3615 = vunpack.c.l.s4 1966171168
        %v3616 = vunpack.c.0.s8 %v3615
        %v3617 = vlaneseq
        %v3618 = vshrl.u32 %v3617, 7
        %v3619 = vsub.s32 %v3616, %v3618
        %v3620 = vrot.slane %v3453, %v3619
        %v3622 = vunpack.c.l.s4 1966171168
        %v3623 = vunpack.c.0.s8 %v3622
        %v3624 = vlaneseq
        %v3625 = vshrl.u32 %v3624, 7
        %v3626 = vsub.s32 %v3623, %v3625
        %v3627 = vrot.slane %v3454, %v3626
        %v3629 = vunpack.c.l.s4 1966171168
        %v3630 = vunpack.c.0.s8 %v3629
        %v3631 = vlaneseq
        %v3632 = vshrl.u32 %v3631, 7
        %v3633 = vsub.s32 %v3630, %v3632
        %v3634 = vrot.slane %v3455, %v3633
        %v3635 = vcombine.low %v3613, %v3620
        %v3636 = vcombine.low %v3627, %v3634
        %v3638 = vunpack.c.l.s4 1966171168
        %v3639 = vunpack.c.0.s8 %v3638
        %v3640 = vlaneseq
        %v3641 = vshrl.u32 %v3640, 7
        %v3642 = vsub.s32 %v3639, %v3641
        %v3643 = vrot.slane %v3635, %v3642
        %v3645 = vunpack.c.l.s4 1966171168
        %v3646 = vunpack.c.0.s8 %v3645
        %v3647 = vlaneseq
        %v3648 = vshrl.u32 %v3647, 7
        %v3649 = vsub.s32 %v3646, %v3648
        %v3650 = vrot.slane %v3636, %v3649
        %v3651 = vcombine.high %v3643, %v3650
        %s3656 = scalar_lea.vmem [#allocation2], 1024
        %3657 = vst [vmem:[%s3656] ss:$8 sm:$0xf] %v3516
        %3658 = vst [vmem:[%s3656] ss:$8 sm:$0xf0] %v3516
        %s3659 = scalar_lea.vmem [#allocation2], 1088
        %3660 = vst [vmem:[%s3659] ss:$8 sm:$0xf] %v3561
        %3661 = vst [vmem:[%s3659] ss:$8 sm:$0xf0] %v3561
        %s3662 = scalar_lea.vmem [#allocation2], 1152
        %3663 = vst [vmem:[%s3662] ss:$8 sm:$0xf] %v3606
        %3664 = vst [vmem:[%s3662] ss:$8 sm:$0xf0] %v3606
        %s3665 = scalar_lea.vmem [#allocation2], 1216
        %3666 = vst [vmem:[%s3665] ss:$8 sm:$0xf] %v3651
        %3667 = vst [vmem:[%s3665] ss:$8 sm:$0xf0] %v3651
        %v3668 = vmul.f32 %v244, %v1716
        %v3669 = vmul.f32 %v245, %v1717
        %v3670 = vmul.f32 %v246, %v1718
        %v3671 = vmul.f32 %v247, %v1719
        %v3672 = vmul.f32 %v248, %v1720
        %v3673 = vmul.f32 %v249, %v1721
        %v3674 = vmul.f32 %v250, %v1722
        %v3675 = vmul.f32 %v251, %v1723
        %v3676 = vmul.f32 %v252, %v1724
        %v3677 = vmul.f32 %v253, %v1725
        %v3678 = vmul.f32 %v254, %v1726
        %v3679 = vmul.f32 %v255, %v1727
        %v3680 = vmul.f32 %v256, %v1728
        %v3681 = vmul.f32 %v257, %v1729
        %v3682 = vmul.f32 %v258, %v1730
        %v3683 = vmul.f32 %v259, %v1731
        %v3701 = vunpack.c.l.s4 1966171168
        %v3702 = vunpack.c.0.s8 %v3701
        %v3703 = vlaneseq
        %v3704 = vshrl.u32 %v3703, 7
        %v3705 = vsub.s32 %v3702, %v3704
        %v3706 = vrot.slane %v3668, %v3705
        %v3708 = vunpack.c.l.s4 1966171168
        %v3709 = vunpack.c.0.s8 %v3708
        %v3710 = vlaneseq
        %v3711 = vshrl.u32 %v3710, 7
        %v3712 = vsub.s32 %v3709, %v3711
        %v3713 = vrot.slane %v3669, %v3712
        %v3715 = vunpack.c.l.s4 1966171168
        %v3716 = vunpack.c.0.s8 %v3715
        %v3717 = vlaneseq
        %v3718 = vshrl.u32 %v3717, 7
        %v3719 = vsub.s32 %v3716, %v3718
        %v3720 = vrot.slane %v3670, %v3719
        %v3722 = vunpack.c.l.s4 1966171168
        %v3723 = vunpack.c.0.s8 %v3722
        %v3724 = vlaneseq
        %v3725 = vshrl.u32 %v3724, 7
        %v3726 = vsub.s32 %v3723, %v3725
        %v3727 = vrot.slane %v3671, %v3726
        %v3728 = vcombine.high %v3706, %v3713
        %v3729 = vcombine.high %v3720, %v3727
        %v3731 = vunpack.c.l.s4 1966171168
        %v3732 = vunpack.c.0.s8 %v3731
        %v3733 = vlaneseq
        %v3734 = vshrl.u32 %v3733, 7
        %v3735 = vsub.s32 %v3732, %v3734
        %v3736 = vrot.slane %v3728, %v3735
        %v3738 = vunpack.c.l.s4 1966171168
        %v3739 = vunpack.c.0.s8 %v3738
        %v3740 = vlaneseq
        %v3741 = vshrl.u32 %v3740, 7
        %v3742 = vsub.s32 %v3739, %v3741
        %v3743 = vrot.slane %v3729, %v3742
        %v3744 = vcombine.high %v3736, %v3743
        %v3746 = vunpack.c.l.s4 1966171168
        %v3747 = vunpack.c.0.s8 %v3746
        %v3748 = vlaneseq
        %v3749 = vshrl.u32 %v3748, 7
        %v3750 = vsub.s32 %v3747, %v3749
        %v3751 = vrot.slane %v3672, %v3750
        %v3753 = vunpack.c.l.s4 1966171168
        %v3754 = vunpack.c.0.s8 %v3753
        %v3755 = vlaneseq
        %v3756 = vshrl.u32 %v3755, 7
        %v3757 = vsub.s32 %v3754, %v3756
        %v3758 = vrot.slane %v3673, %v3757
        %v3760 = vunpack.c.l.s4 1966171168
        %v3761 = vunpack.c.0.s8 %v3760
        %v3762 = vlaneseq
        %v3763 = vshrl.u32 %v3762, 7
        %v3764 = vsub.s32 %v3761, %v3763
        %v3765 = vrot.slane %v3674, %v3764
        %v3767 = vunpack.c.l.s4 1966171168
        %v3768 = vunpack.c.0.s8 %v3767
        %v3769 = vlaneseq
        %v3770 = vshrl.u32 %v3769, 7
        %v3771 = vsub.s32 %v3768, %v3770
        %v3772 = vrot.slane %v3675, %v3771
        %v3773 = vcombine.high %v3751, %v3758
        %v3774 = vcombine.high %v3765, %v3772
        %v3776 = vunpack.c.l.s4 1966171168
        %v3777 = vunpack.c.0.s8 %v3776
        %v3778 = vlaneseq
        %v3779 = vshrl.u32 %v3778, 7
        %v3780 = vsub.s32 %v3777, %v3779
        %v3781 = vrot.slane %v3773, %v3780
        %v3783 = vunpack.c.l.s4 1966171168
        %v3784 = vunpack.c.0.s8 %v3783
        %v3785 = vlaneseq
        %v3786 = vshrl.u32 %v3785, 7
        %v3787 = vsub.s32 %v3784, %v3786
        %v3788 = vrot.slane %v3774, %v3787
        %v3789 = vcombine.high %v3781, %v3788
        %v3791 = vunpack.c.l.s4 1966171168
        %v3792 = vunpack.c.0.s8 %v3791
        %v3793 = vlaneseq
        %v3794 = vshrl.u32 %v3793, 7
        %v3795 = vsub.s32 %v3792, %v3794
        %v3796 = vrot.slane %v3676, %v3795
        %v3798 = vunpack.c.l.s4 1966171168
        %v3799 = vunpack.c.0.s8 %v3798
        %v3800 = vlaneseq
        %v3801 = vshrl.u32 %v3800, 7
        %v3802 = vsub.s32 %v3799, %v3801
        %v3803 = vrot.slane %v3677, %v3802
        %v3805 = vunpack.c.l.s4 1966171168
        %v3806 = vunpack.c.0.s8 %v3805
        %v3807 = vlaneseq
        %v3808 = vshrl.u32 %v3807, 7
        %v3809 = vsub.s32 %v3806, %v3808
        %v3810 = vrot.slane %v3678, %v3809
        %v3812 = vunpack.c.l.s4 1966171168
        %v3813 = vunpack.c.0.s8 %v3812
        %v3814 = vlaneseq
        %v3815 = vshrl.u32 %v3814, 7
        %v3816 = vsub.s32 %v3813, %v3815
        %v3817 = vrot.slane %v3679, %v3816
        %v3818 = vcombine.high %v3796, %v3803
        %v3819 = vcombine.high %v3810, %v3817
        %v3821 = vunpack.c.l.s4 1966171168
        %v3822 = vunpack.c.0.s8 %v3821
        %v3823 = vlaneseq
        %v3824 = vshrl.u32 %v3823, 7
        %v3825 = vsub.s32 %v3822, %v3824
        %v3826 = vrot.slane %v3818, %v3825
        %v3828 = vunpack.c.l.s4 1966171168
        %v3829 = vunpack.c.0.s8 %v3828
        %v3830 = vlaneseq
        %v3831 = vshrl.u32 %v3830, 7
        %v3832 = vsub.s32 %v3829, %v3831
        %v3833 = vrot.slane %v3819, %v3832
        %v3834 = vcombine.high %v3826, %v3833
        %v3836 = vunpack.c.l.s4 1966171168
        %v3837 = vunpack.c.0.s8 %v3836
        %v3838 = vlaneseq
        %v3839 = vshrl.u32 %v3838, 7
        %v3840 = vsub.s32 %v3837, %v3839
        %v3841 = vrot.slane %v3680, %v3840
        %v3843 = vunpack.c.l.s4 1966171168
        %v3844 = vunpack.c.0.s8 %v3843
        %v3845 = vlaneseq
        %v3846 = vshrl.u32 %v3845, 7
        %v3847 = vsub.s32 %v3844, %v3846
        %v3848 = vrot.slane %v3681, %v3847
        %v3850 = vunpack.c.l.s4 1966171168
        %v3851 = vunpack.c.0.s8 %v3850
        %v3852 = vlaneseq
        %v3853 = vshrl.u32 %v3852, 7
        %v3854 = vsub.s32 %v3851, %v3853
        %v3855 = vrot.slane %v3682, %v3854
        %v3857 = vunpack.c.l.s4 1966171168
        %v3858 = vunpack.c.0.s8 %v3857
        %v3859 = vlaneseq
        %v3860 = vshrl.u32 %v3859, 7
        %v3861 = vsub.s32 %v3858, %v3860
        %v3862 = vrot.slane %v3683, %v3861
        %v3863 = vcombine.high %v3841, %v3848
        %v3864 = vcombine.high %v3855, %v3862
        %v3866 = vunpack.c.l.s4 1966171168
        %v3867 = vunpack.c.0.s8 %v3866
        %v3868 = vlaneseq
        %v3869 = vshrl.u32 %v3868, 7
        %v3870 = vsub.s32 %v3867, %v3869
        %v3871 = vrot.slane %v3863, %v3870
        %v3873 = vunpack.c.l.s4 1966171168
        %v3874 = vunpack.c.0.s8 %v3873
        %v3875 = vlaneseq
        %v3876 = vshrl.u32 %v3875, 7
        %v3877 = vsub.s32 %v3874, %v3876
        %v3878 = vrot.slane %v3864, %v3877
        %v3879 = vcombine.high %v3871, %v3878
        %s3884 = scalar_lea.vmem [#allocation2], 1025
        %3885 = vst [vmem:[%s3884] ss:$8 sm:$0xf] %v3744
        %3886 = vst [vmem:[%s3884] ss:$8 sm:$0xf0] %v3744
        %s3887 = scalar_lea.vmem [#allocation2], 1089
        %3888 = vst [vmem:[%s3887] ss:$8 sm:$0xf] %v3789
        %3889 = vst [vmem:[%s3887] ss:$8 sm:$0xf0] %v3789
        %s3890 = scalar_lea.vmem [#allocation2], 1153
        %3891 = vst [vmem:[%s3890] ss:$8 sm:$0xf] %v3834
        %3892 = vst [vmem:[%s3890] ss:$8 sm:$0xf0] %v3834
        %s3893 = scalar_lea.vmem [#allocation2], 1217
        %3894 = vst [vmem:[%s3893] ss:$8 sm:$0xf] %v3879
        %3895 = vst [vmem:[%s3893] ss:$8 sm:$0xf0] %v3879
        %3896 = vst [vmem:[#allocation2 + $0x400] sm:$0xfc] 0.0
        %3897 = vst [vmem:[#allocation2 + $0x408] sm:$0xfc] 0.0
        %3898 = vst [vmem:[#allocation2 + $0x410] sm:$0xfc] 0.0
        %3899 = vst [vmem:[#allocation2 + $0x418] sm:$0xfc] 0.0
        %3900 = vst [vmem:[#allocation2 + $0x420] sm:$0xfc] 0.0
        %3901 = vst [vmem:[#allocation2 + $0x428] sm:$0xfc] 0.0
        %3902 = vst [vmem:[#allocation2 + $0x430] sm:$0xfc] 0.0
        %3903 = vst [vmem:[#allocation2 + $0x438] sm:$0xfc] 0.0
        %3904 = vst [vmem:[#allocation2 + $0x440] sm:$0xfc] 0.0
        %3905 = vst [vmem:[#allocation2 + $0x448] sm:$0xfc] 0.0
        %3906 = vst [vmem:[#allocation2 + $0x450] sm:$0xfc] 0.0
        %3907 = vst [vmem:[#allocation2 + $0x458] sm:$0xfc] 0.0
        %3908 = vst [vmem:[#allocation2 + $0x460] sm:$0xfc] 0.0
        %3909 = vst [vmem:[#allocation2 + $0x468] sm:$0xfc] 0.0
        %3910 = vst [vmem:[#allocation2 + $0x470] sm:$0xfc] 0.0
        %3911 = vst [vmem:[#allocation2 + $0x478] sm:$0xfc] 0.0
        %3912 = vst [vmem:[#allocation2 + $0x480] sm:$0xfc] 0.0
        %3913 = vst [vmem:[#allocation2 + $0x488] sm:$0xfc] 0.0
        %3914 = vst [vmem:[#allocation2 + $0x490] sm:$0xfc] 0.0
        %3915 = vst [vmem:[#allocation2 + $0x498] sm:$0xfc] 0.0
        %3916 = vst [vmem:[#allocation2 + $0x4a0] sm:$0xfc] 0.0
        %3917 = vst [vmem:[#allocation2 + $0x4a8] sm:$0xfc] 0.0
        %3918 = vst [vmem:[#allocation2 + $0x4b0] sm:$0xfc] 0.0
        %3919 = vst [vmem:[#allocation2 + $0x4b8] sm:$0xfc] 0.0
        %3920 = vst [vmem:[#allocation2 + $0x4c0] sm:$0xfc] 0.0
        %3921 = vst [vmem:[#allocation2 + $0x4c8] sm:$0xfc] 0.0
        %3922 = vst [vmem:[#allocation2 + $0x4d0] sm:$0xfc] 0.0
        %3923 = vst [vmem:[#allocation2 + $0x4d8] sm:$0xfc] 0.0
        %3924 = vst [vmem:[#allocation2 + $0x4e0] sm:$0xfc] 0.0
        %3925 = vst [vmem:[#allocation2 + $0x4e8] sm:$0xfc] 0.0
        %3926 = vst [vmem:[#allocation2 + $0x4f0] sm:$0xfc] 0.0
        %3927 = vst [vmem:[#allocation2 + $0x4f8] sm:$0xfc] 0.0
        %v3928 = vld [vmem:[#allocation8] sm:$0xff]
        %v3929 = vld [vmem:[#allocation8 + $0x8] sm:$0xff]
        %v3930 = vld [vmem:[#allocation8 + $0x10] sm:$0xff]
        %v3931 = vld [vmem:[#allocation8 + $0x18] sm:$0xff]
        %v3932 = vld [vmem:[#allocation8 + $0x20] sm:$0xf]
        %v3933 = vld [vmem:[#allocation2] sm:$0xff]
        %v3934 = vld [vmem:[#allocation2 + $0x8] sm:$0xff]
        %v3935 = vld [vmem:[#allocation2 + $0x10] sm:$0xff]
        %v3936 = vld [vmem:[#allocation2 + $0x18] sm:$0xff]
        %v3937 = vld [vmem:[#allocation2 + $0x20] sm:$0xff]
        %v3938 = vld [vmem:[#allocation2 + $0x28] sm:$0xff]
        %v3939 = vld [vmem:[#allocation2 + $0x30] sm:$0xff]
        %v3940 = vld [vmem:[#allocation2 + $0x38] sm:$0xff]
        %v3941 = vld [vmem:[#allocation2 + $0x40] sm:$0xff]
        %v3942 = vld [vmem:[#allocation2 + $0x48] sm:$0xff]
        %v3943 = vld [vmem:[#allocation2 + $0x50] sm:$0xff]
        %v3944 = vld [vmem:[#allocation2 + $0x58] sm:$0xff]
        %v3945 = vld [vmem:[#allocation2 + $0x60] sm:$0xff]
        %v3946 = vld [vmem:[#allocation2 + $0x68] sm:$0xff]
        %v3947 = vld [vmem:[#allocation2 + $0x70] sm:$0xff]
        %v3948 = vld [vmem:[#allocation2 + $0x78] sm:$0xff]
        %v3949 = vld [vmem:[#allocation2 + $0x80] sm:$0xff]
        %v3950 = vld [vmem:[#allocation2 + $0x88] sm:$0xff]
        %v3951 = vld [vmem:[#allocation2 + $0x90] sm:$0xff]
        %v3952 = vld [vmem:[#allocation2 + $0x98] sm:$0xff]
        %v3953 = vld [vmem:[#allocation2 + $0xa0] sm:$0xff]
        %v3954 = vld [vmem:[#allocation2 + $0xa8] sm:$0xff]
        %v3955 = vld [vmem:[#allocation2 + $0xb0] sm:$0xff]
        %v3956 = vld [vmem:[#allocation2 + $0xb8] sm:$0xff]
        %v3957 = vld [vmem:[#allocation2 + $0xc0] sm:$0xff]
        %v3958 = vld [vmem:[#allocation2 + $0xc8] sm:$0xff]
        %v3959 = vld [vmem:[#allocation2 + $0xd0] sm:$0xff]
        %v3960 = vld [vmem:[#allocation2 + $0xd8] sm:$0xff]
        %v3961 = vld [vmem:[#allocation2 + $0xe0] sm:$0xff]
        %v3962 = vld [vmem:[#allocation2 + $0xe8] sm:$0xff]
        %v3963 = vld [vmem:[#allocation2 + $0xf0] sm:$0xff]
        %v3964 = vld [vmem:[#allocation2 + $0xf8] sm:$0xff]
        %v3965 = vld [vmem:[#allocation2 + $0x100] sm:$0xff]
        %v3966 = vld [vmem:[#allocation2 + $0x108] sm:$0xff]
        %v3967 = vld [vmem:[#allocation2 + $0x110] sm:$0xff]
        %v3968 = vld [vmem:[#allocation2 + $0x118] sm:$0xff]
        %v3969 = vld [vmem:[#allocation2 + $0x120] sm:$0xff]
        %v3970 = vld [vmem:[#allocation2 + $0x128] sm:$0xff]
        %v3971 = vld [vmem:[#allocation2 + $0x130] sm:$0xff]
        %v3972 = vld [vmem:[#allocation2 + $0x138] sm:$0xff]
        %v3973 = vld [vmem:[#allocation2 + $0x140] sm:$0xff]
        %v3974 = vld [vmem:[#allocation2 + $0x148] sm:$0xff]
        %v3975 = vld [vmem:[#allocation2 + $0x150] sm:$0xff]
        %v3976 = vld [vmem:[#allocation2 + $0x158] sm:$0xff]
        %v3977 = vld [vmem:[#allocation2 + $0x160] sm:$0xff]
        %v3978 = vld [vmem:[#allocation2 + $0x168] sm:$0xff]
        %v3979 = vld [vmem:[#allocation2 + $0x170] sm:$0xff]
        %v3980 = vld [vmem:[#allocation2 + $0x178] sm:$0xff]
        %v3981 = vld [vmem:[#allocation2 + $0x180] sm:$0xff]
        %v3982 = vld [vmem:[#allocation2 + $0x188] sm:$0xff]
        %v3983 = vld [vmem:[#allocation2 + $0x190] sm:$0xff]
        %v3984 = vld [vmem:[#allocation2 + $0x198] sm:$0xff]
        %v3985 = vld [vmem:[#allocation2 + $0x1a0] sm:$0xff]
        %v3986 = vld [vmem:[#allocation2 + $0x1a8] sm:$0xff]
        %v3987 = vld [vmem:[#allocation2 + $0x1b0] sm:$0xff]
        %v3988 = vld [vmem:[#allocation2 + $0x1b8] sm:$0xff]
        %v3989 = vld [vmem:[#allocation2 + $0x1c0] sm:$0xff]
        %v3990 = vld [vmem:[#allocation2 + $0x1c8] sm:$0xff]
        %v3991 = vld [vmem:[#allocation2 + $0x1d0] sm:$0xff]
        %v3992 = vld [vmem:[#allocation2 + $0x1d8] sm:$0xff]
        %v3993 = vld [vmem:[#allocation2 + $0x1e0] sm:$0xff]
        %v3994 = vld [vmem:[#allocation2 + $0x1e8] sm:$0xff]
        %v3995 = vld [vmem:[#allocation2 + $0x1f0] sm:$0xff]
        %v3996 = vld [vmem:[#allocation2 + $0x1f8] sm:$0xff]
        %v3997 = vld [vmem:[#allocation2 + $0x200] sm:$0xff]
        %v3998 = vld [vmem:[#allocation2 + $0x208] sm:$0xff]
        %v3999 = vld [vmem:[#allocation2 + $0x210] sm:$0xff]
        %v4000 = vld [vmem:[#allocation2 + $0x218] sm:$0xff]
        %v4001 = vld [vmem:[#allocation2 + $0x220] sm:$0xff]
        %v4002 = vld [vmem:[#allocation2 + $0x228] sm:$0xff]
        %v4003 = vld [vmem:[#allocation2 + $0x230] sm:$0xff]
        %v4004 = vld [vmem:[#allocation2 + $0x238] sm:$0xff]
        %v4005 = vld [vmem:[#allocation2 + $0x240] sm:$0xff]
        %v4006 = vld [vmem:[#allocation2 + $0x248] sm:$0xff]
        %v4007 = vld [vmem:[#allocation2 + $0x250] sm:$0xff]
        %v4008 = vld [vmem:[#allocation2 + $0x258] sm:$0xff]
        %v4009 = vld [vmem:[#allocation2 + $0x260] sm:$0xff]
        %v4010 = vld [vmem:[#allocation2 + $0x268] sm:$0xff]
        %v4011 = vld [vmem:[#allocation2 + $0x270] sm:$0xff]
        %v4012 = vld [vmem:[#allocation2 + $0x278] sm:$0xff]
        %v4013 = vld [vmem:[#allocation2 + $0x280] sm:$0xff]
        %v4014 = vld [vmem:[#allocation2 + $0x288] sm:$0xff]
        %v4015 = vld [vmem:[#allocation2 + $0x290] sm:$0xff]
        %v4016 = vld [vmem:[#allocation2 + $0x298] sm:$0xff]
        %v4017 = vld [vmem:[#allocation2 + $0x2a0] sm:$0xff]
        %v4018 = vld [vmem:[#allocation2 + $0x2a8] sm:$0xff]
        %v4019 = vld [vmem:[#allocation2 + $0x2b0] sm:$0xff]
        %v4020 = vld [vmem:[#allocation2 + $0x2b8] sm:$0xff]
        %v4021 = vld [vmem:[#allocation2 + $0x2c0] sm:$0xff]
        %v4022 = vld [vmem:[#allocation2 + $0x2c8] sm:$0xff]
        %v4023 = vld [vmem:[#allocation2 + $0x2d0] sm:$0xff]
        %v4024 = vld [vmem:[#allocation2 + $0x2d8] sm:$0xff]
        %v4025 = vld [vmem:[#allocation2 + $0x2e0] sm:$0xff]
        %v4026 = vld [vmem:[#allocation2 + $0x2e8] sm:$0xff]
        %v4027 = vld [vmem:[#allocation2 + $0x2f0] sm:$0xff]
        %v4028 = vld [vmem:[#allocation2 + $0x2f8] sm:$0xff]
        %v4029 = vld [vmem:[#allocation2 + $0x300] sm:$0xff]
        %v4030 = vld [vmem:[#allocation2 + $0x308] sm:$0xff]
        %v4031 = vld [vmem:[#allocation2 + $0x310] sm:$0xff]
        %v4032 = vld [vmem:[#allocation2 + $0x318] sm:$0xff]
        %v4033 = vld [vmem:[#allocation2 + $0x320] sm:$0xff]
        %v4034 = vld [vmem:[#allocation2 + $0x328] sm:$0xff]
        %v4035 = vld [vmem:[#allocation2 + $0x330] sm:$0xff]
        %v4036 = vld [vmem:[#allocation2 + $0x338] sm:$0xff]
        %v4037 = vld [vmem:[#allocation2 + $0x340] sm:$0xff]
        %v4038 = vld [vmem:[#allocation2 + $0x348] sm:$0xff]
        %v4039 = vld [vmem:[#allocation2 + $0x350] sm:$0xff]
        %v4040 = vld [vmem:[#allocation2 + $0x358] sm:$0xff]
        %v4041 = vld [vmem:[#allocation2 + $0x360] sm:$0xff]
        %v4042 = vld [vmem:[#allocation2 + $0x368] sm:$0xff]
        %v4043 = vld [vmem:[#allocation2 + $0x370] sm:$0xff]
        %v4044 = vld [vmem:[#allocation2 + $0x378] sm:$0xff]
        %v4045 = vld [vmem:[#allocation2 + $0x380] sm:$0xff]
        %v4046 = vld [vmem:[#allocation2 + $0x388] sm:$0xff]
        %v4047 = vld [vmem:[#allocation2 + $0x390] sm:$0xff]
        %v4048 = vld [vmem:[#allocation2 + $0x398] sm:$0xff]
        %v4049 = vld [vmem:[#allocation2 + $0x3a0] sm:$0xff]
        %v4050 = vld [vmem:[#allocation2 + $0x3a8] sm:$0xff]
        %v4051 = vld [vmem:[#allocation2 + $0x3b0] sm:$0xff]
        %v4052 = vld [vmem:[#allocation2 + $0x3b8] sm:$0xff]
        %v4053 = vld [vmem:[#allocation2 + $0x3c0] sm:$0xff]
        %v4054 = vld [vmem:[#allocation2 + $0x3c8] sm:$0xff]
        %v4055 = vld [vmem:[#allocation2 + $0x3d0] sm:$0xff]
        %v4056 = vld [vmem:[#allocation2 + $0x3d8] sm:$0xff]
        %v4057 = vld [vmem:[#allocation2 + $0x3e0] sm:$0xff]
        %v4058 = vld [vmem:[#allocation2 + $0x3e8] sm:$0xff]
        %v4059 = vld [vmem:[#allocation2 + $0x3f0] sm:$0xff]
        %v4060 = vld [vmem:[#allocation2 + $0x3f8] sm:$0xff]
        %v4061 = vld [vmem:[#allocation2 + $0x400] sm:$0xff]
        %v4062 = vld [vmem:[#allocation2 + $0x408] sm:$0xff]
        %v4063 = vld [vmem:[#allocation2 + $0x410] sm:$0xff]
        %v4064 = vld [vmem:[#allocation2 + $0x418] sm:$0xff]
        %v4065 = vld [vmem:[#allocation2 + $0x420] sm:$0xff]
        %v4066 = vld [vmem:[#allocation2 + $0x428] sm:$0xff]
        %v4067 = vld [vmem:[#allocation2 + $0x430] sm:$0xff]
        %v4068 = vld [vmem:[#allocation2 + $0x438] sm:$0xff]
        %v4069 = vld [vmem:[#allocation2 + $0x440] sm:$0xff]
        %v4070 = vld [vmem:[#allocation2 + $0x448] sm:$0xff]
        %v4071 = vld [vmem:[#allocation2 + $0x450] sm:$0xff]
        %v4072 = vld [vmem:[#allocation2 + $0x458] sm:$0xff]
        %v4073 = vld [vmem:[#allocation2 + $0x460] sm:$0xff]
        %v4074 = vld [vmem:[#allocation2 + $0x468] sm:$0xff]
        %v4075 = vld [vmem:[#allocation2 + $0x470] sm:$0xff]
        %v4076 = vld [vmem:[#allocation2 + $0x478] sm:$0xff]
        %v4077 = vld [vmem:[#allocation2 + $0x480] sm:$0xff]
        %v4078 = vld [vmem:[#allocation2 + $0x488] sm:$0xff]
        %v4079 = vld [vmem:[#allocation2 + $0x490] sm:$0xff]
        %v4080 = vld [vmem:[#allocation2 + $0x498] sm:$0xff]
        %v4081 = vld [vmem:[#allocation2 + $0x4a0] sm:$0xff]
        %v4082 = vld [vmem:[#allocation2 + $0x4a8] sm:$0xff]
        %v4083 = vld [vmem:[#allocation2 + $0x4b0] sm:$0xff]
        %v4084 = vld [vmem:[#allocation2 + $0x4b8] sm:$0xff]
        %v4085 = vld [vmem:[#allocation2 + $0x4c0] sm:$0xff]
        %v4086 = vld [vmem:[#allocation2 + $0x4c8] sm:$0xff]
        %v4087 = vld [vmem:[#allocation2 + $0x4d0] sm:$0xff]
        %v4088 = vld [vmem:[#allocation2 + $0x4d8] sm:$0xff]
        %v4089 = vld [vmem:[#allocation2 + $0x4e0] sm:$0xff]
        %v4090 = vld [vmem:[#allocation2 + $0x4e8] sm:$0xff]
        %v4091 = vld [vmem:[#allocation2 + $0x4f0] sm:$0xff]
        %v4092 = vld [vmem:[#allocation2 + $0x4f8] sm:$0xff]
        %vm4093 = vcmask 326656
        %v4095 = vsel %vm4093, %v3928, 0
        %v4098 = vsel %vm4093, %v3929, 0
        %v4101 = vsel %vm4093, %v3930, 0
        %v4104 = vsel %vm4093, %v3931, 0
        %v4107 = vsel %vm4093, %v3932, 0
        %4109 = vmatprep.subr.mxu0 %v3934
        %4110 = vmatpush1.msra.mxu0 %v3933
        %4111 = vmatprep.subr.mxu0 %v3966
        %4112 = vmatpush1.msra.mxu0 %v3965
        %4113 = vmatprep.subr.mxu0 %v3998
        %4114 = vmatpush1.msra.mxu0 %v3997
        %4115 = vmatprep.subr.mxu0 %v4030
        %4116 = vmatpush1.msra.mxu0 %v4029
        %4117 = vmatprep.subr.mxu0 %v4062
        %4118 = vmatpush1.msra.mxu0 %v4061
        %4119 = vmatprep.subr.mxu0 0.0
        %4120 = vmatpush1.msra.mxu0 0.0
        %4121 = vmatprep.subr.mxu0 0.0
        %4122 = vmatpush1.msra.mxu0 0.0
        %4123 = vmatprep.subr.mxu0 0.0
        %4124 = vmatpush1.msra.mxu0 0.0
        %4125 = vmatprep.subr.mxu0 0.0
        %4126 = vmatpush1.msra.mxu0 0.0
        %4127 = vmatprep.subr.mxu0 0.0
        %4128 = vmatpush1.msra.mxu0 0.0
        %4129 = vmatprep.subr.mxu0 0.0
        %4130 = vmatpush1.msra.mxu0 0.0
        %4131 = vmatprep.subr.mxu0 0.0
        %4132 = vmatpush1.msra.mxu0 0.0
        %4133 = vmatprep.subr.mxu0 0.0
        %4134 = vmatpush1.msra.mxu0 0.0
        %4135 = vmatprep.subr.mxu0 0.0
        %4136 = vmatpush1.msra.mxu0 0.0
        %4137 = vmatprep.subr.mxu0 0.0
        %4138 = vmatpush1.msra.mxu0 0.0
        %4139 = vmatprep.subr.mxu0 0.0
        %4140 = vmatpush1.msra.mxu0 0.0
        %4141 = vmatprep.subr.mxu0 0.0
        %4142 = vmatpush1.msra.mxu0 0.0
        %4143 = vmatprep.subr.mxu0 0.0
        %4144 = vmatpush1.msra.mxu0 0.0
        %4145 = vmatprep.subr.mxu0 0.0
        %4146 = vmatpush1.msra.mxu0 0.0
        %4147 = vmatprep.subr.mxu0 0.0
        %4148 = vmatpush1.msra.mxu0 0.0
        %4149 = vmatprep.subr.mxu0 0.0
        %4150 = vmatpush1.msra.mxu0 0.0
        %4151 = vmatprep.subr.mxu0 0.0
        %4152 = vmatpush1.msra.mxu0 0.0
        %4153 = vmatprep.subr.mxu0 0.0
        %4154 = vmatpush1.msra.mxu0 0.0
        %4155 = vmatprep.subr.mxu0 0.0
        %4156 = vmatpush1.msra.mxu0 0.0
        %4157 = vmatprep.subr.mxu0 0.0
        %4158 = vmatpush1.msra.mxu0 0.0
        %4159 = vmatprep.subr.mxu0 0.0
        %4160 = vmatpush1.msra.mxu0 0.0
        %4161 = vmatprep.subr.mxu0 0.0
        %4162 = vmatpush1.msra.mxu0 0.0
        %4163 = vmatprep.subr.mxu0 0.0
        %4164 = vmatpush1.msra.mxu0 0.0
        %4165 = vmatprep.subr.mxu0 0.0
        %4166 = vmatpush1.msra.mxu0 0.0
        %4167 = vmatprep.subr.mxu0 0.0
        %4168 = vmatpush1.msra.mxu0 0.0
        %4169 = vmatprep.subr.mxu0 0.0
        %4170 = vmatpush1.msra.mxu0 0.0
        %4171 = vmatprep.subr.mxu0 0.0
        %4172 = vmatpush1.msra.mxu0 0.0
        %4173 = vmatprep.mubr.f32.mxu0 0.0
        %4174 = vmatmul.mubr.f32.gmra.mrb[0].mxu0 %v4095
        %v4175 = vpop.f32.mrb[0].mxu0
        %v4176 = vadd.f32 0.0, %v4175
        %v4177 = vpop.f32.mrb[0].mxu0
        %v4178 = vadd.f32 0.0, %v4177
        %4179 = vmatprep.mubr.f32.mxu0 0.0
        %4180 = vmatmul.mubr.f32.gmra.mrb[0].mxu0 %v4098
        %v4181 = vpop.f32.mrb[0].mxu0
        %v4182 = vadd.f32 0.0, %v4181
        %v4183 = vpop.f32.mrb[0].mxu0
        %v4184 = vadd.f32 0.0, %v4183
        %4185 = vmatprep.mubr.f32.mxu0 0.0
        %4186 = vmatmul.mubr.f32.gmra.mrb[0].mxu0 %v4101
        %v4187 = vpop.f32.mrb[0].mxu0
        %v4188 = vadd.f32 0.0, %v4187
        %v4189 = vpop.f32.mrb[0].mxu0
        %v4190 = vadd.f32 0.0, %v4189
        %4191 = vmatprep.mubr.f32.mxu0 0.0
        %4192 = vmatmul.mubr.f32.gmra.mrb[0].mxu0 %v4104
        %v4193 = vpop.f32.mrb[0].mxu0
        %v4194 = vadd.f32 0.0, %v4193
        %v4195 = vpop.f32.mrb[0].mxu0
        %v4196 = vadd.f32 0.0, %v4195
        %4197 = vmatprep.mubr.f32.mxu0 0.0
        %4198 = vmatmul.mubr.f32.gmra.mrb[0].mxu0 %v4107
        %v4199 = vpop.f32.mrb[0].mxu0
        %v4200 = vadd.f32 0.0, %v4199
        %v4201 = vpop.f32.mrb[0].mxu0
        %v4202 = vadd.f32 0.0, %v4201
        %4203 = vdwg.mxu0
        %4204 = vmatprep.subr.mxu0 %v3936
        %4205 = vmatpush1.msra.mxu0 %v3935
        %4206 = vmatprep.subr.mxu0 %v3968
        %4207 = vmatpush1.msra.mxu0 %v3967
        %4208 = vmatprep.subr.mxu0 %v4000
        %4209 = vmatpush1.msra.mxu0 %v3999
        %4210 = vmatprep.subr.mxu0 %v4032
        %4211 = vmatpush1.msra.mxu0 %v4031
        %4212 = vmatprep.subr.mxu0 %v4064
        %4213 = vmatpush1.msra.mxu0 %v4063
        %4214 = vmatprep.subr.mxu0 0.0
        %4215 = vmatpush1.msra.mxu0 0.0
        %4216 = vmatprep.subr.mxu0 0.0
        %4217 = vmatpush1.msra.mxu0 0.0
        %4218 = vmatprep.subr.mxu0 0.0
        %4219 = vmatpush1.msra.mxu0 0.0
        %4220 = vmatprep.subr.mxu0 0.0
        %4221 = vmatpush1.msra.mxu0 0.0
        %4222 = vmatprep.subr.mxu0 0.0
        %4223 = vmatpush1.msra.mxu0 0.0
        %4224 = vmatprep.subr.mxu0 0.0
        %4225 = vmatpush1.msra.mxu0 0.0
        %4226 = vmatprep.subr.mxu0 0.0
        %4227 = vmatpush1.msra.mxu0 0.0
        %4228 = vmatprep.subr.mxu0 0.0
        %4229 = vmatpush1.msra.mxu0 0.0
        %4230 = vmatprep.subr.mxu0 0.0
        %4231 = vmatpush1.msra.mxu0 0.0
        %4232 = vmatprep.subr.mxu0 0.0
        %4233 = vmatpush1.msra.mxu0 0.0
        %4234 = vmatprep.subr.mxu0 0.0
        %4235 = vmatpush1.msra.mxu0 0.0
        %4236 = vmatprep.subr.mxu0 0.0
        %4237 = vmatpush1.msra.mxu0 0.0
        %4238 = vmatprep.subr.mxu0 0.0
        %4239 = vmatpush1.msra.mxu0 0.0
        %4240 = vmatprep.subr.mxu0 0.0
        %4241 = vmatpush1.msra.mxu0 0.0
        %4242 = vmatprep.subr.mxu0 0.0
        %4243 = vmatpush1.msra.mxu0 0.0
        %4244 = vmatprep.subr.mxu0 0.0
        %4245 = vmatpush1.msra.mxu0 0.0
        %4246 = vmatprep.subr.mxu0 0.0
        %4247 = vmatpush1.msra.mxu0 0.0
        %4248 = vmatprep.subr.mxu0 0.0
        %4249 = vmatpush1.msra.mxu0 0.0
        %4250 = vmatprep.subr.mxu0 0.0
        %4251 = vmatpush1.msra.mxu0 0.0
        %4252 = vmatprep.subr.mxu0 0.0
        %4253 = vmatpush1.msra.mxu0 0.0
        %4254 = vmatprep.subr.mxu0 0.0
        %4255 = vmatpush1.msra.mxu0 0.0
        %4256 = vmatprep.subr.mxu0 0.0
        %4257 = vmatpush1.msra.mxu0 0.0
        %4258 = vmatprep.subr.mxu0 0.0
        %4259 = vmatpush1.msra.mxu0 0.0
        %4260 = vmatprep.subr.mxu0 0.0
        %4261 = vmatpush1.msra.mxu0 0.0
        %4262 = vmatprep.subr.mxu0 0.0
        %4263 = vmatpush1.msra.mxu0 0.0
        %4264 = vmatprep.subr.mxu0 0.0
        %4265 = vmatpush1.msra.mxu0 0.0
        %4266 = vmatprep.subr.mxu0 0.0
        %4267 = vmatpush1.msra.mxu0 0.0
        %4268 = vmatprep.mubr.f32.mxu0 0.0
        %4269 = vmatmul.mubr.f32.gmra.mrb[0].mxu0 %v4095
        %v4270 = vpop.f32.mrb[0].mxu0
        %v4271 = vadd.f32 0.0, %v4270
        %v4272 = vpop.f32.mrb[0].mxu0
        %v4273 = vadd.f32 0.0, %v4272
        %4274 = vmatprep.mubr.f32.mxu0 0.0
        %4275 = vmatmul.mubr.f32.gmra.mrb[0].mxu0 %v4098
        %v4276 = vpop.f32.mrb[0].mxu0
        %v4277 = vadd.f32 0.0, %v4276
        %v4278 = vpop.f32.mrb[0].mxu0
        %v4279 = vadd.f32 0.0, %v4278
        %4280 = vmatprep.mubr.f32.mxu0 0.0
        %4281 = vmatmul.mubr.f32.gmra.mrb[0].mxu0 %v4101
        %v4282 = vpop.f32.mrb[0].mxu0
        %v4283 = vadd.f32 0.0, %v4282
        %v4284 = vpop.f32.mrb[0].mxu0
        %v4285 = vadd.f32 0.0, %v4284
        %4286 = vmatprep.mubr.f32.mxu0 0.0
        %4287 = vmatmul.mubr.f32.gmra.mrb[0].mxu0 %v4104
        %v4288 = vpop.f32.mrb[0].mxu0
        %v4289 = vadd.f32 0.0, %v4288
        %v4290 = vpop.f32.mrb[0].mxu0
        %v4291 = vadd.f32 0.0, %v4290
        %4292 = vmatprep.mubr.f32.mxu0 0.0
        %4293 = vmatmul.mubr.f32.gmra.mrb[0].mxu0 %v4107
        %v4294 = vpop.f32.mrb[0].mxu0
        %v4295 = vadd.f32 0.0, %v4294
        %v4296 = vpop.f32.mrb[0].mxu0
        %v4297 = vadd.f32 0.0, %v4296
        %4298 = vdwg.mxu0
        %4299 = vmatprep.subr.mxu0 %v3938
        %4300 = vmatpush1.msra.mxu0 %v3937
        %4301 = vmatprep.subr.mxu0 %v3970
        %4302 = vmatpush1.msra.mxu0 %v3969
        %4303 = vmatprep.subr.mxu0 %v4002
        %4304 = vmatpush1.msra.mxu0 %v4001
        %4305 = vmatprep.subr.mxu0 %v4034
        %4306 = vmatpush1.msra.mxu0 %v4033
        %4307 = vmatprep.subr.mxu0 %v4066
        %4308 = vmatpush1.msra.mxu0 %v4065
        %4309 = vmatprep.subr.mxu0 0.0
        %4310 = vmatpush1.msra.mxu0 0.0
        %4311 = vmatprep.subr.mxu0 0.0
        %4312 = vmatpush1.msra.mxu0 0.0
        %4313 = vmatprep.subr.mxu0 0.0
        %4314 = vmatpush1.msra.mxu0 0.0
        %4315 = vmatprep.subr.mxu0 0.0
        %4316 = vmatpush1.msra.mxu0 0.0
        %4317 = vmatprep.subr.mxu0 0.0
        %4318 = vmatpush1.msra.mxu0 0.0
        %4319 = vmatprep.subr.mxu0 0.0
        %4320 = vmatpush1.msra.mxu0 0.0
        %4321 = vmatprep.subr.mxu0 0.0
        %4322 = vmatpush1.msra.mxu0 0.0
        %4323 = vmatprep.subr.mxu0 0.0
        %4324 = vmatpush1.msra.mxu0 0.0
        %4325 = vmatprep.subr.mxu0 0.0
        %4326 = vmatpush1.msra.mxu0 0.0
        %4327 = vmatprep.subr.mxu0 0.0
        %4328 = vmatpush1.msra.mxu0 0.0
        %4329 = vmatprep.subr.mxu0 0.0
        %4330 = vmatpush1.msra.mxu0 0.0
        %4331 = vmatprep.subr.mxu0 0.0
        %4332 = vmatpush1.msra.mxu0 0.0
        %4333 = vmatprep.subr.mxu0 0.0
        %4334 = vmatpush1.msra.mxu0 0.0
        %4335 = vmatprep.subr.mxu0 0.0
        %4336 = vmatpush1.msra.mxu0 0.0
        %4337 = vmatprep.subr.mxu0 0.0
        %4338 = vmatpush1.msra.mxu0 0.0
        %4339 = vmatprep.subr.mxu0 0.0
        %4340 = vmatpush1.msra.mxu0 0.0
        %4341 = vmatprep.subr.mxu0 0.0
        %4342 = vmatpush1.msra.mxu0 0.0
        %4343 = vmatprep.subr.mxu0 0.0
        %4344 = vmatpush1.msra.mxu0 0.0
        %4345 = vmatprep.subr.mxu0 0.0
        %4346 = vmatpush1.msra.mxu0 0.0
        %4347 = vmatprep.subr.mxu0 0.0
        %4348 = vmatpush1.msra.mxu0 0.0
        %4349 = vmatprep.subr.mxu0 0.0
        %4350 = vmatpush1.msra.mxu0 0.0
        %4351 = vmatprep.subr.mxu0 0.0
        %4352 = vmatpush1.msra.mxu0 0.0
        %4353 = vmatprep.subr.mxu0 0.0
        %4354 = vmatpush1.msra.mxu0 0.0
        %4355 = vmatprep.subr.mxu0 0.0
        %4356 = vmatpush1.msra.mxu0 0.0
        %4357 = vmatprep.subr.mxu0 0.0
        %4358 = vmatpush1.msra.mxu0 0.0
        %4359 = vmatprep.subr.mxu0 0.0
        %4360 = vmatpush1.msra.mxu0 0.0
        %4361 = vmatprep.subr.mxu0 0.0
        %4362 = vmatpush1.msra.mxu0 0.0
        %4363 = vmatprep.mubr.f32.mxu0 0.0
        %4364 = vmatmul.mubr.f32.gmra.mrb[0].mxu0 %v4095
        %v4365 = vpop.f32.mrb[0].mxu0
        %v4366 = vadd.f32 0.0, %v4365
        %v4367 = vpop.f32.mrb[0].mxu0
        %v4368 = vadd.f32 0.0, %v4367
        %4369 = vmatprep.mubr.f32.mxu0 0.0
        %4370 = vmatmul.mubr.f32.gmra.mrb[0].mxu0 %v4098
        %v4371 = vpop.f32.mrb[0].mxu0
        %v4372 = vadd.f32 0.0, %v4371
        %v4373 = vpop.f32.mrb[0].mxu0
        %v4374 = vadd.f32 0.0, %v4373
        %4375 = vmatprep.mubr.f32.mxu0 0.0
        %4376 = vmatmul.mubr.f32.gmra.mrb[0].mxu0 %v4101
        %v4377 = vpop.f32.mrb[0].mxu0
        %v4378 = vadd.f32 0.0, %v4377
        %v4379 = vpop.f32.mrb[0].mxu0
        %v4380 = vadd.f32 0.0, %v4379
        %4381 = vmatprep.mubr.f32.mxu0 0.0
        %4382 = vmatmul.mubr.f32.gmra.mrb[0].mxu0 %v4104
        %v4383 = vpop.f32.mrb[0].mxu0
        %v4384 = vadd.f32 0.0, %v4383
        %v4385 = vpop.f32.mrb[0].mxu0
        %v4386 = vadd.f32 0.0, %v4385
        %4387 = vmatprep.mubr.f32.mxu0 0.0
        %4388 = vmatmul.mubr.f32.gmra.mrb[0].mxu0 %v4107
        %v4389 = vpop.f32.mrb[0].mxu0
        %v4390 = vadd.f32 0.0, %v4389
        %v4391 = vpop.f32.mrb[0].mxu0
        %v4392 = vadd.f32 0.0, %v4391
        %4393 = vdwg.mxu0
        %4394 = vmatprep.subr.mxu0 %v3940
        %4395 = vmatpush1.msra.mxu0 %v3939
        %4396 = vmatprep.subr.mxu0 %v3972
        %4397 = vmatpush1.msra.mxu0 %v3971
        %4398 = vmatprep.subr.mxu0 %v4004
        %4399 = vmatpush1.msra.mxu0 %v4003
        %4400 = vmatprep.subr.mxu0 %v4036
        %4401 = vmatpush1.msra.mxu0 %v4035
        %4402 = vmatprep.subr.mxu0 %v4068
        %4403 = vmatpush1.msra.mxu0 %v4067
        %4404 = vmatprep.subr.mxu0 0.0
        %4405 = vmatpush1.msra.mxu0 0.0
        %4406 = vmatprep.subr.mxu0 0.0
        %4407 = vmatpush1.msra.mxu0 0.0
        %4408 = vmatprep.subr.mxu0 0.0
        %4409 = vmatpush1.msra.mxu0 0.0
        %4410 = vmatprep.subr.mxu0 0.0
        %4411 = vmatpush1.msra.mxu0 0.0
        %4412 = vmatprep.subr.mxu0 0.0
        %4413 = vmatpush1.msra.mxu0 0.0
        %4414 = vmatprep.subr.mxu0 0.0
        %4415 = vmatpush1.msra.mxu0 0.0
        %4416 = vmatprep.subr.mxu0 0.0
        %4417 = vmatpush1.msra.mxu0 0.0
        %4418 = vmatprep.subr.mxu0 0.0
        %4419 = vmatpush1.msra.mxu0 0.0
        %4420 = vmatprep.subr.mxu0 0.0
        %4421 = vmatpush1.msra.mxu0 0.0
        %4422 = vmatprep.subr.mxu0 0.0
        %4423 = vmatpush1.msra.mxu0 0.0
        %4424 = vmatprep.subr.mxu0 0.0
        %4425 = vmatpush1.msra.mxu0 0.0
        %4426 = vmatprep.subr.mxu0 0.0
        %4427 = vmatpush1.msra.mxu0 0.0
        %4428 = vmatprep.subr.mxu0 0.0
        %4429 = vmatpush1.msra.mxu0 0.0
        %4430 = vmatprep.subr.mxu0 0.0
        %4431 = vmatpush1.msra.mxu0 0.0
        %4432 = vmatprep.subr.mxu0 0.0
        %4433 = vmatpush1.msra.mxu0 0.0
        %4434 = vmatprep.subr.mxu0 0.0
        %4435 = vmatpush1.msra.mxu0 0.0
        %4436 = vmatprep.subr.mxu0 0.0
        %4437 = vmatpush1.msra.mxu0 0.0
        %4438 = vmatprep.subr.mxu0 0.0
        %4439 = vmatpush1.msra.mxu0 0.0
        %4440 = vmatprep.subr.mxu0 0.0
        %4441 = vmatpush1.msra.mxu0 0.0
        %4442 = vmatprep.subr.mxu0 0.0
        %4443 = vmatpush1.msra.mxu0 0.0
        %4444 = vmatprep.subr.mxu0 0.0
        %4445 = vmatpush1.msra.mxu0 0.0
        %4446 = vmatprep.subr.mxu0 0.0
        %4447 = vmatpush1.msra.mxu0 0.0
        %4448 = vmatprep.subr.mxu0 0.0
        %4449 = vmatpush1.msra.mxu0 0.0
        %4450 = vmatprep.subr.mxu0 0.0
        %4451 = vmatpush1.msra.mxu0 0.0
        %4452 = vmatprep.subr.mxu0 0.0
        %4453 = vmatpush1.msra.mxu0 0.0
        %4454 = vmatprep.subr.mxu0 0.0
        %4455 = vmatpush1.msra.mxu0 0.0
        %4456 = vmatprep.subr.mxu0 0.0
        %4457 = vmatpush1.msra.mxu0 0.0
        %4458 = vmatprep.mubr.f32.mxu0 0.0
        %4459 = vmatmul.mubr.f32.gmra.mrb[0].mxu0 %v4095
        %v4460 = vpop.f32.mrb[0].mxu0
        %v4461 = vadd.f32 0.0, %v4460
        %v4462 = vpop.f32.mrb[0].mxu0
        %v4463 = vadd.f32 0.0, %v4462
        %4464 = vmatprep.mubr.f32.mxu0 0.0
        %4465 = vmatmul.mubr.f32.gmra.mrb[0].mxu0 %v4098
        %v4466 = vpop.f32.mrb[0].mxu0
        %v4467 = vadd.f32 0.0, %v4466
        %v4468 = vpop.f32.mrb[0].mxu0
        %v4469 = vadd.f32 0.0, %v4468
        %4470 = vmatprep.mubr.f32.mxu0 0.0
        %4471 = vmatmul.mubr.f32.gmra.mrb[0].mxu0 %v4101
        %v4472 = vpop.f32.mrb[0].mxu0
        %v4473 = vadd.f32 0.0, %v4472
        %v4474 = vpop.f32.mrb[0].mxu0
        %v4475 = vadd.f32 0.0, %v4474
        %4476 = vmatprep.mubr.f32.mxu0 0.0
        %4477 = vmatmul.mubr.f32.gmra.mrb[0].mxu0 %v4104
        %v4478 = vpop.f32.mrb[0].mxu0
        %v4479 = vadd.f32 0.0, %v4478
        %v4480 = vpop.f32.mrb[0].mxu0
        %v4481 = vadd.f32 0.0, %v4480
        %4482 = vmatprep.mubr.f32.mxu0 0.0
        %4483 = vmatmul.mubr.f32.gmra.mrb[0].mxu0 %v4107
        %v4484 = vpop.f32.mrb[0].mxu0
        %v4485 = vadd.f32 0.0, %v4484
        %v4486 = vpop.f32.mrb[0].mxu0
        %v4487 = vadd.f32 0.0, %v4486
        %4488 = vdwg.mxu0
        %4489 = vmatprep.subr.mxu0 %v3942
        %4490 = vmatpush1.msra.mxu0 %v3941
        %4491 = vmatprep.subr.mxu0 %v3974
        %4492 = vmatpush1.msra.mxu0 %v3973
        %4493 = vmatprep.subr.mxu0 %v4006
        %4494 = vmatpush1.msra.mxu0 %v4005
        %4495 = vmatprep.subr.mxu0 %v4038
        %4496 = vmatpush1.msra.mxu0 %v4037
        %4497 = vmatprep.subr.mxu0 %v4070
        %4498 = vmatpush1.msra.mxu0 %v4069
        %4499 = vmatprep.subr.mxu0 0.0
        %4500 = vmatpush1.msra.mxu0 0.0
        %4501 = vmatprep.subr.mxu0 0.0
        %4502 = vmatpush1.msra.mxu0 0.0
        %4503 = vmatprep.subr.mxu0 0.0
        %4504 = vmatpush1.msra.mxu0 0.0
        %4505 = vmatprep.subr.mxu0 0.0
        %4506 = vmatpush1.msra.mxu0 0.0
        %4507 = vmatprep.subr.mxu0 0.0
        %4508 = vmatpush1.msra.mxu0 0.0
        %4509 = vmatprep.subr.mxu0 0.0
        %4510 = vmatpush1.msra.mxu0 0.0
        %4511 = vmatprep.subr.mxu0 0.0
        %4512 = vmatpush1.msra.mxu0 0.0
        %4513 = vmatprep.subr.mxu0 0.0
        %4514 = vmatpush1.msra.mxu0 0.0
        %4515 = vmatprep.subr.mxu0 0.0
        %4516 = vmatpush1.msra.mxu0 0.0
        %4517 = vmatprep.subr.mxu0 0.0
        %4518 = vmatpush1.msra.mxu0 0.0
        %4519 = vmatprep.subr.mxu0 0.0
        %4520 = vmatpush1.msra.mxu0 0.0
        %4521 = vmatprep.subr.mxu0 0.0
        %4522 = vmatpush1.msra.mxu0 0.0
        %4523 = vmatprep.subr.mxu0 0.0
        %4524 = vmatpush1.msra.mxu0 0.0
        %4525 = vmatprep.subr.mxu0 0.0
        %4526 = vmatpush1.msra.mxu0 0.0
        %4527 = vmatprep.subr.mxu0 0.0
        %4528 = vmatpush1.msra.mxu0 0.0
        %4529 = vmatprep.subr.mxu0 0.0
        %4530 = vmatpush1.msra.mxu0 0.0
        %4531 = vmatprep.subr.mxu0 0.0
        %4532 = vmatpush1.msra.mxu0 0.0
        %4533 = vmatprep.subr.mxu0 0.0
        %4534 = vmatpush1.msra.mxu0 0.0
        %4535 = vmatprep.subr.mxu0 0.0
        %4536 = vmatpush1.msra.mxu0 0.0
        %4537 = vmatprep.subr.mxu0 0.0
        %4538 = vmatpush1.msra.mxu0 0.0
        %4539 = vmatprep.subr.mxu0 0.0
        %4540 = vmatpush1.msra.mxu0 0.0
        %4541 = vmatprep.subr.mxu0 0.0
        %4542 = vmatpush1.msra.mxu0 0.0
        %4543 = vmatprep.subr.mxu0 0.0
        %4544 = vmatpush1.msra.mxu0 0.0
        %4545 = vmatprep.subr.mxu0 0.0
        %4546 = vmatpush1.msra.mxu0 0.0
        %4547 = vmatprep.subr.mxu0 0.0
        %4548 = vmatpush1.msra.mxu0 0.0
        %4549 = vmatprep.subr.mxu0 0.0
        %4550 = vmatpush1.msra.mxu0 0.0
        %4551 = vmatprep.subr.mxu0 0.0
        %4552 = vmatpush1.msra.mxu0 0.0
        %4553 = vmatprep.mubr.f32.mxu0 0.0
        %4554 = vmatmul.mubr.f32.gmra.mrb[0].mxu0 %v4095
        %v4555 = vpop.f32.mrb[0].mxu0
        %v4556 = vadd.f32 0.0, %v4555
        %v4557 = vpop.f32.mrb[0].mxu0
        %v4558 = vadd.f32 0.0, %v4557
        %4559 = vmatprep.mubr.f32.mxu0 0.0
        %4560 = vmatmul.mubr.f32.gmra.mrb[0].mxu0 %v4098
        %v4561 = vpop.f32.mrb[0].mxu0
        %v4562 = vadd.f32 0.0, %v4561
        %v4563 = vpop.f32.mrb[0].mxu0
        %v4564 = vadd.f32 0.0, %v4563
        %4565 = vmatprep.mubr.f32.mxu0 0.0
        %4566 = vmatmul.mubr.f32.gmra.mrb[0].mxu0 %v4101
        %v4567 = vpop.f32.mrb[0].mxu0
        %v4568 = vadd.f32 0.0, %v4567
        %v4569 = vpop.f32.mrb[0].mxu0
        %v4570 = vadd.f32 0.0, %v4569
        %4571 = vmatprep.mubr.f32.mxu0 0.0
        %4572 = vmatmul.mubr.f32.gmra.mrb[0].mxu0 %v4104
        %v4573 = vpop.f32.mrb[0].mxu0
        %v4574 = vadd.f32 0.0, %v4573
        %v4575 = vpop.f32.mrb[0].mxu0
        %v4576 = vadd.f32 0.0, %v4575
        %4577 = vmatprep.mubr.f32.mxu0 0.0
        %4578 = vmatmul.mubr.f32.gmra.mrb[0].mxu0 %v4107
        %v4579 = vpop.f32.mrb[0].mxu0
        %v4580 = vadd.f32 0.0, %v4579
        %v4581 = vpop.f32.mrb[0].mxu0
        %v4582 = vadd.f32 0.0, %v4581
        %4583 = vdwg.mxu0
        %4584 = vmatprep.subr.mxu0 %v3944
        %4585 = vmatpush1.msra.mxu0 %v3943
        %4586 = vmatprep.subr.mxu0 %v3976
        %4587 = vmatpush1.msra.mxu0 %v3975
        %4588 = vmatprep.subr.mxu0 %v4008
        %4589 = vmatpush1.msra.mxu0 %v4007
        %4590 = vmatprep.subr.mxu0 %v4040
        %4591 = vmatpush1.msra.mxu0 %v4039
        %4592 = vmatprep.subr.mxu0 %v4072
        %4593 = vmatpush1.msra.mxu0 %v4071
        %4594 = vmatprep.subr.mxu0 0.0
        %4595 = vmatpush1.msra.mxu0 0.0
        %4596 = vmatprep.subr.mxu0 0.0
        %4597 = vmatpush1.msra.mxu0 0.0
        %4598 = vmatprep.subr.mxu0 0.0
        %4599 = vmatpush1.msra.mxu0 0.0
        %4600 = vmatprep.subr.mxu0 0.0
        %4601 = vmatpush1.msra.mxu0 0.0
        %4602 = vmatprep.subr.mxu0 0.0
        %4603 = vmatpush1.msra.mxu0 0.0
        %4604 = vmatprep.subr.mxu0 0.0
        %4605 = vmatpush1.msra.mxu0 0.0
        %4606 = vmatprep.subr.mxu0 0.0
        %4607 = vmatpush1.msra.mxu0 0.0
        %4608 = vmatprep.subr.mxu0 0.0
        %4609 = vmatpush1.msra.mxu0 0.0
        %4610 = vmatprep.subr.mxu0 0.0
        %4611 = vmatpush1.msra.mxu0 0.0
        %4612 = vmatprep.subr.mxu0 0.0
        %4613 = vmatpush1.msra.mxu0 0.0
        %4614 = vmatprep.subr.mxu0 0.0
        %4615 = vmatpush1.msra.mxu0 0.0
        %4616 = vmatprep.subr.mxu0 0.0
        %4617 = vmatpush1.msra.mxu0 0.0
        %4618 = vmatprep.subr.mxu0 0.0
        %4619 = vmatpush1.msra.mxu0 0.0
        %4620 = vmatprep.subr.mxu0 0.0
        %4621 = vmatpush1.msra.mxu0 0.0
        %4622 = vmatprep.subr.mxu0 0.0
        %4623 = vmatpush1.msra.mxu0 0.0
        %4624 = vmatprep.subr.mxu0 0.0
        %4625 = vmatpush1.msra.mxu0 0.0
        %4626 = vmatprep.subr.mxu0 0.0
        %4627 = vmatpush1.msra.mxu0 0.0
        %4628 = vmatprep.subr.mxu0 0.0
        %4629 = vmatpush1.msra.mxu0 0.0
        %4630 = vmatprep.subr.mxu0 0.0
        %4631 = vmatpush1.msra.mxu0 0.0
        %4632 = vmatprep.subr.mxu0 0.0
        %4633 = vmatpush1.msra.mxu0 0.0
        %4634 = vmatprep.subr.mxu0 0.0
        %4635 = vmatpush1.msra.mxu0 0.0
        %4636 = vmatprep.subr.mxu0 0.0
        %4637 = vmatpush1.msra.mxu0 0.0
        %4638 = vmatprep.subr.mxu0 0.0
        %4639 = vmatpush1.msra.mxu0 0.0
        %4640 = vmatprep.subr.mxu0 0.0
        %4641 = vmatpush1.msra.mxu0 0.0
        %4642 = vmatprep.subr.mxu0 0.0
        %4643 = vmatpush1.msra.mxu0 0.0
        %4644 = vmatprep.subr.mxu0 0.0
        %4645 = vmatpush1.msra.mxu0 0.0
        %4646 = vmatprep.subr.mxu0 0.0
        %4647 = vmatpush1.msra.mxu0 0.0
        %4648 = vmatprep.mubr.f32.mxu0 0.0
        %4649 = vmatmul.mubr.f32.gmra.mrb[0].mxu0 %v4095
        %v4650 = vpop.f32.mrb[0].mxu0
        %v4651 = vadd.f32 0.0, %v4650
        %v4652 = vpop.f32.mrb[0].mxu0
        %v4653 = vadd.f32 0.0, %v4652
        %4654 = vmatprep.mubr.f32.mxu0 0.0
        %4655 = vmatmul.mubr.f32.gmra.mrb[0].mxu0 %v4098
        %v4656 = vpop.f32.mrb[0].mxu0
        %v4657 = vadd.f32 0.0, %v4656
        %v4658 = vpop.f32.mrb[0].mxu0
        %v4659 = vadd.f32 0.0, %v4658
        %4660 = vmatprep.mubr.f32.mxu0 0.0
        %4661 = vmatmul.mubr.f32.gmra.mrb[0].mxu0 %v4101
        %v4662 = vpop.f32.mrb[0].mxu0
        %v4663 = vadd.f32 0.0, %v4662
        %v4664 = vpop.f32.mrb[0].mxu0
        %v4665 = vadd.f32 0.0, %v4664
        %4666 = vmatprep.mubr.f32.mxu0 0.0
        %4667 = vmatmul.mubr.f32.gmra.mrb[0].mxu0 %v4104
        %v4668 = vpop.f32.mrb[0].mxu0
        %v4669 = vadd.f32 0.0, %v4668
        %v4670 = vpop.f32.mrb[0].mxu0
        %v4671 = vadd.f32 0.0, %v4670
        %4672 = vmatprep.mubr.f32.mxu0 0.0
        %4673 = vmatmul.mubr.f32.gmra.mrb[0].mxu0 %v4107
        %v4674 = vpop.f32.mrb[0].mxu0
        %v4675 = vadd.f32 0.0, %v4674
        %v4676 = vpop.f32.mrb[0].mxu0
        %v4677 = vadd.f32 0.0, %v4676
        %4678 = vdwg.mxu0
        %4679 = vmatprep.subr.mxu0 %v3946
        %4680 = vmatpush1.msra.mxu0 %v3945
        %4681 = vmatprep.subr.mxu0 %v3978
        %4682 = vmatpush1.msra.mxu0 %v3977
        %4683 = vmatprep.subr.mxu0 %v4010
        %4684 = vmatpush1.msra.mxu0 %v4009
        %4685 = vmatprep.subr.mxu0 %v4042
        %4686 = vmatpush1.msra.mxu0 %v4041
        %4687 = vmatprep.subr.mxu0 %v4074
        %4688 = vmatpush1.msra.mxu0 %v4073
        %4689 = vmatprep.subr.mxu0 0.0
        %4690 = vmatpush1.msra.mxu0 0.0
        %4691 = vmatprep.subr.mxu0 0.0
        %4692 = vmatpush1.msra.mxu0 0.0
        %4693 = vmatprep.subr.mxu0 0.0
        %4694 = vmatpush1.msra.mxu0 0.0
        %4695 = vmatprep.subr.mxu0 0.0
        %4696 = vmatpush1.msra.mxu0 0.0
        %4697 = vmatprep.subr.mxu0 0.0
        %4698 = vmatpush1.msra.mxu0 0.0
        %4699 = vmatprep.subr.mxu0 0.0
        %4700 = vmatpush1.msra.mxu0 0.0
        %4701 = vmatprep.subr.mxu0 0.0
        %4702 = vmatpush1.msra.mxu0 0.0
        %4703 = vmatprep.subr.mxu0 0.0
        %4704 = vmatpush1.msra.mxu0 0.0
        %4705 = vmatprep.subr.mxu0 0.0
        %4706 = vmatpush1.msra.mxu0 0.0
        %4707 = vmatprep.subr.mxu0 0.0
        %4708 = vmatpush1.msra.mxu0 0.0
        %4709 = vmatprep.subr.mxu0 0.0
        %4710 = vmatpush1.msra.mxu0 0.0
        %4711 = vmatprep.subr.mxu0 0.0
        %4712 = vmatpush1.msra.mxu0 0.0
        %4713 = vmatprep.subr.mxu0 0.0
        %4714 = vmatpush1.msra.mxu0 0.0
        %4715 = vmatprep.subr.mxu0 0.0
        %4716 = vmatpush1.msra.mxu0 0.0
        %4717 = vmatprep.subr.mxu0 0.0
        %4718 = vmatpush1.msra.mxu0 0.0
        %4719 = vmatprep.subr.mxu0 0.0
        %4720 = vmatpush1.msra.mxu0 0.0
        %4721 = vmatprep.subr.mxu0 0.0
        %4722 = vmatpush1.msra.mxu0 0.0
        %4723 = vmatprep.subr.mxu0 0.0
        %4724 = vmatpush1.msra.mxu0 0.0
        %4725 = vmatprep.subr.mxu0 0.0
        %4726 = vmatpush1.msra.mxu0 0.0
        %4727 = vmatprep.subr.mxu0 0.0
        %4728 = vmatpush1.msra.mxu0 0.0
        %4729 = vmatprep.subr.mxu0 0.0
        %4730 = vmatpush1.msra.mxu0 0.0
        %4731 = vmatprep.subr.mxu0 0.0
        %4732 = vmatpush1.msra.mxu0 0.0
        %4733 = vmatprep.subr.mxu0 0.0
        %4734 = vmatpush1.msra.mxu0 0.0
        %4735 = vmatprep.subr.mxu0 0.0
        %4736 = vmatpush1.msra.mxu0 0.0
        %4737 = vmatprep.subr.mxu0 0.0
        %4738 = vmatpush1.msra.mxu0 0.0
        %4739 = vmatprep.subr.mxu0 0.0
        %4740 = vmatpush1.msra.mxu0 0.0
        %4741 = vmatprep.subr.mxu0 0.0
        %4742 = vmatpush1.msra.mxu0 0.0
        %4743 = vmatprep.mubr.f32.mxu0 0.0
        %4744 = vmatmul.mubr.f32.gmra.mrb[0].mxu0 %v4095
        %v4745 = vpop.f32.mrb[0].mxu0
        %v4746 = vadd.f32 0.0, %v4745
        %v4747 = vpop.f32.mrb[0].mxu0
        %v4748 = vadd.f32 0.0, %v4747
        %4749 = vmatprep.mubr.f32.mxu0 0.0
        %4750 = vmatmul.mubr.f32.gmra.mrb[0].mxu0 %v4098
        %v4751 = vpop.f32.mrb[0].mxu0
        %v4752 = vadd.f32 0.0, %v4751
        %v4753 = vpop.f32.mrb[0].mxu0
        %v4754 = vadd.f32 0.0, %v4753
        %4755 = vmatprep.mubr.f32.mxu0 0.0
        %4756 = vmatmul.mubr.f32.gmra.mrb[0].mxu0 %v4101
        %v4757 = vpop.f32.mrb[0].mxu0
        %v4758 = vadd.f32 0.0, %v4757
        %v4759 = vpop.f32.mrb[0].mxu0
        %v4760 = vadd.f32 0.0, %v4759
        %4761 = vmatprep.mubr.f32.mxu0 0.0
        %4762 = vmatmul.mubr.f32.gmra.mrb[0].mxu0 %v4104
        %v4763 = vpop.f32.mrb[0].mxu0
        %v4764 = vadd.f32 0.0, %v4763
        %v4765 = vpop.f32.mrb[0].mxu0
        %v4766 = vadd.f32 0.0, %v4765
        %4767 = vmatprep.mubr.f32.mxu0 0.0
        %4768 = vmatmul.mubr.f32.gmra.mrb[0].mxu0 %v4107
        %v4769 = vpop.f32.mrb[0].mxu0
        %v4770 = vadd.f32 0.0, %v4769
        %v4771 = vpop.f32.mrb[0].mxu0
        %v4772 = vadd.f32 0.0, %v4771
        %4773 = vdwg.mxu0
        %4774 = vmatprep.subr.mxu0 %v3948
        %4775 = vmatpush1.msra.mxu0 %v3947
        %4776 = vmatprep.subr.mxu0 %v3980
        %4777 = vmatpush1.msra.mxu0 %v3979
        %4778 = vmatprep.subr.mxu0 %v4012
        %4779 = vmatpush1.msra.mxu0 %v4011
        %4780 = vmatprep.subr.mxu0 %v4044
        %4781 = vmatpush1.msra.mxu0 %v4043
        %4782 = vmatprep.subr.mxu0 %v4076
        %4783 = vmatpush1.msra.mxu0 %v4075
        %4784 = vmatprep.subr.mxu0 0.0
        %4785 = vmatpush1.msra.mxu0 0.0
        %4786 = vmatprep.subr.mxu0 0.0
        %4787 = vmatpush1.msra.mxu0 0.0
        %4788 = vmatprep.subr.mxu0 0.0
        %4789 = vmatpush1.msra.mxu0 0.0
        %4790 = vmatprep.subr.mxu0 0.0
        %4791 = vmatpush1.msra.mxu0 0.0
        %4792 = vmatprep.subr.mxu0 0.0
        %4793 = vmatpush1.msra.mxu0 0.0
        %4794 = vmatprep.subr.mxu0 0.0
        %4795 = vmatpush1.msra.mxu0 0.0
        %4796 = vmatprep.subr.mxu0 0.0
        %4797 = vmatpush1.msra.mxu0 0.0
        %4798 = vmatprep.subr.mxu0 0.0
        %4799 = vmatpush1.msra.mxu0 0.0
        %4800 = vmatprep.subr.mxu0 0.0
        %4801 = vmatpush1.msra.mxu0 0.0
        %4802 = vmatprep.subr.mxu0 0.0
        %4803 = vmatpush1.msra.mxu0 0.0
        %4804 = vmatprep.subr.mxu0 0.0
        %4805 = vmatpush1.msra.mxu0 0.0
        %4806 = vmatprep.subr.mxu0 0.0
        %4807 = vmatpush1.msra.mxu0 0.0
        %4808 = vmatprep.subr.mxu0 0.0
        %4809 = vmatpush1.msra.mxu0 0.0
        %4810 = vmatprep.subr.mxu0 0.0
        %4811 = vmatpush1.msra.mxu0 0.0
        %4812 = vmatprep.subr.mxu0 0.0
        %4813 = vmatpush1.msra.mxu0 0.0
        %4814 = vmatprep.subr.mxu0 0.0
        %4815 = vmatpush1.msra.mxu0 0.0
        %4816 = vmatprep.subr.mxu0 0.0
        %4817 = vmatpush1.msra.mxu0 0.0
        %4818 = vmatprep.subr.mxu0 0.0
        %4819 = vmatpush1.msra.mxu0 0.0
        %4820 = vmatprep.subr.mxu0 0.0
        %4821 = vmatpush1.msra.mxu0 0.0
        %4822 = vmatprep.subr.mxu0 0.0
        %4823 = vmatpush1.msra.mxu0 0.0
        %4824 = vmatprep.subr.mxu0 0.0
        %4825 = vmatpush1.msra.mxu0 0.0
        %4826 = vmatprep.subr.mxu0 0.0
        %4827 = vmatpush1.msra.mxu0 0.0
        %4828 = vmatprep.subr.mxu0 0.0
        %4829 = vmatpush1.msra.mxu0 0.0
        %4830 = vmatprep.subr.mxu0 0.0
        %4831 = vmatpush1.msra.mxu0 0.0
        %4832 = vmatprep.subr.mxu0 0.0
        %4833 = vmatpush1.msra.mxu0 0.0
        %4834 = vmatprep.subr.mxu0 0.0
        %4835 = vmatpush1.msra.mxu0 0.0
        %4836 = vmatprep.subr.mxu0 0.0
        %4837 = vmatpush1.msra.mxu0 0.0
        %4838 = vmatprep.mubr.f32.mxu0 0.0
        %4839 = vmatmul.mubr.f32.gmra.mrb[0].mxu0 %v4095
        %v4840 = vpop.f32.mrb[0].mxu0
        %v4841 = vadd.f32 0.0, %v4840
        %v4842 = vpop.f32.mrb[0].mxu0
        %v4843 = vadd.f32 0.0, %v4842
        %4844 = vmatprep.mubr.f32.mxu0 0.0
        %4845 = vmatmul.mubr.f32.gmra.mrb[0].mxu0 %v4098
        %v4846 = vpop.f32.mrb[0].mxu0
        %v4847 = vadd.f32 0.0, %v4846
        %v4848 = vpop.f32.mrb[0].mxu0
        %v4849 = vadd.f32 0.0, %v4848
        %4850 = vmatprep.mubr.f32.mxu0 0.0
        %4851 = vmatmul.mubr.f32.gmra.mrb[0].mxu0 %v4101
        %v4852 = vpop.f32.mrb[0].mxu0
        %v4853 = vadd.f32 0.0, %v4852
        %v4854 = vpop.f32.mrb[0].mxu0
        %v4855 = vadd.f32 0.0, %v4854
        %4856 = vmatprep.mubr.f32.mxu0 0.0
        %4857 = vmatmul.mubr.f32.gmra.mrb[0].mxu0 %v4104
        %v4858 = vpop.f32.mrb[0].mxu0
        %v4859 = vadd.f32 0.0, %v4858
        %v4860 = vpop.f32.mrb[0].mxu0
        %v4861 = vadd.f32 0.0, %v4860
        %4862 = vmatprep.mubr.f32.mxu0 0.0
        %4863 = vmatmul.mubr.f32.gmra.mrb[0].mxu0 %v4107
        %v4864 = vpop.f32.mrb[0].mxu0
        %v4865 = vadd.f32 0.0, %v4864
        %v4866 = vpop.f32.mrb[0].mxu0
        %v4867 = vadd.f32 0.0, %v4866
        %4868 = vdwg.mxu0
        %4869 = vmatprep.subr.mxu0 %v3950
        %4870 = vmatpush1.msra.mxu0 %v3949
        %4871 = vmatprep.subr.mxu0 %v3982
        %4872 = vmatpush1.msra.mxu0 %v3981
        %4873 = vmatprep.subr.mxu0 %v4014
        %4874 = vmatpush1.msra.mxu0 %v4013
        %4875 = vmatprep.subr.mxu0 %v4046
        %4876 = vmatpush1.msra.mxu0 %v4045
        %4877 = vmatprep.subr.mxu0 %v4078
        %4878 = vmatpush1.msra.mxu0 %v4077
        %4879 = vmatprep.subr.mxu0 0.0
        %4880 = vmatpush1.msra.mxu0 0.0
        %4881 = vmatprep.subr.mxu0 0.0
        %4882 = vmatpush1.msra.mxu0 0.0
        %4883 = vmatprep.subr.mxu0 0.0
        %4884 = vmatpush1.msra.mxu0 0.0
        %4885 = vmatprep.subr.mxu0 0.0
        %4886 = vmatpush1.msra.mxu0 0.0
        %4887 = vmatprep.subr.mxu0 0.0
        %4888 = vmatpush1.msra.mxu0 0.0
        %4889 = vmatprep.subr.mxu0 0.0
        %4890 = vmatpush1.msra.mxu0 0.0
        %4891 = vmatprep.subr.mxu0 0.0
        %4892 = vmatpush1.msra.mxu0 0.0
        %4893 = vmatprep.subr.mxu0 0.0
        %4894 = vmatpush1.msra.mxu0 0.0
        %4895 = vmatprep.subr.mxu0 0.0
        %4896 = vmatpush1.msra.mxu0 0.0
        %4897 = vmatprep.subr.mxu0 0.0
        %4898 = vmatpush1.msra.mxu0 0.0
        %4899 = vmatprep.subr.mxu0 0.0
        %4900 = vmatpush1.msra.mxu0 0.0
        %4901 = vmatprep.subr.mxu0 0.0
        %4902 = vmatpush1.msra.mxu0 0.0
        %4903 = vmatprep.subr.mxu0 0.0
        %4904 = vmatpush1.msra.mxu0 0.0
        %4905 = vmatprep.subr.mxu0 0.0
        %4906 = vmatpush1.msra.mxu0 0.0
        %4907 = vmatprep.subr.mxu0 0.0
        %4908 = vmatpush1.msra.mxu0 0.0
        %4909 = vmatprep.subr.mxu0 0.0
        %4910 = vmatpush1.msra.mxu0 0.0
        %4911 = vmatprep.subr.mxu0 0.0
        %4912 = vmatpush1.msra.mxu0 0.0
        %4913 = vmatprep.subr.mxu0 0.0
        %4914 = vmatpush1.msra.mxu0 0.0
        %4915 = vmatprep.subr.mxu0 0.0
        %4916 = vmatpush1.msra.mxu0 0.0
        %4917 = vmatprep.subr.mxu0 0.0
        %4918 = vmatpush1.msra.mxu0 0.0
        %4919 = vmatprep.subr.mxu0 0.0
        %4920 = vmatpush1.msra.mxu0 0.0
        %4921 = vmatprep.subr.mxu0 0.0
        %4922 = vmatpush1.msra.mxu0 0.0
        %4923 = vmatprep.subr.mxu0 0.0
        %4924 = vmatpush1.msra.mxu0 0.0
        %4925 = vmatprep.subr.mxu0 0.0
        %4926 = vmatpush1.msra.mxu0 0.0
        %4927 = vmatprep.subr.mxu0 0.0
        %4928 = vmatpush1.msra.mxu0 0.0
        %4929 = vmatprep.subr.mxu0 0.0
        %4930 = vmatpush1.msra.mxu0 0.0
        %4931 = vmatprep.subr.mxu0 0.0
        %4932 = vmatpush1.msra.mxu0 0.0
        %4933 = vmatprep.mubr.f32.mxu0 0.0
        %4934 = vmatmul.mubr.f32.gmra.mrb[0].mxu0 %v4095
        %v4935 = vpop.f32.mrb[0].mxu0
        %v4936 = vadd.f32 0.0, %v4935
        %v4937 = vpop.f32.mrb[0].mxu0
        %v4938 = vadd.f32 0.0, %v4937
        %4939 = vmatprep.mubr.f32.mxu0 0.0
        %4940 = vmatmul.mubr.f32.gmra.mrb[0].mxu0 %v4098
        %v4941 = vpop.f32.mrb[0].mxu0
        %v4942 = vadd.f32 0.0, %v4941
        %v4943 = vpop.f32.mrb[0].mxu0
        %v4944 = vadd.f32 0.0, %v4943
        %4945 = vmatprep.mubr.f32.mxu0 0.0
        %4946 = vmatmul.mubr.f32.gmra.mrb[0].mxu0 %v4101
        %v4947 = vpop.f32.mrb[0].mxu0
        %v4948 = vadd.f32 0.0, %v4947
        %v4949 = vpop.f32.mrb[0].mxu0
        %v4950 = vadd.f32 0.0, %v4949
        %4951 = vmatprep.mubr.f32.mxu0 0.0
        %4952 = vmatmul.mubr.f32.gmra.mrb[0].mxu0 %v4104
        %v4953 = vpop.f32.mrb[0].mxu0
        %v4954 = vadd.f32 0.0, %v4953
        %v4955 = vpop.f32.mrb[0].mxu0
        %v4956 = vadd.f32 0.0, %v4955
        %4957 = vmatprep.mubr.f32.mxu0 0.0
        %4958 = vmatmul.mubr.f32.gmra.mrb[0].mxu0 %v4107
        %v4959 = vpop.f32.mrb[0].mxu0
        %v4960 = vadd.f32 0.0, %v4959
        %v4961 = vpop.f32.mrb[0].mxu0
        %v4962 = vadd.f32 0.0, %v4961
        %4963 = vdwg.mxu0
        %4964 = vmatprep.subr.mxu0 %v3952
        %4965 = vmatpush1.msra.mxu0 %v3951
        %4966 = vmatprep.subr.mxu0 %v3984
        %4967 = vmatpush1.msra.mxu0 %v3983
        %4968 = vmatprep.subr.mxu0 %v4016
        %4969 = vmatpush1.msra.mxu0 %v4015
        %4970 = vmatprep.subr.mxu0 %v4048
        %4971 = vmatpush1.msra.mxu0 %v4047
        %4972 = vmatprep.subr.mxu0 %v4080
        %4973 = vmatpush1.msra.mxu0 %v4079
        %4974 = vmatprep.subr.mxu0 0.0
        %4975 = vmatpush1.msra.mxu0 0.0
        %4976 = vmatprep.subr.mxu0 0.0
        %4977 = vmatpush1.msra.mxu0 0.0
        %4978 = vmatprep.subr.mxu0 0.0
        %4979 = vmatpush1.msra.mxu0 0.0
        %4980 = vmatprep.subr.mxu0 0.0
        %4981 = vmatpush1.msra.mxu0 0.0
        %4982 = vmatprep.subr.mxu0 0.0
        %4983 = vmatpush1.msra.mxu0 0.0
        %4984 = vmatprep.subr.mxu0 0.0
        %4985 = vmatpush1.msra.mxu0 0.0
        %4986 = vmatprep.subr.mxu0 0.0
        %4987 = vmatpush1.msra.mxu0 0.0
        %4988 = vmatprep.subr.mxu0 0.0
        %4989 = vmatpush1.msra.mxu0 0.0
        %4990 = vmatprep.subr.mxu0 0.0
        %4991 = vmatpush1.msra.mxu0 0.0
        %4992 = vmatprep.subr.mxu0 0.0
        %4993 = vmatpush1.msra.mxu0 0.0
        %4994 = vmatprep.subr.mxu0 0.0
        %4995 = vmatpush1.msra.mxu0 0.0
        %4996 = vmatprep.subr.mxu0 0.0
        %4997 = vmatpush1.msra.mxu0 0.0
        %4998 = vmatprep.subr.mxu0 0.0
        %4999 = vmatpush1.msra.mxu0 0.0
        %5000 = vmatprep.subr.mxu0 0.0
        %5001 = vmatpush1.msra.mxu0 0.0
        %5002 = vmatprep.subr.mxu0 0.0
        %5003 = vmatpush1.msra.mxu0 0.0
        %5004 = vmatprep.subr.mxu0 0.0
        %5005 = vmatpush1.msra.mxu0 0.0
        %5006 = vmatprep.subr.mxu0 0.0
        %5007 = vmatpush1.msra.mxu0 0.0
        %5008 = vmatprep.subr.mxu0 0.0
        %5009 = vmatpush1.msra.mxu0 0.0
        %5010 = vmatprep.subr.mxu0 0.0
        %5011 = vmatpush1.msra.mxu0 0.0
        %5012 = vmatprep.subr.mxu0 0.0
        %5013 = vmatpush1.msra.mxu0 0.0
        %5014 = vmatprep.subr.mxu0 0.0
        %5015 = vmatpush1.msra.mxu0 0.0
        %5016 = vmatprep.subr.mxu0 0.0
        %5017 = vmatpush1.msra.mxu0 0.0
        %5018 = vmatprep.subr.mxu0 0.0
        %5019 = vmatpush1.msra.mxu0 0.0
        %5020 = vmatprep.subr.mxu0 0.0
        %5021 = vmatpush1.msra.mxu0 0.0
        %5022 = vmatprep.subr.mxu0 0.0
        %5023 = vmatpush1.msra.mxu0 0.0
        %5024 = vmatprep.subr.mxu0 0.0
        %5025 = vmatpush1.msra.mxu0 0.0
        %5026 = vmatprep.subr.mxu0 0.0
        %5027 = vmatpush1.msra.mxu0 0.0
        %5028 = vmatprep.mubr.f32.mxu0 0.0
        %5029 = vmatmul.mubr.f32.gmra.mrb[0].mxu0 %v4095
        %v5030 = vpop.f32.mrb[0].mxu0
        %v5031 = vadd.f32 0.0, %v5030
        %v5032 = vpop.f32.mrb[0].mxu0
        %v5033 = vadd.f32 0.0, %v5032
        %5034 = vmatprep.mubr.f32.mxu0 0.0
        %5035 = vmatmul.mubr.f32.gmra.mrb[0].mxu0 %v4098
        %v5036 = vpop.f32.mrb[0].mxu0
        %v5037 = vadd.f32 0.0, %v5036
        %v5038 = vpop.f32.mrb[0].mxu0
        %v5039 = vadd.f32 0.0, %v5038
        %5040 = vmatprep.mubr.f32.mxu0 0.0
        %5041 = vmatmul.mubr.f32.gmra.mrb[0].mxu0 %v4101
        %v5042 = vpop.f32.mrb[0].mxu0
        %v5043 = vadd.f32 0.0, %v5042
        %v5044 = vpop.f32.mrb[0].mxu0
        %v5045 = vadd.f32 0.0, %v5044
        %5046 = vmatprep.mubr.f32.mxu0 0.0
        %5047 = vmatmul.mubr.f32.gmra.mrb[0].mxu0 %v4104
        %v5048 = vpop.f32.mrb[0].mxu0
        %v5049 = vadd.f32 0.0, %v5048
        %v5050 = vpop.f32.mrb[0].mxu0
        %v5051 = vadd.f32 0.0, %v5050
        %5052 = vmatprep.mubr.f32.mxu0 0.0
        %5053 = vmatmul.mubr.f32.gmra.mrb[0].mxu0 %v4107
        %v5054 = vpop.f32.mrb[0].mxu0
        %v5055 = vadd.f32 0.0, %v5054
        %v5056 = vpop.f32.mrb[0].mxu0
        %v5057 = vadd.f32 0.0, %v5056
        %5058 = vdwg.mxu0
        %5059 = vmatprep.subr.mxu0 %v3954
        %5060 = vmatpush1.msra.mxu0 %v3953
        %5061 = vmatprep.subr.mxu0 %v3986
        %5062 = vmatpush1.msra.mxu0 %v3985
        %5063 = vmatprep.subr.mxu0 %v4018
        %5064 = vmatpush1.msra.mxu0 %v4017
        %5065 = vmatprep.subr.mxu0 %v4050
        %5066 = vmatpush1.msra.mxu0 %v4049
        %5067 = vmatprep.subr.mxu0 %v4082
        %5068 = vmatpush1.msra.mxu0 %v4081
        %5069 = vmatprep.subr.mxu0 0.0
        %5070 = vmatpush1.msra.mxu0 0.0
        %5071 = vmatprep.subr.mxu0 0.0
        %5072 = vmatpush1.msra.mxu0 0.0
        %5073 = vmatprep.subr.mxu0 0.0
        %5074 = vmatpush1.msra.mxu0 0.0
        %5075 = vmatprep.subr.mxu0 0.0
        %5076 = vmatpush1.msra.mxu0 0.0
        %5077 = vmatprep.subr.mxu0 0.0
        %5078 = vmatpush1.msra.mxu0 0.0
        %5079 = vmatprep.subr.mxu0 0.0
        %5080 = vmatpush1.msra.mxu0 0.0
        %5081 = vmatprep.subr.mxu0 0.0
        %5082 = vmatpush1.msra.mxu0 0.0
        %5083 = vmatprep.subr.mxu0 0.0
        %5084 = vmatpush1.msra.mxu0 0.0
        %5085 = vmatprep.subr.mxu0 0.0
        %5086 = vmatpush1.msra.mxu0 0.0
        %5087 = vmatprep.subr.mxu0 0.0
        %5088 = vmatpush1.msra.mxu0 0.0
        %5089 = vmatprep.subr.mxu0 0.0
        %5090 = vmatpush1.msra.mxu0 0.0
        %5091 = vmatprep.subr.mxu0 0.0
        %5092 = vmatpush1.msra.mxu0 0.0
        %5093 = vmatprep.subr.mxu0 0.0
        %5094 = vmatpush1.msra.mxu0 0.0
        %5095 = vmatprep.subr.mxu0 0.0
        %5096 = vmatpush1.msra.mxu0 0.0
        %5097 = vmatprep.subr.mxu0 0.0
        %5098 = vmatpush1.msra.mxu0 0.0
        %5099 = vmatprep.subr.mxu0 0.0
        %5100 = vmatpush1.msra.mxu0 0.0
        %5101 = vmatprep.subr.mxu0 0.0
        %5102 = vmatpush1.msra.mxu0 0.0
        %5103 = vmatprep.subr.mxu0 0.0
        %5104 = vmatpush1.msra.mxu0 0.0
        %5105 = vmatprep.subr.mxu0 0.0
        %5106 = vmatpush1.msra.mxu0 0.0
        %5107 = vmatprep.subr.mxu0 0.0
        %5108 = vmatpush1.msra.mxu0 0.0
        %5109 = vmatprep.subr.mxu0 0.0
        %5110 = vmatpush1.msra.mxu0 0.0
        %5111 = vmatprep.subr.mxu0 0.0
        %5112 = vmatpush1.msra.mxu0 0.0
        %5113 = vmatprep.subr.mxu0 0.0
        %5114 = vmatpush1.msra.mxu0 0.0
        %5115 = vmatprep.subr.mxu0 0.0
        %5116 = vmatpush1.msra.mxu0 0.0
        %5117 = vmatprep.subr.mxu0 0.0
        %5118 = vmatpush1.msra.mxu0 0.0
        %5119 = vmatprep.subr.mxu0 0.0
        %5120 = vmatpush1.msra.mxu0 0.0
        %5121 = vmatprep.subr.mxu0 0.0
        %5122 = vmatpush1.msra.mxu0 0.0
        %5123 = vmatprep.mubr.f32.mxu0 0.0
        %5124 = vmatmul.mubr.f32.gmra.mrb[0].mxu0 %v4095
        %v5125 = vpop.f32.mrb[0].mxu0
        %v5126 = vadd.f32 0.0, %v5125
        %v5127 = vpop.f32.mrb[0].mxu0
        %v5128 = vadd.f32 0.0, %v5127
        %5129 = vmatprep.mubr.f32.mxu0 0.0
        %5130 = vmatmul.mubr.f32.gmra.mrb[0].mxu0 %v4098
        %v5131 = vpop.f32.mrb[0].mxu0
        %v5132 = vadd.f32 0.0, %v5131
        %v5133 = vpop.f32.mrb[0].mxu0
        %v5134 = vadd.f32 0.0, %v5133
        %5135 = vmatprep.mubr.f32.mxu0 0.0
        %5136 = vmatmul.mubr.f32.gmra.mrb[0].mxu0 %v4101
        %v5137 = vpop.f32.mrb[0].mxu0
        %v5138 = vadd.f32 0.0, %v5137
        %v5139 = vpop.f32.mrb[0].mxu0
        %v5140 = vadd.f32 0.0, %v5139
        %5141 = vmatprep.mubr.f32.mxu0 0.0
        %5142 = vmatmul.mubr.f32.gmra.mrb[0].mxu0 %v4104
        %v5143 = vpop.f32.mrb[0].mxu0
        %v5144 = vadd.f32 0.0, %v5143
        %v5145 = vpop.f32.mrb[0].mxu0
        %v5146 = vadd.f32 0.0, %v5145
        %5147 = vmatprep.mubr.f32.mxu0 0.0
        %5148 = vmatmul.mubr.f32.gmra.mrb[0].mxu0 %v4107
        %v5149 = vpop.f32.mrb[0].mxu0
        %v5150 = vadd.f32 0.0, %v5149
        %v5151 = vpop.f32.mrb[0].mxu0
        %v5152 = vadd.f32 0.0, %v5151
        %5153 = vdwg.mxu0
        %5154 = vmatprep.subr.mxu0 %v3956
        %5155 = vmatpush1.msra.mxu0 %v3955
        %5156 = vmatprep.subr.mxu0 %v3988
        %5157 = vmatpush1.msra.mxu0 %v3987
        %5158 = vmatprep.subr.mxu0 %v4020
        %5159 = vmatpush1.msra.mxu0 %v4019
        %5160 = vmatprep.subr.mxu0 %v4052
        %5161 = vmatpush1.msra.mxu0 %v4051
        %5162 = vmatprep.subr.mxu0 %v4084
        %5163 = vmatpush1.msra.mxu0 %v4083
        %5164 = vmatprep.subr.mxu0 0.0
        %5165 = vmatpush1.msra.mxu0 0.0
        %5166 = vmatprep.subr.mxu0 0.0
        %5167 = vmatpush1.msra.mxu0 0.0
        %5168 = vmatprep.subr.mxu0 0.0
        %5169 = vmatpush1.msra.mxu0 0.0
        %5170 = vmatprep.subr.mxu0 0.0
        %5171 = vmatpush1.msra.mxu0 0.0
        %5172 = vmatprep.subr.mxu0 0.0
        %5173 = vmatpush1.msra.mxu0 0.0
        %5174 = vmatprep.subr.mxu0 0.0
        %5175 = vmatpush1.msra.mxu0 0.0
        %5176 = vmatprep.subr.mxu0 0.0
        %5177 = vmatpush1.msra.mxu0 0.0
        %5178 = vmatprep.subr.mxu0 0.0
        %5179 = vmatpush1.msra.mxu0 0.0
        %5180 = vmatprep.subr.mxu0 0.0
        %5181 = vmatpush1.msra.mxu0 0.0
        %5182 = vmatprep.subr.mxu0 0.0
        %5183 = vmatpush1.msra.mxu0 0.0
        %5184 = vmatprep.subr.mxu0 0.0
        %5185 = vmatpush1.msra.mxu0 0.0
        %5186 = vmatprep.subr.mxu0 0.0
        %5187 = vmatpush1.msra.mxu0 0.0
        %5188 = vmatprep.subr.mxu0 0.0
        %5189 = vmatpush1.msra.mxu0 0.0
        %5190 = vmatprep.subr.mxu0 0.0
        %5191 = vmatpush1.msra.mxu0 0.0
        %5192 = vmatprep.subr.mxu0 0.0
        %5193 = vmatpush1.msra.mxu0 0.0
        %5194 = vmatprep.subr.mxu0 0.0
        %5195 = vmatpush1.msra.mxu0 0.0
        %5196 = vmatprep.subr.mxu0 0.0
        %5197 = vmatpush1.msra.mxu0 0.0
        %5198 = vmatprep.subr.mxu0 0.0
        %5199 = vmatpush1.msra.mxu0 0.0
        %5200 = vmatprep.subr.mxu0 0.0
        %5201 = vmatpush1.msra.mxu0 0.0
        %5202 = vmatprep.subr.mxu0 0.0
        %5203 = vmatpush1.msra.mxu0 0.0
        %5204 = vmatprep.subr.mxu0 0.0
        %5205 = vmatpush1.msra.mxu0 0.0
        %5206 = vmatprep.subr.mxu0 0.0
        %5207 = vmatpush1.msra.mxu0 0.0
        %5208 = vmatprep.subr.mxu0 0.0
        %5209 = vmatpush1.msra.mxu0 0.0
        %5210 = vmatprep.subr.mxu0 0.0
        %5211 = vmatpush1.msra.mxu0 0.0
        %5212 = vmatprep.subr.mxu0 0.0
        %5213 = vmatpush1.msra.mxu0 0.0
        %5214 = vmatprep.subr.mxu0 0.0
        %5215 = vmatpush1.msra.mxu0 0.0
        %5216 = vmatprep.subr.mxu0 0.0
        %5217 = vmatpush1.msra.mxu0 0.0
        %5218 = vmatprep.mubr.f32.mxu0 0.0
        %5219 = vmatmul.mubr.f32.gmra.mrb[0].mxu0 %v4095
        %v5220 = vpop.f32.mrb[0].mxu0
        %v5221 = vadd.f32 0.0, %v5220
        %v5222 = vpop.f32.mrb[0].mxu0
        %v5223 = vadd.f32 0.0, %v5222
        %5224 = vmatprep.mubr.f32.mxu0 0.0
        %5225 = vmatmul.mubr.f32.gmra.mrb[0].mxu0 %v4098
        %v5226 = vpop.f32.mrb[0].mxu0
        %v5227 = vadd.f32 0.0, %v5226
        %v5228 = vpop.f32.mrb[0].mxu0
        %v5229 = vadd.f32 0.0, %v5228
        %5230 = vmatprep.mubr.f32.mxu0 0.0
        %5231 = vmatmul.mubr.f32.gmra.mrb[0].mxu0 %v4101
        %v5232 = vpop.f32.mrb[0].mxu0
        %v5233 = vadd.f32 0.0, %v5232
        %v5234 = vpop.f32.mrb[0].mxu0
        %v5235 = vadd.f32 0.0, %v5234
        %5236 = vmatprep.mubr.f32.mxu0 0.0
        %5237 = vmatmul.mubr.f32.gmra.mrb[0].mxu0 %v4104
        %v5238 = vpop.f32.mrb[0].mxu0
        %v5239 = vadd.f32 0.0, %v5238
        %v5240 = vpop.f32.mrb[0].mxu0
        %v5241 = vadd.f32 0.0, %v5240
        %5242 = vmatprep.mubr.f32.mxu0 0.0
        %5243 = vmatmul.mubr.f32.gmra.mrb[0].mxu0 %v4107
        %v5244 = vpop.f32.mrb[0].mxu0
        %v5245 = vadd.f32 0.0, %v5244
        %v5246 = vpop.f32.mrb[0].mxu0
        %v5247 = vadd.f32 0.0, %v5246
        %5248 = vdwg.mxu0
        %5249 = vmatprep.subr.mxu0 %v3958
        %5250 = vmatpush1.msra.mxu0 %v3957
        %5251 = vmatprep.subr.mxu0 %v3990
        %5252 = vmatpush1.msra.mxu0 %v3989
        %5253 = vmatprep.subr.mxu0 %v4022
        %5254 = vmatpush1.msra.mxu0 %v4021
        %5255 = vmatprep.subr.mxu0 %v4054
        %5256 = vmatpush1.msra.mxu0 %v4053
        %5257 = vmatprep.subr.mxu0 %v4086
        %5258 = vmatpush1.msra.mxu0 %v4085
        %5259 = vmatprep.subr.mxu0 0.0
        %5260 = vmatpush1.msra.mxu0 0.0
        %5261 = vmatprep.subr.mxu0 0.0
        %5262 = vmatpush1.msra.mxu0 0.0
        %5263 = vmatprep.subr.mxu0 0.0
        %5264 = vmatpush1.msra.mxu0 0.0
        %5265 = vmatprep.subr.mxu0 0.0
        %5266 = vmatpush1.msra.mxu0 0.0
        %5267 = vmatprep.subr.mxu0 0.0
        %5268 = vmatpush1.msra.mxu0 0.0
        %5269 = vmatprep.subr.mxu0 0.0
        %5270 = vmatpush1.msra.mxu0 0.0
        %5271 = vmatprep.subr.mxu0 0.0
        %5272 = vmatpush1.msra.mxu0 0.0
        %5273 = vmatprep.subr.mxu0 0.0
        %5274 = vmatpush1.msra.mxu0 0.0
        %5275 = vmatprep.subr.mxu0 0.0
        %5276 = vmatpush1.msra.mxu0 0.0
        %5277 = vmatprep.subr.mxu0 0.0
        %5278 = vmatpush1.msra.mxu0 0.0
        %5279 = vmatprep.subr.mxu0 0.0
        %5280 = vmatpush1.msra.mxu0 0.0
        %5281 = vmatprep.subr.mxu0 0.0
        %5282 = vmatpush1.msra.mxu0 0.0
        %5283 = vmatprep.subr.mxu0 0.0
        %5284 = vmatpush1.msra.mxu0 0.0
        %5285 = vmatprep.subr.mxu0 0.0
        %5286 = vmatpush1.msra.mxu0 0.0
        %5287 = vmatprep.subr.mxu0 0.0
        %5288 = vmatpush1.msra.mxu0 0.0
        %5289 = vmatprep.subr.mxu0 0.0
        %5290 = vmatpush1.msra.mxu0 0.0
        %5291 = vmatprep.subr.mxu0 0.0
        %5292 = vmatpush1.msra.mxu0 0.0
        %5293 = vmatprep.subr.mxu0 0.0
        %5294 = vmatpush1.msra.mxu0 0.0
        %5295 = vmatprep.subr.mxu0 0.0
        %5296 = vmatpush1.msra.mxu0 0.0
        %5297 = vmatprep.subr.mxu0 0.0
        %5298 = vmatpush1.msra.mxu0 0.0
        %5299 = vmatprep.subr.mxu0 0.0
        %5300 = vmatpush1.msra.mxu0 0.0
        %5301 = vmatprep.subr.mxu0 0.0
        %5302 = vmatpush1.msra.mxu0 0.0
        %5303 = vmatprep.subr.mxu0 0.0
        %5304 = vmatpush1.msra.mxu0 0.0
        %5305 = vmatprep.subr.mxu0 0.0
        %5306 = vmatpush1.msra.mxu0 0.0
        %5307 = vmatprep.subr.mxu0 0.0
        %5308 = vmatpush1.msra.mxu0 0.0
        %5309 = vmatprep.subr.mxu0 0.0
        %5310 = vmatpush1.msra.mxu0 0.0
        %5311 = vmatprep.subr.mxu0 0.0
        %5312 = vmatpush1.msra.mxu0 0.0
        %5313 = vmatprep.mubr.f32.mxu0 0.0
        %5314 = vmatmul.mubr.f32.gmra.mrb[0].mxu0 %v4095
        %v5315 = vpop.f32.mrb[0].mxu0
        %v5316 = vadd.f32 0.0, %v5315
        %v5317 = vpop.f32.mrb[0].mxu0
        %v5318 = vadd.f32 0.0, %v5317
        %5319 = vmatprep.mubr.f32.mxu0 0.0
        %5320 = vmatmul.mubr.f32.gmra.mrb[0].mxu0 %v4098
        %v5321 = vpop.f32.mrb[0].mxu0
        %v5322 = vadd.f32 0.0, %v5321
        %v5323 = vpop.f32.mrb[0].mxu0
        %v5324 = vadd.f32 0.0, %v5323
        %5325 = vmatprep.mubr.f32.mxu0 0.0
        %5326 = vmatmul.mubr.f32.gmra.mrb[0].mxu0 %v4101
        %v5327 = vpop.f32.mrb[0].mxu0
        %v5328 = vadd.f32 0.0, %v5327
        %v5329 = vpop.f32.mrb[0].mxu0
        %v5330 = vadd.f32 0.0, %v5329
        %5331 = vmatprep.mubr.f32.mxu0 0.0
        %5332 = vmatmul.mubr.f32.gmra.mrb[0].mxu0 %v4104
        %v5333 = vpop.f32.mrb[0].mxu0
        %v5334 = vadd.f32 0.0, %v5333
        %v5335 = vpop.f32.mrb[0].mxu0
        %v5336 = vadd.f32 0.0, %v5335
        %5337 = vmatprep.mubr.f32.mxu0 0.0
        %5338 = vmatmul.mubr.f32.gmra.mrb[0].mxu0 %v4107
        %v5339 = vpop.f32.mrb[0].mxu0
        %v5340 = vadd.f32 0.0, %v5339
        %v5341 = vpop.f32.mrb[0].mxu0
        %v5342 = vadd.f32 0.0, %v5341
        %5343 = vdwg.mxu0
        %5344 = vmatprep.subr.mxu0 %v3960
        %5345 = vmatpush1.msra.mxu0 %v3959
        %5346 = vmatprep.subr.mxu0 %v3992
        %5347 = vmatpush1.msra.mxu0 %v3991
        %5348 = vmatprep.subr.mxu0 %v4024
        %5349 = vmatpush1.msra.mxu0 %v4023
        %5350 = vmatprep.subr.mxu0 %v4056
        %5351 = vmatpush1.msra.mxu0 %v4055
        %5352 = vmatprep.subr.mxu0 %v4088
        %5353 = vmatpush1.msra.mxu0 %v4087
        %5354 = vmatprep.subr.mxu0 0.0
        %5355 = vmatpush1.msra.mxu0 0.0
        %5356 = vmatprep.subr.mxu0 0.0
        %5357 = vmatpush1.msra.mxu0 0.0
        %5358 = vmatprep.subr.mxu0 0.0
        %5359 = vmatpush1.msra.mxu0 0.0
        %5360 = vmatprep.subr.mxu0 0.0
        %5361 = vmatpush1.msra.mxu0 0.0
        %5362 = vmatprep.subr.mxu0 0.0
        %5363 = vmatpush1.msra.mxu0 0.0
        %5364 = vmatprep.subr.mxu0 0.0
        %5365 = vmatpush1.msra.mxu0 0.0
        %5366 = vmatprep.subr.mxu0 0.0
        %5367 = vmatpush1.msra.mxu0 0.0
        %5368 = vmatprep.subr.mxu0 0.0
        %5369 = vmatpush1.msra.mxu0 0.0
        %5370 = vmatprep.subr.mxu0 0.0
        %5371 = vmatpush1.msra.mxu0 0.0
        %5372 = vmatprep.subr.mxu0 0.0
        %5373 = vmatpush1.msra.mxu0 0.0
        %5374 = vmatprep.subr.mxu0 0.0
        %5375 = vmatpush1.msra.mxu0 0.0
        %5376 = vmatprep.subr.mxu0 0.0
        %5377 = vmatpush1.msra.mxu0 0.0
        %5378 = vmatprep.subr.mxu0 0.0
        %5379 = vmatpush1.msra.mxu0 0.0
        %5380 = vmatprep.subr.mxu0 0.0
        %5381 = vmatpush1.msra.mxu0 0.0
        %5382 = vmatprep.subr.mxu0 0.0
        %5383 = vmatpush1.msra.mxu0 0.0
        %5384 = vmatprep.subr.mxu0 0.0
        %5385 = vmatpush1.msra.mxu0 0.0
        %5386 = vmatprep.subr.mxu0 0.0
        %5387 = vmatpush1.msra.mxu0 0.0
        %5388 = vmatprep.subr.mxu0 0.0
        %5389 = vmatpush1.msra.mxu0 0.0
        %5390 = vmatprep.subr.mxu0 0.0
        %5391 = vmatpush1.msra.mxu0 0.0
        %5392 = vmatprep.subr.mxu0 0.0
        %5393 = vmatpush1.msra.mxu0 0.0
        %5394 = vmatprep.subr.mxu0 0.0
        %5395 = vmatpush1.msra.mxu0 0.0
        %5396 = vmatprep.subr.mxu0 0.0
        %5397 = vmatpush1.msra.mxu0 0.0
        %5398 = vmatprep.subr.mxu0 0.0
        %5399 = vmatpush1.msra.mxu0 0.0
        %5400 = vmatprep.subr.mxu0 0.0
        %5401 = vmatpush1.msra.mxu0 0.0
        %5402 = vmatprep.subr.mxu0 0.0
        %5403 = vmatpush1.msra.mxu0 0.0
        %5404 = vmatprep.subr.mxu0 0.0
        %5405 = vmatpush1.msra.mxu0 0.0
        %5406 = vmatprep.subr.mxu0 0.0
        %5407 = vmatpush1.msra.mxu0 0.0
        %5408 = vmatprep.mubr.f32.mxu0 0.0
        %5409 = vmatmul.mubr.f32.gmra.mrb[0].mxu0 %v4095
        %v5410 = vpop.f32.mrb[0].mxu0
        %v5411 = vadd.f32 0.0, %v5410
        %v5412 = vpop.f32.mrb[0].mxu0
        %v5413 = vadd.f32 0.0, %v5412
        %5414 = vmatprep.mubr.f32.mxu0 0.0
        %5415 = vmatmul.mubr.f32.gmra.mrb[0].mxu0 %v4098
        %v5416 = vpop.f32.mrb[0].mxu0
        %v5417 = vadd.f32 0.0, %v5416
        %v5418 = vpop.f32.mrb[0].mxu0
        %v5419 = vadd.f32 0.0, %v5418
        %5420 = vmatprep.mubr.f32.mxu0 0.0
        %5421 = vmatmul.mubr.f32.gmra.mrb[0].mxu0 %v4101
        %v5422 = vpop.f32.mrb[0].mxu0
        %v5423 = vadd.f32 0.0, %v5422
        %v5424 = vpop.f32.mrb[0].mxu0
        %v5425 = vadd.f32 0.0, %v5424
        %5426 = vmatprep.mubr.f32.mxu0 0.0
        %5427 = vmatmul.mubr.f32.gmra.mrb[0].mxu0 %v4104
        %v5428 = vpop.f32.mrb[0].mxu0
        %v5429 = vadd.f32 0.0, %v5428
        %v5430 = vpop.f32.mrb[0].mxu0
        %v5431 = vadd.f32 0.0, %v5430
        %5432 = vmatprep.mubr.f32.mxu0 0.0
        %5433 = vmatmul.mubr.f32.gmra.mrb[0].mxu0 %v4107
        %v5434 = vpop.f32.mrb[0].mxu0
        %v5435 = vadd.f32 0.0, %v5434
        %v5436 = vpop.f32.mrb[0].mxu0
        %v5437 = vadd.f32 0.0, %v5436
        %5438 = vdwg.mxu0
        %5439 = vmatprep.subr.mxu0 %v3962
        %5440 = vmatpush1.msra.mxu0 %v3961
        %5441 = vmatprep.subr.mxu0 %v3994
        %5442 = vmatpush1.msra.mxu0 %v3993
        %5443 = vmatprep.subr.mxu0 %v4026
        %5444 = vmatpush1.msra.mxu0 %v4025
        %5445 = vmatprep.subr.mxu0 %v4058
        %5446 = vmatpush1.msra.mxu0 %v4057
        %5447 = vmatprep.subr.mxu0 %v4090
        %5448 = vmatpush1.msra.mxu0 %v4089
        %5449 = vmatprep.subr.mxu0 0.0
        %5450 = vmatpush1.msra.mxu0 0.0
        %5451 = vmatprep.subr.mxu0 0.0
        %5452 = vmatpush1.msra.mxu0 0.0
        %5453 = vmatprep.subr.mxu0 0.0
        %5454 = vmatpush1.msra.mxu0 0.0
        %5455 = vmatprep.subr.mxu0 0.0
        %5456 = vmatpush1.msra.mxu0 0.0
        %5457 = vmatprep.subr.mxu0 0.0
        %5458 = vmatpush1.msra.mxu0 0.0
        %5459 = vmatprep.subr.mxu0 0.0
        %5460 = vmatpush1.msra.mxu0 0.0
        %5461 = vmatprep.subr.mxu0 0.0
        %5462 = vmatpush1.msra.mxu0 0.0
        %5463 = vmatprep.subr.mxu0 0.0
        %5464 = vmatpush1.msra.mxu0 0.0
        %5465 = vmatprep.subr.mxu0 0.0
        %5466 = vmatpush1.msra.mxu0 0.0
        %5467 = vmatprep.subr.mxu0 0.0
        %5468 = vmatpush1.msra.mxu0 0.0
        %5469 = vmatprep.subr.mxu0 0.0
        %5470 = vmatpush1.msra.mxu0 0.0
        %5471 = vmatprep.subr.mxu0 0.0
        %5472 = vmatpush1.msra.mxu0 0.0
        %5473 = vmatprep.subr.mxu0 0.0
        %5474 = vmatpush1.msra.mxu0 0.0
        %5475 = vmatprep.subr.mxu0 0.0
        %5476 = vmatpush1.msra.mxu0 0.0
        %5477 = vmatprep.subr.mxu0 0.0
        %5478 = vmatpush1.msra.mxu0 0.0
        %5479 = vmatprep.subr.mxu0 0.0
        %5480 = vmatpush1.msra.mxu0 0.0
        %5481 = vmatprep.subr.mxu0 0.0
        %5482 = vmatpush1.msra.mxu0 0.0
        %5483 = vmatprep.subr.mxu0 0.0
        %5484 = vmatpush1.msra.mxu0 0.0
        %5485 = vmatprep.subr.mxu0 0.0
        %5486 = vmatpush1.msra.mxu0 0.0
        %5487 = vmatprep.subr.mxu0 0.0
        %5488 = vmatpush1.msra.mxu0 0.0
        %5489 = vmatprep.subr.mxu0 0.0
        %5490 = vmatpush1.msra.mxu0 0.0
        %5491 = vmatprep.subr.mxu0 0.0
        %5492 = vmatpush1.msra.mxu0 0.0
        %5493 = vmatprep.subr.mxu0 0.0
        %5494 = vmatpush1.msra.mxu0 0.0
        %5495 = vmatprep.subr.mxu0 0.0
        %5496 = vmatpush1.msra.mxu0 0.0
        %5497 = vmatprep.subr.mxu0 0.0
        %5498 = vmatpush1.msra.mxu0 0.0
        %5499 = vmatprep.subr.mxu0 0.0
        %5500 = vmatpush1.msra.mxu0 0.0
        %5501 = vmatprep.subr.mxu0 0.0
        %5502 = vmatpush1.msra.mxu0 0.0
        %5503 = vmatprep.mubr.f32.mxu0 0.0
        %5504 = vmatmul.mubr.f32.gmra.mrb[0].mxu0 %v4095
        %v5505 = vpop.f32.mrb[0].mxu0
        %v5506 = vadd.f32 0.0, %v5505
        %v5507 = vpop.f32.mrb[0].mxu0
        %v5508 = vadd.f32 0.0, %v5507
        %5509 = vmatprep.mubr.f32.mxu0 0.0
        %5510 = vmatmul.mubr.f32.gmra.mrb[0].mxu0 %v4098
        %v5511 = vpop.f32.mrb[0].mxu0
        %v5512 = vadd.f32 0.0, %v5511
        %v5513 = vpop.f32.mrb[0].mxu0
        %v5514 = vadd.f32 0.0, %v5513
        %5515 = vmatprep.mubr.f32.mxu0 0.0
        %5516 = vmatmul.mubr.f32.gmra.mrb[0].mxu0 %v4101
        %v5517 = vpop.f32.mrb[0].mxu0
        %v5518 = vadd.f32 0.0, %v5517
        %v5519 = vpop.f32.mrb[0].mxu0
        %v5520 = vadd.f32 0.0, %v5519
        %5521 = vmatprep.mubr.f32.mxu0 0.0
        %5522 = vmatmul.mubr.f32.gmra.mrb[0].mxu0 %v4104
        %v5523 = vpop.f32.mrb[0].mxu0
        %v5524 = vadd.f32 0.0, %v5523
        %v5525 = vpop.f32.mrb[0].mxu0
        %v5526 = vadd.f32 0.0, %v5525
        %5527 = vmatprep.mubr.f32.mxu0 0.0
        %5528 = vmatmul.mubr.f32.gmra.mrb[0].mxu0 %v4107
        %v5529 = vpop.f32.mrb[0].mxu0
        %v5530 = vadd.f32 0.0, %v5529
        %v5531 = vpop.f32.mrb[0].mxu0
        %v5532 = vadd.f32 0.0, %v5531
        %5533 = vdwg.mxu0
        %5534 = vmatprep.subr.mxu0 %v3964
        %5535 = vmatpush1.msra.mxu0 %v3963
        %5536 = vmatprep.subr.mxu0 %v3996
        %5537 = vmatpush1.msra.mxu0 %v3995
        %5538 = vmatprep.subr.mxu0 %v4028
        %5539 = vmatpush1.msra.mxu0 %v4027
        %5540 = vmatprep.subr.mxu0 %v4060
        %5541 = vmatpush1.msra.mxu0 %v4059
        %5542 = vmatprep.subr.mxu0 %v4092
        %5543 = vmatpush1.msra.mxu0 %v4091
        %5544 = vmatprep.subr.mxu0 0.0
        %5545 = vmatpush1.msra.mxu0 0.0
        %5546 = vmatprep.subr.mxu0 0.0
        %5547 = vmatpush1.msra.mxu0 0.0
        %5548 = vmatprep.subr.mxu0 0.0
        %5549 = vmatpush1.msra.mxu0 0.0
        %5550 = vmatprep.subr.mxu0 0.0
        %5551 = vmatpush1.msra.mxu0 0.0
        %5552 = vmatprep.subr.mxu0 0.0
        %5553 = vmatpush1.msra.mxu0 0.0
        %5554 = vmatprep.subr.mxu0 0.0
        %5555 = vmatpush1.msra.mxu0 0.0
        %5556 = vmatprep.subr.mxu0 0.0
        %5557 = vmatpush1.msra.mxu0 0.0
        %5558 = vmatprep.subr.mxu0 0.0
        %5559 = vmatpush1.msra.mxu0 0.0
        %5560 = vmatprep.subr.mxu0 0.0
        %5561 = vmatpush1.msra.mxu0 0.0
        %5562 = vmatprep.subr.mxu0 0.0
        %5563 = vmatpush1.msra.mxu0 0.0
        %5564 = vmatprep.subr.mxu0 0.0
        %5565 = vmatpush1.msra.mxu0 0.0
        %5566 = vmatprep.subr.mxu0 0.0
        %5567 = vmatpush1.msra.mxu0 0.0
        %5568 = vmatprep.subr.mxu0 0.0
        %5569 = vmatpush1.msra.mxu0 0.0
        %5570 = vmatprep.subr.mxu0 0.0
        %5571 = vmatpush1.msra.mxu0 0.0
        %5572 = vmatprep.subr.mxu0 0.0
        %5573 = vmatpush1.msra.mxu0 0.0
        %5574 = vmatprep.subr.mxu0 0.0
        %5575 = vmatpush1.msra.mxu0 0.0
        %5576 = vmatprep.subr.mxu0 0.0
        %5577 = vmatpush1.msra.mxu0 0.0
        %5578 = vmatprep.subr.mxu0 0.0
        %5579 = vmatpush1.msra.mxu0 0.0
        %5580 = vmatprep.subr.mxu0 0.0
        %5581 = vmatpush1.msra.mxu0 0.0
        %5582 = vmatprep.subr.mxu0 0.0
        %5583 = vmatpush1.msra.mxu0 0.0
        %5584 = vmatprep.subr.mxu0 0.0
        %5585 = vmatpush1.msra.mxu0 0.0
        %5586 = vmatprep.subr.mxu0 0.0
        %5587 = vmatpush1.msra.mxu0 0.0
        %5588 = vmatprep.subr.mxu0 0.0
        %5589 = vmatpush1.msra.mxu0 0.0
        %5590 = vmatprep.subr.mxu0 0.0
        %5591 = vmatpush1.msra.mxu0 0.0
        %5592 = vmatprep.subr.mxu0 0.0
        %5593 = vmatpush1.msra.mxu0 0.0
        %5594 = vmatprep.subr.mxu0 0.0
        %5595 = vmatpush1.msra.mxu0 0.0
        %5596 = vmatprep.subr.mxu0 0.0
        %5597 = vmatpush1.msra.mxu0 0.0
        %5598 = vmatprep.mubr.f32.mxu0 0.0
        %5599 = vmatmul.mubr.f32.gmra.mrb[0].mxu0 %v4095
        %v5600 = vpop.f32.mrb[0].mxu0
        %v5601 = vadd.f32 0.0, %v5600
        %v5602 = vpop.f32.mrb[0].mxu0
        %v5603 = vadd.f32 0.0, %v5602
        %5604 = vmatprep.mubr.f32.mxu0 0.0
        %5605 = vmatmul.mubr.f32.gmra.mrb[0].mxu0 %v4098
        %v5606 = vpop.f32.mrb[0].mxu0
        %v5607 = vadd.f32 0.0, %v5606
        %v5608 = vpop.f32.mrb[0].mxu0
        %v5609 = vadd.f32 0.0, %v5608
        %5610 = vmatprep.mubr.f32.mxu0 0.0
        %5611 = vmatmul.mubr.f32.gmra.mrb[0].mxu0 %v4101
        %v5612 = vpop.f32.mrb[0].mxu0
        %v5613 = vadd.f32 0.0, %v5612
        %v5614 = vpop.f32.mrb[0].mxu0
        %v5615 = vadd.f32 0.0, %v5614
        %5616 = vmatprep.mubr.f32.mxu0 0.0
        %5617 = vmatmul.mubr.f32.gmra.mrb[0].mxu0 %v4104
        %v5618 = vpop.f32.mrb[0].mxu0
        %v5619 = vadd.f32 0.0, %v5618
        %v5620 = vpop.f32.mrb[0].mxu0
        %v5621 = vadd.f32 0.0, %v5620
        %5622 = vmatprep.mubr.f32.mxu0 0.0
        %5623 = vmatmul.mubr.f32.gmra.mrb[0].mxu0 %v4107
        %v5624 = vpop.f32.mrb[0].mxu0
        %v5625 = vadd.f32 0.0, %v5624
        %v5626 = vpop.f32.mrb[0].mxu0
        %v5627 = vadd.f32 0.0, %v5626
        %5628 = vdwg.mxu0
        %v5629 = vld [vmem:[%s209] sm:$0xff]
        %v5630 = vld [vmem:[%s209 + $0x8] sm:$0xff]
        %v5631 = vld [vmem:[%s209 + $0x10] sm:$0xff]
        %v5632 = vld [vmem:[%s209 + $0x18] sm:$0xff]
        %v5633 = vld [vmem:[%s209 + $0x20] sm:$0xff]
        %v5634 = vld [vmem:[%s209 + $0x28] sm:$0xff]
        %v5635 = vld [vmem:[%s209 + $0x30] sm:$0xff]
        %v5636 = vld [vmem:[%s209 + $0x38] sm:$0xff]
        %v5637 = vld [vmem:[%s209 + $0x40] sm:$0xff]
        %v5638 = vld [vmem:[%s209 + $0x48] sm:$0xff]
        %v5639 = vld [vmem:[%s209 + $0x50] sm:$0xff]
        %v5640 = vld [vmem:[%s209 + $0x58] sm:$0xff]
        %v5641 = vld [vmem:[%s209 + $0x60] sm:$0xff]
        %v5642 = vld [vmem:[%s209 + $0x68] sm:$0xff]
        %v5643 = vld [vmem:[%s209 + $0x70] sm:$0xff]
        %v5644 = vld [vmem:[%s209 + $0x78] sm:$0xff]
        %v5645 = vld [vmem:[%s209 + $0x80] sm:$0xff]
        %v5646 = vld [vmem:[%s209 + $0x88] sm:$0xff]
        %v5647 = vld [vmem:[%s209 + $0x90] sm:$0xff]
        %v5648 = vld [vmem:[%s209 + $0x98] sm:$0xff]
        %v5649 = vld [vmem:[%s209 + $0xa0] sm:$0xff]
        %v5650 = vld [vmem:[%s209 + $0xa8] sm:$0xff]
        %v5651 = vld [vmem:[%s209 + $0xb0] sm:$0xff]
        %v5652 = vld [vmem:[%s209 + $0xb8] sm:$0xff]
        %v5653 = vld [vmem:[%s209 + $0xc0] sm:$0xff]
        %v5654 = vld [vmem:[%s209 + $0xc8] sm:$0xff]
        %v5655 = vld [vmem:[%s209 + $0xd0] sm:$0xff]
        %v5656 = vld [vmem:[%s209 + $0xd8] sm:$0xff]
        %v5657 = vld [vmem:[%s209 + $0xe0] sm:$0xff]
        %v5658 = vld [vmem:[%s209 + $0xe8] sm:$0xff]
        %v5659 = vld [vmem:[%s209 + $0xf0] sm:$0xff]
        %v5660 = vld [vmem:[%s209 + $0xf8] sm:$0xff]
        %v5661 = vld [vmem:[%s209 + $0x100] sm:$0x1]
        %v5662 = vld [vmem:[%s209 + $0x108] sm:$0x1]
        %v5663 = vld [vmem:[%s209 + $0x110] sm:$0x1]
        %v5664 = vld [vmem:[%s209 + $0x118] sm:$0x1]
        %v5665 = vld [vmem:[%s209 + $0x120] sm:$0x1]
        %v5666 = vld [vmem:[%s209 + $0x128] sm:$0x1]
        %v5667 = vld [vmem:[%s209 + $0x130] sm:$0x1]
        %v5668 = vld [vmem:[%s209 + $0x138] sm:$0x1]
        %v5669 = vld [vmem:[%s209 + $0x140] sm:$0x1]
        %v5670 = vld [vmem:[%s209 + $0x148] sm:$0x1]
        %v5671 = vld [vmem:[%s209 + $0x150] sm:$0x1]
        %v5672 = vld [vmem:[%s209 + $0x158] sm:$0x1]
        %v5673 = vld [vmem:[%s209 + $0x160] sm:$0x1]
        %v5674 = vld [vmem:[%s209 + $0x168] sm:$0x1]
        %v5675 = vld [vmem:[%s209 + $0x170] sm:$0x1]
        %v5676 = vld [vmem:[%s209 + $0x178] sm:$0x1]
        %v5677 = vld [vmem:[%s209 + $0x180] sm:$0x1]
        %v5678 = vld [vmem:[%s209 + $0x188] sm:$0x1]
        %v5679 = vld [vmem:[%s209 + $0x190] sm:$0x1]
        %v5680 = vld [vmem:[%s209 + $0x198] sm:$0x1]
        %v5681 = vld [vmem:[%s209 + $0x1a0] sm:$0x1]
        %v5682 = vld [vmem:[%s209 + $0x1a8] sm:$0x1]
        %v5683 = vld [vmem:[%s209 + $0x1b0] sm:$0x1]
        %v5684 = vld [vmem:[%s209 + $0x1b8] sm:$0x1]
        %v5685 = vld [vmem:[%s209 + $0x1c0] sm:$0x1]
        %v5686 = vld [vmem:[%s209 + $0x1c8] sm:$0x1]
        %v5687 = vld [vmem:[%s209 + $0x1d0] sm:$0x1]
        %v5688 = vld [vmem:[%s209 + $0x1d8] sm:$0x1]
        %v5689 = vld [vmem:[%s209 + $0x1e0] sm:$0x1]
        %v5690 = vld [vmem:[%s209 + $0x1e8] sm:$0x1]
        %v5691 = vld [vmem:[%s209 + $0x1f0] sm:$0x1]
        %v5692 = vld [vmem:[%s209 + $0x1f8] sm:$0x1]
        %v5693 = vlaneseq
        %v5694 = vshrl.u32 %v5693, 7
        %v5695 = vsub.s32 0, %v5694
        %v5696 = vrot.slane %v5629, %v5695
        %v5697 = vlaneseq
        %v5698 = vshrl.u32 %v5697, 7
        %v5699 = vsub.s32 0, %v5698
        %v5700 = vrot.slane %v5630, %v5699
        %v5701 = vlaneseq
        %v5702 = vshrl.u32 %v5701, 7
        %v5703 = vsub.s32 0, %v5702
        %v5704 = vrot.slane %v5631, %v5703
        %v5705 = vlaneseq
        %v5706 = vshrl.u32 %v5705, 7
        %v5707 = vsub.s32 0, %v5706
        %v5708 = vrot.slane %v5632, %v5707
        %v5709 = vlaneseq
        %v5710 = vshrl.u32 %v5709, 7
        %v5711 = vsub.s32 0, %v5710
        %v5712 = vrot.slane %v5633, %v5711
        %v5713 = vlaneseq
        %v5714 = vshrl.u32 %v5713, 7
        %v5715 = vsub.s32 0, %v5714
        %v5716 = vrot.slane %v5634, %v5715
        %v5717 = vlaneseq
        %v5718 = vshrl.u32 %v5717, 7
        %v5719 = vsub.s32 0, %v5718
        %v5720 = vrot.slane %v5635, %v5719
        %v5721 = vlaneseq
        %v5722 = vshrl.u32 %v5721, 7
        %v5723 = vsub.s32 0, %v5722
        %v5724 = vrot.slane %v5636, %v5723
        %v5725 = vlaneseq
        %v5726 = vshrl.u32 %v5725, 7
        %v5727 = vsub.s32 0, %v5726
        %v5728 = vrot.slane %v5637, %v5727
        %v5729 = vlaneseq
        %v5730 = vshrl.u32 %v5729, 7
        %v5731 = vsub.s32 0, %v5730
        %v5732 = vrot.slane %v5638, %v5731
        %v5733 = vlaneseq
        %v5734 = vshrl.u32 %v5733, 7
        %v5735 = vsub.s32 0, %v5734
        %v5736 = vrot.slane %v5639, %v5735
        %v5737 = vlaneseq
        %v5738 = vshrl.u32 %v5737, 7
        %v5739 = vsub.s32 0, %v5738
        %v5740 = vrot.slane %v5640, %v5739
        %v5741 = vlaneseq
        %v5742 = vshrl.u32 %v5741, 7
        %v5743 = vsub.s32 0, %v5742
        %v5744 = vrot.slane %v5641, %v5743
        %v5745 = vlaneseq
        %v5746 = vshrl.u32 %v5745, 7
        %v5747 = vsub.s32 0, %v5746
        %v5748 = vrot.slane %v5642, %v5747
        %v5749 = vlaneseq
        %v5750 = vshrl.u32 %v5749, 7
        %v5751 = vsub.s32 0, %v5750
        %v5752 = vrot.slane %v5643, %v5751
        %v5753 = vlaneseq
        %v5754 = vshrl.u32 %v5753, 7
        %v5755 = vsub.s32 0, %v5754
        %v5756 = vrot.slane %v5644, %v5755
        %v5757 = vlaneseq
        %v5758 = vshrl.u32 %v5757, 7
        %v5759 = vsub.s32 0, %v5758
        %v5760 = vrot.slane %v5645, %v5759
        %v5761 = vlaneseq
        %v5762 = vshrl.u32 %v5761, 7
        %v5763 = vsub.s32 0, %v5762
        %v5764 = vrot.slane %v5646, %v5763
        %v5765 = vlaneseq
        %v5766 = vshrl.u32 %v5765, 7
        %v5767 = vsub.s32 0, %v5766
        %v5768 = vrot.slane %v5647, %v5767
        %v5769 = vlaneseq
        %v5770 = vshrl.u32 %v5769, 7
        %v5771 = vsub.s32 0, %v5770
        %v5772 = vrot.slane %v5648, %v5771
        %v5773 = vlaneseq
        %v5774 = vshrl.u32 %v5773, 7
        %v5775 = vsub.s32 0, %v5774
        %v5776 = vrot.slane %v5649, %v5775
        %v5777 = vlaneseq
        %v5778 = vshrl.u32 %v5777, 7
        %v5779 = vsub.s32 0, %v5778
        %v5780 = vrot.slane %v5650, %v5779
        %v5781 = vlaneseq
        %v5782 = vshrl.u32 %v5781, 7
        %v5783 = vsub.s32 0, %v5782
        %v5784 = vrot.slane %v5651, %v5783
        %v5785 = vlaneseq
        %v5786 = vshrl.u32 %v5785, 7
        %v5787 = vsub.s32 0, %v5786
        %v5788 = vrot.slane %v5652, %v5787
        %v5789 = vlaneseq
        %v5790 = vshrl.u32 %v5789, 7
        %v5791 = vsub.s32 0, %v5790
        %v5792 = vrot.slane %v5653, %v5791
        %v5793 = vlaneseq
        %v5794 = vshrl.u32 %v5793, 7
        %v5795 = vsub.s32 0, %v5794
        %v5796 = vrot.slane %v5654, %v5795
        %v5797 = vlaneseq
        %v5798 = vshrl.u32 %v5797, 7
        %v5799 = vsub.s32 0, %v5798
        %v5800 = vrot.slane %v5655, %v5799
        %v5801 = vlaneseq
        %v5802 = vshrl.u32 %v5801, 7
        %v5803 = vsub.s32 0, %v5802
        %v5804 = vrot.slane %v5656, %v5803
        %v5805 = vlaneseq
        %v5806 = vshrl.u32 %v5805, 7
        %v5807 = vsub.s32 0, %v5806
        %v5808 = vrot.slane %v5657, %v5807
        %v5809 = vlaneseq
        %v5810 = vshrl.u32 %v5809, 7
        %v5811 = vsub.s32 0, %v5810
        %v5812 = vrot.slane %v5658, %v5811
        %v5813 = vlaneseq
        %v5814 = vshrl.u32 %v5813, 7
        %v5815 = vsub.s32 0, %v5814
        %v5816 = vrot.slane %v5659, %v5815
        %v5817 = vlaneseq
        %v5818 = vshrl.u32 %v5817, 7
        %v5819 = vsub.s32 0, %v5818
        %v5820 = vrot.slane %v5660, %v5819
        %v5821 = vmul.f32 %v5696, %v4176
        %v5822 = vmul.f32 %v5700, %v4178
        %v5823 = vmul.f32 %v5704, %v4271
        %v5824 = vmul.f32 %v5708, %v4273
        %v5825 = vmul.f32 %v5712, %v4366
        %v5826 = vmul.f32 %v5716, %v4368
        %v5827 = vmul.f32 %v5720, %v4461
        %v5828 = vmul.f32 %v5724, %v4463
        %v5829 = vmul.f32 %v5728, %v4556
        %v5830 = vmul.f32 %v5732, %v4558
        %v5831 = vmul.f32 %v5736, %v4651
        %v5832 = vmul.f32 %v5740, %v4653
        %v5833 = vmul.f32 %v5744, %v4746
        %v5834 = vmul.f32 %v5748, %v4748
        %v5835 = vmul.f32 %v5752, %v4841
        %v5836 = vmul.f32 %v5756, %v4843
        %v5837 = vmul.f32 %v5760, %v4936
        %v5838 = vmul.f32 %v5764, %v4938
        %v5839 = vmul.f32 %v5768, %v5031
        %v5840 = vmul.f32 %v5772, %v5033
        %v5841 = vmul.f32 %v5776, %v5126
        %v5842 = vmul.f32 %v5780, %v5128
        %v5843 = vmul.f32 %v5784, %v5221
        %v5844 = vmul.f32 %v5788, %v5223
        %v5845 = vmul.f32 %v5792, %v5316
        %v5846 = vmul.f32 %v5796, %v5318
        %v5847 = vmul.f32 %v5800, %v5411
        %v5848 = vmul.f32 %v5804, %v5413
        %v5849 = vmul.f32 %v5808, %v5506
        %v5850 = vmul.f32 %v5812, %v5508
        %v5851 = vmul.f32 %v5816, %v5601
        %v5852 = vmul.f32 %v5820, %v5603
        %v5853 = vlaneseq
        %v5854 = vshrl.u32 %v5853, 7
        %v5855 = vsub.s32 1, %v5854
        %v5856 = vrot.slane %v5629, %v5855
        %v5857 = vlaneseq
        %v5858 = vshrl.u32 %v5857, 7
        %v5859 = vsub.s32 1, %v5858
        %v5860 = vrot.slane %v5630, %v5859
        %v5861 = vlaneseq
        %v5862 = vshrl.u32 %v5861, 7
        %v5863 = vsub.s32 1, %v5862
        %v5864 = vrot.slane %v5631, %v5863
        %v5865 = vlaneseq
        %v5866 = vshrl.u32 %v5865, 7
        %v5867 = vsub.s32 1, %v5866
        %v5868 = vrot.slane %v5632, %v5867
        %v5869 = vlaneseq
        %v5870 = vshrl.u32 %v5869, 7
        %v5871 = vsub.s32 1, %v5870
        %v5872 = vrot.slane %v5633, %v5871
        %v5873 = vlaneseq
        %v5874 = vshrl.u32 %v5873, 7
        %v5875 = vsub.s32 1, %v5874
        %v5876 = vrot.slane %v5634, %v5875
        %v5877 = vlaneseq
        %v5878 = vshrl.u32 %v5877, 7
        %v5879 = vsub.s32 1, %v5878
        %v5880 = vrot.slane %v5635, %v5879
        %v5881 = vlaneseq
        %v5882 = vshrl.u32 %v5881, 7
        %v5883 = vsub.s32 1, %v5882
        %v5884 = vrot.slane %v5636, %v5883
        %v5885 = vlaneseq
        %v5886 = vshrl.u32 %v5885, 7
        %v5887 = vsub.s32 1, %v5886
        %v5888 = vrot.slane %v5637, %v5887
        %v5889 = vlaneseq
        %v5890 = vshrl.u32 %v5889, 7
        %v5891 = vsub.s32 1, %v5890
        %v5892 = vrot.slane %v5638, %v5891
        %v5893 = vlaneseq
        %v5894 = vshrl.u32 %v5893, 7
        %v5895 = vsub.s32 1, %v5894
        %v5896 = vrot.slane %v5639, %v5895
        %v5897 = vlaneseq
        %v5898 = vshrl.u32 %v5897, 7
        %v5899 = vsub.s32 1, %v5898
        %v5900 = vrot.slane %v5640, %v5899
        %v5901 = vlaneseq
        %v5902 = vshrl.u32 %v5901, 7
        %v5903 = vsub.s32 1, %v5902
        %v5904 = vrot.slane %v5641, %v5903
        %v5905 = vlaneseq
        %v5906 = vshrl.u32 %v5905, 7
        %v5907 = vsub.s32 1, %v5906
        %v5908 = vrot.slane %v5642, %v5907
        %v5909 = vlaneseq
        %v5910 = vshrl.u32 %v5909, 7
        %v5911 = vsub.s32 1, %v5910
        %v5912 = vrot.slane %v5643, %v5911
        %v5913 = vlaneseq
        %v5914 = vshrl.u32 %v5913, 7
        %v5915 = vsub.s32 1, %v5914
        %v5916 = vrot.slane %v5644, %v5915
        %v5917 = vlaneseq
        %v5918 = vshrl.u32 %v5917, 7
        %v5919 = vsub.s32 1, %v5918
        %v5920 = vrot.slane %v5645, %v5919
        %v5921 = vlaneseq
        %v5922 = vshrl.u32 %v5921, 7
        %v5923 = vsub.s32 1, %v5922
        %v5924 = vrot.slane %v5646, %v5923
        %v5925 = vlaneseq
        %v5926 = vshrl.u32 %v5925, 7
        %v5927 = vsub.s32 1, %v5926
        %v5928 = vrot.slane %v5647, %v5927
        %v5929 = vlaneseq
        %v5930 = vshrl.u32 %v5929, 7
        %v5931 = vsub.s32 1, %v5930
        %v5932 = vrot.slane %v5648, %v5931
        %v5933 = vlaneseq
        %v5934 = vshrl.u32 %v5933, 7
        %v5935 = vsub.s32 1, %v5934
        %v5936 = vrot.slane %v5649, %v5935
        %v5937 = vlaneseq
        %v5938 = vshrl.u32 %v5937, 7
        %v5939 = vsub.s32 1, %v5938
        %v5940 = vrot.slane %v5650, %v5939
        %v5941 = vlaneseq
        %v5942 = vshrl.u32 %v5941, 7
        %v5943 = vsub.s32 1, %v5942
        %v5944 = vrot.slane %v5651, %v5943
        %v5945 = vlaneseq
        %v5946 = vshrl.u32 %v5945, 7
        %v5947 = vsub.s32 1, %v5946
        %v5948 = vrot.slane %v5652, %v5947
        %v5949 = vlaneseq
        %v5950 = vshrl.u32 %v5949, 7
        %v5951 = vsub.s32 1, %v5950
        %v5952 = vrot.slane %v5653, %v5951
        %v5953 = vlaneseq
        %v5954 = vshrl.u32 %v5953, 7
        %v5955 = vsub.s32 1, %v5954
        %v5956 = vrot.slane %v5654, %v5955
        %v5957 = vlaneseq
        %v5958 = vshrl.u32 %v5957, 7
        %v5959 = vsub.s32 1, %v5958
        %v5960 = vrot.slane %v5655, %v5959
        %v5961 = vlaneseq
        %v5962 = vshrl.u32 %v5961, 7
        %v5963 = vsub.s32 1, %v5962
        %v5964 = vrot.slane %v5656, %v5963
        %v5965 = vlaneseq
        %v5966 = vshrl.u32 %v5965, 7
        %v5967 = vsub.s32 1, %v5966
        %v5968 = vrot.slane %v5657, %v5967
        %v5969 = vlaneseq
        %v5970 = vshrl.u32 %v5969, 7
        %v5971 = vsub.s32 1, %v5970
        %v5972 = vrot.slane %v5658, %v5971
        %v5973 = vlaneseq
        %v5974 = vshrl.u32 %v5973, 7
        %v5975 = vsub.s32 1, %v5974
        %v5976 = vrot.slane %v5659, %v5975
        %v5977 = vlaneseq
        %v5978 = vshrl.u32 %v5977, 7
        %v5979 = vsub.s32 1, %v5978
        %v5980 = vrot.slane %v5660, %v5979
        %v5981 = vmul.f32 %v5856, %v4176
        %v5982 = vmul.f32 %v5860, %v4178
        %v5983 = vmul.f32 %v5864, %v4271
        %v5984 = vmul.f32 %v5868, %v4273
        %v5985 = vmul.f32 %v5872, %v4366
        %v5986 = vmul.f32 %v5876, %v4368
        %v5987 = vmul.f32 %v5880, %v4461
        %v5988 = vmul.f32 %v5884, %v4463
        %v5989 = vmul.f32 %v5888, %v4556
        %v5990 = vmul.f32 %v5892, %v4558
        %v5991 = vmul.f32 %v5896, %v4651
        %v5992 = vmul.f32 %v5900, %v4653
        %v5993 = vmul.f32 %v5904, %v4746
        %v5994 = vmul.f32 %v5908, %v4748
        %v5995 = vmul.f32 %v5912, %v4841
        %v5996 = vmul.f32 %v5916, %v4843
        %v5997 = vmul.f32 %v5920, %v4936
        %v5998 = vmul.f32 %v5924, %v4938
        %v5999 = vmul.f32 %v5928, %v5031
        %v6000 = vmul.f32 %v5932, %v5033
        %v6001 = vmul.f32 %v5936, %v5126
        %v6002 = vmul.f32 %v5940, %v5128
        %v6003 = vmul.f32 %v5944, %v5221
        %v6004 = vmul.f32 %v5948, %v5223
        %v6005 = vmul.f32 %v5952, %v5316
        %v6006 = vmul.f32 %v5956, %v5318
        %v6007 = vmul.f32 %v5960, %v5411
        %v6008 = vmul.f32 %v5964, %v5413
        %v6009 = vmul.f32 %v5968, %v5506
        %v6010 = vmul.f32 %v5972, %v5508
        %v6011 = vmul.f32 %v5976, %v5601
        %v6012 = vmul.f32 %v5980, %v5603
        %v6045 = vrot.slane %v5981, 4
        %v6046 = vrot.slane %v5982, 4
        %v6047 = vrot.slane %v5983, 4
        %v6048 = vrot.slane %v5984, 4
        %v6049 = vrot.slane %v5985, 4
        %v6050 = vrot.slane %v5986, 4
        %v6051 = vrot.slane %v5987, 4
        %v6052 = vrot.slane %v5988, 4
        %v6053 = vrot.slane %v5989, 4
        %v6054 = vrot.slane %v5990, 4
        %v6055 = vrot.slane %v5991, 4
        %v6056 = vrot.slane %v5992, 4
        %v6057 = vrot.slane %v5993, 4
        %v6058 = vrot.slane %v5994, 4
        %v6059 = vrot.slane %v5995, 4
        %v6060 = vrot.slane %v5996, 4
        %v6061 = vrot.slane %v5997, 4
        %v6062 = vrot.slane %v5998, 4
        %v6063 = vrot.slane %v5999, 4
        %v6064 = vrot.slane %v6000, 4
        %v6065 = vrot.slane %v6001, 4
        %v6066 = vrot.slane %v6002, 4
        %v6067 = vrot.slane %v6003, 4
        %v6068 = vrot.slane %v6004, 4
        %v6069 = vrot.slane %v6005, 4
        %v6070 = vrot.slane %v6006, 4
        %v6071 = vrot.slane %v6007, 4
        %v6072 = vrot.slane %v6008, 4
        %v6073 = vrot.slane %v6009, 4
        %v6074 = vrot.slane %v6010, 4
        %v6075 = vrot.slane %v6011, 4
        %v6076 = vrot.slane %v6012, 4
        %v6109 = vadd.f32 %v5821, %v6045
        %v6110 = vadd.f32 %v5822, %v6046
        %v6111 = vadd.f32 %v5823, %v6047
        %v6112 = vadd.f32 %v5824, %v6048
        %v6113 = vadd.f32 %v5825, %v6049
        %v6114 = vadd.f32 %v5826, %v6050
        %v6115 = vadd.f32 %v5827, %v6051
        %v6116 = vadd.f32 %v5828, %v6052
        %v6117 = vadd.f32 %v5829, %v6053
        %v6118 = vadd.f32 %v5830, %v6054
        %v6119 = vadd.f32 %v5831, %v6055
        %v6120 = vadd.f32 %v5832, %v6056
        %v6121 = vadd.f32 %v5833, %v6057
        %v6122 = vadd.f32 %v5834, %v6058
        %v6123 = vadd.f32 %v5835, %v6059
        %v6124 = vadd.f32 %v5836, %v6060
        %v6125 = vadd.f32 %v5837, %v6061
        %v6126 = vadd.f32 %v5838, %v6062
        %v6127 = vadd.f32 %v5839, %v6063
        %v6128 = vadd.f32 %v5840, %v6064
        %v6129 = vadd.f32 %v5841, %v6065
        %v6130 = vadd.f32 %v5842, %v6066
        %v6131 = vadd.f32 %v5843, %v6067
        %v6132 = vadd.f32 %v5844, %v6068
        %v6133 = vadd.f32 %v5845, %v6069
        %v6134 = vadd.f32 %v5846, %v6070
        %v6135 = vadd.f32 %v5847, %v6071
        %v6136 = vadd.f32 %v5848, %v6072
        %v6137 = vadd.f32 %v5849, %v6073
        %v6138 = vadd.f32 %v5850, %v6074
        %v6139 = vadd.f32 %v5851, %v6075
        %v6140 = vadd.f32 %v5852, %v6076
        %v6141 = vlaneseq
        %v6142 = vshrl.u32 %v6141, 7
        %v6143 = vsub.s32 2, %v6142
        %v6144 = vrot.slane %v5629, %v6143
        %v6145 = vlaneseq
        %v6146 = vshrl.u32 %v6145, 7
        %v6147 = vsub.s32 2, %v6146
        %v6148 = vrot.slane %v5630, %v6147
        %v6149 = vlaneseq
        %v6150 = vshrl.u32 %v6149, 7
        %v6151 = vsub.s32 2, %v6150
        %v6152 = vrot.slane %v5631, %v6151
        %v6153 = vlaneseq
        %v6154 = vshrl.u32 %v6153, 7
        %v6155 = vsub.s32 2, %v6154
        %v6156 = vrot.slane %v5632, %v6155
        %v6157 = vlaneseq
        %v6158 = vshrl.u32 %v6157, 7
        %v6159 = vsub.s32 2, %v6158
        %v6160 = vrot.slane %v5633, %v6159
        %v6161 = vlaneseq
        %v6162 = vshrl.u32 %v6161, 7
        %v6163 = vsub.s32 2, %v6162
        %v6164 = vrot.slane %v5634, %v6163
        %v6165 = vlaneseq
        %v6166 = vshrl.u32 %v6165, 7
        %v6167 = vsub.s32 2, %v6166
        %v6168 = vrot.slane %v5635, %v6167
        %v6169 = vlaneseq
        %v6170 = vshrl.u32 %v6169, 7
        %v6171 = vsub.s32 2, %v6170
        %v6172 = vrot.slane %v5636, %v6171
        %v6173 = vlaneseq
        %v6174 = vshrl.u32 %v6173, 7
        %v6175 = vsub.s32 2, %v6174
        %v6176 = vrot.slane %v5637, %v6175
        %v6177 = vlaneseq
        %v6178 = vshrl.u32 %v6177, 7
        %v6179 = vsub.s32 2, %v6178
        %v6180 = vrot.slane %v5638, %v6179
        %v6181 = vlaneseq
        %v6182 = vshrl.u32 %v6181, 7
        %v6183 = vsub.s32 2, %v6182
        %v6184 = vrot.slane %v5639, %v6183
        %v6185 = vlaneseq
        %v6186 = vshrl.u32 %v6185, 7
        %v6187 = vsub.s32 2, %v6186
        %v6188 = vrot.slane %v5640, %v6187
        %v6189 = vlaneseq
        %v6190 = vshrl.u32 %v6189, 7
        %v6191 = vsub.s32 2, %v6190
        %v6192 = vrot.slane %v5641, %v6191
        %v6193 = vlaneseq
        %v6194 = vshrl.u32 %v6193, 7
        %v6195 = vsub.s32 2, %v6194
        %v6196 = vrot.slane %v5642, %v6195
        %v6197 = vlaneseq
        %v6198 = vshrl.u32 %v6197, 7
        %v6199 = vsub.s32 2, %v6198
        %v6200 = vrot.slane %v5643, %v6199
        %v6201 = vlaneseq
        %v6202 = vshrl.u32 %v6201, 7
        %v6203 = vsub.s32 2, %v6202
        %v6204 = vrot.slane %v5644, %v6203
        %v6205 = vlaneseq
        %v6206 = vshrl.u32 %v6205, 7
        %v6207 = vsub.s32 2, %v6206
        %v6208 = vrot.slane %v5645, %v6207
        %v6209 = vlaneseq
        %v6210 = vshrl.u32 %v6209, 7
        %v6211 = vsub.s32 2, %v6210
        %v6212 = vrot.slane %v5646, %v6211
        %v6213 = vlaneseq
        %v6214 = vshrl.u32 %v6213, 7
        %v6215 = vsub.s32 2, %v6214
        %v6216 = vrot.slane %v5647, %v6215
        %v6217 = vlaneseq
        %v6218 = vshrl.u32 %v6217, 7
        %v6219 = vsub.s32 2, %v6218
        %v6220 = vrot.slane %v5648, %v6219
        %v6221 = vlaneseq
        %v6222 = vshrl.u32 %v6221, 7
        %v6223 = vsub.s32 2, %v6222
        %v6224 = vrot.slane %v5649, %v6223
        %v6225 = vlaneseq
        %v6226 = vshrl.u32 %v6225, 7
        %v6227 = vsub.s32 2, %v6226
        %v6228 = vrot.slane %v5650, %v6227
        %v6229 = vlaneseq
        %v6230 = vshrl.u32 %v6229, 7
        %v6231 = vsub.s32 2, %v6230
        %v6232 = vrot.slane %v5651, %v6231
        %v6233 = vlaneseq
        %v6234 = vshrl.u32 %v6233, 7
        %v6235 = vsub.s32 2, %v6234
        %v6236 = vrot.slane %v5652, %v6235
        %v6237 = vlaneseq
        %v6238 = vshrl.u32 %v6237, 7
        %v6239 = vsub.s32 2, %v6238
        %v6240 = vrot.slane %v5653, %v6239
        %v6241 = vlaneseq
        %v6242 = vshrl.u32 %v6241, 7
        %v6243 = vsub.s32 2, %v6242
        %v6244 = vrot.slane %v5654, %v6243
        %v6245 = vlaneseq
        %v6246 = vshrl.u32 %v6245, 7
        %v6247 = vsub.s32 2, %v6246
        %v6248 = vrot.slane %v5655, %v6247
        %v6249 = vlaneseq
        %v6250 = vshrl.u32 %v6249, 7
        %v6251 = vsub.s32 2, %v6250
        %v6252 = vrot.slane %v5656, %v6251
        %v6253 = vlaneseq
        %v6254 = vshrl.u32 %v6253, 7
        %v6255 = vsub.s32 2, %v6254
        %v6256 = vrot.slane %v5657, %v6255
        %v6257 = vlaneseq
        %v6258 = vshrl.u32 %v6257, 7
        %v6259 = vsub.s32 2, %v6258
        %v6260 = vrot.slane %v5658, %v6259
        %v6261 = vlaneseq
        %v6262 = vshrl.u32 %v6261, 7
        %v6263 = vsub.s32 2, %v6262
        %v6264 = vrot.slane %v5659, %v6263
        %v6265 = vlaneseq
        %v6266 = vshrl.u32 %v6265, 7
        %v6267 = vsub.s32 2, %v6266
        %v6268 = vrot.slane %v5660, %v6267
        %v6269 = vmul.f32 %v6144, %v4182
        %v6270 = vmul.f32 %v6148, %v4184
        %v6271 = vmul.f32 %v6152, %v4277
        %v6272 = vmul.f32 %v6156, %v4279
        %v6273 = vmul.f32 %v6160, %v4372
        %v6274 = vmul.f32 %v6164, %v4374
        %v6275 = vmul.f32 %v6168, %v4467
        %v6276 = vmul.f32 %v6172, %v4469
        %v6277 = vmul.f32 %v6176, %v4562
        %v6278 = vmul.f32 %v6180, %v4564
        %v6279 = vmul.f32 %v6184, %v4657
        %v6280 = vmul.f32 %v6188, %v4659
        %v6281 = vmul.f32 %v6192, %v4752
        %v6282 = vmul.f32 %v6196, %v4754
        %v6283 = vmul.f32 %v6200, %v4847
        %v6284 = vmul.f32 %v6204, %v4849
        %v6285 = vmul.f32 %v6208, %v4942
        %v6286 = vmul.f32 %v6212, %v4944
        %v6287 = vmul.f32 %v6216, %v5037
        %v6288 = vmul.f32 %v6220, %v5039
        %v6289 = vmul.f32 %v6224, %v5132
        %v6290 = vmul.f32 %v6228, %v5134
        %v6291 = vmul.f32 %v6232, %v5227
        %v6292 = vmul.f32 %v6236, %v5229
        %v6293 = vmul.f32 %v6240, %v5322
        %v6294 = vmul.f32 %v6244, %v5324
        %v6295 = vmul.f32 %v6248, %v5417
        %v6296 = vmul.f32 %v6252, %v5419
        %v6297 = vmul.f32 %v6256, %v5512
        %v6298 = vmul.f32 %v6260, %v5514
        %v6299 = vmul.f32 %v6264, %v5607
        %v6300 = vmul.f32 %v6268, %v5609
        %v6301 = vadd.f32 %v6109, %v6269
        %v6302 = vadd.f32 %v6110, %v6270
        %v6303 = vadd.f32 %v6111, %v6271
        %v6304 = vadd.f32 %v6112, %v6272
        %v6305 = vadd.f32 %v6113, %v6273
        %v6306 = vadd.f32 %v6114, %v6274
        %v6307 = vadd.f32 %v6115, %v6275
        %v6308 = vadd.f32 %v6116, %v6276
        %v6309 = vadd.f32 %v6117, %v6277
        %v6310 = vadd.f32 %v6118, %v6278
        %v6311 = vadd.f32 %v6119, %v6279
        %v6312 = vadd.f32 %v6120, %v6280
        %v6313 = vadd.f32 %v6121, %v6281
        %v6314 = vadd.f32 %v6122, %v6282
        %v6315 = vadd.f32 %v6123, %v6283
        %v6316 = vadd.f32 %v6124, %v6284
        %v6317 = vadd.f32 %v6125, %v6285
        %v6318 = vadd.f32 %v6126, %v6286
        %v6319 = vadd.f32 %v6127, %v6287
        %v6320 = vadd.f32 %v6128, %v6288
        %v6321 = vadd.f32 %v6129, %v6289
        %v6322 = vadd.f32 %v6130, %v6290
        %v6323 = vadd.f32 %v6131, %v6291
        %v6324 = vadd.f32 %v6132, %v6292
        %v6325 = vadd.f32 %v6133, %v6293
        %v6326 = vadd.f32 %v6134, %v6294
        %v6327 = vadd.f32 %v6135, %v6295
        %v6328 = vadd.f32 %v6136, %v6296
        %v6329 = vadd.f32 %v6137, %v6297
        %v6330 = vadd.f32 %v6138, %v6298
        %v6331 = vadd.f32 %v6139, %v6299
        %v6332 = vadd.f32 %v6140, %v6300
        %v6333 = vlaneseq
        %v6334 = vshrl.u32 %v6333, 7
        %v6335 = vsub.s32 3, %v6334
        %v6336 = vrot.slane %v5629, %v6335
        %v6337 = vlaneseq
        %v6338 = vshrl.u32 %v6337, 7
        %v6339 = vsub.s32 3, %v6338
        %v6340 = vrot.slane %v5630, %v6339
        %v6341 = vlaneseq
        %v6342 = vshrl.u32 %v6341, 7
        %v6343 = vsub.s32 3, %v6342
        %v6344 = vrot.slane %v5631, %v6343
        %v6345 = vlaneseq
        %v6346 = vshrl.u32 %v6345, 7
        %v6347 = vsub.s32 3, %v6346
        %v6348 = vrot.slane %v5632, %v6347
        %v6349 = vlaneseq
        %v6350 = vshrl.u32 %v6349, 7
        %v6351 = vsub.s32 3, %v6350
        %v6352 = vrot.slane %v5633, %v6351
        %v6353 = vlaneseq
        %v6354 = vshrl.u32 %v6353, 7
        %v6355 = vsub.s32 3, %v6354
        %v6356 = vrot.slane %v5634, %v6355
        %v6357 = vlaneseq
        %v6358 = vshrl.u32 %v6357, 7
        %v6359 = vsub.s32 3, %v6358
        %v6360 = vrot.slane %v5635, %v6359
        %v6361 = vlaneseq
        %v6362 = vshrl.u32 %v6361, 7
        %v6363 = vsub.s32 3, %v6362
        %v6364 = vrot.slane %v5636, %v6363
        %v6365 = vlaneseq
        %v6366 = vshrl.u32 %v6365, 7
        %v6367 = vsub.s32 3, %v6366
        %v6368 = vrot.slane %v5637, %v6367
        %v6369 = vlaneseq
        %v6370 = vshrl.u32 %v6369, 7
        %v6371 = vsub.s32 3, %v6370
        %v6372 = vrot.slane %v5638, %v6371
        %v6373 = vlaneseq
        %v6374 = vshrl.u32 %v6373, 7
        %v6375 = vsub.s32 3, %v6374
        %v6376 = vrot.slane %v5639, %v6375
        %v6377 = vlaneseq
        %v6378 = vshrl.u32 %v6377, 7
        %v6379 = vsub.s32 3, %v6378
        %v6380 = vrot.slane %v5640, %v6379
        %v6381 = vlaneseq
        %v6382 = vshrl.u32 %v6381, 7
        %v6383 = vsub.s32 3, %v6382
        %v6384 = vrot.slane %v5641, %v6383
        %v6385 = vlaneseq
        %v6386 = vshrl.u32 %v6385, 7
        %v6387 = vsub.s32 3, %v6386
        %v6388 = vrot.slane %v5642, %v6387
        %v6389 = vlaneseq
        %v6390 = vshrl.u32 %v6389, 7
        %v6391 = vsub.s32 3, %v6390
        %v6392 = vrot.slane %v5643, %v6391
        %v6393 = vlaneseq
        %v6394 = vshrl.u32 %v6393, 7
        %v6395 = vsub.s32 3, %v6394
        %v6396 = vrot.slane %v5644, %v6395
        %v6397 = vlaneseq
        %v6398 = vshrl.u32 %v6397, 7
        %v6399 = vsub.s32 3, %v6398
        %v6400 = vrot.slane %v5645, %v6399
        %v6401 = vlaneseq
        %v6402 = vshrl.u32 %v6401, 7
        %v6403 = vsub.s32 3, %v6402
        %v6404 = vrot.slane %v5646, %v6403
        %v6405 = vlaneseq
        %v6406 = vshrl.u32 %v6405, 7
        %v6407 = vsub.s32 3, %v6406
        %v6408 = vrot.slane %v5647, %v6407
        %v6409 = vlaneseq
        %v6410 = vshrl.u32 %v6409, 7
        %v6411 = vsub.s32 3, %v6410
        %v6412 = vrot.slane %v5648, %v6411
        %v6413 = vlaneseq
        %v6414 = vshrl.u32 %v6413, 7
        %v6415 = vsub.s32 3, %v6414
        %v6416 = vrot.slane %v5649, %v6415
        %v6417 = vlaneseq
        %v6418 = vshrl.u32 %v6417, 7
        %v6419 = vsub.s32 3, %v6418
        %v6420 = vrot.slane %v5650, %v6419
        %v6421 = vlaneseq
        %v6422 = vshrl.u32 %v6421, 7
        %v6423 = vsub.s32 3, %v6422
        %v6424 = vrot.slane %v5651, %v6423
        %v6425 = vlaneseq
        %v6426 = vshrl.u32 %v6425, 7
        %v6427 = vsub.s32 3, %v6426
        %v6428 = vrot.slane %v5652, %v6427
        %v6429 = vlaneseq
        %v6430 = vshrl.u32 %v6429, 7
        %v6431 = vsub.s32 3, %v6430
        %v6432 = vrot.slane %v5653, %v6431
        %v6433 = vlaneseq
        %v6434 = vshrl.u32 %v6433, 7
        %v6435 = vsub.s32 3, %v6434
        %v6436 = vrot.slane %v5654, %v6435
        %v6437 = vlaneseq
        %v6438 = vshrl.u32 %v6437, 7
        %v6439 = vsub.s32 3, %v6438
        %v6440 = vrot.slane %v5655, %v6439
        %v6441 = vlaneseq
        %v6442 = vshrl.u32 %v6441, 7
        %v6443 = vsub.s32 3, %v6442
        %v6444 = vrot.slane %v5656, %v6443
        %v6445 = vlaneseq
        %v6446 = vshrl.u32 %v6445, 7
        %v6447 = vsub.s32 3, %v6446
        %v6448 = vrot.slane %v5657, %v6447
        %v6449 = vlaneseq
        %v6450 = vshrl.u32 %v6449, 7
        %v6451 = vsub.s32 3, %v6450
        %v6452 = vrot.slane %v5658, %v6451
        %v6453 = vlaneseq
        %v6454 = vshrl.u32 %v6453, 7
        %v6455 = vsub.s32 3, %v6454
        %v6456 = vrot.slane %v5659, %v6455
        %v6457 = vlaneseq
        %v6458 = vshrl.u32 %v6457, 7
        %v6459 = vsub.s32 3, %v6458
        %v6460 = vrot.slane %v5660, %v6459
        %v6461 = vmul.f32 %v6336, %v4182
        %v6462 = vmul.f32 %v6340, %v4184
        %v6463 = vmul.f32 %v6344, %v4277
        %v6464 = vmul.f32 %v6348, %v4279
        %v6465 = vmul.f32 %v6352, %v4372
        %v6466 = vmul.f32 %v6356, %v4374
        %v6467 = vmul.f32 %v6360, %v4467
        %v6468 = vmul.f32 %v6364, %v4469
        %v6469 = vmul.f32 %v6368, %v4562
        %v6470 = vmul.f32 %v6372, %v4564
        %v6471 = vmul.f32 %v6376, %v4657
        %v6472 = vmul.f32 %v6380, %v4659
        %v6473 = vmul.f32 %v6384, %v4752
        %v6474 = vmul.f32 %v6388, %v4754
        %v6475 = vmul.f32 %v6392, %v4847
        %v6476 = vmul.f32 %v6396, %v4849
        %v6477 = vmul.f32 %v6400, %v4942
        %v6478 = vmul.f32 %v6404, %v4944
        %v6479 = vmul.f32 %v6408, %v5037
        %v6480 = vmul.f32 %v6412, %v5039
        %v6481 = vmul.f32 %v6416, %v5132
        %v6482 = vmul.f32 %v6420, %v5134
        %v6483 = vmul.f32 %v6424, %v5227
        %v6484 = vmul.f32 %v6428, %v5229
        %v6485 = vmul.f32 %v6432, %v5322
        %v6486 = vmul.f32 %v6436, %v5324
        %v6487 = vmul.f32 %v6440, %v5417
        %v6488 = vmul.f32 %v6444, %v5419
        %v6489 = vmul.f32 %v6448, %v5512
        %v6490 = vmul.f32 %v6452, %v5514
        %v6491 = vmul.f32 %v6456, %v5607
        %v6492 = vmul.f32 %v6460, %v5609
        %v6493 = vlaneseq
        %v6494 = vshrl.u32 %v6493, 7
        %v6495 = vsub.s32 4, %v6494
        %v6496 = vrot.slane %v5629, %v6495
        %v6497 = vlaneseq
        %v6498 = vshrl.u32 %v6497, 7
        %v6499 = vsub.s32 4, %v6498
        %v6500 = vrot.slane %v5630, %v6499
        %v6501 = vlaneseq
        %v6502 = vshrl.u32 %v6501, 7
        %v6503 = vsub.s32 4, %v6502
        %v6504 = vrot.slane %v5631, %v6503
        %v6505 = vlaneseq
        %v6506 = vshrl.u32 %v6505, 7
        %v6507 = vsub.s32 4, %v6506
        %v6508 = vrot.slane %v5632, %v6507
        %v6509 = vlaneseq
        %v6510 = vshrl.u32 %v6509, 7
        %v6511 = vsub.s32 4, %v6510
        %v6512 = vrot.slane %v5633, %v6511
        %v6513 = vlaneseq
        %v6514 = vshrl.u32 %v6513, 7
        %v6515 = vsub.s32 4, %v6514
        %v6516 = vrot.slane %v5634, %v6515
        %v6517 = vlaneseq
        %v6518 = vshrl.u32 %v6517, 7
        %v6519 = vsub.s32 4, %v6518
        %v6520 = vrot.slane %v5635, %v6519
        %v6521 = vlaneseq
        %v6522 = vshrl.u32 %v6521, 7
        %v6523 = vsub.s32 4, %v6522
        %v6524 = vrot.slane %v5636, %v6523
        %v6525 = vlaneseq
        %v6526 = vshrl.u32 %v6525, 7
        %v6527 = vsub.s32 4, %v6526
        %v6528 = vrot.slane %v5637, %v6527
        %v6529 = vlaneseq
        %v6530 = vshrl.u32 %v6529, 7
        %v6531 = vsub.s32 4, %v6530
        %v6532 = vrot.slane %v5638, %v6531
        %v6533 = vlaneseq
        %v6534 = vshrl.u32 %v6533, 7
        %v6535 = vsub.s32 4, %v6534
        %v6536 = vrot.slane %v5639, %v6535
        %v6537 = vlaneseq
        %v6538 = vshrl.u32 %v6537, 7
        %v6539 = vsub.s32 4, %v6538
        %v6540 = vrot.slane %v5640, %v6539
        %v6541 = vlaneseq
        %v6542 = vshrl.u32 %v6541, 7
        %v6543 = vsub.s32 4, %v6542
        %v6544 = vrot.slane %v5641, %v6543
        %v6545 = vlaneseq
        %v6546 = vshrl.u32 %v6545, 7
        %v6547 = vsub.s32 4, %v6546
        %v6548 = vrot.slane %v5642, %v6547
        %v6549 = vlaneseq
        %v6550 = vshrl.u32 %v6549, 7
        %v6551 = vsub.s32 4, %v6550
        %v6552 = vrot.slane %v5643, %v6551
        %v6553 = vlaneseq
        %v6554 = vshrl.u32 %v6553, 7
        %v6555 = vsub.s32 4, %v6554
        %v6556 = vrot.slane %v5644, %v6555
        %v6557 = vlaneseq
        %v6558 = vshrl.u32 %v6557, 7
        %v6559 = vsub.s32 4, %v6558
        %v6560 = vrot.slane %v5645, %v6559
        %v6561 = vlaneseq
        %v6562 = vshrl.u32 %v6561, 7
        %v6563 = vsub.s32 4, %v6562
        %v6564 = vrot.slane %v5646, %v6563
        %v6565 = vlaneseq
        %v6566 = vshrl.u32 %v6565, 7
        %v6567 = vsub.s32 4, %v6566
        %v6568 = vrot.slane %v5647, %v6567
        %v6569 = vlaneseq
        %v6570 = vshrl.u32 %v6569, 7
        %v6571 = vsub.s32 4, %v6570
        %v6572 = vrot.slane %v5648, %v6571
        %v6573 = vlaneseq
        %v6574 = vshrl.u32 %v6573, 7
        %v6575 = vsub.s32 4, %v6574
        %v6576 = vrot.slane %v5649, %v6575
        %v6577 = vlaneseq
        %v6578 = vshrl.u32 %v6577, 7
        %v6579 = vsub.s32 4, %v6578
        %v6580 = vrot.slane %v5650, %v6579
        %v6581 = vlaneseq
        %v6582 = vshrl.u32 %v6581, 7
        %v6583 = vsub.s32 4, %v6582
        %v6584 = vrot.slane %v5651, %v6583
        %v6585 = vlaneseq
        %v6586 = vshrl.u32 %v6585, 7
        %v6587 = vsub.s32 4, %v6586
        %v6588 = vrot.slane %v5652, %v6587
        %v6589 = vlaneseq
        %v6590 = vshrl.u32 %v6589, 7
        %v6591 = vsub.s32 4, %v6590
        %v6592 = vrot.slane %v5653, %v6591
        %v6593 = vlaneseq
        %v6594 = vshrl.u32 %v6593, 7
        %v6595 = vsub.s32 4, %v6594
        %v6596 = vrot.slane %v5654, %v6595
        %v6597 = vlaneseq
        %v6598 = vshrl.u32 %v6597, 7
        %v6599 = vsub.s32 4, %v6598
        %v6600 = vrot.slane %v5655, %v6599
        %v6601 = vlaneseq
        %v6602 = vshrl.u32 %v6601, 7
        %v6603 = vsub.s32 4, %v6602
        %v6604 = vrot.slane %v5656, %v6603
        %v6605 = vlaneseq
        %v6606 = vshrl.u32 %v6605, 7
        %v6607 = vsub.s32 4, %v6606
        %v6608 = vrot.slane %v5657, %v6607
        %v6609 = vlaneseq
        %v6610 = vshrl.u32 %v6609, 7
        %v6611 = vsub.s32 4, %v6610
        %v6612 = vrot.slane %v5658, %v6611
        %v6613 = vlaneseq
        %v6614 = vshrl.u32 %v6613, 7
        %v6615 = vsub.s32 4, %v6614
        %v6616 = vrot.slane %v5659, %v6615
        %v6617 = vlaneseq
        %v6618 = vshrl.u32 %v6617, 7
        %v6619 = vsub.s32 4, %v6618
        %v6620 = vrot.slane %v5660, %v6619
        %v6621 = vmul.f32 %v6496, %v4188
        %v6622 = vmul.f32 %v6500, %v4190
        %v6623 = vmul.f32 %v6504, %v4283
        %v6624 = vmul.f32 %v6508, %v4285
        %v6625 = vmul.f32 %v6512, %v4378
        %v6626 = vmul.f32 %v6516, %v4380
        %v6627 = vmul.f32 %v6520, %v4473
        %v6628 = vmul.f32 %v6524, %v4475
        %v6629 = vmul.f32 %v6528, %v4568
        %v6630 = vmul.f32 %v6532, %v4570
        %v6631 = vmul.f32 %v6536, %v4663
        %v6632 = vmul.f32 %v6540, %v4665
        %v6633 = vmul.f32 %v6544, %v4758
        %v6634 = vmul.f32 %v6548, %v4760
        %v6635 = vmul.f32 %v6552, %v4853
        %v6636 = vmul.f32 %v6556, %v4855
        %v6637 = vmul.f32 %v6560, %v4948
        %v6638 = vmul.f32 %v6564, %v4950
        %v6639 = vmul.f32 %v6568, %v5043
        %v6640 = vmul.f32 %v6572, %v5045
        %v6641 = vmul.f32 %v6576, %v5138
        %v6642 = vmul.f32 %v6580, %v5140
        %v6643 = vmul.f32 %v6584, %v5233
        %v6644 = vmul.f32 %v6588, %v5235
        %v6645 = vmul.f32 %v6592, %v5328
        %v6646 = vmul.f32 %v6596, %v5330
        %v6647 = vmul.f32 %v6600, %v5423
        %v6648 = vmul.f32 %v6604, %v5425
        %v6649 = vmul.f32 %v6608, %v5518
        %v6650 = vmul.f32 %v6612, %v5520
        %v6651 = vmul.f32 %v6616, %v5613
        %v6652 = vmul.f32 %v6620, %v5615
        %v6685 = vrot.slane %v6621, 4
        %v6686 = vrot.slane %v6622, 4
        %v6687 = vrot.slane %v6623, 4
        %v6688 = vrot.slane %v6624, 4
        %v6689 = vrot.slane %v6625, 4
        %v6690 = vrot.slane %v6626, 4
        %v6691 = vrot.slane %v6627, 4
        %v6692 = vrot.slane %v6628, 4
        %v6693 = vrot.slane %v6629, 4
        %v6694 = vrot.slane %v6630, 4
        %v6695 = vrot.slane %v6631, 4
        %v6696 = vrot.slane %v6632, 4
        %v6697 = vrot.slane %v6633, 4
        %v6698 = vrot.slane %v6634, 4
        %v6699 = vrot.slane %v6635, 4
        %v6700 = vrot.slane %v6636, 4
        %v6701 = vrot.slane %v6637, 4
        %v6702 = vrot.slane %v6638, 4
        %v6703 = vrot.slane %v6639, 4
        %v6704 = vrot.slane %v6640, 4
        %v6705 = vrot.slane %v6641, 4
        %v6706 = vrot.slane %v6642, 4
        %v6707 = vrot.slane %v6643, 4
        %v6708 = vrot.slane %v6644, 4
        %v6709 = vrot.slane %v6645, 4
        %v6710 = vrot.slane %v6646, 4
        %v6711 = vrot.slane %v6647, 4
        %v6712 = vrot.slane %v6648, 4
        %v6713 = vrot.slane %v6649, 4
        %v6714 = vrot.slane %v6650, 4
        %v6715 = vrot.slane %v6651, 4
        %v6716 = vrot.slane %v6652, 4
        %v6749 = vadd.f32 %v6461, %v6685
        %v6750 = vadd.f32 %v6462, %v6686
        %v6751 = vadd.f32 %v6463, %v6687
        %v6752 = vadd.f32 %v6464, %v6688
        %v6753 = vadd.f32 %v6465, %v6689
        %v6754 = vadd.f32 %v6466, %v6690
        %v6755 = vadd.f32 %v6467, %v6691
        %v6756 = vadd.f32 %v6468, %v6692
        %v6757 = vadd.f32 %v6469, %v6693
        %v6758 = vadd.f32 %v6470, %v6694
        %v6759 = vadd.f32 %v6471, %v6695
        %v6760 = vadd.f32 %v6472, %v6696
        %v6761 = vadd.f32 %v6473, %v6697
        %v6762 = vadd.f32 %v6474, %v6698
        %v6763 = vadd.f32 %v6475, %v6699
        %v6764 = vadd.f32 %v6476, %v6700
        %v6765 = vadd.f32 %v6477, %v6701
        %v6766 = vadd.f32 %v6478, %v6702
        %v6767 = vadd.f32 %v6479, %v6703
        %v6768 = vadd.f32 %v6480, %v6704
        %v6769 = vadd.f32 %v6481, %v6705
        %v6770 = vadd.f32 %v6482, %v6706
        %v6771 = vadd.f32 %v6483, %v6707
        %v6772 = vadd.f32 %v6484, %v6708
        %v6773 = vadd.f32 %v6485, %v6709
        %v6774 = vadd.f32 %v6486, %v6710
        %v6775 = vadd.f32 %v6487, %v6711
        %v6776 = vadd.f32 %v6488, %v6712
        %v6777 = vadd.f32 %v6489, %v6713
        %v6778 = vadd.f32 %v6490, %v6714
        %v6779 = vadd.f32 %v6491, %v6715
        %v6780 = vadd.f32 %v6492, %v6716
        %v6781 = vlaneseq
        %v6782 = vshrl.u32 %v6781, 7
        %v6783 = vsub.s32 5, %v6782
        %v6784 = vrot.slane %v5629, %v6783
        %v6785 = vlaneseq
        %v6786 = vshrl.u32 %v6785, 7
        %v6787 = vsub.s32 5, %v6786
        %v6788 = vrot.slane %v5630, %v6787
        %v6789 = vlaneseq
        %v6790 = vshrl.u32 %v6789, 7
        %v6791 = vsub.s32 5, %v6790
        %v6792 = vrot.slane %v5631, %v6791
        %v6793 = vlaneseq
        %v6794 = vshrl.u32 %v6793, 7
        %v6795 = vsub.s32 5, %v6794
        %v6796 = vrot.slane %v5632, %v6795
        %v6797 = vlaneseq
        %v6798 = vshrl.u32 %v6797, 7
        %v6799 = vsub.s32 5, %v6798
        %v6800 = vrot.slane %v5633, %v6799
        %v6801 = vlaneseq
        %v6802 = vshrl.u32 %v6801, 7
        %v6803 = vsub.s32 5, %v6802
        %v6804 = vrot.slane %v5634, %v6803
        %v6805 = vlaneseq
        %v6806 = vshrl.u32 %v6805, 7
        %v6807 = vsub.s32 5, %v6806
        %v6808 = vrot.slane %v5635, %v6807
        %v6809 = vlaneseq
        %v6810 = vshrl.u32 %v6809, 7
        %v6811 = vsub.s32 5, %v6810
        %v6812 = vrot.slane %v5636, %v6811
        %v6813 = vlaneseq
        %v6814 = vshrl.u32 %v6813, 7
        %v6815 = vsub.s32 5, %v6814
        %v6816 = vrot.slane %v5637, %v6815
        %v6817 = vlaneseq
        %v6818 = vshrl.u32 %v6817, 7
        %v6819 = vsub.s32 5, %v6818
        %v6820 = vrot.slane %v5638, %v6819
        %v6821 = vlaneseq
        %v6822 = vshrl.u32 %v6821, 7
        %v6823 = vsub.s32 5, %v6822
        %v6824 = vrot.slane %v5639, %v6823
        %v6825 = vlaneseq
        %v6826 = vshrl.u32 %v6825, 7
        %v6827 = vsub.s32 5, %v6826
        %v6828 = vrot.slane %v5640, %v6827
        %v6829 = vlaneseq
        %v6830 = vshrl.u32 %v6829, 7
        %v6831 = vsub.s32 5, %v6830
        %v6832 = vrot.slane %v5641, %v6831
        %v6833 = vlaneseq
        %v6834 = vshrl.u32 %v6833, 7
        %v6835 = vsub.s32 5, %v6834
        %v6836 = vrot.slane %v5642, %v6835
        %v6837 = vlaneseq
        %v6838 = vshrl.u32 %v6837, 7
        %v6839 = vsub.s32 5, %v6838
        %v6840 = vrot.slane %v5643, %v6839
        %v6841 = vlaneseq
        %v6842 = vshrl.u32 %v6841, 7
        %v6843 = vsub.s32 5, %v6842
        %v6844 = vrot.slane %v5644, %v6843
        %v6845 = vlaneseq
        %v6846 = vshrl.u32 %v6845, 7
        %v6847 = vsub.s32 5, %v6846
        %v6848 = vrot.slane %v5645, %v6847
        %v6849 = vlaneseq
        %v6850 = vshrl.u32 %v6849, 7
        %v6851 = vsub.s32 5, %v6850
        %v6852 = vrot.slane %v5646, %v6851
        %v6853 = vlaneseq
        %v6854 = vshrl.u32 %v6853, 7
        %v6855 = vsub.s32 5, %v6854
        %v6856 = vrot.slane %v5647, %v6855
        %v6857 = vlaneseq
        %v6858 = vshrl.u32 %v6857, 7
        %v6859 = vsub.s32 5, %v6858
        %v6860 = vrot.slane %v5648, %v6859
        %v6861 = vlaneseq
        %v6862 = vshrl.u32 %v6861, 7
        %v6863 = vsub.s32 5, %v6862
        %v6864 = vrot.slane %v5649, %v6863
        %v6865 = vlaneseq
        %v6866 = vshrl.u32 %v6865, 7
        %v6867 = vsub.s32 5, %v6866
        %v6868 = vrot.slane %v5650, %v6867
        %v6869 = vlaneseq
        %v6870 = vshrl.u32 %v6869, 7
        %v6871 = vsub.s32 5, %v6870
        %v6872 = vrot.slane %v5651, %v6871
        %v6873 = vlaneseq
        %v6874 = vshrl.u32 %v6873, 7
        %v6875 = vsub.s32 5, %v6874
        %v6876 = vrot.slane %v5652, %v6875
        %v6877 = vlaneseq
        %v6878 = vshrl.u32 %v6877, 7
        %v6879 = vsub.s32 5, %v6878
        %v6880 = vrot.slane %v5653, %v6879
        %v6881 = vlaneseq
        %v6882 = vshrl.u32 %v6881, 7
        %v6883 = vsub.s32 5, %v6882
        %v6884 = vrot.slane %v5654, %v6883
        %v6885 = vlaneseq
        %v6886 = vshrl.u32 %v6885, 7
        %v6887 = vsub.s32 5, %v6886
        %v6888 = vrot.slane %v5655, %v6887
        %v6889 = vlaneseq
        %v6890 = vshrl.u32 %v6889, 7
        %v6891 = vsub.s32 5, %v6890
        %v6892 = vrot.slane %v5656, %v6891
        %v6893 = vlaneseq
        %v6894 = vshrl.u32 %v6893, 7
        %v6895 = vsub.s32 5, %v6894
        %v6896 = vrot.slane %v5657, %v6895
        %v6897 = vlaneseq
        %v6898 = vshrl.u32 %v6897, 7
        %v6899 = vsub.s32 5, %v6898
        %v6900 = vrot.slane %v5658, %v6899
        %v6901 = vlaneseq
        %v6902 = vshrl.u32 %v6901, 7
        %v6903 = vsub.s32 5, %v6902
        %v6904 = vrot.slane %v5659, %v6903
        %v6905 = vlaneseq
        %v6906 = vshrl.u32 %v6905, 7
        %v6907 = vsub.s32 5, %v6906
        %v6908 = vrot.slane %v5660, %v6907
        %v6909 = vmul.f32 %v6784, %v4188
        %v6910 = vmul.f32 %v6788, %v4190
        %v6911 = vmul.f32 %v6792, %v4283
        %v6912 = vmul.f32 %v6796, %v4285
        %v6913 = vmul.f32 %v6800, %v4378
        %v6914 = vmul.f32 %v6804, %v4380
        %v6915 = vmul.f32 %v6808, %v4473
        %v6916 = vmul.f32 %v6812, %v4475
        %v6917 = vmul.f32 %v6816, %v4568
        %v6918 = vmul.f32 %v6820, %v4570
        %v6919 = vmul.f32 %v6824, %v4663
        %v6920 = vmul.f32 %v6828, %v4665
        %v6921 = vmul.f32 %v6832, %v4758
        %v6922 = vmul.f32 %v6836, %v4760
        %v6923 = vmul.f32 %v6840, %v4853
        %v6924 = vmul.f32 %v6844, %v4855
        %v6925 = vmul.f32 %v6848, %v4948
        %v6926 = vmul.f32 %v6852, %v4950
        %v6927 = vmul.f32 %v6856, %v5043
        %v6928 = vmul.f32 %v6860, %v5045
        %v6929 = vmul.f32 %v6864, %v5138
        %v6930 = vmul.f32 %v6868, %v5140
        %v6931 = vmul.f32 %v6872, %v5233
        %v6932 = vmul.f32 %v6876, %v5235
        %v6933 = vmul.f32 %v6880, %v5328
        %v6934 = vmul.f32 %v6884, %v5330
        %v6935 = vmul.f32 %v6888, %v5423
        %v6936 = vmul.f32 %v6892, %v5425
        %v6937 = vmul.f32 %v6896, %v5518
        %v6938 = vmul.f32 %v6900, %v5520
        %v6939 = vmul.f32 %v6904, %v5613
        %v6940 = vmul.f32 %v6908, %v5615
        %v6941 = vadd.f32 %v6749, %v6909
        %v6942 = vadd.f32 %v6750, %v6910
        %v6943 = vadd.f32 %v6751, %v6911
        %v6944 = vadd.f32 %v6752, %v6912
        %v6945 = vadd.f32 %v6753, %v6913
        %v6946 = vadd.f32 %v6754, %v6914
        %v6947 = vadd.f32 %v6755, %v6915
        %v6948 = vadd.f32 %v6756, %v6916
        %v6949 = vadd.f32 %v6757, %v6917
        %v6950 = vadd.f32 %v6758, %v6918
        %v6951 = vadd.f32 %v6759, %v6919
        %v6952 = vadd.f32 %v6760, %v6920
        %v6953 = vadd.f32 %v6761, %v6921
        %v6954 = vadd.f32 %v6762, %v6922
        %v6955 = vadd.f32 %v6763, %v6923
        %v6956 = vadd.f32 %v6764, %v6924
        %v6957 = vadd.f32 %v6765, %v6925
        %v6958 = vadd.f32 %v6766, %v6926
        %v6959 = vadd.f32 %v6767, %v6927
        %v6960 = vadd.f32 %v6768, %v6928
        %v6961 = vadd.f32 %v6769, %v6929
        %v6962 = vadd.f32 %v6770, %v6930
        %v6963 = vadd.f32 %v6771, %v6931
        %v6964 = vadd.f32 %v6772, %v6932
        %v6965 = vadd.f32 %v6773, %v6933
        %v6966 = vadd.f32 %v6774, %v6934
        %v6967 = vadd.f32 %v6775, %v6935
        %v6968 = vadd.f32 %v6776, %v6936
        %v6969 = vadd.f32 %v6777, %v6937
        %v6970 = vadd.f32 %v6778, %v6938
        %v6971 = vadd.f32 %v6779, %v6939
        %v6972 = vadd.f32 %v6780, %v6940
        %v6973 = vlaneseq
        %v6974 = vshrl.u32 %v6973, 7
        %v6975 = vsub.s32 6, %v6974
        %v6976 = vrot.slane %v5629, %v6975
        %v6977 = vlaneseq
        %v6978 = vshrl.u32 %v6977, 7
        %v6979 = vsub.s32 6, %v6978
        %v6980 = vrot.slane %v5630, %v6979
        %v6981 = vlaneseq
        %v6982 = vshrl.u32 %v6981, 7
        %v6983 = vsub.s32 6, %v6982
        %v6984 = vrot.slane %v5631, %v6983
        %v6985 = vlaneseq
        %v6986 = vshrl.u32 %v6985, 7
        %v6987 = vsub.s32 6, %v6986
        %v6988 = vrot.slane %v5632, %v6987
        %v6989 = vlaneseq
        %v6990 = vshrl.u32 %v6989, 7
        %v6991 = vsub.s32 6, %v6990
        %v6992 = vrot.slane %v5633, %v6991
        %v6993 = vlaneseq
        %v6994 = vshrl.u32 %v6993, 7
        %v6995 = vsub.s32 6, %v6994
        %v6996 = vrot.slane %v5634, %v6995
        %v6997 = vlaneseq
        %v6998 = vshrl.u32 %v6997, 7
        %v6999 = vsub.s32 6, %v6998
        %v7000 = vrot.slane %v5635, %v6999
        %v7001 = vlaneseq
        %v7002 = vshrl.u32 %v7001, 7
        %v7003 = vsub.s32 6, %v7002
        %v7004 = vrot.slane %v5636, %v7003
        %v7005 = vlaneseq
        %v7006 = vshrl.u32 %v7005, 7
        %v7007 = vsub.s32 6, %v7006
        %v7008 = vrot.slane %v5637, %v7007
        %v7009 = vlaneseq
        %v7010 = vshrl.u32 %v7009, 7
        %v7011 = vsub.s32 6, %v7010
        %v7012 = vrot.slane %v5638, %v7011
        %v7013 = vlaneseq
        %v7014 = vshrl.u32 %v7013, 7
        %v7015 = vsub.s32 6, %v7014
        %v7016 = vrot.slane %v5639, %v7015
        %v7017 = vlaneseq
        %v7018 = vshrl.u32 %v7017, 7
        %v7019 = vsub.s32 6, %v7018
        %v7020 = vrot.slane %v5640, %v7019
        %v7021 = vlaneseq
        %v7022 = vshrl.u32 %v7021, 7
        %v7023 = vsub.s32 6, %v7022
        %v7024 = vrot.slane %v5641, %v7023
        %v7025 = vlaneseq
        %v7026 = vshrl.u32 %v7025, 7
        %v7027 = vsub.s32 6, %v7026
        %v7028 = vrot.slane %v5642, %v7027
        %v7029 = vlaneseq
        %v7030 = vshrl.u32 %v7029, 7
        %v7031 = vsub.s32 6, %v7030
        %v7032 = vrot.slane %v5643, %v7031
        %v7033 = vlaneseq
        %v7034 = vshrl.u32 %v7033, 7
        %v7035 = vsub.s32 6, %v7034
        %v7036 = vrot.slane %v5644, %v7035
        %v7037 = vlaneseq
        %v7038 = vshrl.u32 %v7037, 7
        %v7039 = vsub.s32 6, %v7038
        %v7040 = vrot.slane %v5645, %v7039
        %v7041 = vlaneseq
        %v7042 = vshrl.u32 %v7041, 7
        %v7043 = vsub.s32 6, %v7042
        %v7044 = vrot.slane %v5646, %v7043
        %v7045 = vlaneseq
        %v7046 = vshrl.u32 %v7045, 7
        %v7047 = vsub.s32 6, %v7046
        %v7048 = vrot.slane %v5647, %v7047
        %v7049 = vlaneseq
        %v7050 = vshrl.u32 %v7049, 7
        %v7051 = vsub.s32 6, %v7050
        %v7052 = vrot.slane %v5648, %v7051
        %v7053 = vlaneseq
        %v7054 = vshrl.u32 %v7053, 7
        %v7055 = vsub.s32 6, %v7054
        %v7056 = vrot.slane %v5649, %v7055
        %v7057 = vlaneseq
        %v7058 = vshrl.u32 %v7057, 7
        %v7059 = vsub.s32 6, %v7058
        %v7060 = vrot.slane %v5650, %v7059
        %v7061 = vlaneseq
        %v7062 = vshrl.u32 %v7061, 7
        %v7063 = vsub.s32 6, %v7062
        %v7064 = vrot.slane %v5651, %v7063
        %v7065 = vlaneseq
        %v7066 = vshrl.u32 %v7065, 7
        %v7067 = vsub.s32 6, %v7066
        %v7068 = vrot.slane %v5652, %v7067
        %v7069 = vlaneseq
        %v7070 = vshrl.u32 %v7069, 7
        %v7071 = vsub.s32 6, %v7070
        %v7072 = vrot.slane %v5653, %v7071
        %v7073 = vlaneseq
        %v7074 = vshrl.u32 %v7073, 7
        %v7075 = vsub.s32 6, %v7074
        %v7076 = vrot.slane %v5654, %v7075
        %v7077 = vlaneseq
        %v7078 = vshrl.u32 %v7077, 7
        %v7079 = vsub.s32 6, %v7078
        %v7080 = vrot.slane %v5655, %v7079
        %v7081 = vlaneseq
        %v7082 = vshrl.u32 %v7081, 7
        %v7083 = vsub.s32 6, %v7082
        %v7084 = vrot.slane %v5656, %v7083
        %v7085 = vlaneseq
        %v7086 = vshrl.u32 %v7085, 7
        %v7087 = vsub.s32 6, %v7086
        %v7088 = vrot.slane %v5657, %v7087
        %v7089 = vlaneseq
        %v7090 = vshrl.u32 %v7089, 7
        %v7091 = vsub.s32 6, %v7090
        %v7092 = vrot.slane %v5658, %v7091
        %v7093 = vlaneseq
        %v7094 = vshrl.u32 %v7093, 7
        %v7095 = vsub.s32 6, %v7094
        %v7096 = vrot.slane %v5659, %v7095
        %v7097 = vlaneseq
        %v7098 = vshrl.u32 %v7097, 7
        %v7099 = vsub.s32 6, %v7098
        %v7100 = vrot.slane %v5660, %v7099
        %v7101 = vmul.f32 %v6976, %v4194
        %v7102 = vmul.f32 %v6980, %v4196
        %v7103 = vmul.f32 %v6984, %v4289
        %v7104 = vmul.f32 %v6988, %v4291
        %v7105 = vmul.f32 %v6992, %v4384
        %v7106 = vmul.f32 %v6996, %v4386
        %v7107 = vmul.f32 %v7000, %v4479
        %v7108 = vmul.f32 %v7004, %v4481
        %v7109 = vmul.f32 %v7008, %v4574
        %v7110 = vmul.f32 %v7012, %v4576
        %v7111 = vmul.f32 %v7016, %v4669
        %v7112 = vmul.f32 %v7020, %v4671
        %v7113 = vmul.f32 %v7024, %v4764
        %v7114 = vmul.f32 %v7028, %v4766
        %v7115 = vmul.f32 %v7032, %v4859
        %v7116 = vmul.f32 %v7036, %v4861
        %v7117 = vmul.f32 %v7040, %v4954
        %v7118 = vmul.f32 %v7044, %v4956
        %v7119 = vmul.f32 %v7048, %v5049
        %v7120 = vmul.f32 %v7052, %v5051
        %v7121 = vmul.f32 %v7056, %v5144
        %v7122 = vmul.f32 %v7060, %v5146
        %v7123 = vmul.f32 %v7064, %v5239
        %v7124 = vmul.f32 %v7068, %v5241
        %v7125 = vmul.f32 %v7072, %v5334
        %v7126 = vmul.f32 %v7076, %v5336
        %v7127 = vmul.f32 %v7080, %v5429
        %v7128 = vmul.f32 %v7084, %v5431
        %v7129 = vmul.f32 %v7088, %v5524
        %v7130 = vmul.f32 %v7092, %v5526
        %v7131 = vmul.f32 %v7096, %v5619
        %v7132 = vmul.f32 %v7100, %v5621
        %v7133 = vlaneseq
        %v7134 = vshrl.u32 %v7133, 7
        %v7135 = vsub.s32 7, %v7134
        %v7136 = vrot.slane %v5629, %v7135
        %v7137 = vlaneseq
        %v7138 = vshrl.u32 %v7137, 7
        %v7139 = vsub.s32 7, %v7138
        %v7140 = vrot.slane %v5630, %v7139
        %v7141 = vlaneseq
        %v7142 = vshrl.u32 %v7141, 7
        %v7143 = vsub.s32 7, %v7142
        %v7144 = vrot.slane %v5631, %v7143
        %v7145 = vlaneseq
        %v7146 = vshrl.u32 %v7145, 7
        %v7147 = vsub.s32 7, %v7146
        %v7148 = vrot.slane %v5632, %v7147
        %v7149 = vlaneseq
        %v7150 = vshrl.u32 %v7149, 7
        %v7151 = vsub.s32 7, %v7150
        %v7152 = vrot.slane %v5633, %v7151
        %v7153 = vlaneseq
        %v7154 = vshrl.u32 %v7153, 7
        %v7155 = vsub.s32 7, %v7154
        %v7156 = vrot.slane %v5634, %v7155
        %v7157 = vlaneseq
        %v7158 = vshrl.u32 %v7157, 7
        %v7159 = vsub.s32 7, %v7158
        %v7160 = vrot.slane %v5635, %v7159
        %v7161 = vlaneseq
        %v7162 = vshrl.u32 %v7161, 7
        %v7163 = vsub.s32 7, %v7162
        %v7164 = vrot.slane %v5636, %v7163
        %v7165 = vlaneseq
        %v7166 = vshrl.u32 %v7165, 7
        %v7167 = vsub.s32 7, %v7166
        %v7168 = vrot.slane %v5637, %v7167
        %v7169 = vlaneseq
        %v7170 = vshrl.u32 %v7169, 7
        %v7171 = vsub.s32 7, %v7170
        %v7172 = vrot.slane %v5638, %v7171
        %v7173 = vlaneseq
        %v7174 = vshrl.u32 %v7173, 7
        %v7175 = vsub.s32 7, %v7174
        %v7176 = vrot.slane %v5639, %v7175
        %v7177 = vlaneseq
        %v7178 = vshrl.u32 %v7177, 7
        %v7179 = vsub.s32 7, %v7178
        %v7180 = vrot.slane %v5640, %v7179
        %v7181 = vlaneseq
        %v7182 = vshrl.u32 %v7181, 7
        %v7183 = vsub.s32 7, %v7182
        %v7184 = vrot.slane %v5641, %v7183
        %v7185 = vlaneseq
        %v7186 = vshrl.u32 %v7185, 7
        %v7187 = vsub.s32 7, %v7186
        %v7188 = vrot.slane %v5642, %v7187
        %v7189 = vlaneseq
        %v7190 = vshrl.u32 %v7189, 7
        %v7191 = vsub.s32 7, %v7190
        %v7192 = vrot.slane %v5643, %v7191
        %v7193 = vlaneseq
        %v7194 = vshrl.u32 %v7193, 7
        %v7195 = vsub.s32 7, %v7194
        %v7196 = vrot.slane %v5644, %v7195
        %v7197 = vlaneseq
        %v7198 = vshrl.u32 %v7197, 7
        %v7199 = vsub.s32 7, %v7198
        %v7200 = vrot.slane %v5645, %v7199
        %v7201 = vlaneseq
        %v7202 = vshrl.u32 %v7201, 7
        %v7203 = vsub.s32 7, %v7202
        %v7204 = vrot.slane %v5646, %v7203
        %v7205 = vlaneseq
        %v7206 = vshrl.u32 %v7205, 7
        %v7207 = vsub.s32 7, %v7206
        %v7208 = vrot.slane %v5647, %v7207
        %v7209 = vlaneseq
        %v7210 = vshrl.u32 %v7209, 7
        %v7211 = vsub.s32 7, %v7210
        %v7212 = vrot.slane %v5648, %v7211
        %v7213 = vlaneseq
        %v7214 = vshrl.u32 %v7213, 7
        %v7215 = vsub.s32 7, %v7214
        %v7216 = vrot.slane %v5649, %v7215
        %v7217 = vlaneseq
        %v7218 = vshrl.u32 %v7217, 7
        %v7219 = vsub.s32 7, %v7218
        %v7220 = vrot.slane %v5650, %v7219
        %v7221 = vlaneseq
        %v7222 = vshrl.u32 %v7221, 7
        %v7223 = vsub.s32 7, %v7222
        %v7224 = vrot.slane %v5651, %v7223
        %v7225 = vlaneseq
        %v7226 = vshrl.u32 %v7225, 7
        %v7227 = vsub.s32 7, %v7226
        %v7228 = vrot.slane %v5652, %v7227
        %v7229 = vlaneseq
        %v7230 = vshrl.u32 %v7229, 7
        %v7231 = vsub.s32 7, %v7230
        %v7232 = vrot.slane %v5653, %v7231
        %v7233 = vlaneseq
        %v7234 = vshrl.u32 %v7233, 7
        %v7235 = vsub.s32 7, %v7234
        %v7236 = vrot.slane %v5654, %v7235
        %v7237 = vlaneseq
        %v7238 = vshrl.u32 %v7237, 7
        %v7239 = vsub.s32 7, %v7238
        %v7240 = vrot.slane %v5655, %v7239
        %v7241 = vlaneseq
        %v7242 = vshrl.u32 %v7241, 7
        %v7243 = vsub.s32 7, %v7242
        %v7244 = vrot.slane %v5656, %v7243
        %v7245 = vlaneseq
        %v7246 = vshrl.u32 %v7245, 7
        %v7247 = vsub.s32 7, %v7246
        %v7248 = vrot.slane %v5657, %v7247
        %v7249 = vlaneseq
        %v7250 = vshrl.u32 %v7249, 7
        %v7251 = vsub.s32 7, %v7250
        %v7252 = vrot.slane %v5658, %v7251
        %v7253 = vlaneseq
        %v7254 = vshrl.u32 %v7253, 7
        %v7255 = vsub.s32 7, %v7254
        %v7256 = vrot.slane %v5659, %v7255
        %v7257 = vlaneseq
        %v7258 = vshrl.u32 %v7257, 7
        %v7259 = vsub.s32 7, %v7258
        %v7260 = vrot.slane %v5660, %v7259
        %v7261 = vmul.f32 %v7136, %v4194
        %v7262 = vmul.f32 %v7140, %v4196
        %v7263 = vmul.f32 %v7144, %v4289
        %v7264 = vmul.f32 %v7148, %v4291
        %v7265 = vmul.f32 %v7152, %v4384
        %v7266 = vmul.f32 %v7156, %v4386
        %v7267 = vmul.f32 %v7160, %v4479
        %v7268 = vmul.f32 %v7164, %v4481
        %v7269 = vmul.f32 %v7168, %v4574
        %v7270 = vmul.f32 %v7172, %v4576
        %v7271 = vmul.f32 %v7176, %v4669
        %v7272 = vmul.f32 %v7180, %v4671
        %v7273 = vmul.f32 %v7184, %v4764
        %v7274 = vmul.f32 %v7188, %v4766
        %v7275 = vmul.f32 %v7192, %v4859
        %v7276 = vmul.f32 %v7196, %v4861
        %v7277 = vmul.f32 %v7200, %v4954
        %v7278 = vmul.f32 %v7204, %v4956
        %v7279 = vmul.f32 %v7208, %v5049
        %v7280 = vmul.f32 %v7212, %v5051
        %v7281 = vmul.f32 %v7216, %v5144
        %v7282 = vmul.f32 %v7220, %v5146
        %v7283 = vmul.f32 %v7224, %v5239
        %v7284 = vmul.f32 %v7228, %v5241
        %v7285 = vmul.f32 %v7232, %v5334
        %v7286 = vmul.f32 %v7236, %v5336
        %v7287 = vmul.f32 %v7240, %v5429
        %v7288 = vmul.f32 %v7244, %v5431
        %v7289 = vmul.f32 %v7248, %v5524
        %v7290 = vmul.f32 %v7252, %v5526
        %v7291 = vmul.f32 %v7256, %v5619
        %v7292 = vmul.f32 %v7260, %v5621
        %v7325 = vrot.slane %v7261, 4
        %v7326 = vrot.slane %v7262, 4
        %v7327 = vrot.slane %v7263, 4
        %v7328 = vrot.slane %v7264, 4
        %v7329 = vrot.slane %v7265, 4
        %v7330 = vrot.slane %v7266, 4
        %v7331 = vrot.slane %v7267, 4
        %v7332 = vrot.slane %v7268, 4
        %v7333 = vrot.slane %v7269, 4
        %v7334 = vrot.slane %v7270, 4
        %v7335 = vrot.slane %v7271, 4
        %v7336 = vrot.slane %v7272, 4
        %v7337 = vrot.slane %v7273, 4
        %v7338 = vrot.slane %v7274, 4
        %v7339 = vrot.slane %v7275, 4
        %v7340 = vrot.slane %v7276, 4
        %v7341 = vrot.slane %v7277, 4
        %v7342 = vrot.slane %v7278, 4
        %v7343 = vrot.slane %v7279, 4
        %v7344 = vrot.slane %v7280, 4
        %v7345 = vrot.slane %v7281, 4
        %v7346 = vrot.slane %v7282, 4
        %v7347 = vrot.slane %v7283, 4
        %v7348 = vrot.slane %v7284, 4
        %v7349 = vrot.slane %v7285, 4
        %v7350 = vrot.slane %v7286, 4
        %v7351 = vrot.slane %v7287, 4
        %v7352 = vrot.slane %v7288, 4
        %v7353 = vrot.slane %v7289, 4
        %v7354 = vrot.slane %v7290, 4
        %v7355 = vrot.slane %v7291, 4
        %v7356 = vrot.slane %v7292, 4
        %v7389 = vadd.f32 %v7101, %v7325
        %v7390 = vadd.f32 %v7102, %v7326
        %v7391 = vadd.f32 %v7103, %v7327
        %v7392 = vadd.f32 %v7104, %v7328
        %v7393 = vadd.f32 %v7105, %v7329
        %v7394 = vadd.f32 %v7106, %v7330
        %v7395 = vadd.f32 %v7107, %v7331
        %v7396 = vadd.f32 %v7108, %v7332
        %v7397 = vadd.f32 %v7109, %v7333
        %v7398 = vadd.f32 %v7110, %v7334
        %v7399 = vadd.f32 %v7111, %v7335
        %v7400 = vadd.f32 %v7112, %v7336
        %v7401 = vadd.f32 %v7113, %v7337
        %v7402 = vadd.f32 %v7114, %v7338
        %v7403 = vadd.f32 %v7115, %v7339
        %v7404 = vadd.f32 %v7116, %v7340
        %v7405 = vadd.f32 %v7117, %v7341
        %v7406 = vadd.f32 %v7118, %v7342
        %v7407 = vadd.f32 %v7119, %v7343
        %v7408 = vadd.f32 %v7120, %v7344
        %v7409 = vadd.f32 %v7121, %v7345
        %v7410 = vadd.f32 %v7122, %v7346
        %v7411 = vadd.f32 %v7123, %v7347
        %v7412 = vadd.f32 %v7124, %v7348
        %v7413 = vadd.f32 %v7125, %v7349
        %v7414 = vadd.f32 %v7126, %v7350
        %v7415 = vadd.f32 %v7127, %v7351
        %v7416 = vadd.f32 %v7128, %v7352
        %v7417 = vadd.f32 %v7129, %v7353
        %v7418 = vadd.f32 %v7130, %v7354
        %v7419 = vadd.f32 %v7131, %v7355
        %v7420 = vadd.f32 %v7132, %v7356
        %v7421 = vlaneseq
        %v7422 = vshrl.u32 %v7421, 7
        %v7423 = vsub.s32 0, %v7422
        %v7424 = vrot.slane %v5661, %v7423
        %v7425 = vlaneseq
        %v7426 = vshrl.u32 %v7425, 7
        %v7427 = vsub.s32 0, %v7426
        %v7428 = vrot.slane %v5662, %v7427
        %v7429 = vlaneseq
        %v7430 = vshrl.u32 %v7429, 7
        %v7431 = vsub.s32 0, %v7430
        %v7432 = vrot.slane %v5663, %v7431
        %v7433 = vlaneseq
        %v7434 = vshrl.u32 %v7433, 7
        %v7435 = vsub.s32 0, %v7434
        %v7436 = vrot.slane %v5664, %v7435
        %v7437 = vlaneseq
        %v7438 = vshrl.u32 %v7437, 7
        %v7439 = vsub.s32 0, %v7438
        %v7440 = vrot.slane %v5665, %v7439
        %v7441 = vlaneseq
        %v7442 = vshrl.u32 %v7441, 7
        %v7443 = vsub.s32 0, %v7442
        %v7444 = vrot.slane %v5666, %v7443
        %v7445 = vlaneseq
        %v7446 = vshrl.u32 %v7445, 7
        %v7447 = vsub.s32 0, %v7446
        %v7448 = vrot.slane %v5667, %v7447
        %v7449 = vlaneseq
        %v7450 = vshrl.u32 %v7449, 7
        %v7451 = vsub.s32 0, %v7450
        %v7452 = vrot.slane %v5668, %v7451
        %v7453 = vlaneseq
        %v7454 = vshrl.u32 %v7453, 7
        %v7455 = vsub.s32 0, %v7454
        %v7456 = vrot.slane %v5669, %v7455
        %v7457 = vlaneseq
        %v7458 = vshrl.u32 %v7457, 7
        %v7459 = vsub.s32 0, %v7458
        %v7460 = vrot.slane %v5670, %v7459
        %v7461 = vlaneseq
        %v7462 = vshrl.u32 %v7461, 7
        %v7463 = vsub.s32 0, %v7462
        %v7464 = vrot.slane %v5671, %v7463
        %v7465 = vlaneseq
        %v7466 = vshrl.u32 %v7465, 7
        %v7467 = vsub.s32 0, %v7466
        %v7468 = vrot.slane %v5672, %v7467
        %v7469 = vlaneseq
        %v7470 = vshrl.u32 %v7469, 7
        %v7471 = vsub.s32 0, %v7470
        %v7472 = vrot.slane %v5673, %v7471
        %v7473 = vlaneseq
        %v7474 = vshrl.u32 %v7473, 7
        %v7475 = vsub.s32 0, %v7474
        %v7476 = vrot.slane %v5674, %v7475
        %v7477 = vlaneseq
        %v7478 = vshrl.u32 %v7477, 7
        %v7479 = vsub.s32 0, %v7478
        %v7480 = vrot.slane %v5675, %v7479
        %v7481 = vlaneseq
        %v7482 = vshrl.u32 %v7481, 7
        %v7483 = vsub.s32 0, %v7482
        %v7484 = vrot.slane %v5676, %v7483
        %v7485 = vlaneseq
        %v7486 = vshrl.u32 %v7485, 7
        %v7487 = vsub.s32 0, %v7486
        %v7488 = vrot.slane %v5677, %v7487
        %v7489 = vlaneseq
        %v7490 = vshrl.u32 %v7489, 7
        %v7491 = vsub.s32 0, %v7490
        %v7492 = vrot.slane %v5678, %v7491
        %v7493 = vlaneseq
        %v7494 = vshrl.u32 %v7493, 7
        %v7495 = vsub.s32 0, %v7494
        %v7496 = vrot.slane %v5679, %v7495
        %v7497 = vlaneseq
        %v7498 = vshrl.u32 %v7497, 7
        %v7499 = vsub.s32 0, %v7498
        %v7500 = vrot.slane %v5680, %v7499
        %v7501 = vlaneseq
        %v7502 = vshrl.u32 %v7501, 7
        %v7503 = vsub.s32 0, %v7502
        %v7504 = vrot.slane %v5681, %v7503
        %v7505 = vlaneseq
        %v7506 = vshrl.u32 %v7505, 7
        %v7507 = vsub.s32 0, %v7506
        %v7508 = vrot.slane %v5682, %v7507
        %v7509 = vlaneseq
        %v7510 = vshrl.u32 %v7509, 7
        %v7511 = vsub.s32 0, %v7510
        %v7512 = vrot.slane %v5683, %v7511
        %v7513 = vlaneseq
        %v7514 = vshrl.u32 %v7513, 7
        %v7515 = vsub.s32 0, %v7514
        %v7516 = vrot.slane %v5684, %v7515
        %v7517 = vlaneseq
        %v7518 = vshrl.u32 %v7517, 7
        %v7519 = vsub.s32 0, %v7518
        %v7520 = vrot.slane %v5685, %v7519
        %v7521 = vlaneseq
        %v7522 = vshrl.u32 %v7521, 7
        %v7523 = vsub.s32 0, %v7522
        %v7524 = vrot.slane %v5686, %v7523
        %v7525 = vlaneseq
        %v7526 = vshrl.u32 %v7525, 7
        %v7527 = vsub.s32 0, %v7526
        %v7528 = vrot.slane %v5687, %v7527
        %v7529 = vlaneseq
        %v7530 = vshrl.u32 %v7529, 7
        %v7531 = vsub.s32 0, %v7530
        %v7532 = vrot.slane %v5688, %v7531
        %v7533 = vlaneseq
        %v7534 = vshrl.u32 %v7533, 7
        %v7535 = vsub.s32 0, %v7534
        %v7536 = vrot.slane %v5689, %v7535
        %v7537 = vlaneseq
        %v7538 = vshrl.u32 %v7537, 7
        %v7539 = vsub.s32 0, %v7538
        %v7540 = vrot.slane %v5690, %v7539
        %v7541 = vlaneseq
        %v7542 = vshrl.u32 %v7541, 7
        %v7543 = vsub.s32 0, %v7542
        %v7544 = vrot.slane %v5691, %v7543
        %v7545 = vlaneseq
        %v7546 = vshrl.u32 %v7545, 7
        %v7547 = vsub.s32 0, %v7546
        %v7548 = vrot.slane %v5692, %v7547
        %v7549 = vmul.f32 %v7424, %v4200
        %v7550 = vmul.f32 %v7428, %v4202
        %v7551 = vmul.f32 %v7432, %v4295
        %v7552 = vmul.f32 %v7436, %v4297
        %v7553 = vmul.f32 %v7440, %v4390
        %v7554 = vmul.f32 %v7444, %v4392
        %v7555 = vmul.f32 %v7448, %v4485
        %v7556 = vmul.f32 %v7452, %v4487
        %v7557 = vmul.f32 %v7456, %v4580
        %v7558 = vmul.f32 %v7460, %v4582
        %v7559 = vmul.f32 %v7464, %v4675
        %v7560 = vmul.f32 %v7468, %v4677
        %v7561 = vmul.f32 %v7472, %v4770
        %v7562 = vmul.f32 %v7476, %v4772
        %v7563 = vmul.f32 %v7480, %v4865
        %v7564 = vmul.f32 %v7484, %v4867
        %v7565 = vmul.f32 %v7488, %v4960
        %v7566 = vmul.f32 %v7492, %v4962
        %v7567 = vmul.f32 %v7496, %v5055
        %v7568 = vmul.f32 %v7500, %v5057
        %v7569 = vmul.f32 %v7504, %v5150
        %v7570 = vmul.f32 %v7508, %v5152
        %v7571 = vmul.f32 %v7512, %v5245
        %v7572 = vmul.f32 %v7516, %v5247
        %v7573 = vmul.f32 %v7520, %v5340
        %v7574 = vmul.f32 %v7524, %v5342
        %v7575 = vmul.f32 %v7528, %v5435
        %v7576 = vmul.f32 %v7532, %v5437
        %v7577 = vmul.f32 %v7536, %v5530
        %v7578 = vmul.f32 %v7540, %v5532
        %v7579 = vmul.f32 %v7544, %v5625
        %v7580 = vmul.f32 %v7548, %v5627
        %v7581 = vadd.f32 %v7389, %v7549
        %v7582 = vadd.f32 %v7390, %v7550
        %v7583 = vadd.f32 %v7391, %v7551
        %v7584 = vadd.f32 %v7392, %v7552
        %v7585 = vadd.f32 %v7393, %v7553
        %v7586 = vadd.f32 %v7394, %v7554
        %v7587 = vadd.f32 %v7395, %v7555
        %v7588 = vadd.f32 %v7396, %v7556
        %v7589 = vadd.f32 %v7397, %v7557
        %v7590 = vadd.f32 %v7398, %v7558
        %v7591 = vadd.f32 %v7399, %v7559
        %v7592 = vadd.f32 %v7400, %v7560
        %v7593 = vadd.f32 %v7401, %v7561
        %v7594 = vadd.f32 %v7402, %v7562
        %v7595 = vadd.f32 %v7403, %v7563
        %v7596 = vadd.f32 %v7404, %v7564
        %v7597 = vadd.f32 %v7405, %v7565
        %v7598 = vadd.f32 %v7406, %v7566
        %v7599 = vadd.f32 %v7407, %v7567
        %v7600 = vadd.f32 %v7408, %v7568
        %v7601 = vadd.f32 %v7409, %v7569
        %v7602 = vadd.f32 %v7410, %v7570
        %v7603 = vadd.f32 %v7411, %v7571
        %v7604 = vadd.f32 %v7412, %v7572
        %v7605 = vadd.f32 %v7413, %v7573
        %v7606 = vadd.f32 %v7414, %v7574
        %v7607 = vadd.f32 %v7415, %v7575
        %v7608 = vadd.f32 %v7416, %v7576
        %v7609 = vadd.f32 %v7417, %v7577
        %v7610 = vadd.f32 %v7418, %v7578
        %v7611 = vadd.f32 %v7419, %v7579
        %v7612 = vadd.f32 %v7420, %v7580
        %v7645 = vrot.slane %v6941, 4
        %v7646 = vrot.slane %v6942, 4
        %v7647 = vrot.slane %v6943, 4
        %v7648 = vrot.slane %v6944, 4
        %v7649 = vrot.slane %v6945, 4
        %v7650 = vrot.slane %v6946, 4
        %v7651 = vrot.slane %v6947, 4
        %v7652 = vrot.slane %v6948, 4
        %v7653 = vrot.slane %v6949, 4
        %v7654 = vrot.slane %v6950, 4
        %v7655 = vrot.slane %v6951, 4
        %v7656 = vrot.slane %v6952, 4
        %v7657 = vrot.slane %v6953, 4
        %v7658 = vrot.slane %v6954, 4
        %v7659 = vrot.slane %v6955, 4
        %v7660 = vrot.slane %v6956, 4
        %v7661 = vrot.slane %v6957, 4
        %v7662 = vrot.slane %v6958, 4
        %v7663 = vrot.slane %v6959, 4
        %v7664 = vrot.slane %v6960, 4
        %v7665 = vrot.slane %v6961, 4
        %v7666 = vrot.slane %v6962, 4
        %v7667 = vrot.slane %v6963, 4
        %v7668 = vrot.slane %v6964, 4
        %v7669 = vrot.slane %v6965, 4
        %v7670 = vrot.slane %v6966, 4
        %v7671 = vrot.slane %v6967, 4
        %v7672 = vrot.slane %v6968, 4
        %v7673 = vrot.slane %v6969, 4
        %v7674 = vrot.slane %v6970, 4
        %v7675 = vrot.slane %v6971, 4
        %v7676 = vrot.slane %v6972, 4
        %v7709 = vadd.f32 %v6301, %v7645
        %v7710 = vadd.f32 %v6302, %v7646
        %v7711 = vadd.f32 %v6303, %v7647
        %v7712 = vadd.f32 %v6304, %v7648
        %v7713 = vadd.f32 %v6305, %v7649
        %v7714 = vadd.f32 %v6306, %v7650
        %v7715 = vadd.f32 %v6307, %v7651
        %v7716 = vadd.f32 %v6308, %v7652
        %v7717 = vadd.f32 %v6309, %v7653
        %v7718 = vadd.f32 %v6310, %v7654
        %v7719 = vadd.f32 %v6311, %v7655
        %v7720 = vadd.f32 %v6312, %v7656
        %v7721 = vadd.f32 %v6313, %v7657
        %v7722 = vadd.f32 %v6314, %v7658
        %v7723 = vadd.f32 %v6315, %v7659
        %v7724 = vadd.f32 %v6316, %v7660
        %v7725 = vadd.f32 %v6317, %v7661
        %v7726 = vadd.f32 %v6318, %v7662
        %v7727 = vadd.f32 %v6319, %v7663
        %v7728 = vadd.f32 %v6320, %v7664
        %v7729 = vadd.f32 %v6321, %v7665
        %v7730 = vadd.f32 %v6322, %v7666
        %v7731 = vadd.f32 %v6323, %v7667
        %v7732 = vadd.f32 %v6324, %v7668
        %v7733 = vadd.f32 %v6325, %v7669
        %v7734 = vadd.f32 %v6326, %v7670
        %v7735 = vadd.f32 %v6327, %v7671
        %v7736 = vadd.f32 %v6328, %v7672
        %v7737 = vadd.f32 %v6329, %v7673
        %v7738 = vadd.f32 %v6330, %v7674
        %v7739 = vadd.f32 %v6331, %v7675
        %v7740 = vadd.f32 %v6332, %v7676
        %v7741 = vadd.f32 %v7709, %v7581
        %v7742 = vadd.f32 %v7710, %v7582
        %v7743 = vadd.f32 %v7711, %v7583
        %v7744 = vadd.f32 %v7712, %v7584
        %v7745 = vadd.f32 %v7713, %v7585
        %v7746 = vadd.f32 %v7714, %v7586
        %v7747 = vadd.f32 %v7715, %v7587
        %v7748 = vadd.f32 %v7716, %v7588
        %v7749 = vadd.f32 %v7717, %v7589
        %v7750 = vadd.f32 %v7718, %v7590
        %v7751 = vadd.f32 %v7719, %v7591
        %v7752 = vadd.f32 %v7720, %v7592
        %v7753 = vadd.f32 %v7721, %v7593
        %v7754 = vadd.f32 %v7722, %v7594
        %v7755 = vadd.f32 %v7723, %v7595
        %v7756 = vadd.f32 %v7724, %v7596
        %v7757 = vadd.f32 %v7725, %v7597
        %v7758 = vadd.f32 %v7726, %v7598
        %v7759 = vadd.f32 %v7727, %v7599
        %v7760 = vadd.f32 %v7728, %v7600
        %v7761 = vadd.f32 %v7729, %v7601
        %v7762 = vadd.f32 %v7730, %v7602
        %v7763 = vadd.f32 %v7731, %v7603
        %v7764 = vadd.f32 %v7732, %v7604
        %v7765 = vadd.f32 %v7733, %v7605
        %v7766 = vadd.f32 %v7734, %v7606
        %v7767 = vadd.f32 %v7735, %v7607
        %v7768 = vadd.f32 %v7736, %v7608
        %v7769 = vadd.f32 %v7737, %v7609
        %v7770 = vadd.f32 %v7738, %v7610
        %v7771 = vadd.f32 %v7739, %v7611
        %v7772 = vadd.f32 %v7740, %v7612
        %v7805 = vcombine.low %v7741, %v7742
        %v7806 = vcombine.low %v7743, %v7744
        %v7807 = vcombine.low %v7745, %v7746
        %v7808 = vcombine.low %v7747, %v7748
        %v7809 = vcombine.low %v7749, %v7750
        %v7810 = vcombine.low %v7751, %v7752
        %v7811 = vcombine.low %v7753, %v7754
        %v7812 = vcombine.low %v7755, %v7756
        %v7813 = vcombine.low %v7757, %v7758
        %v7814 = vcombine.low %v7759, %v7760
        %v7815 = vcombine.low %v7761, %v7762
        %v7816 = vcombine.low %v7763, %v7764
        %v7817 = vcombine.low %v7765, %v7766
        %v7818 = vcombine.low %v7767, %v7768
        %v7819 = vcombine.low %v7769, %v7770
        %v7820 = vcombine.low %v7771, %v7772
        %7837 = vst [vmem:[%s240] sm:$0xff] %v7805
        %7838 = vst [vmem:[%s240 + $0x8] sm:$0xff] %v7806
        %7839 = vst [vmem:[%s240 + $0x10] sm:$0xff] %v7807
        %7840 = vst [vmem:[%s240 + $0x18] sm:$0xff] %v7808
        %7841 = vst [vmem:[%s240 + $0x20] sm:$0xff] %v7809
        %7842 = vst [vmem:[%s240 + $0x28] sm:$0xff] %v7810
        %7843 = vst [vmem:[%s240 + $0x30] sm:$0xff] %v7811
        %7844 = vst [vmem:[%s240 + $0x38] sm:$0xff] %v7812
        %7845 = vst [vmem:[%s240 + $0x40] sm:$0xff] %v7813
        %7846 = vst [vmem:[%s240 + $0x48] sm:$0xff] %v7814
        %7847 = vst [vmem:[%s240 + $0x50] sm:$0xff] %v7815
        %7848 = vst [vmem:[%s240 + $0x58] sm:$0xff] %v7816
        %7849 = vst [vmem:[%s240 + $0x60] sm:$0xff] %v7817
        %7850 = vst [vmem:[%s240 + $0x68] sm:$0xff] %v7818
        %7851 = vst [vmem:[%s240 + $0x70] sm:$0xff] %v7819
        %7852 = vst [vmem:[%s240 + $0x78] sm:$0xff] %v7820
        %s7853 = sand.u32 %s104, 1
        %s7854 = scalar_lea.sflag [#allocation5], %s7853
        %s7855 = sand.u32 %s104, 1
        %s7856 = smul.addr %s7855, 128
        %s7857 = scalar_lea.vmem [#allocation9], %s7856
        // Predicated region
        $region45: #{tpu_custom_call.1} parent=31 // pred_check
          %p7858 = pneg %p114
        $region46: #{tpu_custom_call.1} parent=31 // pred_check_branch
          %7860 = sbr.rel (%p7858) target = $region48
        $region47: #{tpu_custom_call.1} parent=31 // pred_region
          %s7861 = smul.u32 32, %s23
          %s7863 = ssub.s32 2048, 2048
          %7864 = vsyncadd %s7854, %s7863
          %s7865 = smul.addr %s7861, 64
          %s7866 = scalar_lea.hbm %s3, %s7865
          %s7868 = sshll.u32 %s7857, 4
          %s7869 = int_to_ptr.vmem [resolvable:$true] %s7868
          %7871 = dma.vmem_to_hbm [thread:$0]  %s7869, 2048, %s7866, %s7854
        $region48: #{tpu_custom_call.1} parent=31 // pred_fallthru
          _
      $region32: #{tpu_custom_call.1} parent=5 // pred_fallthru
        _
      %p7872 = scmp.le.s32.totalorder 2, %s18
      // Predicated region
      $region49: #{tpu_custom_call.1} parent=5 // pred_check
        %p7873 = pneg %p7872
      $region50: #{tpu_custom_call.1} parent=5 // pred_check_branch
        %7875 = sbr.rel (%p7873) target = $region52
      $region51: #{tpu_custom_call.1} parent=5 // pred_region
        %s7876 = ssub.s32 %s18, 2
        // Predicated region
        $region53: #{tpu_custom_call.1} parent=51 // pred_check
          %p7877 = pneg %p120
        $region54: #{tpu_custom_call.1} parent=51 // pred_check_branch
          %7879 = sbr.rel (%p7877) target = $region56
        $region55: #{tpu_custom_call.1} parent=51 // pred_region
          %s7880 = sand.u32 %s105, 1
          %s7881 = scalar_lea.sflag [#allocation5], %s7880
          %s7882 = sand.u32 %s105, 1
          %s7883 = smul.addr %s7882, 128
          %s7884 = scalar_lea.vmem [#allocation9], %s7883
          %7885 = dma.done %s7881, 2048
        $region56: #{tpu_custom_call.1} parent=51 // pred_fallthru
          _
      $region52: #{tpu_custom_call.1} parent=5 // pred_fallthru
        _
    $region6: #{tpu_custom_call.1} parent=1 // loop_footer
      %s22 = sadd.s32 1, %s18
    $region7: #{tpu_custom_call.1} parent=1 // loop_footer_branch
      %17 = sbr.rel target = $region3
    $region8: #{tpu_custom_call.1} parent=1 // loop_exit
      _
    %7886 = vsyncpa [#allocation4], 1
    %s7887 = scalar_lea.sflag [#allocation4], 1
    %7888 = vsyncpa %s7887, 1
    %7889 = vsyncpa [#allocation7], 1
    %s7890 = scalar_lea.sflag [#allocation7], 1
    %7891 = vsyncpa %s7890, 1
    %7892 = vsyncpa [#allocation5], 1
    %s7893 = scalar_lea.sflag [#allocation5], 1
    %7894 = vsyncpa %s7893, 1

</llo_original>
